<compile_context>
chip_gen: v5e
topology: v5e:2x2
jax: 0.10.0
libtpu: 0.0.40
codegen_flags: <defaults>
</compile_context>

<pallas_src>
import functools
import numpy as np
import jax
import jax.numpy as jnp
from jax import lax
from jax.experimental import pallas as pl
from jax.experimental.pallas import tpu as pltpu

# Special token ids (deterministic, in-script).
EOS_ID, BOT_ID, EOT_ID, CONTINUE_ID = 0, 1, 2, 3

_MASK_VALUE = -1e30  # additive mask value for disallowed attention entries


def _compiler_params(*semantics):
    # Explicit scoped-VMEM limit (v5e default is only 16 MiB) with headroom
    # for v7x's 64 MiB physical VMEM.
    return pltpu.CompilerParams(dimension_semantics=semantics,
                                vmem_limit_bytes=48 * 1024 * 1024)


def _pick_tile(n, cap):
    """Largest power-of-two divisor of n with 8 <= tile <= cap, else n itself."""
    best = None
    t = 8
    while t <= min(cap, n):
        if n % t == 0:
            best = t
        t *= 2
    return best if best is not None else n


# -----------------------------------------------------------------------------
# Kernel 1: fused K|V projection (row-tiled, weights resident)
# -----------------------------------------------------------------------------
def _kv_kernel(x_ref, wkv_ref, k_ref, v_ref):
    kv = jnp.dot(x_ref[...], wkv_ref[...], preferred_element_type=jnp.float32)
    d = x_ref.shape[1]
    k_ref[...] = kv[:, :d].astype(k_ref.dtype)   # d is a multiple of 128 -> lane-aligned slice
    v_ref[...] = kv[:, d:].astype(v_ref.dtype)


def kv_project(x_bf, wkv_bf, tm):
    bt, d = x_bf.shape
    return pl.pallas_call(
        _kv_kernel,
        out_shape=(jax.ShapeDtypeStruct((bt, d), jnp.bfloat16),
                   jax.ShapeDtypeStruct((bt, d), jnp.bfloat16)),
        grid=(bt // tm,),
        in_specs=[pl.BlockSpec((tm, d), lambda i: (i, 0)),
                  pl.BlockSpec(wkv_bf.shape, lambda i: (0, 0))],
        out_specs=(pl.BlockSpec((tm, d), lambda i: (i, 0)),
                   pl.BlockSpec((tm, d), lambda i: (i, 0))),
        compiler_params=_compiler_params("parallel"),
    )(x_bf, wkv_bf)


# -----------------------------------------------------------------------------
# Kernel 2: attention + MLP block per query-row tile (mask built in-kernel)
# -----------------------------------------------------------------------------
def _attn_mlp_kernel(xq_ref, rowpos_ref, k_ref, v_ref, kmask_ref,
                     wq_ref, wo_ref, w1_ref, w2_ref, hid_ref):
    tm, d = xq_ref.shape
    btk = k_ref.shape[0]
    i = pl.program_id(0)

    x_bf = xq_ref[...]                                            # (tm, d) bf16
    q = jnp.dot(x_bf, wq_ref[...], preferred_element_type=jnp.float32)
    scale = 1.0 / jnp.sqrt(jnp.float32(d))
    scores = lax.dot_general(
        q.astype(jnp.bfloat16), k_ref[...],
        (((1,), (1,)), ((), ())),
        preferred_element_type=jnp.float32) * scale               # (tm, btk)

    # Block-diagonal causal + key-padding mask, rebuilt in-registers (no
    # (BT,BT) bias matrix in HBM).  With batch-major flattening, "same batch
    # and causal" <=> key_global in [row_global - row_pos, row_global].
    row_g = i * tm + lax.broadcasted_iota(jnp.int32, (tm, btk), 0)
    col_g = lax.broadcasted_iota(jnp.int32, (tm, btk), 1)
    row_pos = rowpos_ref[...]                                     # (tm, 1) int32
    ok = (col_g >= row_g - row_pos) & (col_g <= row_g) & (kmask_ref[...] > 0.5)
    scores = jnp.where(ok, scores, _MASK_VALUE)

    m = jnp.max(scores, axis=-1, keepdims=True)
    p = jnp.exp(scores - m)
    denom = jnp.sum(p, axis=-1, keepdims=True)
    p = p * pl.reciprocal(denom, approx=True)                     # EUP divide

    attn = jnp.dot(p.astype(jnp.bfloat16), v_ref[...],
                   preferred_element_type=jnp.float32)
    h = x_bf.astype(jnp.float32) + jnp.dot(
        attn.astype(jnp.bfloat16), wo_ref[...], preferred_element_type=jnp.float32)
    ff = jnp.maximum(jnp.dot(h.astype(jnp.bfloat16), w1_ref[...],
                             preferred_element_type=jnp.float32), 0.0)
    out = h + jnp.dot(ff.astype(jnp.bfloat16), w2_ref[...],
                      preferred_element_type=jnp.float32)
    hid_ref[...] = out.astype(hid_ref.dtype)


def attn_mlp(x_bf, row_pos, k_full, v_full, key_mask, wq, wo, w1, w2, tm):
    bt, d = x_bf.shape
    f = w1.shape[1]
    # TODO(synk): for very long sequences on v7x (64 MiB VMEM), additionally
    # tile the key axis (flash-style online softmax) instead of keeping K/V
    # as full resident blocks.
    return pl.pallas_call(
        _attn_mlp_kernel,
        out_shape=jax.ShapeDtypeStruct((bt, d), jnp.bfloat16),
        grid=(bt // tm,),
        in_specs=[pl.BlockSpec((tm, d), lambda i: (i, 0)),     # query rows (pipelined)
                  pl.BlockSpec((tm, 1), lambda i: (i, 0)),     # per-row position
                  pl.BlockSpec((bt, d), lambda i: (0, 0)),     # K (resident)
                  pl.BlockSpec((bt, d), lambda i: (0, 0)),     # V (resident)
                  pl.BlockSpec((1, bt), lambda i: (0, 0)),     # key padding mask
                  pl.BlockSpec((d, d), lambda i: (0, 0)),
                  pl.BlockSpec((d, d), lambda i: (0, 0)),
                  pl.BlockSpec((d, f), lambda i: (0, 0)),
                  pl.BlockSpec((f, d), lambda i: (0, 0))],
        out_specs=pl.BlockSpec((tm, d), lambda i: (i, 0)),
        compiler_params=_compiler_params("parallel"),
    )(x_bf, row_pos, k_full, v_full, key_mask, wq, wo, w1, w2)


# -----------------------------------------------------------------------------
# Kernel 3: LM head tiled over (row tiles, vocab tiles) fused with online-LSE
#           cross entropy (torch ignore_index=-100 semantics)
# -----------------------------------------------------------------------------
def _lmhead_ce_kernel(hid_ref, wlm_ref, lab_ref, logits_ref, nll_ref,
                      m_sc, l_sc, t_sc):
    j = pl.program_id(1)

    @pl.when(j == 0)
    def _():
        m_sc[...] = jnp.full(m_sc.shape, -jnp.inf, m_sc.dtype)
        l_sc[...] = jnp.zeros(l_sc.shape, l_sc.dtype)
        t_sc[...] = jnp.zeros(t_sc.shape, t_sc.dtype)

    tile = jnp.dot(hid_ref[...], wlm_ref[...], preferred_element_type=jnp.float32)
    logits_ref[...] = tile                                        # written once

    labels = lab_ref[...]                                         # (tm, 1) int32
    tv = tile.shape[1]
    col = j * tv + lax.broadcasted_iota(jnp.int32, tile.shape, 1)

    m_prev = m_sc[...]
    m_new = jnp.maximum(m_prev, jnp.max(tile, axis=-1, keepdims=True))
    alpha = jnp.exp(m_prev - m_new)
    l_sc[...] = l_sc[...] * alpha + jnp.sum(jnp.exp(tile - m_new),
                                            axis=-1, keepdims=True)
    m_sc[...] = m_new
    t_sc[...] = t_sc[...] + jnp.sum(jnp.where(col == labels, tile, 0.0),
                                    axis=-1, keepdims=True)

    @pl.when(j == pl.num_programs(1) - 1)
    def _():
        nll = m_sc[...] + jnp.log(l_sc[...]) - t_sc[...]
        nll_ref[...] = jnp.where(labels != -100, nll, 0.0)


def lm_head_and_ce(hidden_bf, wlm_bf, labels2d, tm, tv):
    bt, d = hidden_bf.shape
    v = wlm_bf.shape[1]
    return pl.pallas_call(
        _lmhead_ce_kernel,
        out_shape=(jax.ShapeDtypeStruct((bt, v), jnp.float32),
                   jax.ShapeDtypeStruct((bt, 1), jnp.float32)),
        grid=(bt // tm, v // tv),
        in_specs=[pl.BlockSpec((tm, d), lambda i, j: (i, 0)),
                  pl.BlockSpec((d, tv), lambda i, j: (0, j)),
                  pl.BlockSpec((tm, 1), lambda i, j: (i, 0))],
        out_specs=(pl.BlockSpec((tm, tv), lambda i, j: (i, j)),
                   pl.BlockSpec((tm, 1), lambda i, j: (i, 0))),
        scratch_shapes=[pltpu.VMEM((tm, 1), jnp.float32),
                        pltpu.VMEM((tm, 1), jnp.float32),
                        pltpu.VMEM((tm, 1), jnp.float32)],
        compiler_params=_compiler_params("parallel", "arbitrary"),
    )(hidden_bf, wlm_bf, labels2d)


# -----------------------------------------------------------------------------
# DTTModel.forward — whole multi-pass driver under one jax.jit
# -----------------------------------------------------------------------------
def _build_fill_schedule(ids_np):
    """Static per-pass (batch_idx, token_idx) fill pairs for continue tokens."""
    B = ids_np.shape[0]
    continue_lists = [np.nonzero(ids_np[b] == CONTINUE_ID)[0].tolist()
                      for b in range(B)]
    max_n = max((len(l) for l in continue_lists), default=0)
    fills = []
    for p in range(max_n):
        pairs = tuple((int(b), int(clist[p]))
                      for b, clist in enumerate(continue_lists)
                      if len(clist) > p)
        fills.append(pairs)
    return tuple(fills)


@functools.partial(jax.jit, static_argnames=("fills", "compute_loss"))
def _dtt_forward_jit(params, input_ids, attention_mask, labels, *,
                     fills, compute_loss):
    B, T = input_ids.shape
    D = params["emb"].shape[1]
    F = params["w1"].shape[1]
    V = params["wlm"].shape[1]
    BT = B * T
    assert D % 128 == 0 and F % 128 == 0 and V % 128 == 0 and BT % 8 == 0, \
        "hidden/ff/vocab must be 128-lane aligned and B*T a multiple of 8"

    TM = _pick_tile(BT, 256)   # query-row tile (pipelined / megacore-parallel)
    TV = _pick_tile(V, 256)    # vocab tile (256-wide for v6e/v7x MXU)

    # bf16 fused weight slabs (halved weight DMA; MXU-native operands).
    wkv = jnp.concatenate([params["wk"], params["wv"]], axis=1).astype(jnp.bfloat16)
    wq = params["wq"].astype(jnp.bfloat16)
    wo = params["wo"].astype(jnp.bfloat16)
    w1 = params["w1"].astype(jnp.bfloat16)
    w2 = params["w2"].astype(jnp.bfloat16)
    wlm = params["wlm"].astype(jnp.bfloat16)

    # Tiny metadata vectors; the (BT,BT) mask itself is rebuilt inside the
    # attention kernel per tile from these.
    row_pos = jnp.broadcast_to(jnp.arange(T, dtype=jnp.int32), (B, T)).reshape(BT, 1)
    key_mask = attention_mask.reshape(1, BT).astype(jnp.float32)

    # Embedding lookup (glue; gather stays in plain JAX under jit).
    inputs_embeds = jnp.take(params["emb"], input_ids, axis=0)    # (B, T, D) f32

    def hidden_pass(embeds):
        x_bf = embeds.reshape(BT, D).astype(jnp.bfloat16)         # bf16 activations
        k_full, v_full = kv_project(x_bf, wkv, TM)
        return attn_mlp(x_bf, row_pos, k_full, v_full, key_mask,
                        wq, wo, w1, w2, TM)                       # (BT, D) bf16

    # Intermediate DTT passes: hidden states only (no LM head / logits traffic),
    # one batched scatter per pass for the continue-token fills.
    # TODO(synk): the pass loop could be fused into one pallas_call with a
    # scalar-prefetched fill schedule to keep activations resident across passes.
    for pairs in fills:
        hidden = hidden_pass(inputs_embeds).reshape(B, T, D)
        b_idx = jnp.array([p[0] for p in pairs], dtype=jnp.int32)
        t_idx = jnp.array([p[1] for p in pairs], dtype=jnp.int32)
        rows = hidden[b_idx, t_idx - 1].astype(jnp.float32)       # (n_fill, D)
        inputs_embeds = inputs_embeds.at[b_idx, t_idx].set(rows)

    # Single final pass with fully filled embeddings == concatenation of the
    # reference per-pass kept logit slices (causality + exact KV cache).
    hidden = hidden_pass(inputs_embeds)                           # (BT, D) bf16

    # Shifted labels: row (b,t) pairs with labels[b,t+1]; last position of each
    # sequence gets ignore_index (-100), matching logits[:, :-1] vs labels[:, 1:].
    shift_labels = jnp.concatenate(
        [labels[:, 1:], jnp.full((B, 1), -100, labels.dtype)], axis=1)
    labels2d = shift_labels.reshape(BT, 1).astype(jnp.int32)

    logits2d, nll = lm_head_and_ce(hidden, wlm, labels2d, TM, TV)
    logits = logits2d.reshape(B, T, V)

    if compute_loss:
        valid = jnp.sum((labels2d != -100).astype(jnp.float32))
        # torch CrossEntropyLoss(ignore_index=-100) mean semantics (NaN if none valid).
        loss = jnp.sum(nll) / valid
    else:
        loss = jnp.float32(0.0)
    return loss, inputs_embeds, logits


def dtt_forward(params, input_ids, attention_mask, labels=None):
    # Host-side continue-token bookkeeping (read-only; mirrors the PyTorch code).
    fills = _build_fill_schedule(np.asarray(input_ids))
    lbl = labels if labels is not None else input_ids
    loss, inputs_embeds, logits = _dtt_forward_jit(
        params, input_ids, attention_mask, lbl,
        fills=fills, compute_loss=labels is not None)
    # TODO(synk): `generate()` (autoregressive loop with a per-sequence latent-mode
    # state machine) is host-driven control flow and is not ported here.
    return (loss if labels is not None else None), inputs_embeds, logits


# -----------------------------------------------------------------------------
# Deterministic parameter init + demo run.
# -----------------------------------------------------------------------------
def init_params(key, vocab, d_model, d_ff):
    ks = jax.random.split(key, 8)
    s = 0.05
    return {
        "emb": jax.random.normal(ks[0], (vocab, d_model), jnp.float32) * s,
        "wq":  jax.random.normal(ks[1], (d_model, d_model), jnp.float32) * s,
        "wk":  jax.random.normal(ks[2], (d_model, d_model), jnp.float32) * s,
        "wv":  jax.random.normal(ks[3], (d_model, d_model), jnp.float32) * s,
        "wo":  jax.random.normal(ks[4], (d_model, d_model), jnp.float32) * s,
        "w1":  jax.random.normal(ks[5], (d_model, d_ff), jnp.float32) * s,
        "w2":  jax.random.normal(ks[6], (d_ff, d_model), jnp.float32) * s,
        "wlm": jax.random.normal(ks[7], (d_model, vocab), jnp.float32) * s,
    }


if __name__ == "__main__":
    # Small but lane-dense shapes: hidden/ff/vocab multiples of 128 so all
    # matmuls and output blocks are MXU/lane friendly; BT=512 -> 2 row tiles,
    # V=512 -> 2 vocab tiles (exercises the online-LSE CE accumulator).
    B, T, D, F, V = 4, 128, 128, 256, 512

    key = jax.random.PRNGKey(0)
    pkey, ikey = jax.random.split(key)
    params = init_params(pkey, V, D, F)

    # Token ids in [4, V); continue tokens aligned across the batch at
    # positions 5 and 6 (the reference implementation assumes alignment).
    ids = jax.random.randint(ikey, (B, T), 4, V, dtype=jnp.int32)
    input_ids = ids.at[:, 5].set(CONTINUE_ID).at[:, 6].set(CONTINUE_ID)

    attention_mask = jnp.ones((B, T), jnp.float32)
    labels = input_ids  # standard causal-LM labels

    loss, inputs_embeds, logits = dtt_forward(params, input_ids, attention_mask, labels)
    jax.block_until_ready((loss, inputs_embeds, logits))

    assert logits.shape == (B, T, V), logits.shape
    assert inputs_embeds.shape == (B, T, D), inputs_embeds.shape
    assert bool(jnp.isfinite(loss)), "loss is not finite"

    print("KERNEL_OK")
</pallas_src>

<mosaic_0001>
module attributes {stable_mosaic.version = 11 : i64} {
  func.func @_kv_kernel(%arg0: i32, %arg1: memref<256x128xbf16, #tpu.memory_space<vmem>>, %arg2: memref<128x256xbf16, #tpu.memory_space<vmem>>, %arg3: memref<256x128xbf16, #tpu.memory_space<vmem>>, %arg4: memref<256x128xbf16, #tpu.memory_space<vmem>>) attributes {dimension_semantics = [#tpu.dimension_semantics<parallel>], iteration_bounds = array<i64: 2>, scalar_prefetch = 0 : i64, scratch_operands = 0 : i64, tpu.core_type = #tpu.core_type<tc>, window_params = [{transform_indices = @transform_0, window_bounds = array<i64: 256, 128>}, {pipeline_mode = #tpu.pipeline_mode<synchronous>, transform_indices = @transform_1, window_bounds = array<i64: 128, 256>}, {transform_indices = @transform_2, window_bounds = array<i64: 256, 128>}, {transform_indices = @transform_3, window_bounds = array<i64: 256, 128>}]} {
    %c0 = arith.constant 0 : index
    %c0_0 = arith.constant 0 : index
    %0 = vector.load %arg1[%c0, %c0_0] : memref<256x128xbf16, #tpu.memory_space<vmem>>, vector<256x128xbf16>
    %c0_1 = arith.constant 0 : index
    %c0_2 = arith.constant 0 : index
    %1 = vector.load %arg2[%c0_1, %c0_2] : memref<128x256xbf16, #tpu.memory_space<vmem>>, vector<128x256xbf16>
    %cst = arith.constant dense<0.000000e+00> : vector<256x256xf32>
    %2 = tpu.matmul %0, %1, %cst {dimension_numbers = #tpu.dot_dimension_numbers<[1], [0], [0], [1], [0, 0, 1, 1], [], []>} : vector<256x128xbf16>, vector<128x256xbf16>, vector<256x256xf32> -> vector<256x256xf32>
    %3 = vector.extract_strided_slice %2 {offsets = [0, 0], sizes = [256, 128], strides = [1, 1]} : vector<256x256xf32> to vector<256x128xf32>
    %4 = arith.truncf %3 : vector<256x128xf32> to vector<256x128xbf16>
    %c0_3 = arith.constant 0 : index
    %c0_4 = arith.constant 0 : index
    %5 = vector.load %arg3[%c0_3, %c0_4] : memref<256x128xbf16, #tpu.memory_space<vmem>>, vector<256x128xbf16>
    tpu.vector_store %arg3[%c0_3, %c0_4], %4 {strides = array<i32>} : memref<256x128xbf16, #tpu.memory_space<vmem>>, vector<256x128xbf16>,
    %6 = vector.extract_strided_slice %2 {offsets = [0, 128], sizes = [256, 128], strides = [1, 1]} : vector<256x256xf32> to vector<256x128xf32>
    %7 = arith.truncf %6 : vector<256x128xf32> to vector<256x128xbf16>
    %c0_5 = arith.constant 0 : index
    %c0_6 = arith.constant 0 : index
    %8 = vector.load %arg4[%c0_5, %c0_6] : memref<256x128xbf16, #tpu.memory_space<vmem>>, vector<256x128xbf16>
    tpu.vector_store %arg4[%c0_5, %c0_6], %7 {strides = array<i32>} : memref<256x128xbf16, #tpu.memory_space<vmem>>, vector<256x128xbf16>,
    return
  }
  func.func @transform_0(%arg0: i32) -> (i32, i32) {
    %c0_i32 = arith.constant 0 : i32
    %c0_i32_0 = arith.constant 0 : i32
    return %arg0, %c0_i32 : i32, i32
  }
  func.func @transform_1(%arg0: i32) -> (i32, i32) {
    %c0_i32 = arith.constant 0 : i32
    %c0_i32_0 = arith.constant 0 : i32
    %c0_i32_1 = arith.constant 0 : i32
    return %c0_i32, %c0_i32_0 : i32, i32
  }
  func.func @transform_2(%arg0: i32) -> (i32, i32) {
    %c0_i32 = arith.constant 0 : i32
    %c0_i32_0 = arith.constant 0 : i32
    return %arg0, %c0_i32 : i32, i32
  }
  func.func @transform_3(%arg0: i32) -> (i32, i32) {
    %c0_i32 = arith.constant 0 : i32
    %c0_i32_0 = arith.constant 0 : i32
    return %arg0, %c0_i32 : i32, i32
  }
}

module attributes {stable_mosaic.version = 11 : i64} {
  func.func @_attn_mlp_kernel(%arg0: i32, %arg1: memref<256x128xbf16, #tpu.memory_space<vmem>>, %arg2: memref<256x1xi32, #tpu.memory_space<vmem>>, %arg3: memref<512x128xbf16, #tpu.memory_space<vmem>>, %arg4: memref<512x128xbf16, #tpu.memory_space<vmem>>, %arg5: memref<1x512xf32, #tpu.memory_space<vmem>>, %arg6: memref<128x128xbf16, #tpu.memory_space<vmem>>, %arg7: memref<128x128xbf16, #tpu.memory_space<vmem>>, %arg8: memref<128x256xbf16, #tpu.memory_space<vmem>>, %arg9: memref<256x128xbf16, #tpu.memory_space<vmem>>, %arg10: memref<256x128xbf16, #tpu.memory_space<vmem>>) attributes {dimension_semantics = [#tpu.dimension_semantics<parallel>], iteration_bounds = array<i64: 2>, scalar_prefetch = 0 : i64, scratch_operands = 0 : i64, tpu.core_type = #tpu.core_type<tc>, window_params = [{transform_indices = @transform_0, window_bounds = array<i64: 256, 128>}, {transform_indices = @transform_1, window_bounds = array<i64: 256, 1>}, {pipeline_mode = #tpu.pipeline_mode<synchronous>, transform_indices = @transform_2, window_bounds = array<i64: 512, 128>}, {pipeline_mode = #tpu.pipeline_mode<synchronous>, transform_indices = @transform_3, window_bounds = array<i64: 512, 128>}, {pipeline_mode = #tpu.pipeline_mode<synchronous>, transform_indices = @transform_4, window_bounds = array<i64: 1, 512>}, {pipeline_mode = #tpu.pipeline_mode<synchronous>, transform_indices = @transform_5, window_bounds = array<i64: 128, 128>}, {pipeline_mode = #tpu.pipeline_mode<synchronous>, transform_indices = @transform_6, window_bounds = array<i64: 128, 128>}, {pipeline_mode = #tpu.pipeline_mode<synchronous>, transform_indices = @transform_7, window_bounds = array<i64: 128, 256>}, {pipeline_mode = #tpu.pipeline_mode<synchronous>, transform_indices = @transform_8, window_bounds = array<i64: 256, 128>}, {transform_indices = @transform_9, window_bounds = array<i64: 256, 128>}]} {
    %c0 = arith.constant 0 : index
    %c0_0 = arith.constant 0 : index
    %0 = vector.load %arg1[%c0, %c0_0] : memref<256x128xbf16, #tpu.memory_space<vmem>>, vector<256x128xbf16>
    %c0_1 = arith.constant 0 : index
    %c0_2 = arith.constant 0 : index
    %1 = vector.load %arg6[%c0_1, %c0_2] : memref<128x128xbf16, #tpu.memory_space<vmem>>, vector<128x128xbf16>
    %cst = arith.constant dense<0.000000e+00> : vector<256x128xf32>
    %2 = tpu.matmul %0, %1, %cst {dimension_numbers = #tpu.dot_dimension_numbers<[1], [0], [0], [1], [0, 0, 1, 1], [], []>} : vector<256x128xbf16>, vector<128x128xbf16>, vector<256x128xf32> -> vector<256x128xf32>
    %cst_3 = arith.constant 1.280000e+02 : f32
    %3 = math.sqrt %cst_3 : f32
    %cst_4 = arith.constant 1.000000e+00 : f32
    %4 = arith.divf %cst_4, %3 : f32
    %5 = arith.truncf %2 : vector<256x128xf32> to vector<256x128xbf16>
    %c0_5 = arith.constant 0 : index
    %c0_6 = arith.constant 0 : index
    %6 = vector.load %arg3[%c0_5, %c0_6] : memref<512x128xbf16, #tpu.memory_space<vmem>>, vector<512x128xbf16>
    %cst_7 = arith.constant dense<0.000000e+00> : vector<256x512xf32>
    %7 = tpu.matmul %5, %6, %cst_7 {dimension_numbers = #tpu.dot_dimension_numbers<[1], [1], [0], [0], [0, 0, 1, 0], [], []>} : vector<256x128xbf16>, vector<512x128xbf16>, vector<256x512xf32> -> vector<256x512xf32>
    %8 = vector.broadcast %4 : f32 to vector<256x512xf32>
    %9 = arith.mulf %7, %8 : vector<256x512xf32>
    %c256_i32 = arith.constant 256 : i32
    %10 = arith.muli %arg0, %c256_i32 : i32
    %11 = tpu.iota {dimensions = array<i32: 0>} : vector<256x512xi32>
    %12 = vector.broadcast %10 : i32 to vector<256x512xi32>
    %13 = arith.addi %12, %11 : vector<256x512xi32>
    %14 = tpu.iota {dimensions = array<i32: 1>} : vector<256x512xi32>
    %c0_8 = arith.constant 0 : index
    %c0_9 = arith.constant 0 : index
    %15 = vector.load %arg2[%c0_8, %c0_9] : memref<256x1xi32, #tpu.memory_space<vmem>>, vector<256x1xi32>
    %16 = vector.broadcast %15 : vector<256x1xi32> to vector<256x512xi32>
    %17 = arith.subi %13, %16 : vector<256x512xi32>
    %18 = arith.cmpi sge, %14, %17 : vector<256x512xi32>
    %19 = arith.cmpi sle, %14, %13 : vector<256x512xi32>
    %20 = arith.andi %18, %19 : vector<256x512xi1>
    %c0_10 = arith.constant 0 : index
    %c0_11 = arith.constant 0 : index
    %21 = vector.load %arg5[%c0_10, %c0_11] : memref<1x512xf32, #tpu.memory_space<vmem>>, vector<1x512xf32>
    %cst_12 = arith.constant 5.000000e-01 : f32
    %22 = vector.broadcast %cst_12 : f32 to vector<1x512xf32>
    %23 = arith.cmpf ogt, %21, %22 : vector<1x512xf32>
    %24 = vector.broadcast %23 : vector<1x512xi1> to vector<256x512xi1>
    %25 = arith.andi %20, %24 : vector<256x512xi1>
    %cst_13 = arith.constant -1.000000e+30 : f32
    %26 = vector.broadcast %cst_13 : f32 to vector<256x512xf32>
    %27 = arith.select %25, %9, %26 : vector<256x512xi1>, vector<256x512xf32>
    %cst_14 = arith.constant dense<0xFF800000> : vector<256xf32>
    %28 = vector.multi_reduction <maximumf>, %27, %cst_14 [1] : vector<256x512xf32> to vector<256xf32>
    %29 = vector.shape_cast %28 : vector<256xf32> to vector<256x1xf32>
    %30 = vector.broadcast %29 : vector<256x1xf32> to vector<256x512xf32>
    %31 = arith.subf %27, %30 : vector<256x512xf32>
    %32 = math.exp %31 : vector<256x512xf32>
    %cst_15 = arith.constant dense<0.000000e+00> : vector<256xf32>
    %33 = vector.multi_reduction <add>, %32, %cst_15 [1] : vector<256x512xf32> to vector<256xf32>
    %34 = vector.shape_cast %33 : vector<256xf32> to vector<256x1xf32>
    %35 = tpu.reciprocal %34 {approx = true} : vector<256x1xf32> -> vector<256x1xf32>
    %36 = vector.broadcast %35 : vector<256x1xf32> to vector<256x512xf32>
    %37 = arith.mulf %32, %36 : vector<256x512xf32>
    %38 = arith.truncf %37 : vector<256x512xf32> to vector<256x512xbf16>
    %c0_16 = arith.constant 0 : index
    %c0_17 = arith.constant 0 : index
    %39 = vector.load %arg4[%c0_16, %c0_17] : memref<512x128xbf16, #tpu.memory_space<vmem>>, vector<512x128xbf16>
    %cst_18 = arith.constant dense<0.000000e+00> : vector<256x128xf32>
    %40 = tpu.matmul %38, %39, %cst_18 {dimension_numbers = #tpu.dot_dimension_numbers<[1], [0], [0], [1], [0, 0, 1, 1], [], []>} : vector<256x512xbf16>, vector<512x128xbf16>, vector<256x128xf32> -> vector<256x128xf32>
    %41 = arith.extf %0 : vector<256x128xbf16> to vector<256x128xf32>
    %42 = arith.truncf %40 : vector<256x128xf32> to vector<256x128xbf16>
    %c0_19 = arith.constant 0 : index
    %c0_20 = arith.constant 0 : index
    %43 = vector.load %arg7[%c0_19, %c0_20] : memref<128x128xbf16, #tpu.memory_space<vmem>>, vector<128x128xbf16>
    %cst_21 = arith.constant dense<0.000000e+00> : vector<256x128xf32>
    %44 = tpu.matmul %42, %43, %cst_21 {dimension_numbers = #tpu.dot_dimension_numbers<[1], [0], [0], [1], [0, 0, 1, 1], [], []>} : vector<256x128xbf16>, vector<128x128xbf16>, vector<256x128xf32> -> vector<256x128xf32>
    %45 = arith.addf %41, %44 : vector<256x128xf32>
    %46 = arith.truncf %45 : vector<256x128xf32> to vector<256x128xbf16>
    %c0_22 = arith.constant 0 : index
    %c0_23 = arith.constant 0 : index
    %47 = vector.load %arg8[%c0_22, %c0_23] : memref<128x256xbf16, #tpu.memory_space<vmem>>, vector<128x256xbf16>
    %cst_24 = arith.constant dense<0.000000e+00> : vector<256x256xf32>
    %48 = tpu.matmul %46, %47, %cst_24 {dimension_numbers = #tpu.dot_dimension_numbers<[1], [0], [0], [1], [0, 0, 1, 1], [], []>} : vector<256x128xbf16>, vector<128x256xbf16>, vector<256x256xf32> -> vector<256x256xf32>
    %cst_25 = arith.constant 0.000000e+00 : f32
    %49 = vector.broadcast %cst_25 : f32 to vector<256x256xf32>
    %50 = arith.maximumf %48, %49 : vector<256x256xf32>
    %51 = arith.truncf %50 : vector<256x256xf32> to vector<256x256xbf16>
    %c0_26 = arith.constant 0 : index
    %c0_27 = arith.constant 0 : index
    %52 = vector.load %arg9[%c0_26, %c0_27] : memref<256x128xbf16, #tpu.memory_space<vmem>>, vector<256x128xbf16>
    %cst_28 = arith.constant dense<0.000000e+00> : vector<256x128xf32>
    %53 = tpu.matmul %51, %52, %cst_28 {dimension_numbers = #tpu.dot_dimension_numbers<[1], [0], [0], [1], [0, 0, 1, 1], [], []>} : vector<256x256xbf16>, vector<256x128xbf16>, vector<256x128xf32> -> vector<256x128xf32>
    %54 = arith.addf %45, %53 : vector<256x128xf32>
    %55 = arith.truncf %54 : vector<256x128xf32> to vector<256x128xbf16>
    %c0_29 = arith.constant 0 : index
    %c0_30 = arith.constant 0 : index
    %56 = vector.load %arg10[%c0_29, %c0_30] : memref<256x128xbf16, #tpu.memory_space<vmem>>, vector<256x128xbf16>
    tpu.vector_store %arg10[%c0_29, %c0_30], %55 {strides = array<i32>} : memref<256x128xbf16, #tpu.memory_space<vmem>>, vector<256x128xbf16>,
    return
  }
  func.func @transform_0(%arg0: i32) -> (i32, i32) {
    %c0_i32 = arith.constant 0 : i32
    %c0_i32_0 = arith.constant 0 : i32
    return %arg0, %c0_i32 : i32, i32
  }
  func.func @transform_1(%arg0: i32) -> (i32, i32) {
    %c0_i32 = arith.constant 0 : i32
    %c0_i32_0 = arith.constant 0 : i32
    return %arg0, %c0_i32 : i32, i32
  }
  func.func @transform_2(%arg0: i32) -> (i32, i32) {
    %c0_i32 = arith.constant 0 : i32
    %c0_i32_0 = arith.constant 0 : i32
    %c0_i32_1 = arith.constant 0 : i32
    return %c0_i32, %c0_i32_0 : i32, i32
  }
  func.func @transform_3(%arg0: i32) -> (i32, i32) {
    %c0_i32 = arith.constant 0 : i32
    %c0_i32_0 = arith.constant 0 : i32
    %c0_i32_1 = arith.constant 0 : i32
    return %c0_i32, %c0_i32_0 : i32, i32
  }
  func.func @transform_4(%arg0: i32) -> (i32, i32) {
    %c0_i32 = arith.constant 0 : i32
    %c0_i32_0 = arith.constant 0 : i32
    %c0_i32_1 = arith.constant 0 : i32
    return %c0_i32, %c0_i32_0 : i32, i32
  }
  func.func @transform_5(%arg0: i32) -> (i32, i32) {
    %c0_i32 = arith.constant 0 : i32
    %c0_i32_0 = arith.constant 0 : i32
    %c0_i32_1 = arith.constant 0 : i32
    return %c0_i32, %c0_i32_0 : i32, i32
  }
  func.func @transform_6(%arg0: i32) -> (i32, i32) {
    %c0_i32 = arith.constant 0 : i32
    %c0_i32_0 = arith.constant 0 : i32
    %c0_i32_1 = arith.constant 0 : i32
    return %c0_i32, %c0_i32_0 : i32, i32
  }
  func.func @transform_7(%arg0: i32) -> (i32, i32) {
    %c0_i32 = arith.constant 0 : i32
    %c0_i32_0 = arith.constant 0 : i32
    %c0_i32_1 = arith.constant 0 : i32
    return %c0_i32, %c0_i32_0 : i32, i32
  }
  func.func @transform_8(%arg0: i32) -> (i32, i32) {
    %c0_i32 = arith.constant 0 : i32
    %c0_i32_0 = arith.constant 0 : i32
    %c0_i32_1 = arith.constant 0 : i32
    return %c0_i32, %c0_i32_0 : i32, i32
  }
  func.func @transform_9(%arg0: i32) -> (i32, i32) {
    %c0_i32 = arith.constant 0 : i32
    %c0_i32_0 = arith.constant 0 : i32
    return %arg0, %c0_i32 : i32, i32
  }
}

module attributes {stable_mosaic.version = 11 : i64} {
  func.func @_lmhead_ce_kernel(%arg0: i32, %arg1: i32, %arg2: memref<256x128xbf16, #tpu.memory_space<vmem>>, %arg3: memref<128x256xbf16, #tpu.memory_space<vmem>>, %arg4: memref<256x1xi32, #tpu.memory_space<vmem>>, %arg5: memref<256x256xf32, #tpu.memory_space<vmem>>, %arg6: memref<256x1xf32, #tpu.memory_space<vmem>>, %arg7: memref<256x1xf32, #tpu.memory_space<vmem>>, %arg8: memref<256x1xf32, #tpu.memory_space<vmem>>, %arg9: memref<256x1xf32, #tpu.memory_space<vmem>>) attributes {dimension_semantics = [#tpu.dimension_semantics<parallel>, #tpu.dimension_semantics<arbitrary>], iteration_bounds = array<i64: 2, 2>, scalar_prefetch = 0 : i64, scratch_operands = 3 : i64, tpu.core_type = #tpu.core_type<tc>, window_params = [{transform_indices = @transform_0, window_bounds = array<i64: 256, 128>}, {transform_indices = @transform_1, window_bounds = array<i64: 128, 256>}, {transform_indices = @transform_2, window_bounds = array<i64: 256, 1>}, {transform_indices = @transform_3, window_bounds = array<i64: 256, 256>}, {transform_indices = @transform_4, window_bounds = array<i64: 256, 1>}]} {
    %c0_i32 = arith.constant 0 : i32
    %0 = arith.cmpi eq, %arg1, %c0_i32 : i32
    %1 = arith.extui %0 : i1 to i32
    %c0_i32_0 = arith.constant 0 : i32
    %2 = arith.cmpi ne, %1, %c0_i32_0 : i32
    scf.if %2 {
      %cst_25 = arith.constant 0xFF800000 : f32
      %40 = vector.broadcast %cst_25 : f32 to vector<256x1xf32>
      %c0_26 = arith.constant 0 : index
      %c0_27 = arith.constant 0 : index
      %41 = vector.load %arg7[%c0_26, %c0_27] : memref<256x1xf32, #tpu.memory_space<vmem>>, vector<256x1xf32>
      tpu.vector_store %arg7[%c0_26, %c0_27], %40 {strides = array<i32>} : memref<256x1xf32, #tpu.memory_space<vmem>>, vector<256x1xf32>,
      %cst_28 = arith.constant 0.000000e+00 : f32
      %42 = vector.broadcast %cst_28 : f32 to vector<256x1xf32>
      %c0_29 = arith.constant 0 : index
      %c0_30 = arith.constant 0 : index
      %43 = vector.load %arg8[%c0_29, %c0_30] : memref<256x1xf32, #tpu.memory_space<vmem>>, vector<256x1xf32>
      tpu.vector_store %arg8[%c0_29, %c0_30], %42 {strides = array<i32>} : memref<256x1xf32, #tpu.memory_space<vmem>>, vector<256x1xf32>,
      %cst_31 = arith.constant 0.000000e+00 : f32
      %44 = vector.broadcast %cst_31 : f32 to vector<256x1xf32>
      %c0_32 = arith.constant 0 : index
      %c0_33 = arith.constant 0 : index
      %45 = vector.load %arg9[%c0_32, %c0_33] : memref<256x1xf32, #tpu.memory_space<vmem>>, vector<256x1xf32>
      tpu.vector_store %arg9[%c0_32, %c0_33], %44 {strides = array<i32>} : memref<256x1xf32, #tpu.memory_space<vmem>>, vector<256x1xf32>,
    } else {
    }
    %c0 = arith.constant 0 : index
    %c0_1 = arith.constant 0 : index
    %3 = vector.load %arg2[%c0, %c0_1] : memref<256x128xbf16, #tpu.memory_space<vmem>>, vector<256x128xbf16>
    %c0_2 = arith.constant 0 : index
    %c0_3 = arith.constant 0 : index
    %4 = vector.load %arg3[%c0_2, %c0_3] : memref<128x256xbf16, #tpu.memory_space<vmem>>, vector<128x256xbf16>
    %cst = arith.constant dense<0.000000e+00> : vector<256x256xf32>
    %5 = tpu.matmul %3, %4, %cst {dimension_numbers = #tpu.dot_dimension_numbers<[1], [0], [0], [1], [0, 0, 1, 1], [], []>} : vector<256x128xbf16>, vector<128x256xbf16>, vector<256x256xf32> -> vector<256x256xf32>
    %c0_4 = arith.constant 0 : index
    %c0_5 = arith.constant 0 : index
    %6 = vector.load %arg5[%c0_4, %c0_5] : memref<256x256xf32, #tpu.memory_space<vmem>>, vector<256x256xf32>
    tpu.vector_store %arg5[%c0_4, %c0_5], %5 {strides = array<i32>} : memref<256x256xf32, #tpu.memory_space<vmem>>, vector<256x256xf32>,
    %c0_6 = arith.constant 0 : index
    %c0_7 = arith.constant 0 : index
    %7 = vector.load %arg4[%c0_6, %c0_7] : memref<256x1xi32, #tpu.memory_space<vmem>>, vector<256x1xi32>
    %c256_i32 = arith.constant 256 : i32
    %8 = arith.muli %arg1, %c256_i32 : i32
    %9 = tpu.iota {dimensions = array<i32: 1>} : vector<256x256xi32>
    %10 = vector.broadcast %8 : i32 to vector<256x256xi32>
    %11 = arith.addi %10, %9 : vector<256x256xi32>
    %c0_8 = arith.constant 0 : index
    %c0_9 = arith.constant 0 : index
    %12 = vector.load %arg7[%c0_8, %c0_9] : memref<256x1xf32, #tpu.memory_space<vmem>>, vector<256x1xf32>
    %cst_10 = arith.constant dense<0xFF800000> : vector<256xf32>
    %13 = vector.multi_reduction <maximumf>, %5, %cst_10 [1] : vector<256x256xf32> to vector<256xf32>
    %14 = vector.shape_cast %13 : vector<256xf32> to vector<256x1xf32>
    %15 = arith.maximumf %12, %14 : vector<256x1xf32>
    %16 = arith.subf %12, %15 : vector<256x1xf32>
    %17 = math.exp %16 : vector<256x1xf32>
    %c0_11 = arith.constant 0 : index
    %c0_12 = arith.constant 0 : index
    %18 = vector.load %arg8[%c0_11, %c0_12] : memref<256x1xf32, #tpu.memory_space<vmem>>, vector<256x1xf32>
    %19 = arith.mulf %18, %17 : vector<256x1xf32>
    %20 = vector.broadcast %15 : vector<256x1xf32> to vector<256x256xf32>
    %21 = arith.subf %5, %20 : vector<256x256xf32>
    %22 = math.exp %21 : vector<256x256xf32>
    %cst_13 = arith.constant dense<0.000000e+00> : vector<256xf32>
    %23 = vector.multi_reduction <add>, %22, %cst_13 [1] : vector<256x256xf32> to vector<256xf32>
    %24 = vector.shape_cast %23 : vector<256xf32> to vector<256x1xf32>
    %25 = arith.addf %19, %24 : vector<256x1xf32>
    %c0_14 = arith.constant 0 : index
    %c0_15 = arith.constant 0 : index
    %26 = vector.load %arg8[%c0_14, %c0_15] : memref<256x1xf32, #tpu.memory_space<vmem>>, vector<256x1xf32>
    tpu.vector_store %arg8[%c0_14, %c0_15], %25 {strides = array<i32>} : memref<256x1xf32, #tpu.memory_space<vmem>>, vector<256x1xf32>,
    %c0_16 = arith.constant 0 : index
    %c0_17 = arith.constant 0 : index
    %27 = vector.load %arg7[%c0_16, %c0_17] : memref<256x1xf32, #tpu.memory_space<vmem>>, vector<256x1xf32>
    tpu.vector_store %arg7[%c0_16, %c0_17], %15 {strides = array<i32>} : memref<256x1xf32, #tpu.memory_space<vmem>>, vector<256x1xf32>,
    %c0_18 = arith.constant 0 : index
    %c0_19 = arith.constant 0 : index
    %28 = vector.load %arg9[%c0_18, %c0_19] : memref<256x1xf32, #tpu.memory_space<vmem>>, vector<256x1xf32>
    %29 = vector.broadcast %7 : vector<256x1xi32> to vector<256x256xi32>
    %30 = arith.cmpi eq, %11, %29 : vector<256x256xi32>
    %cst_20 = arith.constant 0.000000e+00 : f32
    %31 = vector.broadcast %cst_20 : f32 to vector<256x256xf32>
    %32 = arith.select %30, %5, %31 : vector<256x256xi1>, vector<256x256xf32>
    %cst_21 = arith.constant dense<0.000000e+00> : vector<256xf32>
    %33 = vector.multi_reduction <add>, %32, %cst_21 [1] : vector<256x256xf32> to vector<256xf32>
    %34 = vector.shape_cast %33 : vector<256xf32> to vector<256x1xf32>
    %35 = arith.addf %28, %34 : vector<256x1xf32>
    %c0_22 = arith.constant 0 : index
    %c0_23 = arith.constant 0 : index
    %36 = vector.load %arg9[%c0_22, %c0_23] : memref<256x1xf32, #tpu.memory_space<vmem>>, vector<256x1xf32>
    tpu.vector_store %arg9[%c0_22, %c0_23], %35 {strides = array<i32>} : memref<256x1xf32, #tpu.memory_space<vmem>>, vector<256x1xf32>,
    %c1_i32 = arith.constant 1 : i32
    %37 = arith.cmpi eq, %arg1, %c1_i32 : i32
    %38 = arith.extui %37 : i1 to i32
    %c0_i32_24 = arith.constant 0 : i32
    %39 = arith.cmpi ne, %38, %c0_i32_24 : i32
    scf.if %39 {
      %c0_25 = arith.constant 0 : index
      %c0_26 = arith.constant 0 : index
      %40 = vector.load %arg7[%c0_25, %c0_26] : memref<256x1xf32, #tpu.memory_space<vmem>>, vector<256x1xf32>
      %c0_27 = arith.constant 0 : index
      %c0_28 = arith.constant 0 : index
      %41 = vector.load %arg8[%c0_27, %c0_28] : memref<256x1xf32, #tpu.memory_space<vmem>>, vector<256x1xf32>
      %42 = math.log %41 : vector<256x1xf32>
      %43 = arith.addf %40, %42 : vector<256x1xf32>
      %c0_29 = arith.constant 0 : index
      %c0_30 = arith.constant 0 : index
      %44 = vector.load %arg9[%c0_29, %c0_30] : memref<256x1xf32, #tpu.memory_space<vmem>>, vector<256x1xf32>
      %45 = arith.subf %43, %44 : vector<256x1xf32>
      %c-100_i32 = arith.constant -100 : i32
      %46 = vector.broadcast %c-100_i32 : i32 to vector<256x1xi32>
      %47 = arith.cmpi ne, %7, %46 : vector<256x1xi32>
      %cst_31 = arith.constant 0.000000e+00 : f32
      %48 = vector.broadcast %cst_31 : f32 to vector<256x1xf32>
      %49 = arith.select %47, %45, %48 : vector<256x1xi1>, vector<256x1xf32>
      %c0_32 = arith.constant 0 : index
      %c0_33 = arith.constant 0 : index
      %50 = vector.load %arg6[%c0_32, %c0_33] : memref<256x1xf32, #tpu.memory_space<vmem>>, vector<256x1xf32>
      tpu.vector_store %arg6[%c0_32, %c0_33], %49 {strides = array<i32>} : memref<256x1xf32, #tpu.memory_space<vmem>>, vector<256x1xf32>,
    } else {
    }
    return
  }
  func.func @transform_0(%arg0: i32, %arg1: i32) -> (i32, i32) {
    %c0_i32 = arith.constant 0 : i32
    %c0_i32_0 = arith.constant 0 : i32
    return %arg0, %c0_i32 : i32, i32
  }
  func.func @transform_1(%arg0: i32, %arg1: i32) -> (i32, i32) {
    %c0_i32 = arith.constant 0 : i32
    %c0_i32_0 = arith.constant 0 : i32
    return %c0_i32, %arg1 : i32, i32
  }
  func.func @transform_2(%arg0: i32, %arg1: i32) -> (i32, i32) {
    %c0_i32 = arith.constant 0 : i32
    %c0_i32_0 = arith.constant 0 : i32
    return %arg0, %c0_i32 : i32, i32
  }
  func.func @transform_3(%arg0: i32, %arg1: i32) -> (i32, i32) {
    %c0_i32 = arith.constant 0 : i32
    return %arg0, %arg1 : i32, i32
  }
  func.func @transform_4(%arg0: i32, %arg1: i32) -> (i32, i32) {
    %c0_i32 = arith.constant 0 : i32
    %c0_i32_0 = arith.constant 0 : i32
    return %arg0, %c0_i32 : i32, i32
  }
}

</mosaic_0001>

<llo_original>
// kernel: _dtt_forward_jit.7
$region0: #{_dtt_forward_jit.7}
  #allocation0 [shape = 'u32[]', space=smem, size = 0x4, offset = 0x4, fixed_abs, tag = 'smem constant byte address 0x4 - core index']
  #allocation1 [shape = 'u32[72,128]{1,0:T(1,128)}', space=vmem, size = 0x9000, scoped, tag = 'internal scratch']
  %s0 = inlined_call_operand.vmem [shape: bf16[512,128], index: 0, kind: input, shape index: {}]
  %s1 = inlined_call_operand.vmem [shape: bf16[128,256], index: 1, kind: input, shape index: {}]
  %s2 = inlined_call_operand.vmem [shape: bf16[512,128], index: 2, kind: output, shape index: {0}]
  %s3 = inlined_call_operand.vmem [shape: bf16[512,128], index: 3, kind: output, shape index: {1}]
  %4 = xla_tuple %s2, %s3
  %s5 = sld [smem:[#allocation0]]
  $region49: #{_dtt_forward_jit.7} parent=0
    _
  %s7 = ssub.s32 1, %s5
  %s8 = scalar_select 0, %s7, %s5
  loop: start=0, step=1, limit=4
  $region2: #{_dtt_forward_jit.7} parent=0 // loop_pre_header
    _
  $region3: #{_dtt_forward_jit.7} parent=0 // loop_header
    %s10 = sphi 0, %s14
    %p11 = scmp.ge.s32.totalorder %s10, 4
    %s20 = sphi 0, %s22
    %s23 = sphi 0, %s20
    %s24 = sphi 0, %s23
    %s40 = sphi 0, %s24
    %s44 = sphi 0, %s44
    %s46 = sphi 0, %s44
    %s47 = sphi 0, %s46
    %s61 = sphi 0, %s47
    %s67 = sphi 0, %s69
    %s70 = sphi 0, %s67
    %s71 = sphi 0, %s70
    %s87 = sphi 0, %s71
    %s93 = sphi 0, %s95
    %s96 = sphi 0, %s93
    %s97 = sphi 0, %s96
    %s113 = sphi 0, %s97
  $region4: #{_dtt_forward_jit.7} parent=0 // loop_header_branch
    %13 = sbr.rel (%p11) target = $region8
  $region5: #{_dtt_forward_jit.7} parent=0 // loop_body
    %s15 = ssub.s32 %s10, 1
    %s16 = ssub.s32 %s10, 2
    %s17 = sadd.s32 %s10, 1
    %s18 = ssub.s32 %s10, %s17
    %p19 = scmp.eq.s32.totalorder %s18, 0
    %s21 = sadd.s32 %s20, 1
    %s22 = scalar_select %p19, %s20, %s21
    %p25 = pneg %p19
    %p26 = scmp.eq.s32.totalorder %s10, 1
    %p27 = por %p25, %p26
    %p28 = scmp.ne.s32.totalorder %s20, %s23
    %p29 = scmp.eq.s32.totalorder %s10, 0
    %p30 = por %p28, %p29
    %p31 = scmp.ne.s32.totalorder %s20, %s23
    %p32 = scmp.eq.s32.totalorder %s15, 1
    %p33 = por %p31, %p32
    %p34 = scmp.ne.s32.totalorder %s23, %s24
    %p35 = scmp.eq.s32.totalorder %s15, 0
    %p36 = por %p34, %p35
    %p37 = scmp.ne.s32.totalorder %s23, %s24
    %p38 = scmp.eq.s32.totalorder %s16, 1
    %p39 = por %p37, %p38
    %p41 = scmp.ne.s32.totalorder %s24, %s40
    %p42 = scmp.eq.s32.totalorder %s16, 0
    %p43 = por %p41, %p42
    %s45 = sadd.s32 %s44, 1
    %p48 = scmp.eq.s32.totalorder %s10, 1
    %p49 = scmp.ne.s32.totalorder %s44, %s46
    %p50 = scmp.eq.s32.totalorder %s10, 0
    %p51 = por %p49, %p50
    %p52 = scmp.ne.s32.totalorder %s44, %s46
    %p53 = scmp.eq.s32.totalorder %s15, 1
    %p54 = por %p52, %p53
    %p55 = scmp.ne.s32.totalorder %s46, %s47
    %p56 = scmp.eq.s32.totalorder %s15, 0
    %p57 = por %p55, %p56
    %p58 = scmp.ne.s32.totalorder %s46, %s47
    %p59 = scmp.eq.s32.totalorder %s16, 1
    %p60 = por %p58, %p59
    %p62 = scmp.ne.s32.totalorder %s47, %s61
    %p63 = scmp.eq.s32.totalorder %s16, 0
    %p64 = por %p62, %p63
    %s65 = ssub.s32 %s10, %s17
    %p66 = scmp.eq.s32.totalorder %s65, 0
    %s68 = sadd.s32 %s67, 1
    %s69 = scalar_select %p66, %s67, %s68
    %p72 = pneg %p66
    %p73 = scmp.eq.s32.totalorder %s10, 1
    %p74 = por %p72, %p73
    %p75 = scmp.ne.s32.totalorder %s67, %s70
    %p76 = scmp.eq.s32.totalorder %s10, 0
    %p77 = por %p75, %p76
    %p78 = scmp.ne.s32.totalorder %s67, %s70
    %p79 = scmp.eq.s32.totalorder %s15, 1
    %p80 = por %p78, %p79
    %p81 = scmp.ne.s32.totalorder %s70, %s71
    %p82 = scmp.eq.s32.totalorder %s15, 0
    %p83 = por %p81, %p82
    %p84 = scmp.ne.s32.totalorder %s70, %s71
    %p85 = scmp.eq.s32.totalorder %s16, 1
    %p86 = por %p84, %p85
    %p88 = scmp.ne.s32.totalorder %s71, %s87
    %p89 = scmp.eq.s32.totalorder %s16, 0
    %p90 = por %p88, %p89
    %s91 = ssub.s32 %s10, %s17
    %p92 = scmp.eq.s32.totalorder %s91, 0
    %s94 = sadd.s32 %s93, 1
    %s95 = scalar_select %p92, %s93, %s94
    %p98 = pneg %p92
    %p99 = scmp.eq.s32.totalorder %s10, 1
    %p100 = por %p98, %p99
    %p101 = scmp.ne.s32.totalorder %s93, %s96
    %p102 = scmp.eq.s32.totalorder %s10, 0
    %p103 = por %p101, %p102
    %p104 = scmp.ne.s32.totalorder %s93, %s96
    %p105 = scmp.eq.s32.totalorder %s15, 1
    %p106 = por %p104, %p105
    %p107 = scmp.ne.s32.totalorder %s96, %s97
    %p108 = scmp.eq.s32.totalorder %s15, 0
    %p109 = por %p107, %p108
    %p110 = scmp.ne.s32.totalorder %s96, %s97
    %p111 = scmp.eq.s32.totalorder %s16, 1
    %p112 = por %p110, %p111
    %p114 = scmp.ne.s32.totalorder %s97, %s113
    %p115 = scmp.eq.s32.totalorder %s16, 0
    %p116 = por %p114, %p115
    %p117 = scmp.le.s32.totalorder 1, %s10
    %p118 = scmp.lt.s32.totalorder %s10, 3
    %p119 = pnand %p117, %p118
    %p120 = pneg %p119
    // Predicated region
    $region9: #{_dtt_forward_jit.7} parent=5 // pred_check
      _
    $region10: #{_dtt_forward_jit.7} parent=5 // pred_check_branch
      %122 = sbr.rel (%p119) target = $region12
    $region11: #{_dtt_forward_jit.7} parent=5 // pred_region
      %s123 = ssub.s32 %s10, 1
      // Predicated region
      $region13: #{_dtt_forward_jit.7} parent=11 // pred_check
        %p124 = pneg %p57
      $region14: #{_dtt_forward_jit.7} parent=11 // pred_check_branch
        %126 = sbr.rel (%p124) target = $region16
      $region15: #{_dtt_forward_jit.7} parent=11 // pred_region
        _
      $region16: #{_dtt_forward_jit.7} parent=11 // pred_fallthru
        _
    $region12: #{_dtt_forward_jit.7} parent=5 // pred_fallthru
      _
    %p127 = scmp.lt.s32.totalorder %s10, 2
    // Predicated region
    $region17: #{_dtt_forward_jit.7} parent=5 // pred_check
      %p128 = pneg %p127
    $region18: #{_dtt_forward_jit.7} parent=5 // pred_check_branch
      %130 = sbr.rel (%p128) target = $region20
    $region19: #{_dtt_forward_jit.7} parent=5 // pred_region
      // Predicated region
      $region21: #{_dtt_forward_jit.7} parent=19 // pred_check
        %p131 = pneg %p30
      $region22: #{_dtt_forward_jit.7} parent=19 // pred_check_branch
        %133 = sbr.rel (%p131) target = $region24
      $region23: #{_dtt_forward_jit.7} parent=19 // pred_region
        %s134 = smul.u32 32, %s10
        %p135 = scmp.lt.s32.totalorder %s134, 63
        %s136 = scalar_select %p135, %s134, 63
        %s137 = smul.addr %s136, 4
        %s138 = scalar_lea.vmem %s0, %s137
        %s139 = smul.u32 32, %s10
      $region24: #{_dtt_forward_jit.7} parent=19 // pred_fallthru
        _
    $region20: #{_dtt_forward_jit.7} parent=5 // pred_fallthru
      _
    %p140 = scmp.le.s32.totalorder 1, %s10
    %p141 = scmp.lt.s32.totalorder %s10, 3
    %p142 = pnand %p140, %p141
    %p143 = pneg %p142
    // Predicated region
    $region25: #{_dtt_forward_jit.7} parent=5 // pred_check
      _
    $region26: #{_dtt_forward_jit.7} parent=5 // pred_check_branch
      %145 = sbr.rel (%p142) target = $region28
    $region27: #{_dtt_forward_jit.7} parent=5 // pred_region
      %s146 = ssub.s32 %s10, 1
      %s147 = smul.u32 32, %s15
      %p148 = scmp.lt.s32.totalorder %s147, 63
      %s149 = scalar_select %p148, %s147, 63
      %s150 = smul.addr %s149, 4
      %s151 = scalar_lea.vmem %s0, %s150
      %p152 = pneg %p36
      %p153 = pneg %p33
      %p154 = pneg %p57
      %p155 = pneg %p54
      %p156 = pneg %p83
      %p157 = pneg %p80
      %s158 = smul.u32 32, %s15
      %p159 = scmp.lt.s32.totalorder %s158, 63
      %s160 = scalar_select %p159, %s158, 63
      %s161 = smul.addr %s160, 4
      %s162 = scalar_lea.vmem %s2, %s161
      %p163 = pneg %p109
      %p164 = pneg %p106
      %s165 = smul.u32 32, %s15
      %p166 = scmp.lt.s32.totalorder %s165, 63
      %s167 = scalar_select %p166, %s165, 63
      %s168 = smul.addr %s167, 4
      %s169 = scalar_lea.vmem %s3, %s168
      %s170 = smul.u32 32, %s15
      %p171 = scmp.lt.s32.totalorder %s170, 63
      %s172 = scalar_select %p171, %s170, 63
      %s173 = smul.addr %s172, 4
      %s174 = scalar_lea.vmem %s0, %s173
      %s175 = smul.u32 32, %s15
      %s176 = smul.u32 32, %s15
      %p177 = scmp.lt.s32.totalorder %s176, 63
      %s178 = scalar_select %p177, %s176, 63
      %s179 = smul.addr %s178, 4
      %s180 = scalar_lea.vmem %s2, %s179
      %s181 = smul.u32 32, %s15
      %s182 = smul.u32 32, %s15
      %p183 = scmp.lt.s32.totalorder %s182, 63
      %s184 = scalar_select %p183, %s182, 63
      %s185 = smul.addr %s184, 4
      %s186 = scalar_lea.vmem %s3, %s185
      %s187 = smul.u32 32, %s15
      %v188 = vld [vmem:[%s174] sm:$0xf]
      %v189 = vld [vmem:[%s174 + $0x4] sm:$0xf]
      %v190 = vld [vmem:[%s174 + $0x8] sm:$0xf]
      %v191 = vld [vmem:[%s174 + $0xc] sm:$0xf]
      %v192 = vld [vmem:[%s174 + $0x10] sm:$0xf]
      %v193 = vld [vmem:[%s174 + $0x14] sm:$0xf]
      %v194 = vld [vmem:[%s174 + $0x18] sm:$0xf]
      %v195 = vld [vmem:[%s174 + $0x1c] sm:$0xf]
      %v196 = vld [vmem:[%s174 + $0x20] sm:$0xf]
      %v197 = vld [vmem:[%s174 + $0x24] sm:$0xf]
      %v198 = vld [vmem:[%s174 + $0x28] sm:$0xf]
      %v199 = vld [vmem:[%s174 + $0x2c] sm:$0xf]
      %v200 = vld [vmem:[%s174 + $0x30] sm:$0xf]
      %v201 = vld [vmem:[%s174 + $0x34] sm:$0xf]
      %v202 = vld [vmem:[%s174 + $0x38] sm:$0xf]
      %v203 = vld [vmem:[%s174 + $0x3c] sm:$0xf]
      %v204 = vld [vmem:[%s174 + $0x40] sm:$0xf]
      %v205 = vld [vmem:[%s174 + $0x44] sm:$0xf]
      %v206 = vld [vmem:[%s174 + $0x48] sm:$0xf]
      %v207 = vld [vmem:[%s174 + $0x4c] sm:$0xf]
      %v208 = vld [vmem:[%s174 + $0x50] sm:$0xf]
      %v209 = vld [vmem:[%s174 + $0x54] sm:$0xf]
      %v210 = vld [vmem:[%s174 + $0x58] sm:$0xf]
      %v211 = vld [vmem:[%s174 + $0x5c] sm:$0xf]
      %v212 = vld [vmem:[%s174 + $0x60] sm:$0xf]
      %v213 = vld [vmem:[%s174 + $0x64] sm:$0xf]
      %v214 = vld [vmem:[%s174 + $0x68] sm:$0xf]
      %v215 = vld [vmem:[%s174 + $0x6c] sm:$0xf]
      %v216 = vld [vmem:[%s174 + $0x70] sm:$0xf]
      %v217 = vld [vmem:[%s174 + $0x74] sm:$0xf]
      %v218 = vld [vmem:[%s174 + $0x78] sm:$0xf]
      %v219 = vld [vmem:[%s174 + $0x7c] sm:$0xf]
      %v220 = vld [vmem:[%s1] sm:$0xff]
      %v221 = vld [vmem:[%s1 + $0x8] sm:$0xff]
      %v222 = vld [vmem:[%s1 + $0x10] sm:$0xff]
      %v223 = vld [vmem:[%s1 + $0x18] sm:$0xff]
      %v224 = vld [vmem:[%s1 + $0x20] sm:$0xff]
      %v225 = vld [vmem:[%s1 + $0x28] sm:$0xff]
      %v226 = vld [vmem:[%s1 + $0x30] sm:$0xff]
      %v227 = vld [vmem:[%s1 + $0x38] sm:$0xff]
      %v228 = vld [vmem:[%s1 + $0x40] sm:$0xff]
      %v229 = vld [vmem:[%s1 + $0x48] sm:$0xff]
      %v230 = vld [vmem:[%s1 + $0x50] sm:$0xff]
      %v231 = vld [vmem:[%s1 + $0x58] sm:$0xff]
      %v232 = vld [vmem:[%s1 + $0x60] sm:$0xff]
      %v233 = vld [vmem:[%s1 + $0x68] sm:$0xff]
      %v234 = vld [vmem:[%s1 + $0x70] sm:$0xff]
      %v235 = vld [vmem:[%s1 + $0x78] sm:$0xff]
      %v268 = vunpack.c.l.b16 %v188
      %v269 = vunpack.c.l.b16 %v189
      %v270 = vunpack.c.l.b16 %v190
      %v271 = vunpack.c.l.b16 %v191
      %v272 = vunpack.c.l.b16 %v192
      %v273 = vunpack.c.l.b16 %v193
      %v274 = vunpack.c.l.b16 %v194
      %v275 = vunpack.c.l.b16 %v195
      %v276 = vunpack.c.l.b16 %v196
      %v277 = vunpack.c.l.b16 %v197
      %v278 = vunpack.c.l.b16 %v198
      %v279 = vunpack.c.l.b16 %v199
      %v280 = vunpack.c.l.b16 %v200
      %v281 = vunpack.c.l.b16 %v201
      %v282 = vunpack.c.l.b16 %v202
      %v283 = vunpack.c.l.b16 %v203
      %v284 = vunpack.c.l.b16 %v204
      %v285 = vunpack.c.l.b16 %v205
      %v286 = vunpack.c.l.b16 %v206
      %v287 = vunpack.c.l.b16 %v207
      %v288 = vunpack.c.l.b16 %v208
      %v289 = vunpack.c.l.b16 %v209
      %v290 = vunpack.c.l.b16 %v210
      %v291 = vunpack.c.l.b16 %v211
      %v292 = vunpack.c.l.b16 %v212
      %v293 = vunpack.c.l.b16 %v213
      %v294 = vunpack.c.l.b16 %v214
      %v295 = vunpack.c.l.b16 %v215
      %v296 = vunpack.c.l.b16 %v216
      %v297 = vunpack.c.l.b16 %v217
      %v298 = vunpack.c.l.b16 %v218
      %v299 = vunpack.c.l.b16 %v219
      %v300 = vpack.c.b16 %v269, %v268
      %v301 = vpack.c.b16 %v271, %v270
      %v302 = vpack.c.b16 %v273, %v272
      %v303 = vpack.c.b16 %v275, %v274
      %v304 = vpack.c.b16 %v277, %v276
      %v305 = vpack.c.b16 %v279, %v278
      %v306 = vpack.c.b16 %v281, %v280
      %v307 = vpack.c.b16 %v283, %v282
      %v308 = vpack.c.b16 %v285, %v284
      %v309 = vpack.c.b16 %v287, %v286
      %v310 = vpack.c.b16 %v289, %v288
      %v311 = vpack.c.b16 %v291, %v290
      %v312 = vpack.c.b16 %v293, %v292
      %v313 = vpack.c.b16 %v295, %v294
      %v314 = vpack.c.b16 %v297, %v296
      %v315 = vpack.c.b16 %v299, %v298
      %v348 = vunpack.c.l.b16 %v220
      %v349 = vunpack.c.h.b16 %v220
      %v350 = vunpack.c.l.b16 %v221
      %v351 = vunpack.c.h.b16 %v221
      %v352 = vunpack.c.l.b16 %v222
      %v353 = vunpack.c.h.b16 %v222
      %v354 = vunpack.c.l.b16 %v223
      %v355 = vunpack.c.h.b16 %v223
      %v356 = vunpack.c.l.b16 %v224
      %v357 = vunpack.c.h.b16 %v224
      %v358 = vunpack.c.l.b16 %v225
      %v359 = vunpack.c.h.b16 %v225
      %v360 = vunpack.c.l.b16 %v226
      %v361 = vunpack.c.h.b16 %v226
      %v362 = vunpack.c.l.b16 %v227
      %v363 = vunpack.c.h.b16 %v227
      %v364 = vunpack.c.l.b16 %v228
      %v365 = vunpack.c.h.b16 %v228
      %v366 = vunpack.c.l.b16 %v229
      %v367 = vunpack.c.h.b16 %v229
      %v368 = vunpack.c.l.b16 %v230
      %v369 = vunpack.c.h.b16 %v230
      %v370 = vunpack.c.l.b16 %v231
      %v371 = vunpack.c.h.b16 %v231
      %v372 = vunpack.c.l.b16 %v232
      %v373 = vunpack.c.h.b16 %v232
      %v374 = vunpack.c.l.b16 %v233
      %v375 = vunpack.c.h.b16 %v233
      %v376 = vunpack.c.l.b16 %v234
      %v377 = vunpack.c.h.b16 %v234
      %v378 = vunpack.c.l.b16 %v235
      %v379 = vunpack.c.h.b16 %v235
      %v380 = vpack.c.b16 %v350, %v348
      %v381 = vpack.c.b16 %v351, %v349
      %v382 = vpack.c.b16 %v354, %v352
      %v383 = vpack.c.b16 %v355, %v353
      %v384 = vpack.c.b16 %v358, %v356
      %v385 = vpack.c.b16 %v359, %v357
      %v386 = vpack.c.b16 %v362, %v360
      %v387 = vpack.c.b16 %v363, %v361
      %v388 = vpack.c.b16 %v366, %v364
      %v389 = vpack.c.b16 %v367, %v365
      %v390 = vpack.c.b16 %v370, %v368
      %v391 = vpack.c.b16 %v371, %v369
      %v392 = vpack.c.b16 %v374, %v372
      %v393 = vpack.c.b16 %v375, %v373
      %v394 = vpack.c.b16 %v378, %v376
      %v395 = vpack.c.b16 %v379, %v377
      %412 = vmatpush.bf16.msra.mxu0 %v394
      %413 = vmatpush.bf16.msra.mxu0 %v392
      %414 = vmatpush.bf16.msra.mxu0 %v390
      %415 = vmatpush.bf16.msra.mxu0 %v388
      %416 = vmatpush.bf16.msra.mxu0 %v386
      %417 = vmatpush.bf16.msra.mxu0 %v384
      %418 = vmatpush.bf16.msra.mxu0 %v382
      %419 = vmatpush.bf16.msra.mxu0 %v380
      %420 = vmatmul.bf16.gmra.mxu0 %v300
      %v421 = vpop.f32.mrf.mxu0
      %v422 = vadd.f32 0.0, %v421
      %v423 = vpop.f32.mrf.mxu0
      %v424 = vadd.f32 0.0, %v423
      %425 = vmatmul.bf16.gmra.mxu0 %v301
      %v426 = vpop.f32.mrf.mxu0
      %v427 = vadd.f32 0.0, %v426
      %v428 = vpop.f32.mrf.mxu0
      %v429 = vadd.f32 0.0, %v428
      %430 = vmatmul.bf16.gmra.mxu0 %v302
      %v431 = vpop.f32.mrf.mxu0
      %v432 = vadd.f32 0.0, %v431
      %v433 = vpop.f32.mrf.mxu0
      %v434 = vadd.f32 0.0, %v433
      %435 = vmatmul.bf16.gmra.mxu0 %v303
      %v436 = vpop.f32.mrf.mxu0
      %v437 = vadd.f32 0.0, %v436
      %v438 = vpop.f32.mrf.mxu0
      %v439 = vadd.f32 0.0, %v438
      %440 = vmatmul.bf16.gmra.mxu0 %v304
      %v441 = vpop.f32.mrf.mxu0
      %v442 = vadd.f32 0.0, %v441
      %v443 = vpop.f32.mrf.mxu0
      %v444 = vadd.f32 0.0, %v443
      %445 = vmatmul.bf16.gmra.mxu0 %v305
      %v446 = vpop.f32.mrf.mxu0
      %v447 = vadd.f32 0.0, %v446
      %v448 = vpop.f32.mrf.mxu0
      %v449 = vadd.f32 0.0, %v448
      %450 = vmatmul.bf16.gmra.mxu0 %v306
      %v451 = vpop.f32.mrf.mxu0
      %v452 = vadd.f32 0.0, %v451
      %v453 = vpop.f32.mrf.mxu0
      %v454 = vadd.f32 0.0, %v453
      %455 = vmatmul.bf16.gmra.mxu0 %v307
      %v456 = vpop.f32.mrf.mxu0
      %v457 = vadd.f32 0.0, %v456
      %v458 = vpop.f32.mrf.mxu0
      %v459 = vadd.f32 0.0, %v458
      %460 = vmatmul.bf16.gmra.mxu0 %v308
      %v461 = vpop.f32.mrf.mxu0
      %v462 = vadd.f32 0.0, %v461
      %v463 = vpop.f32.mrf.mxu0
      %v464 = vadd.f32 0.0, %v463
      %465 = vmatmul.bf16.gmra.mxu0 %v309
      %v466 = vpop.f32.mrf.mxu0
      %v467 = vadd.f32 0.0, %v466
      %v468 = vpop.f32.mrf.mxu0
      %v469 = vadd.f32 0.0, %v468
      %470 = vmatmul.bf16.gmra.mxu0 %v310
      %v471 = vpop.f32.mrf.mxu0
      %v472 = vadd.f32 0.0, %v471
      %v473 = vpop.f32.mrf.mxu0
      %v474 = vadd.f32 0.0, %v473
      %475 = vmatmul.bf16.gmra.mxu0 %v311
      %v476 = vpop.f32.mrf.mxu0
      %v477 = vadd.f32 0.0, %v476
      %v478 = vpop.f32.mrf.mxu0
      %v479 = vadd.f32 0.0, %v478
      %480 = vmatmul.bf16.gmra.mxu0 %v312
      %v481 = vpop.f32.mrf.mxu0
      %v482 = vadd.f32 0.0, %v481
      %v483 = vpop.f32.mrf.mxu0
      %v484 = vadd.f32 0.0, %v483
      %485 = vmatmul.bf16.gmra.mxu0 %v313
      %v486 = vpop.f32.mrf.mxu0
      %v487 = vadd.f32 0.0, %v486
      %v488 = vpop.f32.mrf.mxu0
      %v489 = vadd.f32 0.0, %v488
      %490 = vmatmul.bf16.gmra.mxu0 %v314
      %v491 = vpop.f32.mrf.mxu0
      %v492 = vadd.f32 0.0, %v491
      %v493 = vpop.f32.mrf.mxu0
      %v494 = vadd.f32 0.0, %v493
      %495 = vmatmul.bf16.gmra.mxu0 %v315
      %v496 = vpop.f32.mrf.mxu0
      %v497 = vadd.f32 0.0, %v496
      %v498 = vpop.f32.mrf.mxu0
      %v499 = vadd.f32 0.0, %v498
      %500 = vdwg.mxu0
      %501 = vmatpush.bf16.msra.mxu0 %v395
      %502 = vmatpush.bf16.msra.mxu0 %v393
      %503 = vmatpush.bf16.msra.mxu0 %v391
      %504 = vmatpush.bf16.msra.mxu0 %v389
      %505 = vmatpush.bf16.msra.mxu0 %v387
      %506 = vmatpush.bf16.msra.mxu0 %v385
      %507 = vmatpush.bf16.msra.mxu0 %v383
      %508 = vmatpush.bf16.msra.mxu0 %v381
      %509 = vmatmul.bf16.gmra.mxu0 %v300
      %v510 = vpop.f32.mrf.mxu0
      %v511 = vadd.f32 0.0, %v510
      %v512 = vpop.f32.mrf.mxu0
      %v513 = vadd.f32 0.0, %v512
      %514 = vmatmul.bf16.gmra.mxu0 %v301
      %v515 = vpop.f32.mrf.mxu0
      %v516 = vadd.f32 0.0, %v515
      %v517 = vpop.f32.mrf.mxu0
      %v518 = vadd.f32 0.0, %v517
      %519 = vmatmul.bf16.gmra.mxu0 %v302
      %v520 = vpop.f32.mrf.mxu0
      %v521 = vadd.f32 0.0, %v520
      %v522 = vpop.f32.mrf.mxu0
      %v523 = vadd.f32 0.0, %v522
      %524 = vmatmul.bf16.gmra.mxu0 %v303
      %v525 = vpop.f32.mrf.mxu0
      %v526 = vadd.f32 0.0, %v525
      %v527 = vpop.f32.mrf.mxu0
      %v528 = vadd.f32 0.0, %v527
      %529 = vmatmul.bf16.gmra.mxu0 %v304
      %v530 = vpop.f32.mrf.mxu0
      %v531 = vadd.f32 0.0, %v530
      %v532 = vpop.f32.mrf.mxu0
      %v533 = vadd.f32 0.0, %v532
      %534 = vmatmul.bf16.gmra.mxu0 %v305
      %v535 = vpop.f32.mrf.mxu0
      %v536 = vadd.f32 0.0, %v535
      %v537 = vpop.f32.mrf.mxu0
      %v538 = vadd.f32 0.0, %v537
      %539 = vmatmul.bf16.gmra.mxu0 %v306
      %v540 = vpop.f32.mrf.mxu0
      %v541 = vadd.f32 0.0, %v540
      %v542 = vpop.f32.mrf.mxu0
      %v543 = vadd.f32 0.0, %v542
      %544 = vmatmul.bf16.gmra.mxu0 %v307
      %v545 = vpop.f32.mrf.mxu0
      %v546 = vadd.f32 0.0, %v545
      %v547 = vpop.f32.mrf.mxu0
      %v548 = vadd.f32 0.0, %v547
      %549 = vmatmul.bf16.gmra.mxu0 %v308
      %v550 = vpop.f32.mrf.mxu0
      %v551 = vadd.f32 0.0, %v550
      %v552 = vpop.f32.mrf.mxu0
      %v553 = vadd.f32 0.0, %v552
      %554 = vmatmul.bf16.gmra.mxu0 %v309
      %v555 = vpop.f32.mrf.mxu0
      %v556 = vadd.f32 0.0, %v555
      %v557 = vpop.f32.mrf.mxu0
      %v558 = vadd.f32 0.0, %v557
      %559 = vmatmul.bf16.gmra.mxu0 %v310
      %v560 = vpop.f32.mrf.mxu0
      %v561 = vadd.f32 0.0, %v560
      %v562 = vpop.f32.mrf.mxu0
      %v563 = vadd.f32 0.0, %v562
      %564 = vmatmul.bf16.gmra.mxu0 %v311
      %v565 = vpop.f32.mrf.mxu0
      %v566 = vadd.f32 0.0, %v565
      %v567 = vpop.f32.mrf.mxu0
      %v568 = vadd.f32 0.0, %v567
      %569 = vmatmul.bf16.gmra.mxu0 %v312
      %v570 = vpop.f32.mrf.mxu0
      %v571 = vadd.f32 0.0, %v570
      %v572 = vpop.f32.mrf.mxu0
      %v573 = vadd.f32 0.0, %v572
      %574 = vmatmul.bf16.gmra.mxu0 %v313
      %v575 = vpop.f32.mrf.mxu0
      %v576 = vadd.f32 0.0, %v575
      %v577 = vpop.f32.mrf.mxu0
      %v578 = vadd.f32 0.0, %v577
      %579 = vmatmul.bf16.gmra.mxu0 %v314
      %v580 = vpop.f32.mrf.mxu0
      %v581 = vadd.f32 0.0, %v580
      %v582 = vpop.f32.mrf.mxu0
      %v583 = vadd.f32 0.0, %v582
      %584 = vmatmul.bf16.gmra.mxu0 %v315
      %v585 = vpop.f32.mrf.mxu0
      %v586 = vadd.f32 0.0, %v585
      %v587 = vpop.f32.mrf.mxu0
      %v588 = vadd.f32 0.0, %v587
      %589 = vdwg.mxu0
      %v590 = vpack.c.bf16 %v422, %v422
      %v591 = vpack.c.bf16 %v424, %v424
      %v592 = vpack.c.bf16 %v427, %v427
      %v593 = vpack.c.bf16 %v429, %v429
      %v594 = vpack.c.bf16 %v432, %v432
      %v595 = vpack.c.bf16 %v434, %v434
      %v596 = vpack.c.bf16 %v437, %v437
      %v597 = vpack.c.bf16 %v439, %v439
      %v598 = vpack.c.bf16 %v442, %v442
      %v599 = vpack.c.bf16 %v444, %v444
      %v600 = vpack.c.bf16 %v447, %v447
      %v601 = vpack.c.bf16 %v449, %v449
      %v602 = vpack.c.bf16 %v452, %v452
      %v603 = vpack.c.bf16 %v454, %v454
      %v604 = vpack.c.bf16 %v457, %v457
      %v605 = vpack.c.bf16 %v459, %v459
      %v606 = vpack.c.bf16 %v462, %v462
      %v607 = vpack.c.bf16 %v464, %v464
      %v608 = vpack.c.bf16 %v467, %v467
      %v609 = vpack.c.bf16 %v469, %v469
      %v610 = vpack.c.bf16 %v472, %v472
      %v611 = vpack.c.bf16 %v474, %v474
      %v612 = vpack.c.bf16 %v477, %v477
      %v613 = vpack.c.bf16 %v479, %v479
      %v614 = vpack.c.bf16 %v482, %v482
      %v615 = vpack.c.bf16 %v484, %v484
      %v616 = vpack.c.bf16 %v487, %v487
      %v617 = vpack.c.bf16 %v489, %v489
      %v618 = vpack.c.bf16 %v492, %v492
      %v619 = vpack.c.bf16 %v494, %v494
      %v620 = vpack.c.bf16 %v497, %v497
      %v621 = vpack.c.bf16 %v499, %v499
      %622 = vst [vmem:[%s180] sm:$0xf] %v590
      %623 = vst [vmem:[%s180 + $0x4] sm:$0xf] %v591
      %624 = vst [vmem:[%s180 + $0x8] sm:$0xf] %v592
      %625 = vst [vmem:[%s180 + $0xc] sm:$0xf] %v593
      %626 = vst [vmem:[%s180 + $0x10] sm:$0xf] %v594
      %627 = vst [vmem:[%s180 + $0x14] sm:$0xf] %v595
      %628 = vst [vmem:[%s180 + $0x18] sm:$0xf] %v596
      %629 = vst [vmem:[%s180 + $0x1c] sm:$0xf] %v597
      %630 = vst [vmem:[%s180 + $0x20] sm:$0xf] %v598
      %631 = vst [vmem:[%s180 + $0x24] sm:$0xf] %v599
      %632 = vst [vmem:[%s180 + $0x28] sm:$0xf] %v600
      %633 = vst [vmem:[%s180 + $0x2c] sm:$0xf] %v601
      %634 = vst [vmem:[%s180 + $0x30] sm:$0xf] %v602
      %635 = vst [vmem:[%s180 + $0x34] sm:$0xf] %v603
      %636 = vst [vmem:[%s180 + $0x38] sm:$0xf] %v604
      %637 = vst [vmem:[%s180 + $0x3c] sm:$0xf] %v605
      %638 = vst [vmem:[%s180 + $0x40] sm:$0xf] %v606
      %639 = vst [vmem:[%s180 + $0x44] sm:$0xf] %v607
      %640 = vst [vmem:[%s180 + $0x48] sm:$0xf] %v608
      %641 = vst [vmem:[%s180 + $0x4c] sm:$0xf] %v609
      %642 = vst [vmem:[%s180 + $0x50] sm:$0xf] %v610
      %643 = vst [vmem:[%s180 + $0x54] sm:$0xf] %v611
      %644 = vst [vmem:[%s180 + $0x58] sm:$0xf] %v612
      %645 = vst [vmem:[%s180 + $0x5c] sm:$0xf] %v613
      %646 = vst [vmem:[%s180 + $0x60] sm:$0xf] %v614
      %647 = vst [vmem:[%s180 + $0x64] sm:$0xf] %v615
      %648 = vst [vmem:[%s180 + $0x68] sm:$0xf] %v616
      %649 = vst [vmem:[%s180 + $0x6c] sm:$0xf] %v617
      %650 = vst [vmem:[%s180 + $0x70] sm:$0xf] %v618
      %651 = vst [vmem:[%s180 + $0x74] sm:$0xf] %v619
      %652 = vst [vmem:[%s180 + $0x78] sm:$0xf] %v620
      %653 = vst [vmem:[%s180 + $0x7c] sm:$0xf] %v621
      %v654 = vpack.c.bf16 %v511, %v511
      %v655 = vpack.c.bf16 %v513, %v513
      %v656 = vpack.c.bf16 %v516, %v516
      %v657 = vpack.c.bf16 %v518, %v518
      %v658 = vpack.c.bf16 %v521, %v521
      %v659 = vpack.c.bf16 %v523, %v523
      %v660 = vpack.c.bf16 %v526, %v526
      %v661 = vpack.c.bf16 %v528, %v528
      %v662 = vpack.c.bf16 %v531, %v531
      %v663 = vpack.c.bf16 %v533, %v533
      %v664 = vpack.c.bf16 %v536, %v536
      %v665 = vpack.c.bf16 %v538, %v538
      %v666 = vpack.c.bf16 %v541, %v541
      %v667 = vpack.c.bf16 %v543, %v543
      %v668 = vpack.c.bf16 %v546, %v546
      %v669 = vpack.c.bf16 %v548, %v548
      %v670 = vpack.c.bf16 %v551, %v551
      %v671 = vpack.c.bf16 %v553, %v553
      %v672 = vpack.c.bf16 %v556, %v556
      %v673 = vpack.c.bf16 %v558, %v558
      %v674 = vpack.c.bf16 %v561, %v561
      %v675 = vpack.c.bf16 %v563, %v563
      %v676 = vpack.c.bf16 %v566, %v566
      %v677 = vpack.c.bf16 %v568, %v568
      %v678 = vpack.c.bf16 %v571, %v571
      %v679 = vpack.c.bf16 %v573, %v573
      %v680 = vpack.c.bf16 %v576, %v576
      %v681 = vpack.c.bf16 %v578, %v578
      %v682 = vpack.c.bf16 %v581, %v581
      %v683 = vpack.c.bf16 %v583, %v583
      %v684 = vpack.c.bf16 %v586, %v586
      %v685 = vpack.c.bf16 %v588, %v588
      %686 = vst [vmem:[%s186] sm:$0xf] %v654
      %687 = vst [vmem:[%s186 + $0x4] sm:$0xf] %v655
      %688 = vst [vmem:[%s186 + $0x8] sm:$0xf] %v656
      %689 = vst [vmem:[%s186 + $0xc] sm:$0xf] %v657
      %690 = vst [vmem:[%s186 + $0x10] sm:$0xf] %v658
      %691 = vst [vmem:[%s186 + $0x14] sm:$0xf] %v659
      %692 = vst [vmem:[%s186 + $0x18] sm:$0xf] %v660
      %693 = vst [vmem:[%s186 + $0x1c] sm:$0xf] %v661
      %694 = vst [vmem:[%s186 + $0x20] sm:$0xf] %v662
      %695 = vst [vmem:[%s186 + $0x24] sm:$0xf] %v663
      %696 = vst [vmem:[%s186 + $0x28] sm:$0xf] %v664
      %697 = vst [vmem:[%s186 + $0x2c] sm:$0xf] %v665
      %698 = vst [vmem:[%s186 + $0x30] sm:$0xf] %v666
      %699 = vst [vmem:[%s186 + $0x34] sm:$0xf] %v667
      %700 = vst [vmem:[%s186 + $0x38] sm:$0xf] %v668
      %701 = vst [vmem:[%s186 + $0x3c] sm:$0xf] %v669
      %702 = vst [vmem:[%s186 + $0x40] sm:$0xf] %v670
      %703 = vst [vmem:[%s186 + $0x44] sm:$0xf] %v671
      %704 = vst [vmem:[%s186 + $0x48] sm:$0xf] %v672
      %705 = vst [vmem:[%s186 + $0x4c] sm:$0xf] %v673
      %706 = vst [vmem:[%s186 + $0x50] sm:$0xf] %v674
      %707 = vst [vmem:[%s186 + $0x54] sm:$0xf] %v675
      %708 = vst [vmem:[%s186 + $0x58] sm:$0xf] %v676
      %709 = vst [vmem:[%s186 + $0x5c] sm:$0xf] %v677
      %710 = vst [vmem:[%s186 + $0x60] sm:$0xf] %v678
      %711 = vst [vmem:[%s186 + $0x64] sm:$0xf] %v679
      %712 = vst [vmem:[%s186 + $0x68] sm:$0xf] %v680
      %713 = vst [vmem:[%s186 + $0x6c] sm:$0xf] %v681
      %714 = vst [vmem:[%s186 + $0x70] sm:$0xf] %v682
      %715 = vst [vmem:[%s186 + $0x74] sm:$0xf] %v683
      %716 = vst [vmem:[%s186 + $0x78] sm:$0xf] %v684
      %717 = vst [vmem:[%s186 + $0x7c] sm:$0xf] %v685
      %s718 = smul.u32 32, %s15
      %p719 = scmp.lt.s32.totalorder %s718, 63
      %s720 = scalar_select %p719, %s718, 63
      %s721 = smul.addr %s720, 4
      %s722 = scalar_lea.vmem %s2, %s721
      %s723 = smul.u32 32, %s15
      %p724 = scmp.lt.s32.totalorder %s723, 63
      %s725 = scalar_select %p724, %s723, 63
      %s726 = smul.addr %s725, 4
      %s727 = scalar_lea.vmem %s3, %s726
      // Predicated region
      $region29: #{_dtt_forward_jit.7} parent=27 // pred_check
        %p728 = pneg %p80
      $region30: #{_dtt_forward_jit.7} parent=27 // pred_check_branch
        %730 = sbr.rel (%p728) target = $region32
      $region31: #{_dtt_forward_jit.7} parent=27 // pred_region
        %s731 = smul.u32 32, %s15
      $region32: #{_dtt_forward_jit.7} parent=27 // pred_fallthru
        _
      // Predicated region
      $region33: #{_dtt_forward_jit.7} parent=27 // pred_check
        %p732 = pneg %p106
      $region34: #{_dtt_forward_jit.7} parent=27 // pred_check_branch
        %734 = sbr.rel (%p732) target = $region36
      $region35: #{_dtt_forward_jit.7} parent=27 // pred_region
        %s735 = smul.u32 32, %s15
      $region36: #{_dtt_forward_jit.7} parent=27 // pred_fallthru
        _
    $region28: #{_dtt_forward_jit.7} parent=5 // pred_fallthru
      _
    %p736 = scmp.le.s32.totalorder 2, %s10
    // Predicated region
    $region37: #{_dtt_forward_jit.7} parent=5 // pred_check
      %p737 = pneg %p736
    $region38: #{_dtt_forward_jit.7} parent=5 // pred_check_branch
      %739 = sbr.rel (%p737) target = $region40
    $region39: #{_dtt_forward_jit.7} parent=5 // pred_region
      %s740 = ssub.s32 %s10, 2
      // Predicated region
      $region41: #{_dtt_forward_jit.7} parent=39 // pred_check
        %p741 = pneg %p86
      $region42: #{_dtt_forward_jit.7} parent=39 // pred_check_branch
        %743 = sbr.rel (%p741) target = $region44
      $region43: #{_dtt_forward_jit.7} parent=39 // pred_region
        %s744 = smul.u32 32, %s16
        %p745 = scmp.lt.s32.totalorder %s744, 63
        %s746 = scalar_select %p745, %s744, 63
        %s747 = smul.addr %s746, 4
        %s748 = scalar_lea.vmem %s2, %s747
      $region44: #{_dtt_forward_jit.7} parent=39 // pred_fallthru
        _
      // Predicated region
      $region45: #{_dtt_forward_jit.7} parent=39 // pred_check
        %p749 = pneg %p112
      $region46: #{_dtt_forward_jit.7} parent=39 // pred_check_branch
        %751 = sbr.rel (%p749) target = $region48
      $region47: #{_dtt_forward_jit.7} parent=39 // pred_region
        %s752 = smul.u32 32, %s16
        %p753 = scmp.lt.s32.totalorder %s752, 63
        %s754 = scalar_select %p753, %s752, 63
        %s755 = smul.addr %s754, 4
        %s756 = scalar_lea.vmem %s3, %s755
      $region48: #{_dtt_forward_jit.7} parent=39 // pred_fallthru
        _
    $region40: #{_dtt_forward_jit.7} parent=5 // pred_fallthru
      _
  $region6: #{_dtt_forward_jit.7} parent=0 // loop_footer
    %s14 = sadd.s32 1, %s10
  $region7: #{_dtt_forward_jit.7} parent=0 // loop_footer_branch
    %9 = sbr.rel target = $region3
  $region8: #{_dtt_forward_jit.7} parent=0 // loop_exit
    _

// kernel: _dtt_forward_jit.13
$region0: #{_dtt_forward_jit.13}
  #allocation0 [shape = 'u32[]', space=smem, size = 0x4, offset = 0x4, fixed_abs, tag = 'smem constant byte address 0x4 - core index']
  #allocation1 [shape = 'u32[72,128]{1,0:T(1,128)}', space=vmem, size = 0x9000, scoped, tag = 'internal scratch']
  #allocation2 [shape = 'f32[256,1]{1,0:T(8,128)}', space=vmem, size = 0x20000, scoped, tag = 'scratch operand']
  #allocation3 [shape = 'f32[256,1]{1,0:T(8,128)}', space=vmem, size = 0x20000, scoped, tag = 'scratch operand']
  #allocation4 [shape = 'f32[256,1]{1,0:T(8,128)}', space=vmem, size = 0x20000, scoped, tag = 'scratch operand']
  %s0 = inlined_call_operand.vmem [shape: bf16[512,128], index: 0, kind: input, shape index: {}]
  %s1 = inlined_call_operand.vmem [shape: bf16[128,512], index: 1, kind: input, shape index: {}]
  %s2 = inlined_call_operand.vmem [shape: s32[512,1], index: 2, kind: input, shape index: {}]
  %s3 = inlined_call_operand.hbm [shape: f32[512,512], index: 3, kind: output, shape index: {0}]
  %s4 = inlined_call_operand.vmem [shape: f32[512,1], index: 4, kind: output, shape index: {1}]
  %5 = xla_tuple %s3, %s4
  %s6 = sld [smem:[#allocation0]]
  $region99: #{_dtt_forward_jit.13} parent=0
    _
  %s8 = ssub.s32 1, %s6
  %s9 = scalar_select 0, %s8, %s6
  $region1: #{_dtt_forward_jit.13} parent=0
    #allocation5 [shape = 'u8[131072]{0}', space=vmem, size = 0x20000, scoped, tag = 'input window, operand 1']
    #allocation6 [shape = 'u8[524288]{0}', space=vmem, size = 0x80000, scoped, tag = 'output window, operand 0']
    #allocation7 [shape = 's32[2]{0}', space=sflag, size = 0x8, scoped, tag = 'scoped memory for _dtt_forward_jit.13']
    %10 = vsyncpa [#allocation7], 0
    %s11 = scalar_lea.sflag [#allocation7], 1
    %12 = vsyncpa %s11, 0
    loop: start=0, step=1, limit=6
    $region2: #{_dtt_forward_jit.13} parent=1 // loop_pre_header
      _
    $region3: #{_dtt_forward_jit.13} parent=1 // loop_header
      %s14 = sphi 0, %s18
      %p15 = scmp.ge.s32.totalorder %s14, 6
      %s21 = sphi 0, %s33
      %s22 = sphi 0, %s29
      %s23 = sphi 0, %s21
      %s24 = sphi 0, %s22
      %s25 = sphi 0, %s23
      %s26 = sphi 0, %s24
      %s36 = sphi 0, %s38
      %s39 = sphi 0, %s36
      %s40 = sphi 0, %s39
      %s56 = sphi 0, %s40
      %s62 = sphi 0, %s64
      %s65 = sphi 0, %s62
      %s66 = sphi 0, %s65
      %s82 = sphi 0, %s66
      %s88 = sphi 0, %s90
      %s91 = sphi 0, %s88
      %s92 = sphi 0, %s91
      %s108 = sphi 0, %s92
      %s116 = sphi 0, %s118
      %s119 = sphi 0, %s116
      %s120 = sphi 0, %s119
      %s136 = sphi 0, %s120
      %s142 = sphi 0, %s144
      %s145 = sphi 0, %s142
      %s146 = sphi 0, %s145
      %s162 = sphi 0, %s146
    $region4: #{_dtt_forward_jit.13} parent=1 // loop_header_branch
      %17 = sbr.rel (%p15) target = $region8
    $region5: #{_dtt_forward_jit.13} parent=1 // loop_body
      %s19 = ssub.s32 %s14, 1
      %s20 = ssub.s32 %s14, 2
      %s27 = sadd.s32 1, %s22
      %p28 = scmp.ge.s32.totalorder %s27, 2
      %s29 = scalar_select %p28, 0, %s27
      %s30 = sadd.s32 1, %s21
      %s31 = scalar_select %p28, %s30, %s21
      %p32 = scmp.ge.s32.totalorder %s31, 2
      %s33 = scalar_select %p32, 0, %s31
      %s34 = ssub.s32 %s21, %s33
      %p35 = scmp.eq.s32.totalorder %s34, 0
      %s37 = sadd.s32 %s36, 1
      %s38 = scalar_select %p35, %s36, %s37
      %p41 = pneg %p35
      %p42 = scmp.eq.s32.totalorder %s14, 3
      %p43 = por %p41, %p42
      %p44 = scmp.ne.s32.totalorder %s36, %s39
      %p45 = scmp.eq.s32.totalorder %s14, 0
      %p46 = por %p44, %p45
      %p47 = scmp.ne.s32.totalorder %s36, %s39
      %p48 = scmp.eq.s32.totalorder %s19, 3
      %p49 = por %p47, %p48
      %p50 = scmp.ne.s32.totalorder %s39, %s40
      %p51 = scmp.eq.s32.totalorder %s19, 0
      %p52 = por %p50, %p51
      %p53 = scmp.ne.s32.totalorder %s39, %s40
      %p54 = scmp.eq.s32.totalorder %s20, 3
      %p55 = por %p53, %p54
      %p57 = scmp.ne.s32.totalorder %s40, %s56
      %p58 = scmp.eq.s32.totalorder %s20, 0
      %p59 = por %p57, %p58
      %s60 = ssub.s32 %s22, %s29
      %p61 = scmp.eq.s32.totalorder %s60, 0
      %s63 = sadd.s32 %s62, 1
      %s64 = scalar_select %p61, %s62, %s63
      %p67 = pneg %p61
      %p68 = scmp.eq.s32.totalorder %s14, 3
      %p69 = por %p67, %p68
      %p70 = scmp.ne.s32.totalorder %s62, %s65
      %p71 = scmp.eq.s32.totalorder %s14, 0
      %p72 = por %p70, %p71
      %p73 = scmp.ne.s32.totalorder %s62, %s65
      %p74 = scmp.eq.s32.totalorder %s19, 3
      %p75 = por %p73, %p74
      %p76 = scmp.ne.s32.totalorder %s65, %s66
      %p77 = scmp.eq.s32.totalorder %s19, 0
      %p78 = por %p76, %p77
      %p79 = scmp.ne.s32.totalorder %s65, %s66
      %p80 = scmp.eq.s32.totalorder %s20, 3
      %p81 = por %p79, %p80
      %p83 = scmp.ne.s32.totalorder %s66, %s82
      %p84 = scmp.eq.s32.totalorder %s20, 0
      %p85 = por %p83, %p84
      %s86 = ssub.s32 %s21, %s33
      %p87 = scmp.eq.s32.totalorder %s86, 0
      %s89 = sadd.s32 %s88, 1
      %s90 = scalar_select %p87, %s88, %s89
      %p93 = pneg %p87
      %p94 = scmp.eq.s32.totalorder %s14, 3
      %p95 = por %p93, %p94
      %p96 = scmp.ne.s32.totalorder %s88, %s91
      %p97 = scmp.eq.s32.totalorder %s14, 0
      %p98 = por %p96, %p97
      %p99 = scmp.ne.s32.totalorder %s88, %s91
      %p100 = scmp.eq.s32.totalorder %s19, 3
      %p101 = por %p99, %p100
      %p102 = scmp.ne.s32.totalorder %s91, %s92
      %p103 = scmp.eq.s32.totalorder %s19, 0
      %p104 = por %p102, %p103
      %p105 = scmp.ne.s32.totalorder %s91, %s92
      %p106 = scmp.eq.s32.totalorder %s20, 3
      %p107 = por %p105, %p106
      %p109 = scmp.ne.s32.totalorder %s92, %s108
      %p110 = scmp.eq.s32.totalorder %s20, 0
      %p111 = por %p109, %p110
      %s112 = ssub.s32 %s21, %s33
      %s113 = ssub.s32 %s22, %s29
      %s114 = sor.u32 %s112, %s113
      %p115 = scmp.eq.s32.totalorder %s114, 0
      %s117 = sadd.s32 %s116, 1
      %s118 = scalar_select %p115, %s116, %s117
      %p121 = pneg %p115
      %p122 = scmp.eq.s32.totalorder %s14, 3
      %p123 = por %p121, %p122
      %p124 = scmp.ne.s32.totalorder %s116, %s119
      %p125 = scmp.eq.s32.totalorder %s14, 0
      %p126 = por %p124, %p125
      %p127 = scmp.ne.s32.totalorder %s116, %s119
      %p128 = scmp.eq.s32.totalorder %s19, 3
      %p129 = por %p127, %p128
      %p130 = scmp.ne.s32.totalorder %s119, %s120
      %p131 = scmp.eq.s32.totalorder %s19, 0
      %p132 = por %p130, %p131
      %p133 = scmp.ne.s32.totalorder %s119, %s120
      %p134 = scmp.eq.s32.totalorder %s20, 3
      %p135 = por %p133, %p134
      %p137 = scmp.ne.s32.totalorder %s120, %s136
      %p138 = scmp.eq.s32.totalorder %s20, 0
      %p139 = por %p137, %p138
      %s140 = ssub.s32 %s21, %s33
      %p141 = scmp.eq.s32.totalorder %s140, 0
      %s143 = sadd.s32 %s142, 1
      %s144 = scalar_select %p141, %s142, %s143
      %p147 = pneg %p141
      %p148 = scmp.eq.s32.totalorder %s14, 3
      %p149 = por %p147, %p148
      %p150 = scmp.ne.s32.totalorder %s142, %s145
      %p151 = scmp.eq.s32.totalorder %s14, 0
      %p152 = por %p150, %p151
      %p153 = scmp.ne.s32.totalorder %s142, %s145
      %p154 = scmp.eq.s32.totalorder %s19, 3
      %p155 = por %p153, %p154
      %p156 = scmp.ne.s32.totalorder %s145, %s146
      %p157 = scmp.eq.s32.totalorder %s19, 0
      %p158 = por %p156, %p157
      %p159 = scmp.ne.s32.totalorder %s145, %s146
      %p160 = scmp.eq.s32.totalorder %s20, 3
      %p161 = por %p159, %p160
      %p163 = scmp.ne.s32.totalorder %s146, %s162
      %p164 = scmp.eq.s32.totalorder %s20, 0
      %p165 = por %p163, %p164
      %p166 = scmp.le.s32.totalorder 1, %s14
      %p167 = scmp.lt.s32.totalorder %s14, 5
      %p168 = pnand %p166, %p167
      %p169 = pneg %p168
      // Predicated region
      $region9: #{_dtt_forward_jit.13} parent=5 // pred_check
        _
      $region10: #{_dtt_forward_jit.13} parent=5 // pred_check_branch
        %171 = sbr.rel (%p168) target = $region12
      $region11: #{_dtt_forward_jit.13} parent=5 // pred_region
        %s172 = ssub.s32 %s14, 1
      $region12: #{_dtt_forward_jit.13} parent=5 // pred_fallthru
        _
      %p173 = scmp.lt.s32.totalorder %s14, 4
      // Predicated region
      $region13: #{_dtt_forward_jit.13} parent=5 // pred_check
        %p174 = pneg %p173
      $region14: #{_dtt_forward_jit.13} parent=5 // pred_check_branch
        %176 = sbr.rel (%p174) target = $region16
      $region15: #{_dtt_forward_jit.13} parent=5 // pred_region
        // Predicated region
        $region17: #{_dtt_forward_jit.13} parent=15 // pred_check
          %p177 = pneg %p46
        $region18: #{_dtt_forward_jit.13} parent=15 // pred_check_branch
          %179 = sbr.rel (%p177) target = $region20
        $region19: #{_dtt_forward_jit.13} parent=15 // pred_region
          %s180 = smul.u32 32, %s21
          %p181 = scmp.lt.s32.totalorder %s180, 63
          %s182 = scalar_select %p181, %s180, 63
          %s183 = smul.addr %s182, 4
          %s184 = scalar_lea.vmem %s0, %s183
          %s185 = smul.u32 32, %s21
        $region20: #{_dtt_forward_jit.13} parent=15 // pred_fallthru
          _
        // Predicated region
        $region21: #{_dtt_forward_jit.13} parent=15 // pred_check
          %p186 = pneg %p72
        $region22: #{_dtt_forward_jit.13} parent=15 // pred_check_branch
          %188 = sbr.rel (%p186) target = $region24
        $region23: #{_dtt_forward_jit.13} parent=15 // pred_region
          %s189 = sand.u32 %s62, 1
          %s190 = sand.u32 %s62, 1
          %s191 = smul.addr %s190, 128
          %s192 = scalar_lea.vmem [#allocation5], %s191
          %s193 = smul.u32 2, %s22
          %s194 = smul.addr %s193, 4
          %s195 = scalar_lea.vmem %s1, %s194
          // Predicated region
          $region25: #{_dtt_forward_jit.13} parent=23 // pred_check
            _
          $region26: #{_dtt_forward_jit.13} parent=23 // pred_check_branch
            %197 = sbr.rel (0) target = $region28
          $region27: #{_dtt_forward_jit.13} parent=23 // pred_region
            // Predicated region
            $region29: #{_dtt_forward_jit.13} parent=27 // pred_check
              _
            $region30: #{_dtt_forward_jit.13} parent=27 // pred_check_branch
              %199 = sbr.rel (0) target = $region32
            $region31: #{_dtt_forward_jit.13} parent=27 // pred_region
              // Predicated region
              $region44: #{_dtt_forward_jit.13} parent=31 // pred_check
                _
              $region45: #{_dtt_forward_jit.13} parent=31 // pred_check_branch
                %245 = sbr.rel (0) target = $region47
              $region46: #{_dtt_forward_jit.13} parent=31 // pred_region
                loop: start=0, step=1, limit=1
                $region48: #{_dtt_forward_jit.13} parent=46 // loop_pre_header
                  _
                $region49: #{_dtt_forward_jit.13} parent=46 // loop_header
                  %s247 = sphi 0, %s251
                  %p248 = scmp.ge.s32.totalorder %s247, 1
                  %s252 = sphi %s195, %s195
                  %s253 = sphi %s192, %s192
                $region50: #{_dtt_forward_jit.13} parent=46 // loop_header_branch
                  %250 = sbr.rel (%p248) target = $region54
                $region51: #{_dtt_forward_jit.13} parent=46 // loop_body
                  %v254 = vld [vmem:[%s252] sm:$0xff]
                  %255 = vst [vmem:[%s253] sm:$0xff] %v254
                  %v256 = vld [vmem:[%s252 + $0x10] sm:$0xff]
                  %257 = vst [vmem:[%s253 + $0x8] sm:$0xff] %v256
                  %v258 = vld [vmem:[%s252 + $0x20] sm:$0xff]
                  %259 = vst [vmem:[%s253 + $0x10] sm:$0xff] %v258
                  %v260 = vld [vmem:[%s252 + $0x30] sm:$0xff]
                  %261 = vst [vmem:[%s253 + $0x18] sm:$0xff] %v260
                  %v262 = vld [vmem:[%s252 + $0x40] sm:$0xff]
                  %263 = vst [vmem:[%s253 + $0x20] sm:$0xff] %v262
                  %v264 = vld [vmem:[%s252 + $0x50] sm:$0xff]
                  %265 = vst [vmem:[%s253 + $0x28] sm:$0xff] %v264
                  %v266 = vld [vmem:[%s252 + $0x60] sm:$0xff]
                  %267 = vst [vmem:[%s253 + $0x30] sm:$0xff] %v266
                  %v268 = vld [vmem:[%s252 + $0x70] sm:$0xff]
                  %269 = vst [vmem:[%s253 + $0x38] sm:$0xff] %v268
                  %v270 = vld [vmem:[%s252 + $0x80] sm:$0xff]
                  %271 = vst [vmem:[%s253 + $0x40] sm:$0xff] %v270
                  %v272 = vld [vmem:[%s252 + $0x90] sm:$0xff]
                  %273 = vst [vmem:[%s253 + $0x48] sm:$0xff] %v272
                  %v274 = vld [vmem:[%s252 + $0xa0] sm:$0xff]
                  %275 = vst [vmem:[%s253 + $0x50] sm:$0xff] %v274
                  %v276 = vld [vmem:[%s252 + $0xb0] sm:$0xff]
                  %277 = vst [vmem:[%s253 + $0x58] sm:$0xff] %v276
                  %v278 = vld [vmem:[%s252 + $0xc0] sm:$0xff]
                  %279 = vst [vmem:[%s253 + $0x60] sm:$0xff] %v278
                  %v280 = vld [vmem:[%s252 + $0xd0] sm:$0xff]
                  %281 = vst [vmem:[%s253 + $0x68] sm:$0xff] %v280
                  %v282 = vld [vmem:[%s252 + $0xe0] sm:$0xff]
                  %283 = vst [vmem:[%s253 + $0x70] sm:$0xff] %v282
                  %v284 = vld [vmem:[%s252 + $0xf0] sm:$0xff]
                  %285 = vst [vmem:[%s253 + $0x78] sm:$0xff] %v284
                $region52: #{_dtt_forward_jit.13} parent=46 // loop_footer
                  %s251 = sadd.s32 1, %s247
                $region53: #{_dtt_forward_jit.13} parent=46 // loop_footer_branch
                  %246 = sbr.rel target = $region49
                $region54: #{_dtt_forward_jit.13} parent=46 // loop_exit
                  _
              $region47: #{_dtt_forward_jit.13} parent=31 // pred_fallthru
                _
              // Predicated region
              $region55: #{_dtt_forward_jit.13} parent=31 // pred_check
                _
              $region56: #{_dtt_forward_jit.13} parent=31 // pred_check_branch
                %287 = sbr.rel target = $region58
              $region57: #{_dtt_forward_jit.13} parent=31 // pred_region
                _
              $region58: #{_dtt_forward_jit.13} parent=31 // pred_fallthru
                _
            $region32: #{_dtt_forward_jit.13} parent=27 // pred_fallthru
              _
            // Predicated region
            $region33: #{_dtt_forward_jit.13} parent=27 // pred_check
              _
            $region34: #{_dtt_forward_jit.13} parent=27 // pred_check_branch
              %201 = sbr.rel target = $region36
            $region35: #{_dtt_forward_jit.13} parent=27 // pred_region
              %s203 = ssub.s32 256, 1
              loop: start=0, step=1, limit=1
              $region37: #{_dtt_forward_jit.13} parent=35 // loop_pre_header
                _
              $region38: #{_dtt_forward_jit.13} parent=35 // loop_header
                %s205 = sphi 0, %s209
                %p206 = scmp.ge.s32.totalorder %s205, 1
                %s210 = sphi %s195, %s195
                %s211 = sphi %s192, %s192
              $region39: #{_dtt_forward_jit.13} parent=35 // loop_header_branch
                %208 = sbr.rel (%p206) target = $region43
              $region40: #{_dtt_forward_jit.13} parent=35 // loop_body
                %v212 = vld [vmem:[%s210] sm:%s203]
                %213 = vst [vmem:[%s211] sm:%s203] %v212
                %v214 = vld [vmem:[%s210 + $0x10] sm:%s203]
                %215 = vst [vmem:[%s211 + $0x8] sm:%s203] %v214
                %v216 = vld [vmem:[%s210 + $0x20] sm:%s203]
                %217 = vst [vmem:[%s211 + $0x10] sm:%s203] %v216
                %v218 = vld [vmem:[%s210 + $0x30] sm:%s203]
                %219 = vst [vmem:[%s211 + $0x18] sm:%s203] %v218
                %v220 = vld [vmem:[%s210 + $0x40] sm:%s203]
                %221 = vst [vmem:[%s211 + $0x20] sm:%s203] %v220
                %v222 = vld [vmem:[%s210 + $0x50] sm:%s203]
                %223 = vst [vmem:[%s211 + $0x28] sm:%s203] %v222
                %v224 = vld [vmem:[%s210 + $0x60] sm:%s203]
                %225 = vst [vmem:[%s211 + $0x30] sm:%s203] %v224
                %v226 = vld [vmem:[%s210 + $0x70] sm:%s203]
                %227 = vst [vmem:[%s211 + $0x38] sm:%s203] %v226
                %v228 = vld [vmem:[%s210 + $0x80] sm:%s203]
                %229 = vst [vmem:[%s211 + $0x40] sm:%s203] %v228
                %v230 = vld [vmem:[%s210 + $0x90] sm:%s203]
                %231 = vst [vmem:[%s211 + $0x48] sm:%s203] %v230
                %v232 = vld [vmem:[%s210 + $0xa0] sm:%s203]
                %233 = vst [vmem:[%s211 + $0x50] sm:%s203] %v232
                %v234 = vld [vmem:[%s210 + $0xb0] sm:%s203]
                %235 = vst [vmem:[%s211 + $0x58] sm:%s203] %v234
                %v236 = vld [vmem:[%s210 + $0xc0] sm:%s203]
                %237 = vst [vmem:[%s211 + $0x60] sm:%s203] %v236
                %v238 = vld [vmem:[%s210 + $0xd0] sm:%s203]
                %239 = vst [vmem:[%s211 + $0x68] sm:%s203] %v238
                %v240 = vld [vmem:[%s210 + $0xe0] sm:%s203]
                %241 = vst [vmem:[%s211 + $0x70] sm:%s203] %v240
                %v242 = vld [vmem:[%s210 + $0xf0] sm:%s203]
                %243 = vst [vmem:[%s211 + $0x78] sm:%s203] %v242
              $region41: #{_dtt_forward_jit.13} parent=35 // loop_footer
                %s209 = sadd.s32 1, %s205
              $region42: #{_dtt_forward_jit.13} parent=35 // loop_footer_branch
                %204 = sbr.rel target = $region38
              $region43: #{_dtt_forward_jit.13} parent=35 // loop_exit
                _
            $region36: #{_dtt_forward_jit.13} parent=27 // pred_fallthru
              _
          $region28: #{_dtt_forward_jit.13} parent=23 // pred_fallthru
            _
          %288 = vnop
        $region24: #{_dtt_forward_jit.13} parent=15 // pred_fallthru
          _
        // Predicated region
        $region59: #{_dtt_forward_jit.13} parent=15 // pred_check
          %p289 = pneg %p98
        $region60: #{_dtt_forward_jit.13} parent=15 // pred_check_branch
          %291 = sbr.rel (%p289) target = $region62
        $region61: #{_dtt_forward_jit.13} parent=15 // pred_region
          %s292 = smul.u32 32, %s21
          %p293 = scmp.lt.s32.totalorder %s292, 63
          %s294 = scalar_select %p293, %s292, 63
          %s295 = smul.addr %s294, 8
          %s296 = scalar_lea.vmem %s2, %s295
          %s297 = smul.u32 32, %s21
        $region62: #{_dtt_forward_jit.13} parent=15 // pred_fallthru
          _
      $region16: #{_dtt_forward_jit.13} parent=5 // pred_fallthru
        _
      %p298 = scmp.le.s32.totalorder 1, %s14
      %p299 = scmp.lt.s32.totalorder %s14, 5
      %p300 = pnand %p298, %p299
      %p301 = pneg %p300
      // Predicated region
      $region63: #{_dtt_forward_jit.13} parent=5 // pred_check
        _
      $region64: #{_dtt_forward_jit.13} parent=5 // pred_check_branch
        %303 = sbr.rel (%p300) target = $region66
      $region65: #{_dtt_forward_jit.13} parent=5 // pred_region
        %s304 = ssub.s32 %s14, 1
        %s305 = sand.u32 %s65, 1
        %s306 = sand.u32 %s65, 1
        %s307 = smul.addr %s306, 128
        %s308 = scalar_lea.vmem [#allocation5], %s307
        // Predicated region
        $region67: #{_dtt_forward_jit.13} parent=65 // pred_check
          %p309 = pneg %p78
        $region68: #{_dtt_forward_jit.13} parent=65 // pred_check_branch
          %311 = sbr.rel (%p309) target = $region70
        $region69: #{_dtt_forward_jit.13} parent=65 // pred_region
          _
        $region70: #{_dtt_forward_jit.13} parent=65 // pred_fallthru
          _
        %s312 = smul.u32 32, %s23
        %p313 = scmp.lt.s32.totalorder %s312, 63
        %s314 = scalar_select %p313, %s312, 63
        %s315 = smul.addr %s314, 4
        %s316 = scalar_lea.vmem %s0, %s315
        %p317 = pneg %p52
        %p318 = pneg %p49
        %s319 = sand.u32 %s65, 1
        %s320 = sand.u32 %s65, 1
        %s321 = smul.addr %s320, 128
        %s322 = scalar_lea.vmem [#allocation5], %s321
        %p323 = pneg %p78
        %p324 = pneg %p75
        %s325 = smul.u32 32, %s23
        %p326 = scmp.lt.s32.totalorder %s325, 63
        %s327 = scalar_select %p326, %s325, 63
        %s328 = smul.addr %s327, 8
        %s329 = scalar_lea.vmem %s2, %s328
        %p330 = pneg %p104
        %p331 = pneg %p101
        %p332 = pneg %p132
        %p333 = pneg %p129
        %s334 = sand.u32 %s119, 1
        %s335 = scalar_lea.sflag [#allocation7], %s334
        %s336 = sand.u32 %s119, 1
        %s337 = smul.addr %s336, 512
        %s338 = scalar_lea.vmem [#allocation6], %s337
        %p339 = pneg %p158
        %p340 = pneg %p155
        %s341 = smul.u32 32, %s23
        %p342 = scmp.lt.s32.totalorder %s341, 63
        %s343 = scalar_select %p342, %s341, 63
        %s344 = smul.addr %s343, 8
        %s345 = scalar_lea.vmem %s4, %s344
        %s346 = smul.u32 32, %s23
        %p347 = scmp.lt.s32.totalorder %s346, 63
        %s348 = scalar_select %p347, %s346, 63
        %s349 = smul.addr %s348, 4
        %s350 = scalar_lea.vmem %s0, %s349
        %s351 = smul.u32 32, %s23
        %s352 = smul.u32 2, %s24
        %s353 = smul.u32 32, %s23
        %p354 = scmp.lt.s32.totalorder %s353, 63
        %s355 = scalar_select %p354, %s353, 63
        %s356 = smul.addr %s355, 8
        %s357 = scalar_lea.vmem %s2, %s356
        %s358 = smul.u32 32, %s23
        %s359 = smul.u32 32, %s23
        %s360 = smul.u32 2, %s24
        %s361 = smul.u32 32, %s23
        %p362 = scmp.lt.s32.totalorder %s361, 63
        %s363 = scalar_select %p362, %s361, 63
        %s364 = smul.addr %s363, 8
        %s365 = scalar_lea.vmem %s4, %s364
        %s366 = smul.u32 32, %s23
        %p367 = scmp.eq.s32.totalorder %s24, 0
        // Predicated region
        $region71: #{_dtt_forward_jit.13} parent=65 // pred_check
          %p368 = pneg %p367
        $region72: #{_dtt_forward_jit.13} parent=65 // pred_check_branch
          %370 = sbr.rel (%p368) target = $region74
        $region73: #{_dtt_forward_jit.13} parent=65 // pred_region
          %vm371 = vcmask 7168
          %372 = vst.msk [vmem:[#allocation2] sm:$0xff] %vm371, -inf
          %373 = vst.msk [vmem:[#allocation2 + $0x8] sm:$0xff] %vm371, -inf
          %374 = vst.msk [vmem:[#allocation2 + $0x10] sm:$0xff] %vm371, -inf
          %375 = vst.msk [vmem:[#allocation2 + $0x18] sm:$0xff] %vm371, -inf
          %376 = vst.msk [vmem:[#allocation2 + $0x20] sm:$0xff] %vm371, -inf
          %377 = vst.msk [vmem:[#allocation2 + $0x28] sm:$0xff] %vm371, -inf
          %378 = vst.msk [vmem:[#allocation2 + $0x30] sm:$0xff] %vm371, -inf
          %379 = vst.msk [vmem:[#allocation2 + $0x38] sm:$0xff] %vm371, -inf
          %380 = vst.msk [vmem:[#allocation2 + $0x40] sm:$0xff] %vm371, -inf
          %381 = vst.msk [vmem:[#allocation2 + $0x48] sm:$0xff] %vm371, -inf
          %382 = vst.msk [vmem:[#allocation2 + $0x50] sm:$0xff] %vm371, -inf
          %383 = vst.msk [vmem:[#allocation2 + $0x58] sm:$0xff] %vm371, -inf
          %384 = vst.msk [vmem:[#allocation2 + $0x60] sm:$0xff] %vm371, -inf
          %385 = vst.msk [vmem:[#allocation2 + $0x68] sm:$0xff] %vm371, -inf
          %386 = vst.msk [vmem:[#allocation2 + $0x70] sm:$0xff] %vm371, -inf
          %387 = vst.msk [vmem:[#allocation2 + $0x78] sm:$0xff] %vm371, -inf
          %388 = vst.msk [vmem:[#allocation2 + $0x80] sm:$0xff] %vm371, -inf
          %389 = vst.msk [vmem:[#allocation2 + $0x88] sm:$0xff] %vm371, -inf
          %390 = vst.msk [vmem:[#allocation2 + $0x90] sm:$0xff] %vm371, -inf
          %391 = vst.msk [vmem:[#allocation2 + $0x98] sm:$0xff] %vm371, -inf
          %392 = vst.msk [vmem:[#allocation2 + $0xa0] sm:$0xff] %vm371, -inf
          %393 = vst.msk [vmem:[#allocation2 + $0xa8] sm:$0xff] %vm371, -inf
          %394 = vst.msk [vmem:[#allocation2 + $0xb0] sm:$0xff] %vm371, -inf
          %395 = vst.msk [vmem:[#allocation2 + $0xb8] sm:$0xff] %vm371, -inf
          %396 = vst.msk [vmem:[#allocation2 + $0xc0] sm:$0xff] %vm371, -inf
          %397 = vst.msk [vmem:[#allocation2 + $0xc8] sm:$0xff] %vm371, -inf
          %398 = vst.msk [vmem:[#allocation2 + $0xd0] sm:$0xff] %vm371, -inf
          %399 = vst.msk [vmem:[#allocation2 + $0xd8] sm:$0xff] %vm371, -inf
          %400 = vst.msk [vmem:[#allocation2 + $0xe0] sm:$0xff] %vm371, -inf
          %401 = vst.msk [vmem:[#allocation2 + $0xe8] sm:$0xff] %vm371, -inf
          %402 = vst.msk [vmem:[#allocation2 + $0xf0] sm:$0xff] %vm371, -inf
          %403 = vst.msk [vmem:[#allocation2 + $0xf8] sm:$0xff] %vm371, -inf
          %404 = vst.msk [vmem:[#allocation3] sm:$0xff] %vm371, 0.0
          %405 = vst.msk [vmem:[#allocation3 + $0x8] sm:$0xff] %vm371, 0.0
          %406 = vst.msk [vmem:[#allocation3 + $0x10] sm:$0xff] %vm371, 0.0
          %407 = vst.msk [vmem:[#allocation3 + $0x18] sm:$0xff] %vm371, 0.0
          %408 = vst.msk [vmem:[#allocation3 + $0x20] sm:$0xff] %vm371, 0.0
          %409 = vst.msk [vmem:[#allocation3 + $0x28] sm:$0xff] %vm371, 0.0
          %410 = vst.msk [vmem:[#allocation3 + $0x30] sm:$0xff] %vm371, 0.0
          %411 = vst.msk [vmem:[#allocation3 + $0x38] sm:$0xff] %vm371, 0.0
          %412 = vst.msk [vmem:[#allocation3 + $0x40] sm:$0xff] %vm371, 0.0
          %413 = vst.msk [vmem:[#allocation3 + $0x48] sm:$0xff] %vm371, 0.0
          %414 = vst.msk [vmem:[#allocation3 + $0x50] sm:$0xff] %vm371, 0.0
          %415 = vst.msk [vmem:[#allocation3 + $0x58] sm:$0xff] %vm371, 0.0
          %416 = vst.msk [vmem:[#allocation3 + $0x60] sm:$0xff] %vm371, 0.0
          %417 = vst.msk [vmem:[#allocation3 + $0x68] sm:$0xff] %vm371, 0.0
          %418 = vst.msk [vmem:[#allocation3 + $0x70] sm:$0xff] %vm371, 0.0
          %419 = vst.msk [vmem:[#allocation3 + $0x78] sm:$0xff] %vm371, 0.0
          %420 = vst.msk [vmem:[#allocation3 + $0x80] sm:$0xff] %vm371, 0.0
          %421 = vst.msk [vmem:[#allocation3 + $0x88] sm:$0xff] %vm371, 0.0
          %422 = vst.msk [vmem:[#allocation3 + $0x90] sm:$0xff] %vm371, 0.0
          %423 = vst.msk [vmem:[#allocation3 + $0x98] sm:$0xff] %vm371, 0.0
          %424 = vst.msk [vmem:[#allocation3 + $0xa0] sm:$0xff] %vm371, 0.0
          %425 = vst.msk [vmem:[#allocation3 + $0xa8] sm:$0xff] %vm371, 0.0
          %426 = vst.msk [vmem:[#allocation3 + $0xb0] sm:$0xff] %vm371, 0.0
          %427 = vst.msk [vmem:[#allocation3 + $0xb8] sm:$0xff] %vm371, 0.0
          %428 = vst.msk [vmem:[#allocation3 + $0xc0] sm:$0xff] %vm371, 0.0
          %429 = vst.msk [vmem:[#allocation3 + $0xc8] sm:$0xff] %vm371, 0.0
          %430 = vst.msk [vmem:[#allocation3 + $0xd0] sm:$0xff] %vm371, 0.0
          %431 = vst.msk [vmem:[#allocation3 + $0xd8] sm:$0xff] %vm371, 0.0
          %432 = vst.msk [vmem:[#allocation3 + $0xe0] sm:$0xff] %vm371, 0.0
          %433 = vst.msk [vmem:[#allocation3 + $0xe8] sm:$0xff] %vm371, 0.0
          %434 = vst.msk [vmem:[#allocation3 + $0xf0] sm:$0xff] %vm371, 0.0
          %435 = vst.msk [vmem:[#allocation3 + $0xf8] sm:$0xff] %vm371, 0.0
          %436 = vst.msk [vmem:[#allocation4] sm:$0xff] %vm371, 0.0
          %437 = vst.msk [vmem:[#allocation4 + $0x8] sm:$0xff] %vm371, 0.0
          %438 = vst.msk [vmem:[#allocation4 + $0x10] sm:$0xff] %vm371, 0.0
          %439 = vst.msk [vmem:[#allocation4 + $0x18] sm:$0xff] %vm371, 0.0
          %440 = vst.msk [vmem:[#allocation4 + $0x20] sm:$0xff] %vm371, 0.0
          %441 = vst.msk [vmem:[#allocation4 + $0x28] sm:$0xff] %vm371, 0.0
          %442 = vst.msk [vmem:[#allocation4 + $0x30] sm:$0xff] %vm371, 0.0
          %443 = vst.msk [vmem:[#allocation4 + $0x38] sm:$0xff] %vm371, 0.0
          %444 = vst.msk [vmem:[#allocation4 + $0x40] sm:$0xff] %vm371, 0.0
          %445 = vst.msk [vmem:[#allocation4 + $0x48] sm:$0xff] %vm371, 0.0
          %446 = vst.msk [vmem:[#allocation4 + $0x50] sm:$0xff] %vm371, 0.0
          %447 = vst.msk [vmem:[#allocation4 + $0x58] sm:$0xff] %vm371, 0.0
          %448 = vst.msk [vmem:[#allocation4 + $0x60] sm:$0xff] %vm371, 0.0
          %449 = vst.msk [vmem:[#allocation4 + $0x68] sm:$0xff] %vm371, 0.0
          %450 = vst.msk [vmem:[#allocation4 + $0x70] sm:$0xff] %vm371, 0.0
          %451 = vst.msk [vmem:[#allocation4 + $0x78] sm:$0xff] %vm371, 0.0
          %452 = vst.msk [vmem:[#allocation4 + $0x80] sm:$0xff] %vm371, 0.0
          %453 = vst.msk [vmem:[#allocation4 + $0x88] sm:$0xff] %vm371, 0.0
          %454 = vst.msk [vmem:[#allocation4 + $0x90] sm:$0xff] %vm371, 0.0
          %455 = vst.msk [vmem:[#allocation4 + $0x98] sm:$0xff] %vm371, 0.0
          %456 = vst.msk [vmem:[#allocation4 + $0xa0] sm:$0xff] %vm371, 0.0
          %457 = vst.msk [vmem:[#allocation4 + $0xa8] sm:$0xff] %vm371, 0.0
          %458 = vst.msk [vmem:[#allocation4 + $0xb0] sm:$0xff] %vm371, 0.0
          %459 = vst.msk [vmem:[#allocation4 + $0xb8] sm:$0xff] %vm371, 0.0
          %460 = vst.msk [vmem:[#allocation4 + $0xc0] sm:$0xff] %vm371, 0.0
          %461 = vst.msk [vmem:[#allocation4 + $0xc8] sm:$0xff] %vm371, 0.0
          %462 = vst.msk [vmem:[#allocation4 + $0xd0] sm:$0xff] %vm371, 0.0
          %463 = vst.msk [vmem:[#allocation4 + $0xd8] sm:$0xff] %vm371, 0.0
          %464 = vst.msk [vmem:[#allocation4 + $0xe0] sm:$0xff] %vm371, 0.0
          %465 = vst.msk [vmem:[#allocation4 + $0xe8] sm:$0xff] %vm371, 0.0
          %466 = vst.msk [vmem:[#allocation4 + $0xf0] sm:$0xff] %vm371, 0.0
          %467 = vst.msk [vmem:[#allocation4 + $0xf8] sm:$0xff] %vm371, 0.0
        $region74: #{_dtt_forward_jit.13} parent=65 // pred_fallthru
          _
        %v468 = vld [vmem:[%s350] sm:$0xf]
        %v469 = vld [vmem:[%s350 + $0x4] sm:$0xf]
        %v470 = vld [vmem:[%s350 + $0x8] sm:$0xf]
        %v471 = vld [vmem:[%s350 + $0xc] sm:$0xf]
        %v472 = vld [vmem:[%s350 + $0x10] sm:$0xf]
        %v473 = vld [vmem:[%s350 + $0x14] sm:$0xf]
        %v474 = vld [vmem:[%s350 + $0x18] sm:$0xf]
        %v475 = vld [vmem:[%s350 + $0x1c] sm:$0xf]
        %v476 = vld [vmem:[%s350 + $0x20] sm:$0xf]
        %v477 = vld [vmem:[%s350 + $0x24] sm:$0xf]
        %v478 = vld [vmem:[%s350 + $0x28] sm:$0xf]
        %v479 = vld [vmem:[%s350 + $0x2c] sm:$0xf]
        %v480 = vld [vmem:[%s350 + $0x30] sm:$0xf]
        %v481 = vld [vmem:[%s350 + $0x34] sm:$0xf]
        %v482 = vld [vmem:[%s350 + $0x38] sm:$0xf]
        %v483 = vld [vmem:[%s350 + $0x3c] sm:$0xf]
        %v484 = vld [vmem:[%s350 + $0x40] sm:$0xf]
        %v485 = vld [vmem:[%s350 + $0x44] sm:$0xf]
        %v486 = vld [vmem:[%s350 + $0x48] sm:$0xf]
        %v487 = vld [vmem:[%s350 + $0x4c] sm:$0xf]
        %v488 = vld [vmem:[%s350 + $0x50] sm:$0xf]
        %v489 = vld [vmem:[%s350 + $0x54] sm:$0xf]
        %v490 = vld [vmem:[%s350 + $0x58] sm:$0xf]
        %v491 = vld [vmem:[%s350 + $0x5c] sm:$0xf]
        %v492 = vld [vmem:[%s350 + $0x60] sm:$0xf]
        %v493 = vld [vmem:[%s350 + $0x64] sm:$0xf]
        %v494 = vld [vmem:[%s350 + $0x68] sm:$0xf]
        %v495 = vld [vmem:[%s350 + $0x6c] sm:$0xf]
        %v496 = vld [vmem:[%s350 + $0x70] sm:$0xf]
        %v497 = vld [vmem:[%s350 + $0x74] sm:$0xf]
        %v498 = vld [vmem:[%s350 + $0x78] sm:$0xf]
        %v499 = vld [vmem:[%s350 + $0x7c] sm:$0xf]
        %v500 = vld [vmem:[%s308] sm:$0xff]
        %v501 = vld [vmem:[%s308 + $0x8] sm:$0xff]
        %v502 = vld [vmem:[%s308 + $0x10] sm:$0xff]
        %v503 = vld [vmem:[%s308 + $0x18] sm:$0xff]
        %v504 = vld [vmem:[%s308 + $0x20] sm:$0xff]
        %v505 = vld [vmem:[%s308 + $0x28] sm:$0xff]
        %v506 = vld [vmem:[%s308 + $0x30] sm:$0xff]
        %v507 = vld [vmem:[%s308 + $0x38] sm:$0xff]
        %v508 = vld [vmem:[%s308 + $0x40] sm:$0xff]
        %v509 = vld [vmem:[%s308 + $0x48] sm:$0xff]
        %v510 = vld [vmem:[%s308 + $0x50] sm:$0xff]
        %v511 = vld [vmem:[%s308 + $0x58] sm:$0xff]
        %v512 = vld [vmem:[%s308 + $0x60] sm:$0xff]
        %v513 = vld [vmem:[%s308 + $0x68] sm:$0xff]
        %v514 = vld [vmem:[%s308 + $0x70] sm:$0xff]
        %v515 = vld [vmem:[%s308 + $0x78] sm:$0xff]
        %v548 = vunpack.c.l.b16 %v468
        %v549 = vunpack.c.l.b16 %v469
        %v550 = vunpack.c.l.b16 %v470
        %v551 = vunpack.c.l.b16 %v471
        %v552 = vunpack.c.l.b16 %v472
        %v553 = vunpack.c.l.b16 %v473
        %v554 = vunpack.c.l.b16 %v474
        %v555 = vunpack.c.l.b16 %v475
        %v556 = vunpack.c.l.b16 %v476
        %v557 = vunpack.c.l.b16 %v477
        %v558 = vunpack.c.l.b16 %v478
        %v559 = vunpack.c.l.b16 %v479
        %v560 = vunpack.c.l.b16 %v480
        %v561 = vunpack.c.l.b16 %v481
        %v562 = vunpack.c.l.b16 %v482
        %v563 = vunpack.c.l.b16 %v483
        %v564 = vunpack.c.l.b16 %v484
        %v565 = vunpack.c.l.b16 %v485
        %v566 = vunpack.c.l.b16 %v486
        %v567 = vunpack.c.l.b16 %v487
        %v568 = vunpack.c.l.b16 %v488
        %v569 = vunpack.c.l.b16 %v489
        %v570 = vunpack.c.l.b16 %v490
        %v571 = vunpack.c.l.b16 %v491
        %v572 = vunpack.c.l.b16 %v492
        %v573 = vunpack.c.l.b16 %v493
        %v574 = vunpack.c.l.b16 %v494
        %v575 = vunpack.c.l.b16 %v495
        %v576 = vunpack.c.l.b16 %v496
        %v577 = vunpack.c.l.b16 %v497
        %v578 = vunpack.c.l.b16 %v498
        %v579 = vunpack.c.l.b16 %v499
        %v580 = vpack.c.b16 %v549, %v548
        %v581 = vpack.c.b16 %v551, %v550
        %v582 = vpack.c.b16 %v553, %v552
        %v583 = vpack.c.b16 %v555, %v554
        %v584 = vpack.c.b16 %v557, %v556
        %v585 = vpack.c.b16 %v559, %v558
        %v586 = vpack.c.b16 %v561, %v560
        %v587 = vpack.c.b16 %v563, %v562
        %v588 = vpack.c.b16 %v565, %v564
        %v589 = vpack.c.b16 %v567, %v566
        %v590 = vpack.c.b16 %v569, %v568
        %v591 = vpack.c.b16 %v571, %v570
        %v592 = vpack.c.b16 %v573, %v572
        %v593 = vpack.c.b16 %v575, %v574
        %v594 = vpack.c.b16 %v577, %v576
        %v595 = vpack.c.b16 %v579, %v578
        %v628 = vunpack.c.l.b16 %v500
        %v629 = vunpack.c.h.b16 %v500
        %v630 = vunpack.c.l.b16 %v501
        %v631 = vunpack.c.h.b16 %v501
        %v632 = vunpack.c.l.b16 %v502
        %v633 = vunpack.c.h.b16 %v502
        %v634 = vunpack.c.l.b16 %v503
        %v635 = vunpack.c.h.b16 %v503
        %v636 = vunpack.c.l.b16 %v504
        %v637 = vunpack.c.h.b16 %v504
        %v638 = vunpack.c.l.b16 %v505
        %v639 = vunpack.c.h.b16 %v505
        %v640 = vunpack.c.l.b16 %v506
        %v641 = vunpack.c.h.b16 %v506
        %v642 = vunpack.c.l.b16 %v507
        %v643 = vunpack.c.h.b16 %v507
        %v644 = vunpack.c.l.b16 %v508
        %v645 = vunpack.c.h.b16 %v508
        %v646 = vunpack.c.l.b16 %v509
        %v647 = vunpack.c.h.b16 %v509
        %v648 = vunpack.c.l.b16 %v510
        %v649 = vunpack.c.h.b16 %v510
        %v650 = vunpack.c.l.b16 %v511
        %v651 = vunpack.c.h.b16 %v511
        %v652 = vunpack.c.l.b16 %v512
        %v653 = vunpack.c.h.b16 %v512
        %v654 = vunpack.c.l.b16 %v513
        %v655 = vunpack.c.h.b16 %v513
        %v656 = vunpack.c.l.b16 %v514
        %v657 = vunpack.c.h.b16 %v514
        %v658 = vunpack.c.l.b16 %v515
        %v659 = vunpack.c.h.b16 %v515
        %v660 = vpack.c.b16 %v630, %v628
        %v661 = vpack.c.b16 %v631, %v629
        %v662 = vpack.c.b16 %v634, %v632
        %v663 = vpack.c.b16 %v635, %v633
        %v664 = vpack.c.b16 %v638, %v636
        %v665 = vpack.c.b16 %v639, %v637
        %v666 = vpack.c.b16 %v642, %v640
        %v667 = vpack.c.b16 %v643, %v641
        %v668 = vpack.c.b16 %v646, %v644
        %v669 = vpack.c.b16 %v647, %v645
        %v670 = vpack.c.b16 %v650, %v648
        %v671 = vpack.c.b16 %v651, %v649
        %v672 = vpack.c.b16 %v654, %v652
        %v673 = vpack.c.b16 %v655, %v653
        %v674 = vpack.c.b16 %v658, %v656
        %v675 = vpack.c.b16 %v659, %v657
        %692 = vmatpush.bf16.msra.mxu0 %v674
        %693 = vmatpush.bf16.msra.mxu0 %v672
        %694 = vmatpush.bf16.msra.mxu0 %v670
        %695 = vmatpush.bf16.msra.mxu0 %v668
        %696 = vmatpush.bf16.msra.mxu0 %v666
        %697 = vmatpush.bf16.msra.mxu0 %v664
        %698 = vmatpush.bf16.msra.mxu0 %v662
        %699 = vmatpush.bf16.msra.mxu0 %v660
        %700 = vmatmul.bf16.gmra.mxu0 %v580
        %v701 = vpop.f32.mrf.mxu0
        %v702 = vadd.f32 0.0, %v701
        %v703 = vpop.f32.mrf.mxu0
        %v704 = vadd.f32 0.0, %v703
        %705 = vmatmul.bf16.gmra.mxu0 %v581
        %v706 = vpop.f32.mrf.mxu0
        %v707 = vadd.f32 0.0, %v706
        %v708 = vpop.f32.mrf.mxu0
        %v709 = vadd.f32 0.0, %v708
        %710 = vmatmul.bf16.gmra.mxu0 %v582
        %v711 = vpop.f32.mrf.mxu0
        %v712 = vadd.f32 0.0, %v711
        %v713 = vpop.f32.mrf.mxu0
        %v714 = vadd.f32 0.0, %v713
        %715 = vmatmul.bf16.gmra.mxu0 %v583
        %v716 = vpop.f32.mrf.mxu0
        %v717 = vadd.f32 0.0, %v716
        %v718 = vpop.f32.mrf.mxu0
        %v719 = vadd.f32 0.0, %v718
        %720 = vmatmul.bf16.gmra.mxu0 %v584
        %v721 = vpop.f32.mrf.mxu0
        %v722 = vadd.f32 0.0, %v721
        %v723 = vpop.f32.mrf.mxu0
        %v724 = vadd.f32 0.0, %v723
        %725 = vmatmul.bf16.gmra.mxu0 %v585
        %v726 = vpop.f32.mrf.mxu0
        %v727 = vadd.f32 0.0, %v726
        %v728 = vpop.f32.mrf.mxu0
        %v729 = vadd.f32 0.0, %v728
        %730 = vmatmul.bf16.gmra.mxu0 %v586
        %v731 = vpop.f32.mrf.mxu0
        %v732 = vadd.f32 0.0, %v731
        %v733 = vpop.f32.mrf.mxu0
        %v734 = vadd.f32 0.0, %v733
        %735 = vmatmul.bf16.gmra.mxu0 %v587
        %v736 = vpop.f32.mrf.mxu0
        %v737 = vadd.f32 0.0, %v736
        %v738 = vpop.f32.mrf.mxu0
        %v739 = vadd.f32 0.0, %v738
        %740 = vmatmul.bf16.gmra.mxu0 %v588
        %v741 = vpop.f32.mrf.mxu0
        %v742 = vadd.f32 0.0, %v741
        %v743 = vpop.f32.mrf.mxu0
        %v744 = vadd.f32 0.0, %v743
        %745 = vmatmul.bf16.gmra.mxu0 %v589
        %v746 = vpop.f32.mrf.mxu0
        %v747 = vadd.f32 0.0, %v746
        %v748 = vpop.f32.mrf.mxu0
        %v749 = vadd.f32 0.0, %v748
        %750 = vmatmul.bf16.gmra.mxu0 %v590
        %v751 = vpop.f32.mrf.mxu0
        %v752 = vadd.f32 0.0, %v751
        %v753 = vpop.f32.mrf.mxu0
        %v754 = vadd.f32 0.0, %v753
        %755 = vmatmul.bf16.gmra.mxu0 %v591
        %v756 = vpop.f32.mrf.mxu0
        %v757 = vadd.f32 0.0, %v756
        %v758 = vpop.f32.mrf.mxu0
        %v759 = vadd.f32 0.0, %v758
        %760 = vmatmul.bf16.gmra.mxu0 %v592
        %v761 = vpop.f32.mrf.mxu0
        %v762 = vadd.f32 0.0, %v761
        %v763 = vpop.f32.mrf.mxu0
        %v764 = vadd.f32 0.0, %v763
        %765 = vmatmul.bf16.gmra.mxu0 %v593
        %v766 = vpop.f32.mrf.mxu0
        %v767 = vadd.f32 0.0, %v766
        %v768 = vpop.f32.mrf.mxu0
        %v769 = vadd.f32 0.0, %v768
        %770 = vmatmul.bf16.gmra.mxu0 %v594
        %v771 = vpop.f32.mrf.mxu0
        %v772 = vadd.f32 0.0, %v771
        %v773 = vpop.f32.mrf.mxu0
        %v774 = vadd.f32 0.0, %v773
        %775 = vmatmul.bf16.gmra.mxu0 %v595
        %v776 = vpop.f32.mrf.mxu0
        %v777 = vadd.f32 0.0, %v776
        %v778 = vpop.f32.mrf.mxu0
        %v779 = vadd.f32 0.0, %v778
        %780 = vdwg.mxu0
        %781 = vmatpush.bf16.msra.mxu0 %v675
        %782 = vmatpush.bf16.msra.mxu0 %v673
        %783 = vmatpush.bf16.msra.mxu0 %v671
        %784 = vmatpush.bf16.msra.mxu0 %v669
        %785 = vmatpush.bf16.msra.mxu0 %v667
        %786 = vmatpush.bf16.msra.mxu0 %v665
        %787 = vmatpush.bf16.msra.mxu0 %v663
        %788 = vmatpush.bf16.msra.mxu0 %v661
        %789 = vmatmul.bf16.gmra.mxu0 %v580
        %v790 = vpop.f32.mrf.mxu0
        %v791 = vadd.f32 0.0, %v790
        %v792 = vpop.f32.mrf.mxu0
        %v793 = vadd.f32 0.0, %v792
        %794 = vmatmul.bf16.gmra.mxu0 %v581
        %v795 = vpop.f32.mrf.mxu0
        %v796 = vadd.f32 0.0, %v795
        %v797 = vpop.f32.mrf.mxu0
        %v798 = vadd.f32 0.0, %v797
        %799 = vmatmul.bf16.gmra.mxu0 %v582
        %v800 = vpop.f32.mrf.mxu0
        %v801 = vadd.f32 0.0, %v800
        %v802 = vpop.f32.mrf.mxu0
        %v803 = vadd.f32 0.0, %v802
        %804 = vmatmul.bf16.gmra.mxu0 %v583
        %v805 = vpop.f32.mrf.mxu0
        %v806 = vadd.f32 0.0, %v805
        %v807 = vpop.f32.mrf.mxu0
        %v808 = vadd.f32 0.0, %v807
        %809 = vmatmul.bf16.gmra.mxu0 %v584
        %v810 = vpop.f32.mrf.mxu0
        %v811 = vadd.f32 0.0, %v810
        %v812 = vpop.f32.mrf.mxu0
        %v813 = vadd.f32 0.0, %v812
        %814 = vmatmul.bf16.gmra.mxu0 %v585
        %v815 = vpop.f32.mrf.mxu0
        %v816 = vadd.f32 0.0, %v815
        %v817 = vpop.f32.mrf.mxu0
        %v818 = vadd.f32 0.0, %v817
        %819 = vmatmul.bf16.gmra.mxu0 %v586
        %v820 = vpop.f32.mrf.mxu0
        %v821 = vadd.f32 0.0, %v820
        %v822 = vpop.f32.mrf.mxu0
        %v823 = vadd.f32 0.0, %v822
        %824 = vmatmul.bf16.gmra.mxu0 %v587
        %v825 = vpop.f32.mrf.mxu0
        %v826 = vadd.f32 0.0, %v825
        %v827 = vpop.f32.mrf.mxu0
        %v828 = vadd.f32 0.0, %v827
        %829 = vmatmul.bf16.gmra.mxu0 %v588
        %v830 = vpop.f32.mrf.mxu0
        %v831 = vadd.f32 0.0, %v830
        %v832 = vpop.f32.mrf.mxu0
        %v833 = vadd.f32 0.0, %v832
        %834 = vmatmul.bf16.gmra.mxu0 %v589
        %v835 = vpop.f32.mrf.mxu0
        %v836 = vadd.f32 0.0, %v835
        %v837 = vpop.f32.mrf.mxu0
        %v838 = vadd.f32 0.0, %v837
        %839 = vmatmul.bf16.gmra.mxu0 %v590
        %v840 = vpop.f32.mrf.mxu0
        %v841 = vadd.f32 0.0, %v840
        %v842 = vpop.f32.mrf.mxu0
        %v843 = vadd.f32 0.0, %v842
        %844 = vmatmul.bf16.gmra.mxu0 %v591
        %v845 = vpop.f32.mrf.mxu0
        %v846 = vadd.f32 0.0, %v845
        %v847 = vpop.f32.mrf.mxu0
        %v848 = vadd.f32 0.0, %v847
        %849 = vmatmul.bf16.gmra.mxu0 %v592
        %v850 = vpop.f32.mrf.mxu0
        %v851 = vadd.f32 0.0, %v850
        %v852 = vpop.f32.mrf.mxu0
        %v853 = vadd.f32 0.0, %v852
        %854 = vmatmul.bf16.gmra.mxu0 %v593
        %v855 = vpop.f32.mrf.mxu0
        %v856 = vadd.f32 0.0, %v855
        %v857 = vpop.f32.mrf.mxu0
        %v858 = vadd.f32 0.0, %v857
        %859 = vmatmul.bf16.gmra.mxu0 %v594
        %v860 = vpop.f32.mrf.mxu0
        %v861 = vadd.f32 0.0, %v860
        %v862 = vpop.f32.mrf.mxu0
        %v863 = vadd.f32 0.0, %v862
        %864 = vmatmul.bf16.gmra.mxu0 %v595
        %v865 = vpop.f32.mrf.mxu0
        %v866 = vadd.f32 0.0, %v865
        %v867 = vpop.f32.mrf.mxu0
        %v868 = vadd.f32 0.0, %v867
        %869 = vdwg.mxu0
        %870 = vst [vmem:[%s338] sm:$0xff] %v702
        %871 = vst [vmem:[%s338 + $0x8] sm:$0xff] %v791
        %872 = vst [vmem:[%s338 + $0x10] sm:$0xff] %v704
        %873 = vst [vmem:[%s338 + $0x18] sm:$0xff] %v793
        %874 = vst [vmem:[%s338 + $0x20] sm:$0xff] %v707
        %875 = vst [vmem:[%s338 + $0x28] sm:$0xff] %v796
        %876 = vst [vmem:[%s338 + $0x30] sm:$0xff] %v709
        %877 = vst [vmem:[%s338 + $0x38] sm:$0xff] %v798
        %878 = vst [vmem:[%s338 + $0x40] sm:$0xff] %v712
        %879 = vst [vmem:[%s338 + $0x48] sm:$0xff] %v801
        %880 = vst [vmem:[%s338 + $0x50] sm:$0xff] %v714
        %881 = vst [vmem:[%s338 + $0x58] sm:$0xff] %v803
        %882 = vst [vmem:[%s338 + $0x60] sm:$0xff] %v717
        %883 = vst [vmem:[%s338 + $0x68] sm:$0xff] %v806
        %884 = vst [vmem:[%s338 + $0x70] sm:$0xff] %v719
        %885 = vst [vmem:[%s338 + $0x78] sm:$0xff] %v808
        %886 = vst [vmem:[%s338 + $0x80] sm:$0xff] %v722
        %887 = vst [vmem:[%s338 + $0x88] sm:$0xff] %v811
        %888 = vst [vmem:[%s338 + $0x90] sm:$0xff] %v724
        %889 = vst [vmem:[%s338 + $0x98] sm:$0xff] %v813
        %890 = vst [vmem:[%s338 + $0xa0] sm:$0xff] %v727
        %891 = vst [vmem:[%s338 + $0xa8] sm:$0xff] %v816
        %892 = vst [vmem:[%s338 + $0xb0] sm:$0xff] %v729
        %893 = vst [vmem:[%s338 + $0xb8] sm:$0xff] %v818
        %894 = vst [vmem:[%s338 + $0xc0] sm:$0xff] %v732
        %895 = vst [vmem:[%s338 + $0xc8] sm:$0xff] %v821
        %896 = vst [vmem:[%s338 + $0xd0] sm:$0xff] %v734
        %897 = vst [vmem:[%s338 + $0xd8] sm:$0xff] %v823
        %898 = vst [vmem:[%s338 + $0xe0] sm:$0xff] %v737
        %899 = vst [vmem:[%s338 + $0xe8] sm:$0xff] %v826
        %900 = vst [vmem:[%s338 + $0xf0] sm:$0xff] %v739
        %901 = vst [vmem:[%s338 + $0xf8] sm:$0xff] %v828
        %902 = vst [vmem:[%s338 + $0x100] sm:$0xff] %v742
        %903 = vst [vmem:[%s338 + $0x108] sm:$0xff] %v831
        %904 = vst [vmem:[%s338 + $0x110] sm:$0xff] %v744
        %905 = vst [vmem:[%s338 + $0x118] sm:$0xff] %v833
        %906 = vst [vmem:[%s338 + $0x120] sm:$0xff] %v747
        %907 = vst [vmem:[%s338 + $0x128] sm:$0xff] %v836
        %908 = vst [vmem:[%s338 + $0x130] sm:$0xff] %v749
        %909 = vst [vmem:[%s338 + $0x138] sm:$0xff] %v838
        %910 = vst [vmem:[%s338 + $0x140] sm:$0xff] %v752
        %911 = vst [vmem:[%s338 + $0x148] sm:$0xff] %v841
        %912 = vst [vmem:[%s338 + $0x150] sm:$0xff] %v754
        %913 = vst [vmem:[%s338 + $0x158] sm:$0xff] %v843
        %914 = vst [vmem:[%s338 + $0x160] sm:$0xff] %v757
        %915 = vst [vmem:[%s338 + $0x168] sm:$0xff] %v846
        %916 = vst [vmem:[%s338 + $0x170] sm:$0xff] %v759
        %917 = vst [vmem:[%s338 + $0x178] sm:$0xff] %v848
        %918 = vst [vmem:[%s338 + $0x180] sm:$0xff] %v762
        %919 = vst [vmem:[%s338 + $0x188] sm:$0xff] %v851
        %920 = vst [vmem:[%s338 + $0x190] sm:$0xff] %v764
        %921 = vst [vmem:[%s338 + $0x198] sm:$0xff] %v853
        %922 = vst [vmem:[%s338 + $0x1a0] sm:$0xff] %v767
        %923 = vst [vmem:[%s338 + $0x1a8] sm:$0xff] %v856
        %924 = vst [vmem:[%s338 + $0x1b0] sm:$0xff] %v769
        %925 = vst [vmem:[%s338 + $0x1b8] sm:$0xff] %v858
        %926 = vst [vmem:[%s338 + $0x1c0] sm:$0xff] %v772
        %927 = vst [vmem:[%s338 + $0x1c8] sm:$0xff] %v861
        %928 = vst [vmem:[%s338 + $0x1d0] sm:$0xff] %v774
        %929 = vst [vmem:[%s338 + $0x1d8] sm:$0xff] %v863
        %930 = vst [vmem:[%s338 + $0x1e0] sm:$0xff] %v777
        %931 = vst [vmem:[%s338 + $0x1e8] sm:$0xff] %v866
        %932 = vst [vmem:[%s338 + $0x1f0] sm:$0xff] %v779
        %933 = vst [vmem:[%s338 + $0x1f8] sm:$0xff] %v868
        %v934 = vld [vmem:[%s357] sm:$0xff]
        %v935 = vld [vmem:[%s357 + $0x8] sm:$0xff]
        %v936 = vld [vmem:[%s357 + $0x10] sm:$0xff]
        %v937 = vld [vmem:[%s357 + $0x18] sm:$0xff]
        %v938 = vld [vmem:[%s357 + $0x20] sm:$0xff]
        %v939 = vld [vmem:[%s357 + $0x28] sm:$0xff]
        %v940 = vld [vmem:[%s357 + $0x30] sm:$0xff]
        %v941 = vld [vmem:[%s357 + $0x38] sm:$0xff]
        %v942 = vld [vmem:[%s357 + $0x40] sm:$0xff]
        %v943 = vld [vmem:[%s357 + $0x48] sm:$0xff]
        %v944 = vld [vmem:[%s357 + $0x50] sm:$0xff]
        %v945 = vld [vmem:[%s357 + $0x58] sm:$0xff]
        %v946 = vld [vmem:[%s357 + $0x60] sm:$0xff]
        %v947 = vld [vmem:[%s357 + $0x68] sm:$0xff]
        %v948 = vld [vmem:[%s357 + $0x70] sm:$0xff]
        %v949 = vld [vmem:[%s357 + $0x78] sm:$0xff]
        %v950 = vld [vmem:[%s357 + $0x80] sm:$0xff]
        %v951 = vld [vmem:[%s357 + $0x88] sm:$0xff]
        %v952 = vld [vmem:[%s357 + $0x90] sm:$0xff]
        %v953 = vld [vmem:[%s357 + $0x98] sm:$0xff]
        %v954 = vld [vmem:[%s357 + $0xa0] sm:$0xff]
        %v955 = vld [vmem:[%s357 + $0xa8] sm:$0xff]
        %v956 = vld [vmem:[%s357 + $0xb0] sm:$0xff]
        %v957 = vld [vmem:[%s357 + $0xb8] sm:$0xff]
        %v958 = vld [vmem:[%s357 + $0xc0] sm:$0xff]
        %v959 = vld [vmem:[%s357 + $0xc8] sm:$0xff]
        %v960 = vld [vmem:[%s357 + $0xd0] sm:$0xff]
        %v961 = vld [vmem:[%s357 + $0xd8] sm:$0xff]
        %v962 = vld [vmem:[%s357 + $0xe0] sm:$0xff]
        %v963 = vld [vmem:[%s357 + $0xe8] sm:$0xff]
        %v964 = vld [vmem:[%s357 + $0xf0] sm:$0xff]
        %v965 = vld [vmem:[%s357 + $0xf8] sm:$0xff]
        %s966 = smul.u32 %s24, 256
        %v967 = vlaneseq
        %v968 = vand.u32 %v967, 127
        %v969 = vadd.s32 %v968, 128
        %v970 = vstv %s966
        %v971 = vadd.s32 %v970, %v968
        %v972 = vadd.s32 %v970, %v969
        %v973 = vld [vmem:[#allocation2] sm:$0xff]
        %v974 = vld [vmem:[#allocation2 + $0x8] sm:$0xff]
        %v975 = vld [vmem:[#allocation2 + $0x10] sm:$0xff]
        %v976 = vld [vmem:[#allocation2 + $0x18] sm:$0xff]
        %v977 = vld [vmem:[#allocation2 + $0x20] sm:$0xff]
        %v978 = vld [vmem:[#allocation2 + $0x28] sm:$0xff]
        %v979 = vld [vmem:[#allocation2 + $0x30] sm:$0xff]
        %v980 = vld [vmem:[#allocation2 + $0x38] sm:$0xff]
        %v981 = vld [vmem:[#allocation2 + $0x40] sm:$0xff]
        %v982 = vld [vmem:[#allocation2 + $0x48] sm:$0xff]
        %v983 = vld [vmem:[#allocation2 + $0x50] sm:$0xff]
        %v984 = vld [vmem:[#allocation2 + $0x58] sm:$0xff]
        %v985 = vld [vmem:[#allocation2 + $0x60] sm:$0xff]
        %v986 = vld [vmem:[#allocation2 + $0x68] sm:$0xff]
        %v987 = vld [vmem:[#allocation2 + $0x70] sm:$0xff]
        %v988 = vld [vmem:[#allocation2 + $0x78] sm:$0xff]
        %v989 = vld [vmem:[#allocation2 + $0x80] sm:$0xff]
        %v990 = vld [vmem:[#allocation2 + $0x88] sm:$0xff]
        %v991 = vld [vmem:[#allocation2 + $0x90] sm:$0xff]
        %v992 = vld [vmem:[#allocation2 + $0x98] sm:$0xff]
        %v993 = vld [vmem:[#allocation2 + $0xa0] sm:$0xff]
        %v994 = vld [vmem:[#allocation2 + $0xa8] sm:$0xff]
        %v995 = vld [vmem:[#allocation2 + $0xb0] sm:$0xff]
        %v996 = vld [vmem:[#allocation2 + $0xb8] sm:$0xff]
        %v997 = vld [vmem:[#allocation2 + $0xc0] sm:$0xff]
        %v998 = vld [vmem:[#allocation2 + $0xc8] sm:$0xff]
        %v999 = vld [vmem:[#allocation2 + $0xd0] sm:$0xff]
        %v1000 = vld [vmem:[#allocation2 + $0xd8] sm:$0xff]
        %v1001 = vld [vmem:[#allocation2 + $0xe0] sm:$0xff]
        %v1002 = vld [vmem:[#allocation2 + $0xe8] sm:$0xff]
        %v1003 = vld [vmem:[#allocation2 + $0xf0] sm:$0xff]
        %v1004 = vld [vmem:[#allocation2 + $0xf8] sm:$0xff]
        %v1005 = vmax.f32 %v702, %v791
        %1006 = vmax.xlane.f32.xlu0 %v1005
        %v1007 = vpop.xlane.xlu0 %1006
        %v1008 = vmax.f32 %v704, %v793
        %1009 = vmax.xlane.f32.xlu0 %v1008
        %v1010 = vpop.xlane.xlu0 %1009
        %v1011 = vmax.f32 %v707, %v796
        %1012 = vmax.xlane.f32.xlu0 %v1011
        %v1013 = vpop.xlane.xlu0 %1012
        %v1014 = vmax.f32 %v709, %v798
        %1015 = vmax.xlane.f32.xlu0 %v1014
        %v1016 = vpop.xlane.xlu0 %1015
        %v1017 = vmax.f32 %v712, %v801
        %1018 = vmax.xlane.f32.xlu0 %v1017
        %v1019 = vpop.xlane.xlu0 %1018
        %v1020 = vmax.f32 %v714, %v803
        %1021 = vmax.xlane.f32.xlu0 %v1020
        %v1022 = vpop.xlane.xlu0 %1021
        %v1023 = vmax.f32 %v717, %v806
        %1024 = vmax.xlane.f32.xlu0 %v1023
        %v1025 = vpop.xlane.xlu0 %1024
        %v1026 = vmax.f32 %v719, %v808
        %1027 = vmax.xlane.f32.xlu0 %v1026
        %v1028 = vpop.xlane.xlu0 %1027
        %v1029 = vmax.f32 %v722, %v811
        %1030 = vmax.xlane.f32.xlu0 %v1029
        %v1031 = vpop.xlane.xlu0 %1030
        %v1032 = vmax.f32 %v724, %v813
        %1033 = vmax.xlane.f32.xlu0 %v1032
        %v1034 = vpop.xlane.xlu0 %1033
        %v1035 = vmax.f32 %v727, %v816
        %1036 = vmax.xlane.f32.xlu0 %v1035
        %v1037 = vpop.xlane.xlu0 %1036
        %v1038 = vmax.f32 %v729, %v818
        %1039 = vmax.xlane.f32.xlu0 %v1038
        %v1040 = vpop.xlane.xlu0 %1039
        %v1041 = vmax.f32 %v732, %v821
        %1042 = vmax.xlane.f32.xlu0 %v1041
        %v1043 = vpop.xlane.xlu0 %1042
        %v1044 = vmax.f32 %v734, %v823
        %1045 = vmax.xlane.f32.xlu0 %v1044
        %v1046 = vpop.xlane.xlu0 %1045
        %v1047 = vmax.f32 %v737, %v826
        %1048 = vmax.xlane.f32.xlu0 %v1047
        %v1049 = vpop.xlane.xlu0 %1048
        %v1050 = vmax.f32 %v739, %v828
        %1051 = vmax.xlane.f32.xlu0 %v1050
        %v1052 = vpop.xlane.xlu0 %1051
        %v1053 = vmax.f32 %v742, %v831
        %1054 = vmax.xlane.f32.xlu0 %v1053
        %v1055 = vpop.xlane.xlu0 %1054
        %v1056 = vmax.f32 %v744, %v833
        %1057 = vmax.xlane.f32.xlu0 %v1056
        %v1058 = vpop.xlane.xlu0 %1057
        %v1059 = vmax.f32 %v747, %v836
        %1060 = vmax.xlane.f32.xlu0 %v1059
        %v1061 = vpop.xlane.xlu0 %1060
        %v1062 = vmax.f32 %v749, %v838
        %1063 = vmax.xlane.f32.xlu0 %v1062
        %v1064 = vpop.xlane.xlu0 %1063
        %v1065 = vmax.f32 %v752, %v841
        %1066 = vmax.xlane.f32.xlu0 %v1065
        %v1067 = vpop.xlane.xlu0 %1066
        %v1068 = vmax.f32 %v754, %v843
        %1069 = vmax.xlane.f32.xlu0 %v1068
        %v1070 = vpop.xlane.xlu0 %1069
        %v1071 = vmax.f32 %v757, %v846
        %1072 = vmax.xlane.f32.xlu0 %v1071
        %v1073 = vpop.xlane.xlu0 %1072
        %v1074 = vmax.f32 %v759, %v848
        %1075 = vmax.xlane.f32.xlu0 %v1074
        %v1076 = vpop.xlane.xlu0 %1075
        %v1077 = vmax.f32 %v762, %v851
        %1078 = vmax.xlane.f32.xlu0 %v1077
        %v1079 = vpop.xlane.xlu0 %1078
        %v1080 = vmax.f32 %v764, %v853
        %1081 = vmax.xlane.f32.xlu0 %v1080
        %v1082 = vpop.xlane.xlu0 %1081
        %v1083 = vmax.f32 %v767, %v856
        %1084 = vmax.xlane.f32.xlu0 %v1083
        %v1085 = vpop.xlane.xlu0 %1084
        %v1086 = vmax.f32 %v769, %v858
        %1087 = vmax.xlane.f32.xlu0 %v1086
        %v1088 = vpop.xlane.xlu0 %1087
        %v1089 = vmax.f32 %v772, %v861
        %1090 = vmax.xlane.f32.xlu0 %v1089
        %v1091 = vpop.xlane.xlu0 %1090
        %v1092 = vmax.f32 %v774, %v863
        %1093 = vmax.xlane.f32.xlu0 %v1092
        %v1094 = vpop.xlane.xlu0 %1093
        %v1095 = vmax.f32 %v777, %v866
        %1096 = vmax.xlane.f32.xlu0 %v1095
        %v1097 = vpop.xlane.xlu0 %1096
        %v1098 = vmax.f32 %v779, %v868
        %1099 = vmax.xlane.f32.xlu0 %v1098
        %v1100 = vpop.xlane.xlu0 %1099
        %v1101 = vmax.f32 %v973, %v1007
        %v1102 = vmax.f32 %v974, %v1010
        %v1103 = vmax.f32 %v975, %v1013
        %v1104 = vmax.f32 %v976, %v1016
        %v1105 = vmax.f32 %v977, %v1019
        %v1106 = vmax.f32 %v978, %v1022
        %v1107 = vmax.f32 %v979, %v1025
        %v1108 = vmax.f32 %v980, %v1028
        %v1109 = vmax.f32 %v981, %v1031
        %v1110 = vmax.f32 %v982, %v1034
        %v1111 = vmax.f32 %v983, %v1037
        %v1112 = vmax.f32 %v984, %v1040
        %v1113 = vmax.f32 %v985, %v1043
        %v1114 = vmax.f32 %v986, %v1046
        %v1115 = vmax.f32 %v987, %v1049
        %v1116 = vmax.f32 %v988, %v1052
        %v1117 = vmax.f32 %v989, %v1055
        %v1118 = vmax.f32 %v990, %v1058
        %v1119 = vmax.f32 %v991, %v1061
        %v1120 = vmax.f32 %v992, %v1064
        %v1121 = vmax.f32 %v993, %v1067
        %v1122 = vmax.f32 %v994, %v1070
        %v1123 = vmax.f32 %v995, %v1073
        %v1124 = vmax.f32 %v996, %v1076
        %v1125 = vmax.f32 %v997, %v1079
        %v1126 = vmax.f32 %v998, %v1082
        %v1127 = vmax.f32 %v999, %v1085
        %v1128 = vmax.f32 %v1000, %v1088
        %v1129 = vmax.f32 %v1001, %v1091
        %v1130 = vmax.f32 %v1002, %v1094
        %v1131 = vmax.f32 %v1003, %v1097
        %v1132 = vmax.f32 %v1004, %v1100
        %v1133 = vsub.f32 %v973, %v1101
        %v1134 = vsub.f32 %v974, %v1102
        %v1135 = vsub.f32 %v975, %v1103
        %v1136 = vsub.f32 %v976, %v1104
        %v1137 = vsub.f32 %v977, %v1105
        %v1138 = vsub.f32 %v978, %v1106
        %v1139 = vsub.f32 %v979, %v1107
        %v1140 = vsub.f32 %v980, %v1108
        %v1141 = vsub.f32 %v981, %v1109
        %v1142 = vsub.f32 %v982, %v1110
        %v1143 = vsub.f32 %v983, %v1111
        %v1144 = vsub.f32 %v984, %v1112
        %v1145 = vsub.f32 %v985, %v1113
        %v1146 = vsub.f32 %v986, %v1114
        %v1147 = vsub.f32 %v987, %v1115
        %v1148 = vsub.f32 %v988, %v1116
        %v1149 = vsub.f32 %v989, %v1117
        %v1150 = vsub.f32 %v990, %v1118
        %v1151 = vsub.f32 %v991, %v1119
        %v1152 = vsub.f32 %v992, %v1120
        %v1153 = vsub.f32 %v993, %v1121
        %v1154 = vsub.f32 %v994, %v1122
        %v1155 = vsub.f32 %v995, %v1123
        %v1156 = vsub.f32 %v996, %v1124
        %v1157 = vsub.f32 %v997, %v1125
        %v1158 = vsub.f32 %v998, %v1126
        %v1159 = vsub.f32 %v999, %v1127
        %v1160 = vsub.f32 %v1000, %v1128
        %v1161 = vsub.f32 %v1001, %v1129
        %v1162 = vsub.f32 %v1002, %v1130
        %v1163 = vsub.f32 %v1003, %v1131
        %v1164 = vsub.f32 %v1004, %v1132
        %v1165 = vmul.f32 %v1133, 1.442695
        %v1166 = vpow.pop %v1165
        %v1167 = vmul.f32 %v1134, 1.442695
        %v1168 = vpow.pop %v1167
        %v1169 = vmul.f32 %v1135, 1.442695
        %v1170 = vpow.pop %v1169
        %v1171 = vmul.f32 %v1136, 1.442695
        %v1172 = vpow.pop %v1171
        %v1173 = vmul.f32 %v1137, 1.442695
        %v1174 = vpow.pop %v1173
        %v1175 = vmul.f32 %v1138, 1.442695
        %v1176 = vpow.pop %v1175
        %v1177 = vmul.f32 %v1139, 1.442695
        %v1178 = vpow.pop %v1177
        %v1179 = vmul.f32 %v1140, 1.442695
        %v1180 = vpow.pop %v1179
        %v1181 = vmul.f32 %v1141, 1.442695
        %v1182 = vpow.pop %v1181
        %v1183 = vmul.f32 %v1142, 1.442695
        %v1184 = vpow.pop %v1183
        %v1185 = vmul.f32 %v1143, 1.442695
        %v1186 = vpow.pop %v1185
        %v1187 = vmul.f32 %v1144, 1.442695
        %v1188 = vpow.pop %v1187
        %v1189 = vmul.f32 %v1145, 1.442695
        %v1190 = vpow.pop %v1189
        %v1191 = vmul.f32 %v1146, 1.442695
        %v1192 = vpow.pop %v1191
        %v1193 = vmul.f32 %v1147, 1.442695
        %v1194 = vpow.pop %v1193
        %v1195 = vmul.f32 %v1148, 1.442695
        %v1196 = vpow.pop %v1195
        %v1197 = vmul.f32 %v1149, 1.442695
        %v1198 = vpow.pop %v1197
        %v1199 = vmul.f32 %v1150, 1.442695
        %v1200 = vpow.pop %v1199
        %v1201 = vmul.f32 %v1151, 1.442695
        %v1202 = vpow.pop %v1201
        %v1203 = vmul.f32 %v1152, 1.442695
        %v1204 = vpow.pop %v1203
        %v1205 = vmul.f32 %v1153, 1.442695
        %v1206 = vpow.pop %v1205
        %v1207 = vmul.f32 %v1154, 1.442695
        %v1208 = vpow.pop %v1207
        %v1209 = vmul.f32 %v1155, 1.442695
        %v1210 = vpow.pop %v1209
        %v1211 = vmul.f32 %v1156, 1.442695
        %v1212 = vpow.pop %v1211
        %v1213 = vmul.f32 %v1157, 1.442695
        %v1214 = vpow.pop %v1213
        %v1215 = vmul.f32 %v1158, 1.442695
        %v1216 = vpow.pop %v1215
        %v1217 = vmul.f32 %v1159, 1.442695
        %v1218 = vpow.pop %v1217
        %v1219 = vmul.f32 %v1160, 1.442695
        %v1220 = vpow.pop %v1219
        %v1221 = vmul.f32 %v1161, 1.442695
        %v1222 = vpow.pop %v1221
        %v1223 = vmul.f32 %v1162, 1.442695
        %v1224 = vpow.pop %v1223
        %v1225 = vmul.f32 %v1163, 1.442695
        %v1226 = vpow.pop %v1225
        %v1227 = vmul.f32 %v1164, 1.442695
        %v1228 = vpow.pop %v1227
        %v1229 = vld [vmem:[#allocation3] sm:$0xff]
        %v1230 = vld [vmem:[#allocation3 + $0x8] sm:$0xff]
        %v1231 = vld [vmem:[#allocation3 + $0x10] sm:$0xff]
        %v1232 = vld [vmem:[#allocation3 + $0x18] sm:$0xff]
        %v1233 = vld [vmem:[#allocation3 + $0x20] sm:$0xff]
        %v1234 = vld [vmem:[#allocation3 + $0x28] sm:$0xff]
        %v1235 = vld [vmem:[#allocation3 + $0x30] sm:$0xff]
        %v1236 = vld [vmem:[#allocation3 + $0x38] sm:$0xff]
        %v1237 = vld [vmem:[#allocation3 + $0x40] sm:$0xff]
        %v1238 = vld [vmem:[#allocation3 + $0x48] sm:$0xff]
        %v1239 = vld [vmem:[#allocation3 + $0x50] sm:$0xff]
        %v1240 = vld [vmem:[#allocation3 + $0x58] sm:$0xff]
        %v1241 = vld [vmem:[#allocation3 + $0x60] sm:$0xff]
        %v1242 = vld [vmem:[#allocation3 + $0x68] sm:$0xff]
        %v1243 = vld [vmem:[#allocation3 + $0x70] sm:$0xff]
        %v1244 = vld [vmem:[#allocation3 + $0x78] sm:$0xff]
        %v1245 = vld [vmem:[#allocation3 + $0x80] sm:$0xff]
        %v1246 = vld [vmem:[#allocation3 + $0x88] sm:$0xff]
        %v1247 = vld [vmem:[#allocation3 + $0x90] sm:$0xff]
        %v1248 = vld [vmem:[#allocation3 + $0x98] sm:$0xff]
        %v1249 = vld [vmem:[#allocation3 + $0xa0] sm:$0xff]
        %v1250 = vld [vmem:[#allocation3 + $0xa8] sm:$0xff]
        %v1251 = vld [vmem:[#allocation3 + $0xb0] sm:$0xff]
        %v1252 = vld [vmem:[#allocation3 + $0xb8] sm:$0xff]
        %v1253 = vld [vmem:[#allocation3 + $0xc0] sm:$0xff]
        %v1254 = vld [vmem:[#allocation3 + $0xc8] sm:$0xff]
        %v1255 = vld [vmem:[#allocation3 + $0xd0] sm:$0xff]
        %v1256 = vld [vmem:[#allocation3 + $0xd8] sm:$0xff]
        %v1257 = vld [vmem:[#allocation3 + $0xe0] sm:$0xff]
        %v1258 = vld [vmem:[#allocation3 + $0xe8] sm:$0xff]
        %v1259 = vld [vmem:[#allocation3 + $0xf0] sm:$0xff]
        %v1260 = vld [vmem:[#allocation3 + $0xf8] sm:$0xff]
        %v1261 = vmul.f32 %v1229, %v1166
        %v1262 = vmul.f32 %v1230, %v1168
        %v1263 = vmul.f32 %v1231, %v1170
        %v1264 = vmul.f32 %v1232, %v1172
        %v1265 = vmul.f32 %v1233, %v1174
        %v1266 = vmul.f32 %v1234, %v1176
        %v1267 = vmul.f32 %v1235, %v1178
        %v1268 = vmul.f32 %v1236, %v1180
        %v1269 = vmul.f32 %v1237, %v1182
        %v1270 = vmul.f32 %v1238, %v1184
        %v1271 = vmul.f32 %v1239, %v1186
        %v1272 = vmul.f32 %v1240, %v1188
        %v1273 = vmul.f32 %v1241, %v1190
        %v1274 = vmul.f32 %v1242, %v1192
        %v1275 = vmul.f32 %v1243, %v1194
        %v1276 = vmul.f32 %v1244, %v1196
        %v1277 = vmul.f32 %v1245, %v1198
        %v1278 = vmul.f32 %v1246, %v1200
        %v1279 = vmul.f32 %v1247, %v1202
        %v1280 = vmul.f32 %v1248, %v1204
        %v1281 = vmul.f32 %v1249, %v1206
        %v1282 = vmul.f32 %v1250, %v1208
        %v1283 = vmul.f32 %v1251, %v1210
        %v1284 = vmul.f32 %v1252, %v1212
        %v1285 = vmul.f32 %v1253, %v1214
        %v1286 = vmul.f32 %v1254, %v1216
        %v1287 = vmul.f32 %v1255, %v1218
        %v1288 = vmul.f32 %v1256, %v1220
        %v1289 = vmul.f32 %v1257, %v1222
        %v1290 = vmul.f32 %v1258, %v1224
        %v1291 = vmul.f32 %v1259, %v1226
        %v1292 = vmul.f32 %v1260, %v1228
        %1294 = vset.pattern.permute.xlu0 0
        %1295 = vperm.xlu0 %1294, %v1101
        %v1296 = vpop.permute.xlu0 %1295
        %1299 = vset.pattern.permute.xlu0 0
        %1300 = vperm.xlu0 %1299, %v1102
        %v1301 = vpop.permute.xlu0 %1300
        %1304 = vset.pattern.permute.xlu0 0
        %1305 = vperm.xlu0 %1304, %v1103
        %v1306 = vpop.permute.xlu0 %1305
        %1309 = vset.pattern.permute.xlu0 0
        %1310 = vperm.xlu0 %1309, %v1104
        %v1311 = vpop.permute.xlu0 %1310
        %1314 = vset.pattern.permute.xlu0 0
        %1315 = vperm.xlu0 %1314, %v1105
        %v1316 = vpop.permute.xlu0 %1315
        %1319 = vset.pattern.permute.xlu0 0
        %1320 = vperm.xlu0 %1319, %v1106
        %v1321 = vpop.permute.xlu0 %1320
        %1324 = vset.pattern.permute.xlu0 0
        %1325 = vperm.xlu0 %1324, %v1107
        %v1326 = vpop.permute.xlu0 %1325
        %1329 = vset.pattern.permute.xlu0 0
        %1330 = vperm.xlu0 %1329, %v1108
        %v1331 = vpop.permute.xlu0 %1330
        %1334 = vset.pattern.permute.xlu0 0
        %1335 = vperm.xlu0 %1334, %v1109
        %v1336 = vpop.permute.xlu0 %1335
        %1339 = vset.pattern.permute.xlu0 0
        %1340 = vperm.xlu0 %1339, %v1110
        %v1341 = vpop.permute.xlu0 %1340
        %1344 = vset.pattern.permute.xlu0 0
        %1345 = vperm.xlu0 %1344, %v1111
        %v1346 = vpop.permute.xlu0 %1345
        %1349 = vset.pattern.permute.xlu0 0
        %1350 = vperm.xlu0 %1349, %v1112
        %v1351 = vpop.permute.xlu0 %1350
        %1354 = vset.pattern.permute.xlu0 0
        %1355 = vperm.xlu0 %1354, %v1113
        %v1356 = vpop.permute.xlu0 %1355
        %1359 = vset.pattern.permute.xlu0 0
        %1360 = vperm.xlu0 %1359, %v1114
        %v1361 = vpop.permute.xlu0 %1360
        %1364 = vset.pattern.permute.xlu0 0
        %1365 = vperm.xlu0 %1364, %v1115
        %v1366 = vpop.permute.xlu0 %1365
        %1369 = vset.pattern.permute.xlu0 0
        %1370 = vperm.xlu0 %1369, %v1116
        %v1371 = vpop.permute.xlu0 %1370
        %1374 = vset.pattern.permute.xlu0 0
        %1375 = vperm.xlu0 %1374, %v1117
        %v1376 = vpop.permute.xlu0 %1375
        %1379 = vset.pattern.permute.xlu0 0
        %1380 = vperm.xlu0 %1379, %v1118
        %v1381 = vpop.permute.xlu0 %1380
        %1384 = vset.pattern.permute.xlu0 0
        %1385 = vperm.xlu0 %1384, %v1119
        %v1386 = vpop.permute.xlu0 %1385
        %1389 = vset.pattern.permute.xlu0 0
        %1390 = vperm.xlu0 %1389, %v1120
        %v1391 = vpop.permute.xlu0 %1390
        %1394 = vset.pattern.permute.xlu0 0
        %1395 = vperm.xlu0 %1394, %v1121
        %v1396 = vpop.permute.xlu0 %1395
        %1399 = vset.pattern.permute.xlu0 0
        %1400 = vperm.xlu0 %1399, %v1122
        %v1401 = vpop.permute.xlu0 %1400
        %1404 = vset.pattern.permute.xlu0 0
        %1405 = vperm.xlu0 %1404, %v1123
        %v1406 = vpop.permute.xlu0 %1405
        %1409 = vset.pattern.permute.xlu0 0
        %1410 = vperm.xlu0 %1409, %v1124
        %v1411 = vpop.permute.xlu0 %1410
        %1414 = vset.pattern.permute.xlu0 0
        %1415 = vperm.xlu0 %1414, %v1125
        %v1416 = vpop.permute.xlu0 %1415
        %1419 = vset.pattern.permute.xlu0 0
        %1420 = vperm.xlu0 %1419, %v1126
        %v1421 = vpop.permute.xlu0 %1420
        %1424 = vset.pattern.permute.xlu0 0
        %1425 = vperm.xlu0 %1424, %v1127
        %v1426 = vpop.permute.xlu0 %1425
        %1429 = vset.pattern.permute.xlu0 0
        %1430 = vperm.xlu0 %1429, %v1128
        %v1431 = vpop.permute.xlu0 %1430
        %1434 = vset.pattern.permute.xlu0 0
        %1435 = vperm.xlu0 %1434, %v1129
        %v1436 = vpop.permute.xlu0 %1435
        %1439 = vset.pattern.permute.xlu0 0
        %1440 = vperm.xlu0 %1439, %v1130
        %v1441 = vpop.permute.xlu0 %1440
        %1444 = vset.pattern.permute.xlu0 0
        %1445 = vperm.xlu0 %1444, %v1131
        %v1446 = vpop.permute.xlu0 %1445
        %1449 = vset.pattern.permute.xlu0 0
        %1450 = vperm.xlu0 %1449, %v1132
        %v1451 = vpop.permute.xlu0 %1450
        %v1453 = vsub.f32 %v702, %v1296
        %v1454 = vsub.f32 %v791, %v1296
        %v1455 = vsub.f32 %v704, %v1301
        %v1456 = vsub.f32 %v793, %v1301
        %v1457 = vsub.f32 %v707, %v1306
        %v1458 = vsub.f32 %v796, %v1306
        %v1459 = vsub.f32 %v709, %v1311
        %v1460 = vsub.f32 %v798, %v1311
        %v1461 = vsub.f32 %v712, %v1316
        %v1462 = vsub.f32 %v801, %v1316
        %v1463 = vsub.f32 %v714, %v1321
        %v1464 = vsub.f32 %v803, %v1321
        %v1465 = vsub.f32 %v717, %v1326
        %v1466 = vsub.f32 %v806, %v1326
        %v1467 = vsub.f32 %v719, %v1331
        %v1468 = vsub.f32 %v808, %v1331
        %v1469 = vsub.f32 %v722, %v1336
        %v1470 = vsub.f32 %v811, %v1336
        %v1471 = vsub.f32 %v724, %v1341
        %v1472 = vsub.f32 %v813, %v1341
        %v1473 = vsub.f32 %v727, %v1346
        %v1474 = vsub.f32 %v816, %v1346
        %v1475 = vsub.f32 %v729, %v1351
        %v1476 = vsub.f32 %v818, %v1351
        %v1477 = vsub.f32 %v732, %v1356
        %v1478 = vsub.f32 %v821, %v1356
        %v1479 = vsub.f32 %v734, %v1361
        %v1480 = vsub.f32 %v823, %v1361
        %v1481 = vsub.f32 %v737, %v1366
        %v1482 = vsub.f32 %v826, %v1366
        %v1483 = vsub.f32 %v739, %v1371
        %v1484 = vsub.f32 %v828, %v1371
        %v1485 = vsub.f32 %v742, %v1376
        %v1486 = vsub.f32 %v831, %v1376
        %v1487 = vsub.f32 %v744, %v1381
        %v1488 = vsub.f32 %v833, %v1381
        %v1489 = vsub.f32 %v747, %v1386
        %v1490 = vsub.f32 %v836, %v1386
        %v1491 = vsub.f32 %v749, %v1391
        %v1492 = vsub.f32 %v838, %v1391
        %v1493 = vsub.f32 %v752, %v1396
        %v1494 = vsub.f32 %v841, %v1396
        %v1495 = vsub.f32 %v754, %v1401
        %v1496 = vsub.f32 %v843, %v1401
        %v1497 = vsub.f32 %v757, %v1406
        %v1498 = vsub.f32 %v846, %v1406
        %v1499 = vsub.f32 %v759, %v1411
        %v1500 = vsub.f32 %v848, %v1411
        %v1501 = vsub.f32 %v762, %v1416
        %v1502 = vsub.f32 %v851, %v1416
        %v1503 = vsub.f32 %v764, %v1421
        %v1504 = vsub.f32 %v853, %v1421
        %v1505 = vsub.f32 %v767, %v1426
        %v1506 = vsub.f32 %v856, %v1426
        %v1507 = vsub.f32 %v769, %v1431
        %v1508 = vsub.f32 %v858, %v1431
        %v1509 = vsub.f32 %v772, %v1436
        %v1510 = vsub.f32 %v861, %v1436
        %v1511 = vsub.f32 %v774, %v1441
        %v1512 = vsub.f32 %v863, %v1441
        %v1513 = vsub.f32 %v777, %v1446
        %v1514 = vsub.f32 %v866, %v1446
        %v1515 = vsub.f32 %v779, %v1451
        %v1516 = vsub.f32 %v868, %v1451
        %v1517 = vmul.f32 %v1453, 1.442695
        %v1518 = vpow.pop %v1517
        %v1519 = vmul.f32 %v1454, 1.442695
        %v1520 = vpow.pop %v1519
        %v1521 = vmul.f32 %v1455, 1.442695
        %v1522 = vpow.pop %v1521
        %v1523 = vmul.f32 %v1456, 1.442695
        %v1524 = vpow.pop %v1523
        %v1525 = vmul.f32 %v1457, 1.442695
        %v1526 = vpow.pop %v1525
        %v1527 = vmul.f32 %v1458, 1.442695
        %v1528 = vpow.pop %v1527
        %v1529 = vmul.f32 %v1459, 1.442695
        %v1530 = vpow.pop %v1529
        %v1531 = vmul.f32 %v1460, 1.442695
        %v1532 = vpow.pop %v1531
        %v1533 = vmul.f32 %v1461, 1.442695
        %v1534 = vpow.pop %v1533
        %v1535 = vmul.f32 %v1462, 1.442695
        %v1536 = vpow.pop %v1535
        %v1537 = vmul.f32 %v1463, 1.442695
        %v1538 = vpow.pop %v1537
        %v1539 = vmul.f32 %v1464, 1.442695
        %v1540 = vpow.pop %v1539
        %v1541 = vmul.f32 %v1465, 1.442695
        %v1542 = vpow.pop %v1541
        %v1543 = vmul.f32 %v1466, 1.442695
        %v1544 = vpow.pop %v1543
        %v1545 = vmul.f32 %v1467, 1.442695
        %v1546 = vpow.pop %v1545
        %v1547 = vmul.f32 %v1468, 1.442695
        %v1548 = vpow.pop %v1547
        %v1549 = vmul.f32 %v1469, 1.442695
        %v1550 = vpow.pop %v1549
        %v1551 = vmul.f32 %v1470, 1.442695
        %v1552 = vpow.pop %v1551
        %v1553 = vmul.f32 %v1471, 1.442695
        %v1554 = vpow.pop %v1553
        %v1555 = vmul.f32 %v1472, 1.442695
        %v1556 = vpow.pop %v1555
        %v1557 = vmul.f32 %v1473, 1.442695
        %v1558 = vpow.pop %v1557
        %v1559 = vmul.f32 %v1474, 1.442695
        %v1560 = vpow.pop %v1559
        %v1561 = vmul.f32 %v1475, 1.442695
        %v1562 = vpow.pop %v1561
        %v1563 = vmul.f32 %v1476, 1.442695
        %v1564 = vpow.pop %v1563
        %v1565 = vmul.f32 %v1477, 1.442695
        %v1566 = vpow.pop %v1565
        %v1567 = vmul.f32 %v1478, 1.442695
        %v1568 = vpow.pop %v1567
        %v1569 = vmul.f32 %v1479, 1.442695
        %v1570 = vpow.pop %v1569
        %v1571 = vmul.f32 %v1480, 1.442695
        %v1572 = vpow.pop %v1571
        %v1573 = vmul.f32 %v1481, 1.442695
        %v1574 = vpow.pop %v1573
        %v1575 = vmul.f32 %v1482, 1.442695
        %v1576 = vpow.pop %v1575
        %v1577 = vmul.f32 %v1483, 1.442695
        %v1578 = vpow.pop %v1577
        %v1579 = vmul.f32 %v1484, 1.442695
        %v1580 = vpow.pop %v1579
        %v1581 = vmul.f32 %v1485, 1.442695
        %v1582 = vpow.pop %v1581
        %v1583 = vmul.f32 %v1486, 1.442695
        %v1584 = vpow.pop %v1583
        %v1585 = vmul.f32 %v1487, 1.442695
        %v1586 = vpow.pop %v1585
        %v1587 = vmul.f32 %v1488, 1.442695
        %v1588 = vpow.pop %v1587
        %v1589 = vmul.f32 %v1489, 1.442695
        %v1590 = vpow.pop %v1589
        %v1591 = vmul.f32 %v1490, 1.442695
        %v1592 = vpow.pop %v1591
        %v1593 = vmul.f32 %v1491, 1.442695
        %v1594 = vpow.pop %v1593
        %v1595 = vmul.f32 %v1492, 1.442695
        %v1596 = vpow.pop %v1595
        %v1597 = vmul.f32 %v1493, 1.442695
        %v1598 = vpow.pop %v1597
        %v1599 = vmul.f32 %v1494, 1.442695
        %v1600 = vpow.pop %v1599
        %v1601 = vmul.f32 %v1495, 1.442695
        %v1602 = vpow.pop %v1601
        %v1603 = vmul.f32 %v1496, 1.442695
        %v1604 = vpow.pop %v1603
        %v1605 = vmul.f32 %v1497, 1.442695
        %v1606 = vpow.pop %v1605
        %v1607 = vmul.f32 %v1498, 1.442695
        %v1608 = vpow.pop %v1607
        %v1609 = vmul.f32 %v1499, 1.442695
        %v1610 = vpow.pop %v1609
        %v1611 = vmul.f32 %v1500, 1.442695
        %v1612 = vpow.pop %v1611
        %v1613 = vmul.f32 %v1501, 1.442695
        %v1614 = vpow.pop %v1613
        %v1615 = vmul.f32 %v1502, 1.442695
        %v1616 = vpow.pop %v1615
        %v1617 = vmul.f32 %v1503, 1.442695
        %v1618 = vpow.pop %v1617
        %v1619 = vmul.f32 %v1504, 1.442695
        %v1620 = vpow.pop %v1619
        %v1621 = vmul.f32 %v1505, 1.442695
        %v1622 = vpow.pop %v1621
        %v1623 = vmul.f32 %v1506, 1.442695
        %v1624 = vpow.pop %v1623
        %v1625 = vmul.f32 %v1507, 1.442695
        %v1626 = vpow.pop %v1625
        %v1627 = vmul.f32 %v1508, 1.442695
        %v1628 = vpow.pop %v1627
        %v1629 = vmul.f32 %v1509, 1.442695
        %v1630 = vpow.pop %v1629
        %v1631 = vmul.f32 %v1510, 1.442695
        %v1632 = vpow.pop %v1631
        %v1633 = vmul.f32 %v1511, 1.442695
        %v1634 = vpow.pop %v1633
        %v1635 = vmul.f32 %v1512, 1.442695
        %v1636 = vpow.pop %v1635
        %v1637 = vmul.f32 %v1513, 1.442695
        %v1638 = vpow.pop %v1637
        %v1639 = vmul.f32 %v1514, 1.442695
        %v1640 = vpow.pop %v1639
        %v1641 = vmul.f32 %v1515, 1.442695
        %v1642 = vpow.pop %v1641
        %v1643 = vmul.f32 %v1516, 1.442695
        %v1644 = vpow.pop %v1643
        %v1645 = vadd.f32 %v1518, %v1520
        %1646 = vadd.xlane.f32.xlu0 %v1645
        %v1647 = vpop.xlane.xlu0 %1646
        %v1648 = vadd.f32 %v1522, %v1524
        %1649 = vadd.xlane.f32.xlu0 %v1648
        %v1650 = vpop.xlane.xlu0 %1649
        %v1651 = vadd.f32 %v1526, %v1528
        %1652 = vadd.xlane.f32.xlu0 %v1651
        %v1653 = vpop.xlane.xlu0 %1652
        %v1654 = vadd.f32 %v1530, %v1532
        %1655 = vadd.xlane.f32.xlu0 %v1654
        %v1656 = vpop.xlane.xlu0 %1655
        %v1657 = vadd.f32 %v1534, %v1536
        %1658 = vadd.xlane.f32.xlu0 %v1657
        %v1659 = vpop.xlane.xlu0 %1658
        %v1660 = vadd.f32 %v1538, %v1540
        %1661 = vadd.xlane.f32.xlu0 %v1660
        %v1662 = vpop.xlane.xlu0 %1661
        %v1663 = vadd.f32 %v1542, %v1544
        %1664 = vadd.xlane.f32.xlu0 %v1663
        %v1665 = vpop.xlane.xlu0 %1664
        %v1666 = vadd.f32 %v1546, %v1548
        %1667 = vadd.xlane.f32.xlu0 %v1666
        %v1668 = vpop.xlane.xlu0 %1667
        %v1669 = vadd.f32 %v1550, %v1552
        %1670 = vadd.xlane.f32.xlu0 %v1669
        %v1671 = vpop.xlane.xlu0 %1670
        %v1672 = vadd.f32 %v1554, %v1556
        %1673 = vadd.xlane.f32.xlu0 %v1672
        %v1674 = vpop.xlane.xlu0 %1673
        %v1675 = vadd.f32 %v1558, %v1560
        %1676 = vadd.xlane.f32.xlu0 %v1675
        %v1677 = vpop.xlane.xlu0 %1676
        %v1678 = vadd.f32 %v1562, %v1564
        %1679 = vadd.xlane.f32.xlu0 %v1678
        %v1680 = vpop.xlane.xlu0 %1679
        %v1681 = vadd.f32 %v1566, %v1568
        %1682 = vadd.xlane.f32.xlu0 %v1681
        %v1683 = vpop.xlane.xlu0 %1682
        %v1684 = vadd.f32 %v1570, %v1572
        %1685 = vadd.xlane.f32.xlu0 %v1684
        %v1686 = vpop.xlane.xlu0 %1685
        %v1687 = vadd.f32 %v1574, %v1576
        %1688 = vadd.xlane.f32.xlu0 %v1687
        %v1689 = vpop.xlane.xlu0 %1688
        %v1690 = vadd.f32 %v1578, %v1580
        %1691 = vadd.xlane.f32.xlu0 %v1690
        %v1692 = vpop.xlane.xlu0 %1691
        %v1693 = vadd.f32 %v1582, %v1584
        %1694 = vadd.xlane.f32.xlu0 %v1693
        %v1695 = vpop.xlane.xlu0 %1694
        %v1696 = vadd.f32 %v1586, %v1588
        %1697 = vadd.xlane.f32.xlu0 %v1696
        %v1698 = vpop.xlane.xlu0 %1697
        %v1699 = vadd.f32 %v1590, %v1592
        %1700 = vadd.xlane.f32.xlu0 %v1699
        %v1701 = vpop.xlane.xlu0 %1700
        %v1702 = vadd.f32 %v1594, %v1596
        %1703 = vadd.xlane.f32.xlu0 %v1702
        %v1704 = vpop.xlane.xlu0 %1703
        %v1705 = vadd.f32 %v1598, %v1600
        %1706 = vadd.xlane.f32.xlu0 %v1705
        %v1707 = vpop.xlane.xlu0 %1706
        %v1708 = vadd.f32 %v1602, %v1604
        %1709 = vadd.xlane.f32.xlu0 %v1708
        %v1710 = vpop.xlane.xlu0 %1709
        %v1711 = vadd.f32 %v1606, %v1608
        %1712 = vadd.xlane.f32.xlu0 %v1711
        %v1713 = vpop.xlane.xlu0 %1712
        %v1714 = vadd.f32 %v1610, %v1612
        %1715 = vadd.xlane.f32.xlu0 %v1714
        %v1716 = vpop.xlane.xlu0 %1715
        %v1717 = vadd.f32 %v1614, %v1616
        %1718 = vadd.xlane.f32.xlu0 %v1717
        %v1719 = vpop.xlane.xlu0 %1718
        %v1720 = vadd.f32 %v1618, %v1620
        %1721 = vadd.xlane.f32.xlu0 %v1720
        %v1722 = vpop.xlane.xlu0 %1721
        %v1723 = vadd.f32 %v1622, %v1624
        %1724 = vadd.xlane.f32.xlu0 %v1723
        %v1725 = vpop.xlane.xlu0 %1724
        %v1726 = vadd.f32 %v1626, %v1628
        %1727 = vadd.xlane.f32.xlu0 %v1726
        %v1728 = vpop.xlane.xlu0 %1727
        %v1729 = vadd.f32 %v1630, %v1632
        %1730 = vadd.xlane.f32.xlu0 %v1729
        %v1731 = vpop.xlane.xlu0 %1730
        %v1732 = vadd.f32 %v1634, %v1636
        %1733 = vadd.xlane.f32.xlu0 %v1732
        %v1734 = vpop.xlane.xlu0 %1733
        %v1735 = vadd.f32 %v1638, %v1640
        %1736 = vadd.xlane.f32.xlu0 %v1735
        %v1737 = vpop.xlane.xlu0 %1736
        %v1738 = vadd.f32 %v1642, %v1644
        %1739 = vadd.xlane.f32.xlu0 %v1738
        %v1740 = vpop.xlane.xlu0 %1739
        %v1741 = vadd.f32 %v1261, %v1647
        %v1742 = vadd.f32 %v1262, %v1650
        %v1743 = vadd.f32 %v1263, %v1653
        %v1744 = vadd.f32 %v1264, %v1656
        %v1745 = vadd.f32 %v1265, %v1659
        %v1746 = vadd.f32 %v1266, %v1662
        %v1747 = vadd.f32 %v1267, %v1665
        %v1748 = vadd.f32 %v1268, %v1668
        %v1749 = vadd.f32 %v1269, %v1671
        %v1750 = vadd.f32 %v1270, %v1674
        %v1751 = vadd.f32 %v1271, %v1677
        %v1752 = vadd.f32 %v1272, %v1680
        %v1753 = vadd.f32 %v1273, %v1683
        %v1754 = vadd.f32 %v1274, %v1686
        %v1755 = vadd.f32 %v1275, %v1689
        %v1756 = vadd.f32 %v1276, %v1692
        %v1757 = vadd.f32 %v1277, %v1695
        %v1758 = vadd.f32 %v1278, %v1698
        %v1759 = vadd.f32 %v1279, %v1701
        %v1760 = vadd.f32 %v1280, %v1704
        %v1761 = vadd.f32 %v1281, %v1707
        %v1762 = vadd.f32 %v1282, %v1710
        %v1763 = vadd.f32 %v1283, %v1713
        %v1764 = vadd.f32 %v1284, %v1716
        %v1765 = vadd.f32 %v1285, %v1719
        %v1766 = vadd.f32 %v1286, %v1722
        %v1767 = vadd.f32 %v1287, %v1725
        %v1768 = vadd.f32 %v1288, %v1728
        %v1769 = vadd.f32 %v1289, %v1731
        %v1770 = vadd.f32 %v1290, %v1734
        %v1771 = vadd.f32 %v1291, %v1737
        %v1772 = vadd.f32 %v1292, %v1740
        %vm1773 = vcmask 7168
        %1774 = vst.msk [vmem:[#allocation3] sm:$0xff] %vm1773, %v1741
        %1775 = vst.msk [vmem:[#allocation3 + $0x8] sm:$0xff] %vm1773, %v1742
        %1776 = vst.msk [vmem:[#allocation3 + $0x10] sm:$0xff] %vm1773, %v1743
        %1777 = vst.msk [vmem:[#allocation3 + $0x18] sm:$0xff] %vm1773, %v1744
        %1778 = vst.msk [vmem:[#allocation3 + $0x20] sm:$0xff] %vm1773, %v1745
        %1779 = vst.msk [vmem:[#allocation3 + $0x28] sm:$0xff] %vm1773, %v1746
        %1780 = vst.msk [vmem:[#allocation3 + $0x30] sm:$0xff] %vm1773, %v1747
        %1781 = vst.msk [vmem:[#allocation3 + $0x38] sm:$0xff] %vm1773, %v1748
        %1782 = vst.msk [vmem:[#allocation3 + $0x40] sm:$0xff] %vm1773, %v1749
        %1783 = vst.msk [vmem:[#allocation3 + $0x48] sm:$0xff] %vm1773, %v1750
        %1784 = vst.msk [vmem:[#allocation3 + $0x50] sm:$0xff] %vm1773, %v1751
        %1785 = vst.msk [vmem:[#allocation3 + $0x58] sm:$0xff] %vm1773, %v1752
        %1786 = vst.msk [vmem:[#allocation3 + $0x60] sm:$0xff] %vm1773, %v1753
        %1787 = vst.msk [vmem:[#allocation3 + $0x68] sm:$0xff] %vm1773, %v1754
        %1788 = vst.msk [vmem:[#allocation3 + $0x70] sm:$0xff] %vm1773, %v1755
        %1789 = vst.msk [vmem:[#allocation3 + $0x78] sm:$0xff] %vm1773, %v1756
        %1790 = vst.msk [vmem:[#allocation3 + $0x80] sm:$0xff] %vm1773, %v1757
        %1791 = vst.msk [vmem:[#allocation3 + $0x88] sm:$0xff] %vm1773, %v1758
        %1792 = vst.msk [vmem:[#allocation3 + $0x90] sm:$0xff] %vm1773, %v1759
        %1793 = vst.msk [vmem:[#allocation3 + $0x98] sm:$0xff] %vm1773, %v1760
        %1794 = vst.msk [vmem:[#allocation3 + $0xa0] sm:$0xff] %vm1773, %v1761
        %1795 = vst.msk [vmem:[#allocation3 + $0xa8] sm:$0xff] %vm1773, %v1762
        %1796 = vst.msk [vmem:[#allocation3 + $0xb0] sm:$0xff] %vm1773, %v1763
        %1797 = vst.msk [vmem:[#allocation3 + $0xb8] sm:$0xff] %vm1773, %v1764
        %1798 = vst.msk [vmem:[#allocation3 + $0xc0] sm:$0xff] %vm1773, %v1765
        %1799 = vst.msk [vmem:[#allocation3 + $0xc8] sm:$0xff] %vm1773, %v1766
        %1800 = vst.msk [vmem:[#allocation3 + $0xd0] sm:$0xff] %vm1773, %v1767
        %1801 = vst.msk [vmem:[#allocation3 + $0xd8] sm:$0xff] %vm1773, %v1768
        %1802 = vst.msk [vmem:[#allocation3 + $0xe0] sm:$0xff] %vm1773, %v1769
        %1803 = vst.msk [vmem:[#allocation3 + $0xe8] sm:$0xff] %vm1773, %v1770
        %1804 = vst.msk [vmem:[#allocation3 + $0xf0] sm:$0xff] %vm1773, %v1771
        %1805 = vst.msk [vmem:[#allocation3 + $0xf8] sm:$0xff] %vm1773, %v1772
        %1806 = vst.msk [vmem:[#allocation2] sm:$0xff] %vm1773, %v1101
        %1807 = vst.msk [vmem:[#allocation2 + $0x8] sm:$0xff] %vm1773, %v1102
        %1808 = vst.msk [vmem:[#allocation2 + $0x10] sm:$0xff] %vm1773, %v1103
        %1809 = vst.msk [vmem:[#allocation2 + $0x18] sm:$0xff] %vm1773, %v1104
        %1810 = vst.msk [vmem:[#allocation2 + $0x20] sm:$0xff] %vm1773, %v1105
        %1811 = vst.msk [vmem:[#allocation2 + $0x28] sm:$0xff] %vm1773, %v1106
        %1812 = vst.msk [vmem:[#allocation2 + $0x30] sm:$0xff] %vm1773, %v1107
        %1813 = vst.msk [vmem:[#allocation2 + $0x38] sm:$0xff] %vm1773, %v1108
        %1814 = vst.msk [vmem:[#allocation2 + $0x40] sm:$0xff] %vm1773, %v1109
        %1815 = vst.msk [vmem:[#allocation2 + $0x48] sm:$0xff] %vm1773, %v1110
        %1816 = vst.msk [vmem:[#allocation2 + $0x50] sm:$0xff] %vm1773, %v1111
        %1817 = vst.msk [vmem:[#allocation2 + $0x58] sm:$0xff] %vm1773, %v1112
        %1818 = vst.msk [vmem:[#allocation2 + $0x60] sm:$0xff] %vm1773, %v1113
        %1819 = vst.msk [vmem:[#allocation2 + $0x68] sm:$0xff] %vm1773, %v1114
        %1820 = vst.msk [vmem:[#allocation2 + $0x70] sm:$0xff] %vm1773, %v1115
        %1821 = vst.msk [vmem:[#allocation2 + $0x78] sm:$0xff] %vm1773, %v1116
        %1822 = vst.msk [vmem:[#allocation2 + $0x80] sm:$0xff] %vm1773, %v1117
        %1823 = vst.msk [vmem:[#allocation2 + $0x88] sm:$0xff] %vm1773, %v1118
        %1824 = vst.msk [vmem:[#allocation2 + $0x90] sm:$0xff] %vm1773, %v1119
        %1825 = vst.msk [vmem:[#allocation2 + $0x98] sm:$0xff] %vm1773, %v1120
        %1826 = vst.msk [vmem:[#allocation2 + $0xa0] sm:$0xff] %vm1773, %v1121
        %1827 = vst.msk [vmem:[#allocation2 + $0xa8] sm:$0xff] %vm1773, %v1122
        %1828 = vst.msk [vmem:[#allocation2 + $0xb0] sm:$0xff] %vm1773, %v1123
        %1829 = vst.msk [vmem:[#allocation2 + $0xb8] sm:$0xff] %vm1773, %v1124
        %1830 = vst.msk [vmem:[#allocation2 + $0xc0] sm:$0xff] %vm1773, %v1125
        %1831 = vst.msk [vmem:[#allocation2 + $0xc8] sm:$0xff] %vm1773, %v1126
        %1832 = vst.msk [vmem:[#allocation2 + $0xd0] sm:$0xff] %vm1773, %v1127
        %1833 = vst.msk [vmem:[#allocation2 + $0xd8] sm:$0xff] %vm1773, %v1128
        %1834 = vst.msk [vmem:[#allocation2 + $0xe0] sm:$0xff] %vm1773, %v1129
        %1835 = vst.msk [vmem:[#allocation2 + $0xe8] sm:$0xff] %vm1773, %v1130
        %1836 = vst.msk [vmem:[#allocation2 + $0xf0] sm:$0xff] %vm1773, %v1131
        %1837 = vst.msk [vmem:[#allocation2 + $0xf8] sm:$0xff] %vm1773, %v1132
        %v1838 = vld [vmem:[#allocation4] sm:$0xff]
        %v1839 = vld [vmem:[#allocation4 + $0x8] sm:$0xff]
        %v1840 = vld [vmem:[#allocation4 + $0x10] sm:$0xff]
        %v1841 = vld [vmem:[#allocation4 + $0x18] sm:$0xff]
        %v1842 = vld [vmem:[#allocation4 + $0x20] sm:$0xff]
        %v1843 = vld [vmem:[#allocation4 + $0x28] sm:$0xff]
        %v1844 = vld [vmem:[#allocation4 + $0x30] sm:$0xff]
        %v1845 = vld [vmem:[#allocation4 + $0x38] sm:$0xff]
        %v1846 = vld [vmem:[#allocation4 + $0x40] sm:$0xff]
        %v1847 = vld [vmem:[#allocation4 + $0x48] sm:$0xff]
        %v1848 = vld [vmem:[#allocation4 + $0x50] sm:$0xff]
        %v1849 = vld [vmem:[#allocation4 + $0x58] sm:$0xff]
        %v1850 = vld [vmem:[#allocation4 + $0x60] sm:$0xff]
        %v1851 = vld [vmem:[#allocation4 + $0x68] sm:$0xff]
        %v1852 = vld [vmem:[#allocation4 + $0x70] sm:$0xff]
        %v1853 = vld [vmem:[#allocation4 + $0x78] sm:$0xff]
        %v1854 = vld [vmem:[#allocation4 + $0x80] sm:$0xff]
        %v1855 = vld [vmem:[#allocation4 + $0x88] sm:$0xff]
        %v1856 = vld [vmem:[#allocation4 + $0x90] sm:$0xff]
        %v1857 = vld [vmem:[#allocation4 + $0x98] sm:$0xff]
        %v1858 = vld [vmem:[#allocation4 + $0xa0] sm:$0xff]
        %v1859 = vld [vmem:[#allocation4 + $0xa8] sm:$0xff]
        %v1860 = vld [vmem:[#allocation4 + $0xb0] sm:$0xff]
        %v1861 = vld [vmem:[#allocation4 + $0xb8] sm:$0xff]
        %v1862 = vld [vmem:[#allocation4 + $0xc0] sm:$0xff]
        %v1863 = vld [vmem:[#allocation4 + $0xc8] sm:$0xff]
        %v1864 = vld [vmem:[#allocation4 + $0xd0] sm:$0xff]
        %v1865 = vld [vmem:[#allocation4 + $0xd8] sm:$0xff]
        %v1866 = vld [vmem:[#allocation4 + $0xe0] sm:$0xff]
        %v1867 = vld [vmem:[#allocation4 + $0xe8] sm:$0xff]
        %v1868 = vld [vmem:[#allocation4 + $0xf0] sm:$0xff]
        %v1869 = vld [vmem:[#allocation4 + $0xf8] sm:$0xff]
        %1870 = vset.pattern.permute.xlu0 0
        %1871 = vperm.xlu0 %1870, %v934
        %v1872 = vpop.permute.xlu0 %1871
        %1873 = vset.pattern.permute.xlu0 0
        %1874 = vperm.xlu0 %1873, %v935
        %v1875 = vpop.permute.xlu0 %1874
        %1876 = vset.pattern.permute.xlu0 0
        %1877 = vperm.xlu0 %1876, %v936
        %v1878 = vpop.permute.xlu0 %1877
        %1879 = vset.pattern.permute.xlu0 0
        %1880 = vperm.xlu0 %1879, %v937
        %v1881 = vpop.permute.xlu0 %1880
        %1882 = vset.pattern.permute.xlu0 0
        %1883 = vperm.xlu0 %1882, %v938
        %v1884 = vpop.permute.xlu0 %1883
        %1885 = vset.pattern.permute.xlu0 0
        %1886 = vperm.xlu0 %1885, %v939
        %v1887 = vpop.permute.xlu0 %1886
        %1888 = vset.pattern.permute.xlu0 0
        %1889 = vperm.xlu0 %1888, %v940
        %v1890 = vpop.permute.xlu0 %1889
        %1891 = vset.pattern.permute.xlu0 0
        %1892 = vperm.xlu0 %1891, %v941
        %v1893 = vpop.permute.xlu0 %1892
        %1894 = vset.pattern.permute.xlu0 0
        %1895 = vperm.xlu0 %1894, %v942
        %v1896 = vpop.permute.xlu0 %1895
        %1897 = vset.pattern.permute.xlu0 0
        %1898 = vperm.xlu0 %1897, %v943
        %v1899 = vpop.permute.xlu0 %1898
        %1900 = vset.pattern.permute.xlu0 0
        %1901 = vperm.xlu0 %1900, %v944
        %v1902 = vpop.permute.xlu0 %1901
        %1903 = vset.pattern.permute.xlu0 0
        %1904 = vperm.xlu0 %1903, %v945
        %v1905 = vpop.permute.xlu0 %1904
        %1906 = vset.pattern.permute.xlu0 0
        %1907 = vperm.xlu0 %1906, %v946
        %v1908 = vpop.permute.xlu0 %1907
        %1909 = vset.pattern.permute.xlu0 0
        %1910 = vperm.xlu0 %1909, %v947
        %v1911 = vpop.permute.xlu0 %1910
        %1912 = vset.pattern.permute.xlu0 0
        %1913 = vperm.xlu0 %1912, %v948
        %v1914 = vpop.permute.xlu0 %1913
        %1915 = vset.pattern.permute.xlu0 0
        %1916 = vperm.xlu0 %1915, %v949
        %v1917 = vpop.permute.xlu0 %1916
        %1918 = vset.pattern.permute.xlu0 0
        %1919 = vperm.xlu0 %1918, %v950
        %v1920 = vpop.permute.xlu0 %1919
        %1921 = vset.pattern.permute.xlu0 0
        %1922 = vperm.xlu0 %1921, %v951
        %v1923 = vpop.permute.xlu0 %1922
        %1924 = vset.pattern.permute.xlu0 0
        %1925 = vperm.xlu0 %1924, %v952
        %v1926 = vpop.permute.xlu0 %1925
        %1927 = vset.pattern.permute.xlu0 0
        %1928 = vperm.xlu0 %1927, %v953
        %v1929 = vpop.permute.xlu0 %1928
        %1930 = vset.pattern.permute.xlu0 0
        %1931 = vperm.xlu0 %1930, %v954
        %v1932 = vpop.permute.xlu0 %1931
        %1933 = vset.pattern.permute.xlu0 0
        %1934 = vperm.xlu0 %1933, %v955
        %v1935 = vpop.permute.xlu0 %1934
        %1936 = vset.pattern.permute.xlu0 0
        %1937 = vperm.xlu0 %1936, %v956
        %v1938 = vpop.permute.xlu0 %1937
        %1939 = vset.pattern.permute.xlu0 0
        %1940 = vperm.xlu0 %1939, %v957
        %v1941 = vpop.permute.xlu0 %1940
        %1942 = vset.pattern.permute.xlu0 0
        %1943 = vperm.xlu0 %1942, %v958
        %v1944 = vpop.permute.xlu0 %1943
        %1945 = vset.pattern.permute.xlu0 0
        %1946 = vperm.xlu0 %1945, %v959
        %v1947 = vpop.permute.xlu0 %1946
        %1948 = vset.pattern.permute.xlu0 0
        %1949 = vperm.xlu0 %1948, %v960
        %v1950 = vpop.permute.xlu0 %1949
        %1951 = vset.pattern.permute.xlu0 0
        %1952 = vperm.xlu0 %1951, %v961
        %v1953 = vpop.permute.xlu0 %1952
        %1954 = vset.pattern.permute.xlu0 0
        %1955 = vperm.xlu0 %1954, %v962
        %v1956 = vpop.permute.xlu0 %1955
        %1957 = vset.pattern.permute.xlu0 0
        %1958 = vperm.xlu0 %1957, %v963
        %v1959 = vpop.permute.xlu0 %1958
        %1960 = vset.pattern.permute.xlu0 0
        %1961 = vperm.xlu0 %1960, %v964
        %v1962 = vpop.permute.xlu0 %1961
        %1963 = vset.pattern.permute.xlu0 0
        %1964 = vperm.xlu0 %1963, %v965
        %v1965 = vpop.permute.xlu0 %1964
        %vm1966 = vcmp.eq.s32.totalorder %v971, %v1872
        %vm1967 = vcmp.eq.s32.totalorder %v972, %v1872
        %vm1968 = vcmp.eq.s32.totalorder %v971, %v1875
        %vm1969 = vcmp.eq.s32.totalorder %v972, %v1875
        %vm1970 = vcmp.eq.s32.totalorder %v971, %v1878
        %vm1971 = vcmp.eq.s32.totalorder %v972, %v1878
        %vm1972 = vcmp.eq.s32.totalorder %v971, %v1881
        %vm1973 = vcmp.eq.s32.totalorder %v972, %v1881
        %vm1974 = vcmp.eq.s32.totalorder %v971, %v1884
        %vm1975 = vcmp.eq.s32.totalorder %v972, %v1884
        %vm1976 = vcmp.eq.s32.totalorder %v971, %v1887
        %vm1977 = vcmp.eq.s32.totalorder %v972, %v1887
        %vm1978 = vcmp.eq.s32.totalorder %v971, %v1890
        %vm1979 = vcmp.eq.s32.totalorder %v972, %v1890
        %vm1980 = vcmp.eq.s32.totalorder %v971, %v1893
        %vm1981 = vcmp.eq.s32.totalorder %v972, %v1893
        %vm1982 = vcmp.eq.s32.totalorder %v971, %v1896
        %vm1983 = vcmp.eq.s32.totalorder %v972, %v1896
        %vm1984 = vcmp.eq.s32.totalorder %v971, %v1899
        %vm1985 = vcmp.eq.s32.totalorder %v972, %v1899
        %vm1986 = vcmp.eq.s32.totalorder %v971, %v1902
        %vm1987 = vcmp.eq.s32.totalorder %v972, %v1902
        %vm1988 = vcmp.eq.s32.totalorder %v971, %v1905
        %vm1989 = vcmp.eq.s32.totalorder %v972, %v1905
        %vm1990 = vcmp.eq.s32.totalorder %v971, %v1908
        %vm1991 = vcmp.eq.s32.totalorder %v972, %v1908
        %vm1992 = vcmp.eq.s32.totalorder %v971, %v1911
        %vm1993 = vcmp.eq.s32.totalorder %v972, %v1911
        %vm1994 = vcmp.eq.s32.totalorder %v971, %v1914
        %vm1995 = vcmp.eq.s32.totalorder %v972, %v1914
        %vm1996 = vcmp.eq.s32.totalorder %v971, %v1917
        %vm1997 = vcmp.eq.s32.totalorder %v972, %v1917
        %vm1998 = vcmp.eq.s32.totalorder %v971, %v1920
        %vm1999 = vcmp.eq.s32.totalorder %v972, %v1920
        %vm2000 = vcmp.eq.s32.totalorder %v971, %v1923
        %vm2001 = vcmp.eq.s32.totalorder %v972, %v1923
        %vm2002 = vcmp.eq.s32.totalorder %v971, %v1926
        %vm2003 = vcmp.eq.s32.totalorder %v972, %v1926
        %vm2004 = vcmp.eq.s32.totalorder %v971, %v1929
        %vm2005 = vcmp.eq.s32.totalorder %v972, %v1929
        %vm2006 = vcmp.eq.s32.totalorder %v971, %v1932
        %vm2007 = vcmp.eq.s32.totalorder %v972, %v1932
        %vm2008 = vcmp.eq.s32.totalorder %v971, %v1935
        %vm2009 = vcmp.eq.s32.totalorder %v972, %v1935
        %vm2010 = vcmp.eq.s32.totalorder %v971, %v1938
        %vm2011 = vcmp.eq.s32.totalorder %v972, %v1938
        %vm2012 = vcmp.eq.s32.totalorder %v971, %v1941
        %vm2013 = vcmp.eq.s32.totalorder %v972, %v1941
        %vm2014 = vcmp.eq.s32.totalorder %v971, %v1944
        %vm2015 = vcmp.eq.s32.totalorder %v972, %v1944
        %vm2016 = vcmp.eq.s32.totalorder %v971, %v1947
        %vm2017 = vcmp.eq.s32.totalorder %v972, %v1947
        %vm2018 = vcmp.eq.s32.totalorder %v971, %v1950
        %vm2019 = vcmp.eq.s32.totalorder %v972, %v1950
        %vm2020 = vcmp.eq.s32.totalorder %v971, %v1953
        %vm2021 = vcmp.eq.s32.totalorder %v972, %v1953
        %vm2022 = vcmp.eq.s32.totalorder %v971, %v1956
        %vm2023 = vcmp.eq.s32.totalorder %v972, %v1956
        %vm2024 = vcmp.eq.s32.totalorder %v971, %v1959
        %vm2025 = vcmp.eq.s32.totalorder %v972, %v1959
        %vm2026 = vcmp.eq.s32.totalorder %v971, %v1962
        %vm2027 = vcmp.eq.s32.totalorder %v972, %v1962
        %vm2028 = vcmp.eq.s32.totalorder %v971, %v1965
        %vm2029 = vcmp.eq.s32.totalorder %v972, %v1965
        %v2030 = vsel %vm1966, %v702, 0.0
        %v2031 = vsel %vm1967, %v791, 0.0
        %v2032 = vsel %vm1968, %v704, 0.0
        %v2033 = vsel %vm1969, %v793, 0.0
        %v2034 = vsel %vm1970, %v707, 0.0
        %v2035 = vsel %vm1971, %v796, 0.0
        %v2036 = vsel %vm1972, %v709, 0.0
        %v2037 = vsel %vm1973, %v798, 0.0
        %v2038 = vsel %vm1974, %v712, 0.0
        %v2039 = vsel %vm1975, %v801, 0.0
        %v2040 = vsel %vm1976, %v714, 0.0
        %v2041 = vsel %vm1977, %v803, 0.0
        %v2042 = vsel %vm1978, %v717, 0.0
        %v2043 = vsel %vm1979, %v806, 0.0
        %v2044 = vsel %vm1980, %v719, 0.0
        %v2045 = vsel %vm1981, %v808, 0.0
        %v2046 = vsel %vm1982, %v722, 0.0
        %v2047 = vsel %vm1983, %v811, 0.0
        %v2048 = vsel %vm1984, %v724, 0.0
        %v2049 = vsel %vm1985, %v813, 0.0
        %v2050 = vsel %vm1986, %v727, 0.0
        %v2051 = vsel %vm1987, %v816, 0.0
        %v2052 = vsel %vm1988, %v729, 0.0
        %v2053 = vsel %vm1989, %v818, 0.0
        %v2054 = vsel %vm1990, %v732, 0.0
        %v2055 = vsel %vm1991, %v821, 0.0
        %v2056 = vsel %vm1992, %v734, 0.0
        %v2057 = vsel %vm1993, %v823, 0.0
        %v2058 = vsel %vm1994, %v737, 0.0
        %v2059 = vsel %vm1995, %v826, 0.0
        %v2060 = vsel %vm1996, %v739, 0.0
        %v2061 = vsel %vm1997, %v828, 0.0
        %v2062 = vsel %vm1998, %v742, 0.0
        %v2063 = vsel %vm1999, %v831, 0.0
        %v2064 = vsel %vm2000, %v744, 0.0
        %v2065 = vsel %vm2001, %v833, 0.0
        %v2066 = vsel %vm2002, %v747, 0.0
        %v2067 = vsel %vm2003, %v836, 0.0
        %v2068 = vsel %vm2004, %v749, 0.0
        %v2069 = vsel %vm2005, %v838, 0.0
        %v2070 = vsel %vm2006, %v752, 0.0
        %v2071 = vsel %vm2007, %v841, 0.0
        %v2072 = vsel %vm2008, %v754, 0.0
        %v2073 = vsel %vm2009, %v843, 0.0
        %v2074 = vsel %vm2010, %v757, 0.0
        %v2075 = vsel %vm2011, %v846, 0.0
        %v2076 = vsel %vm2012, %v759, 0.0
        %v2077 = vsel %vm2013, %v848, 0.0
        %v2078 = vsel %vm2014, %v762, 0.0
        %v2079 = vsel %vm2015, %v851, 0.0
        %v2080 = vsel %vm2016, %v764, 0.0
        %v2081 = vsel %vm2017, %v853, 0.0
        %v2082 = vsel %vm2018, %v767, 0.0
        %v2083 = vsel %vm2019, %v856, 0.0
        %v2084 = vsel %vm2020, %v769, 0.0
        %v2085 = vsel %vm2021, %v858, 0.0
        %v2086 = vsel %vm2022, %v772, 0.0
        %v2087 = vsel %vm2023, %v861, 0.0
        %v2088 = vsel %vm2024, %v774, 0.0
        %v2089 = vsel %vm2025, %v863, 0.0
        %v2090 = vsel %vm2026, %v777, 0.0
        %v2091 = vsel %vm2027, %v866, 0.0
        %v2092 = vsel %vm2028, %v779, 0.0
        %v2093 = vsel %vm2029, %v868, 0.0
        %v2094 = vadd.f32 %v2030, %v2031
        %2095 = vadd.xlane.f32.xlu0 %v2094
        %v2096 = vpop.xlane.xlu0 %2095
        %v2097 = vadd.f32 %v2032, %v2033
        %2098 = vadd.xlane.f32.xlu0 %v2097
        %v2099 = vpop.xlane.xlu0 %2098
        %v2100 = vadd.f32 %v2034, %v2035
        %2101 = vadd.xlane.f32.xlu0 %v2100
        %v2102 = vpop.xlane.xlu0 %2101
        %v2103 = vadd.f32 %v2036, %v2037
        %2104 = vadd.xlane.f32.xlu0 %v2103
        %v2105 = vpop.xlane.xlu0 %2104
        %v2106 = vadd.f32 %v2038, %v2039
        %2107 = vadd.xlane.f32.xlu0 %v2106
        %v2108 = vpop.xlane.xlu0 %2107
        %v2109 = vadd.f32 %v2040, %v2041
        %2110 = vadd.xlane.f32.xlu0 %v2109
        %v2111 = vpop.xlane.xlu0 %2110
        %v2112 = vadd.f32 %v2042, %v2043
        %2113 = vadd.xlane.f32.xlu0 %v2112
        %v2114 = vpop.xlane.xlu0 %2113
        %v2115 = vadd.f32 %v2044, %v2045
        %2116 = vadd.xlane.f32.xlu0 %v2115
        %v2117 = vpop.xlane.xlu0 %2116
        %v2118 = vadd.f32 %v2046, %v2047
        %2119 = vadd.xlane.f32.xlu0 %v2118
        %v2120 = vpop.xlane.xlu0 %2119
        %v2121 = vadd.f32 %v2048, %v2049
        %2122 = vadd.xlane.f32.xlu0 %v2121
        %v2123 = vpop.xlane.xlu0 %2122
        %v2124 = vadd.f32 %v2050, %v2051
        %2125 = vadd.xlane.f32.xlu0 %v2124
        %v2126 = vpop.xlane.xlu0 %2125
        %v2127 = vadd.f32 %v2052, %v2053
        %2128 = vadd.xlane.f32.xlu0 %v2127
        %v2129 = vpop.xlane.xlu0 %2128
        %v2130 = vadd.f32 %v2054, %v2055
        %2131 = vadd.xlane.f32.xlu0 %v2130
        %v2132 = vpop.xlane.xlu0 %2131
        %v2133 = vadd.f32 %v2056, %v2057
        %2134 = vadd.xlane.f32.xlu0 %v2133
        %v2135 = vpop.xlane.xlu0 %2134
        %v2136 = vadd.f32 %v2058, %v2059
        %2137 = vadd.xlane.f32.xlu0 %v2136
        %v2138 = vpop.xlane.xlu0 %2137
        %v2139 = vadd.f32 %v2060, %v2061
        %2140 = vadd.xlane.f32.xlu0 %v2139
        %v2141 = vpop.xlane.xlu0 %2140
        %v2142 = vadd.f32 %v2062, %v2063
        %2143 = vadd.xlane.f32.xlu0 %v2142
        %v2144 = vpop.xlane.xlu0 %2143
        %v2145 = vadd.f32 %v2064, %v2065
        %2146 = vadd.xlane.f32.xlu0 %v2145
        %v2147 = vpop.xlane.xlu0 %2146
        %v2148 = vadd.f32 %v2066, %v2067
        %2149 = vadd.xlane.f32.xlu0 %v2148
        %v2150 = vpop.xlane.xlu0 %2149
        %v2151 = vadd.f32 %v2068, %v2069
        %2152 = vadd.xlane.f32.xlu0 %v2151
        %v2153 = vpop.xlane.xlu0 %2152
        %v2154 = vadd.f32 %v2070, %v2071
        %2155 = vadd.xlane.f32.xlu0 %v2154
        %v2156 = vpop.xlane.xlu0 %2155
        %v2157 = vadd.f32 %v2072, %v2073
        %2158 = vadd.xlane.f32.xlu0 %v2157
        %v2159 = vpop.xlane.xlu0 %2158
        %v2160 = vadd.f32 %v2074, %v2075
        %2161 = vadd.xlane.f32.xlu0 %v2160
        %v2162 = vpop.xlane.xlu0 %2161
        %v2163 = vadd.f32 %v2076, %v2077
        %2164 = vadd.xlane.f32.xlu0 %v2163
        %v2165 = vpop.xlane.xlu0 %2164
        %v2166 = vadd.f32 %v2078, %v2079
        %2167 = vadd.xlane.f32.xlu0 %v2166
        %v2168 = vpop.xlane.xlu0 %2167
        %v2169 = vadd.f32 %v2080, %v2081
        %2170 = vadd.xlane.f32.xlu0 %v2169
        %v2171 = vpop.xlane.xlu0 %2170
        %v2172 = vadd.f32 %v2082, %v2083
        %2173 = vadd.xlane.f32.xlu0 %v2172
        %v2174 = vpop.xlane.xlu0 %2173
        %v2175 = vadd.f32 %v2084, %v2085
        %2176 = vadd.xlane.f32.xlu0 %v2175
        %v2177 = vpop.xlane.xlu0 %2176
        %v2178 = vadd.f32 %v2086, %v2087
        %2179 = vadd.xlane.f32.xlu0 %v2178
        %v2180 = vpop.xlane.xlu0 %2179
        %v2181 = vadd.f32 %v2088, %v2089
        %2182 = vadd.xlane.f32.xlu0 %v2181
        %v2183 = vpop.xlane.xlu0 %2182
        %v2184 = vadd.f32 %v2090, %v2091
        %2185 = vadd.xlane.f32.xlu0 %v2184
        %v2186 = vpop.xlane.xlu0 %2185
        %v2187 = vadd.f32 %v2092, %v2093
        %2188 = vadd.xlane.f32.xlu0 %v2187
        %v2189 = vpop.xlane.xlu0 %2188
        %v2190 = vadd.f32 %v1838, %v2096
        %v2191 = vadd.f32 %v1839, %v2099
        %v2192 = vadd.f32 %v1840, %v2102
        %v2193 = vadd.f32 %v1841, %v2105
        %v2194 = vadd.f32 %v1842, %v2108
        %v2195 = vadd.f32 %v1843, %v2111
        %v2196 = vadd.f32 %v1844, %v2114
        %v2197 = vadd.f32 %v1845, %v2117
        %v2198 = vadd.f32 %v1846, %v2120
        %v2199 = vadd.f32 %v1847, %v2123
        %v2200 = vadd.f32 %v1848, %v2126
        %v2201 = vadd.f32 %v1849, %v2129
        %v2202 = vadd.f32 %v1850, %v2132
        %v2203 = vadd.f32 %v1851, %v2135
        %v2204 = vadd.f32 %v1852, %v2138
        %v2205 = vadd.f32 %v1853, %v2141
        %v2206 = vadd.f32 %v1854, %v2144
        %v2207 = vadd.f32 %v1855, %v2147
        %v2208 = vadd.f32 %v1856, %v2150
        %v2209 = vadd.f32 %v1857, %v2153
        %v2210 = vadd.f32 %v1858, %v2156
        %v2211 = vadd.f32 %v1859, %v2159
        %v2212 = vadd.f32 %v1860, %v2162
        %v2213 = vadd.f32 %v1861, %v2165
        %v2214 = vadd.f32 %v1862, %v2168
        %v2215 = vadd.f32 %v1863, %v2171
        %v2216 = vadd.f32 %v1864, %v2174
        %v2217 = vadd.f32 %v1865, %v2177
        %v2218 = vadd.f32 %v1866, %v2180
        %v2219 = vadd.f32 %v1867, %v2183
        %v2220 = vadd.f32 %v1868, %v2186
        %v2221 = vadd.f32 %v1869, %v2189
        %2222 = vst.msk [vmem:[#allocation4] sm:$0xff] %vm1773, %v2190
        %2223 = vst.msk [vmem:[#allocation4 + $0x8] sm:$0xff] %vm1773, %v2191
        %2224 = vst.msk [vmem:[#allocation4 + $0x10] sm:$0xff] %vm1773, %v2192
        %2225 = vst.msk [vmem:[#allocation4 + $0x18] sm:$0xff] %vm1773, %v2193
        %2226 = vst.msk [vmem:[#allocation4 + $0x20] sm:$0xff] %vm1773, %v2194
        %2227 = vst.msk [vmem:[#allocation4 + $0x28] sm:$0xff] %vm1773, %v2195
        %2228 = vst.msk [vmem:[#allocation4 + $0x30] sm:$0xff] %vm1773, %v2196
        %2229 = vst.msk [vmem:[#allocation4 + $0x38] sm:$0xff] %vm1773, %v2197
        %2230 = vst.msk [vmem:[#allocation4 + $0x40] sm:$0xff] %vm1773, %v2198
        %2231 = vst.msk [vmem:[#allocation4 + $0x48] sm:$0xff] %vm1773, %v2199
        %2232 = vst.msk [vmem:[#allocation4 + $0x50] sm:$0xff] %vm1773, %v2200
        %2233 = vst.msk [vmem:[#allocation4 + $0x58] sm:$0xff] %vm1773, %v2201
        %2234 = vst.msk [vmem:[#allocation4 + $0x60] sm:$0xff] %vm1773, %v2202
        %2235 = vst.msk [vmem:[#allocation4 + $0x68] sm:$0xff] %vm1773, %v2203
        %2236 = vst.msk [vmem:[#allocation4 + $0x70] sm:$0xff] %vm1773, %v2204
        %2237 = vst.msk [vmem:[#allocation4 + $0x78] sm:$0xff] %vm1773, %v2205
        %2238 = vst.msk [vmem:[#allocation4 + $0x80] sm:$0xff] %vm1773, %v2206
        %2239 = vst.msk [vmem:[#allocation4 + $0x88] sm:$0xff] %vm1773, %v2207
        %2240 = vst.msk [vmem:[#allocation4 + $0x90] sm:$0xff] %vm1773, %v2208
        %2241 = vst.msk [vmem:[#allocation4 + $0x98] sm:$0xff] %vm1773, %v2209
        %2242 = vst.msk [vmem:[#allocation4 + $0xa0] sm:$0xff] %vm1773, %v2210
        %2243 = vst.msk [vmem:[#allocation4 + $0xa8] sm:$0xff] %vm1773, %v2211
        %2244 = vst.msk [vmem:[#allocation4 + $0xb0] sm:$0xff] %vm1773, %v2212
        %2245 = vst.msk [vmem:[#allocation4 + $0xb8] sm:$0xff] %vm1773, %v2213
        %2246 = vst.msk [vmem:[#allocation4 + $0xc0] sm:$0xff] %vm1773, %v2214
        %2247 = vst.msk [vmem:[#allocation4 + $0xc8] sm:$0xff] %vm1773, %v2215
        %2248 = vst.msk [vmem:[#allocation4 + $0xd0] sm:$0xff] %vm1773, %v2216
        %2249 = vst.msk [vmem:[#allocation4 + $0xd8] sm:$0xff] %vm1773, %v2217
        %2250 = vst.msk [vmem:[#allocation4 + $0xe0] sm:$0xff] %vm1773, %v2218
        %2251 = vst.msk [vmem:[#allocation4 + $0xe8] sm:$0xff] %vm1773, %v2219
        %2252 = vst.msk [vmem:[#allocation4 + $0xf0] sm:$0xff] %vm1773, %v2220
        %2253 = vst.msk [vmem:[#allocation4 + $0xf8] sm:$0xff] %vm1773, %v2221
        %p2254 = scmp.eq.s32.totalorder %s24, 1
        // Predicated region
        $region75: #{_dtt_forward_jit.13} parent=65 // pred_check
          %p2255 = pneg %p2254
        $region76: #{_dtt_forward_jit.13} parent=65 // pred_check_branch
          %2257 = sbr.rel (%p2255) target = $region78
        $region77: #{_dtt_forward_jit.13} parent=65 // pred_region
          %v2258 = vld [vmem:[#allocation2] sm:$0xff]
          %v2259 = vld [vmem:[#allocation2 + $0x8] sm:$0xff]
          %v2260 = vld [vmem:[#allocation2 + $0x10] sm:$0xff]
          %v2261 = vld [vmem:[#allocation2 + $0x18] sm:$0xff]
          %v2262 = vld [vmem:[#allocation2 + $0x20] sm:$0xff]
          %v2263 = vld [vmem:[#allocation2 + $0x28] sm:$0xff]
          %v2264 = vld [vmem:[#allocation2 + $0x30] sm:$0xff]
          %v2265 = vld [vmem:[#allocation2 + $0x38] sm:$0xff]
          %v2266 = vld [vmem:[#allocation2 + $0x40] sm:$0xff]
          %v2267 = vld [vmem:[#allocation2 + $0x48] sm:$0xff]
          %v2268 = vld [vmem:[#allocation2 + $0x50] sm:$0xff]
          %v2269 = vld [vmem:[#allocation2 + $0x58] sm:$0xff]
          %v2270 = vld [vmem:[#allocation2 + $0x60] sm:$0xff]
          %v2271 = vld [vmem:[#allocation2 + $0x68] sm:$0xff]
          %v2272 = vld [vmem:[#allocation2 + $0x70] sm:$0xff]
          %v2273 = vld [vmem:[#allocation2 + $0x78] sm:$0xff]
          %v2274 = vld [vmem:[#allocation2 + $0x80] sm:$0xff]
          %v2275 = vld [vmem:[#allocation2 + $0x88] sm:$0xff]
          %v2276 = vld [vmem:[#allocation2 + $0x90] sm:$0xff]
          %v2277 = vld [vmem:[#allocation2 + $0x98] sm:$0xff]
          %v2278 = vld [vmem:[#allocation2 + $0xa0] sm:$0xff]
          %v2279 = vld [vmem:[#allocation2 + $0xa8] sm:$0xff]
          %v2280 = vld [vmem:[#allocation2 + $0xb0] sm:$0xff]
          %v2281 = vld [vmem:[#allocation2 + $0xb8] sm:$0xff]
          %v2282 = vld [vmem:[#allocation2 + $0xc0] sm:$0xff]
          %v2283 = vld [vmem:[#allocation2 + $0xc8] sm:$0xff]
          %v2284 = vld [vmem:[#allocation2 + $0xd0] sm:$0xff]
          %v2285 = vld [vmem:[#allocation2 + $0xd8] sm:$0xff]
          %v2286 = vld [vmem:[#allocation2 + $0xe0] sm:$0xff]
          %v2287 = vld [vmem:[#allocation2 + $0xe8] sm:$0xff]
          %v2288 = vld [vmem:[#allocation2 + $0xf0] sm:$0xff]
          %v2289 = vld [vmem:[#allocation2 + $0xf8] sm:$0xff]
          %v2290 = vld [vmem:[#allocation3] sm:$0xff]
          %v2291 = vld [vmem:[#allocation3 + $0x8] sm:$0xff]
          %v2292 = vld [vmem:[#allocation3 + $0x10] sm:$0xff]
          %v2293 = vld [vmem:[#allocation3 + $0x18] sm:$0xff]
          %v2294 = vld [vmem:[#allocation3 + $0x20] sm:$0xff]
          %v2295 = vld [vmem:[#allocation3 + $0x28] sm:$0xff]
          %v2296 = vld [vmem:[#allocation3 + $0x30] sm:$0xff]
          %v2297 = vld [vmem:[#allocation3 + $0x38] sm:$0xff]
          %v2298 = vld [vmem:[#allocation3 + $0x40] sm:$0xff]
          %v2299 = vld [vmem:[#allocation3 + $0x48] sm:$0xff]
          %v2300 = vld [vmem:[#allocation3 + $0x50] sm:$0xff]
          %v2301 = vld [vmem:[#allocation3 + $0x58] sm:$0xff]
          %v2302 = vld [vmem:[#allocation3 + $0x60] sm:$0xff]
          %v2303 = vld [vmem:[#allocation3 + $0x68] sm:$0xff]
          %v2304 = vld [vmem:[#allocation3 + $0x70] sm:$0xff]
          %v2305 = vld [vmem:[#allocation3 + $0x78] sm:$0xff]
          %v2306 = vld [vmem:[#allocation3 + $0x80] sm:$0xff]
          %v2307 = vld [vmem:[#allocation3 + $0x88] sm:$0xff]
          %v2308 = vld [vmem:[#allocation3 + $0x90] sm:$0xff]
          %v2309 = vld [vmem:[#allocation3 + $0x98] sm:$0xff]
          %v2310 = vld [vmem:[#allocation3 + $0xa0] sm:$0xff]
          %v2311 = vld [vmem:[#allocation3 + $0xa8] sm:$0xff]
          %v2312 = vld [vmem:[#allocation3 + $0xb0] sm:$0xff]
          %v2313 = vld [vmem:[#allocation3 + $0xb8] sm:$0xff]
          %v2314 = vld [vmem:[#allocation3 + $0xc0] sm:$0xff]
          %v2315 = vld [vmem:[#allocation3 + $0xc8] sm:$0xff]
          %v2316 = vld [vmem:[#allocation3 + $0xd0] sm:$0xff]
          %v2317 = vld [vmem:[#allocation3 + $0xd8] sm:$0xff]
          %v2318 = vld [vmem:[#allocation3 + $0xe0] sm:$0xff]
          %v2319 = vld [vmem:[#allocation3 + $0xe8] sm:$0xff]
          %v2320 = vld [vmem:[#allocation3 + $0xf0] sm:$0xff]
          %v2321 = vld [vmem:[#allocation3 + $0xf8] sm:$0xff]
          %v2322 = vlog2.pop %v2290
          %v2323 = vmul.f32 %v2322, 0.6931472
          %v2324 = vlog2.pop %v2291
          %v2325 = vmul.f32 %v2324, 0.6931472
          %v2326 = vlog2.pop %v2292
          %v2327 = vmul.f32 %v2326, 0.6931472
          %v2328 = vlog2.pop %v2293
          %v2329 = vmul.f32 %v2328, 0.6931472
          %v2330 = vlog2.pop %v2294
          %v2331 = vmul.f32 %v2330, 0.6931472
          %v2332 = vlog2.pop %v2295
          %v2333 = vmul.f32 %v2332, 0.6931472
          %v2334 = vlog2.pop %v2296
          %v2335 = vmul.f32 %v2334, 0.6931472
          %v2336 = vlog2.pop %v2297
          %v2337 = vmul.f32 %v2336, 0.6931472
          %v2338 = vlog2.pop %v2298
          %v2339 = vmul.f32 %v2338, 0.6931472
          %v2340 = vlog2.pop %v2299
          %v2341 = vmul.f32 %v2340, 0.6931472
          %v2342 = vlog2.pop %v2300
          %v2343 = vmul.f32 %v2342, 0.6931472
          %v2344 = vlog2.pop %v2301
          %v2345 = vmul.f32 %v2344, 0.6931472
          %v2346 = vlog2.pop %v2302
          %v2347 = vmul.f32 %v2346, 0.6931472
          %v2348 = vlog2.pop %v2303
          %v2349 = vmul.f32 %v2348, 0.6931472
          %v2350 = vlog2.pop %v2304
          %v2351 = vmul.f32 %v2350, 0.6931472
          %v2352 = vlog2.pop %v2305
          %v2353 = vmul.f32 %v2352, 0.6931472
          %v2354 = vlog2.pop %v2306
          %v2355 = vmul.f32 %v2354, 0.6931472
          %v2356 = vlog2.pop %v2307
          %v2357 = vmul.f32 %v2356, 0.6931472
          %v2358 = vlog2.pop %v2308
          %v2359 = vmul.f32 %v2358, 0.6931472
          %v2360 = vlog2.pop %v2309
          %v2361 = vmul.f32 %v2360, 0.6931472
          %v2362 = vlog2.pop %v2310
          %v2363 = vmul.f32 %v2362, 0.6931472
          %v2364 = vlog2.pop %v2311
          %v2365 = vmul.f32 %v2364, 0.6931472
          %v2366 = vlog2.pop %v2312
          %v2367 = vmul.f32 %v2366, 0.6931472
          %v2368 = vlog2.pop %v2313
          %v2369 = vmul.f32 %v2368, 0.6931472
          %v2370 = vlog2.pop %v2314
          %v2371 = vmul.f32 %v2370, 0.6931472
          %v2372 = vlog2.pop %v2315
          %v2373 = vmul.f32 %v2372, 0.6931472
          %v2374 = vlog2.pop %v2316
          %v2375 = vmul.f32 %v2374, 0.6931472
          %v2376 = vlog2.pop %v2317
          %v2377 = vmul.f32 %v2376, 0.6931472
          %v2378 = vlog2.pop %v2318
          %v2379 = vmul.f32 %v2378, 0.6931472
          %v2380 = vlog2.pop %v2319
          %v2381 = vmul.f32 %v2380, 0.6931472
          %v2382 = vlog2.pop %v2320
          %v2383 = vmul.f32 %v2382, 0.6931472
          %v2384 = vlog2.pop %v2321
          %v2385 = vmul.f32 %v2384, 0.6931472
          %v2386 = vadd.f32 %v2258, %v2323
          %v2387 = vadd.f32 %v2259, %v2325
          %v2388 = vadd.f32 %v2260, %v2327
          %v2389 = vadd.f32 %v2261, %v2329
          %v2390 = vadd.f32 %v2262, %v2331
          %v2391 = vadd.f32 %v2263, %v2333
          %v2392 = vadd.f32 %v2264, %v2335
          %v2393 = vadd.f32 %v2265, %v2337
          %v2394 = vadd.f32 %v2266, %v2339
          %v2395 = vadd.f32 %v2267, %v2341
          %v2396 = vadd.f32 %v2268, %v2343
          %v2397 = vadd.f32 %v2269, %v2345
          %v2398 = vadd.f32 %v2270, %v2347
          %v2399 = vadd.f32 %v2271, %v2349
          %v2400 = vadd.f32 %v2272, %v2351
          %v2401 = vadd.f32 %v2273, %v2353
          %v2402 = vadd.f32 %v2274, %v2355
          %v2403 = vadd.f32 %v2275, %v2357
          %v2404 = vadd.f32 %v2276, %v2359
          %v2405 = vadd.f32 %v2277, %v2361
          %v2406 = vadd.f32 %v2278, %v2363
          %v2407 = vadd.f32 %v2279, %v2365
          %v2408 = vadd.f32 %v2280, %v2367
          %v2409 = vadd.f32 %v2281, %v2369
          %v2410 = vadd.f32 %v2282, %v2371
          %v2411 = vadd.f32 %v2283, %v2373
          %v2412 = vadd.f32 %v2284, %v2375
          %v2413 = vadd.f32 %v2285, %v2377
          %v2414 = vadd.f32 %v2286, %v2379
          %v2415 = vadd.f32 %v2287, %v2381
          %v2416 = vadd.f32 %v2288, %v2383
          %v2417 = vadd.f32 %v2289, %v2385
          %v2418 = vld [vmem:[#allocation4] sm:$0xff]
          %v2419 = vld [vmem:[#allocation4 + $0x8] sm:$0xff]
          %v2420 = vld [vmem:[#allocation4 + $0x10] sm:$0xff]
          %v2421 = vld [vmem:[#allocation4 + $0x18] sm:$0xff]
          %v2422 = vld [vmem:[#allocation4 + $0x20] sm:$0xff]
          %v2423 = vld [vmem:[#allocation4 + $0x28] sm:$0xff]
          %v2424 = vld [vmem:[#allocation4 + $0x30] sm:$0xff]
          %v2425 = vld [vmem:[#allocation4 + $0x38] sm:$0xff]
          %v2426 = vld [vmem:[#allocation4 + $0x40] sm:$0xff]
          %v2427 = vld [vmem:[#allocation4 + $0x48] sm:$0xff]
          %v2428 = vld [vmem:[#allocation4 + $0x50] sm:$0xff]
          %v2429 = vld [vmem:[#allocation4 + $0x58] sm:$0xff]
          %v2430 = vld [vmem:[#allocation4 + $0x60] sm:$0xff]
          %v2431 = vld [vmem:[#allocation4 + $0x68] sm:$0xff]
          %v2432 = vld [vmem:[#allocation4 + $0x70] sm:$0xff]
          %v2433 = vld [vmem:[#allocation4 + $0x78] sm:$0xff]
          %v2434 = vld [vmem:[#allocation4 + $0x80] sm:$0xff]
          %v2435 = vld [vmem:[#allocation4 + $0x88] sm:$0xff]
          %v2436 = vld [vmem:[#allocation4 + $0x90] sm:$0xff]
          %v2437 = vld [vmem:[#allocation4 + $0x98] sm:$0xff]
          %v2438 = vld [vmem:[#allocation4 + $0xa0] sm:$0xff]
          %v2439 = vld [vmem:[#allocation4 + $0xa8] sm:$0xff]
          %v2440 = vld [vmem:[#allocation4 + $0xb0] sm:$0xff]
          %v2441 = vld [vmem:[#allocation4 + $0xb8] sm:$0xff]
          %v2442 = vld [vmem:[#allocation4 + $0xc0] sm:$0xff]
          %v2443 = vld [vmem:[#allocation4 + $0xc8] sm:$0xff]
          %v2444 = vld [vmem:[#allocation4 + $0xd0] sm:$0xff]
          %v2445 = vld [vmem:[#allocation4 + $0xd8] sm:$0xff]
          %v2446 = vld [vmem:[#allocation4 + $0xe0] sm:$0xff]
          %v2447 = vld [vmem:[#allocation4 + $0xe8] sm:$0xff]
          %v2448 = vld [vmem:[#allocation4 + $0xf0] sm:$0xff]
          %v2449 = vld [vmem:[#allocation4 + $0xf8] sm:$0xff]
          %v2450 = vsub.f32 %v2386, %v2418
          %v2451 = vsub.f32 %v2387, %v2419
          %v2452 = vsub.f32 %v2388, %v2420
          %v2453 = vsub.f32 %v2389, %v2421
          %v2454 = vsub.f32 %v2390, %v2422
          %v2455 = vsub.f32 %v2391, %v2423
          %v2456 = vsub.f32 %v2392, %v2424
          %v2457 = vsub.f32 %v2393, %v2425
          %v2458 = vsub.f32 %v2394, %v2426
          %v2459 = vsub.f32 %v2395, %v2427
          %v2460 = vsub.f32 %v2396, %v2428
          %v2461 = vsub.f32 %v2397, %v2429
          %v2462 = vsub.f32 %v2398, %v2430
          %v2463 = vsub.f32 %v2399, %v2431
          %v2464 = vsub.f32 %v2400, %v2432
          %v2465 = vsub.f32 %v2401, %v2433
          %v2466 = vsub.f32 %v2402, %v2434
          %v2467 = vsub.f32 %v2403, %v2435
          %v2468 = vsub.f32 %v2404, %v2436
          %v2469 = vsub.f32 %v2405, %v2437
          %v2470 = vsub.f32 %v2406, %v2438
          %v2471 = vsub.f32 %v2407, %v2439
          %v2472 = vsub.f32 %v2408, %v2440
          %v2473 = vsub.f32 %v2409, %v2441
          %v2474 = vsub.f32 %v2410, %v2442
          %v2475 = vsub.f32 %v2411, %v2443
          %v2476 = vsub.f32 %v2412, %v2444
          %v2477 = vsub.f32 %v2413, %v2445
          %v2478 = vsub.f32 %v2414, %v2446
          %v2479 = vsub.f32 %v2415, %v2447
          %v2480 = vsub.f32 %v2416, %v2448
          %v2481 = vsub.f32 %v2417, %v2449
          %vm2482 = vcmp.ne.s32.totalorder %v934, 4294967196
          %vm2483 = vcmp.ne.s32.totalorder %v935, 4294967196
          %vm2484 = vcmp.ne.s32.totalorder %v936, 4294967196
          %vm2485 = vcmp.ne.s32.totalorder %v937, 4294967196
          %vm2486 = vcmp.ne.s32.totalorder %v938, 4294967196
          %vm2487 = vcmp.ne.s32.totalorder %v939, 4294967196
          %vm2488 = vcmp.ne.s32.totalorder %v940, 4294967196
          %vm2489 = vcmp.ne.s32.totalorder %v941, 4294967196
          %vm2490 = vcmp.ne.s32.totalorder %v942, 4294967196
          %vm2491 = vcmp.ne.s32.totalorder %v943, 4294967196
          %vm2492 = vcmp.ne.s32.totalorder %v944, 4294967196
          %vm2493 = vcmp.ne.s32.totalorder %v945, 4294967196
          %vm2494 = vcmp.ne.s32.totalorder %v946, 4294967196
          %vm2495 = vcmp.ne.s32.totalorder %v947, 4294967196
          %vm2496 = vcmp.ne.s32.totalorder %v948, 4294967196
          %vm2497 = vcmp.ne.s32.totalorder %v949, 4294967196
          %vm2498 = vcmp.ne.s32.totalorder %v950, 4294967196
          %vm2499 = vcmp.ne.s32.totalorder %v951, 4294967196
          %vm2500 = vcmp.ne.s32.totalorder %v952, 4294967196
          %vm2501 = vcmp.ne.s32.totalorder %v953, 4294967196
          %vm2502 = vcmp.ne.s32.totalorder %v954, 4294967196
          %vm2503 = vcmp.ne.s32.totalorder %v955, 4294967196
          %vm2504 = vcmp.ne.s32.totalorder %v956, 4294967196
          %vm2505 = vcmp.ne.s32.totalorder %v957, 4294967196
          %vm2506 = vcmp.ne.s32.totalorder %v958, 4294967196
          %vm2507 = vcmp.ne.s32.totalorder %v959, 4294967196
          %vm2508 = vcmp.ne.s32.totalorder %v960, 4294967196
          %vm2509 = vcmp.ne.s32.totalorder %v961, 4294967196
          %vm2510 = vcmp.ne.s32.totalorder %v962, 4294967196
          %vm2511 = vcmp.ne.s32.totalorder %v963, 4294967196
          %vm2512 = vcmp.ne.s32.totalorder %v964, 4294967196
          %vm2513 = vcmp.ne.s32.totalorder %v965, 4294967196
          %v2514 = vsel %vm2482, %v2450, 0.0
          %v2515 = vsel %vm2483, %v2451, 0.0
          %v2516 = vsel %vm2484, %v2452, 0.0
          %v2517 = vsel %vm2485, %v2453, 0.0
          %v2518 = vsel %vm2486, %v2454, 0.0
          %v2519 = vsel %vm2487, %v2455, 0.0
          %v2520 = vsel %vm2488, %v2456, 0.0
          %v2521 = vsel %vm2489, %v2457, 0.0
          %v2522 = vsel %vm2490, %v2458, 0.0
          %v2523 = vsel %vm2491, %v2459, 0.0
          %v2524 = vsel %vm2492, %v2460, 0.0
          %v2525 = vsel %vm2493, %v2461, 0.0
          %v2526 = vsel %vm2494, %v2462, 0.0
          %v2527 = vsel %vm2495, %v2463, 0.0
          %v2528 = vsel %vm2496, %v2464, 0.0
          %v2529 = vsel %vm2497, %v2465, 0.0
          %v2530 = vsel %vm2498, %v2466, 0.0
          %v2531 = vsel %vm2499, %v2467, 0.0
          %v2532 = vsel %vm2500, %v2468, 0.0
          %v2533 = vsel %vm2501, %v2469, 0.0
          %v2534 = vsel %vm2502, %v2470, 0.0
          %v2535 = vsel %vm2503, %v2471, 0.0
          %v2536 = vsel %vm2504, %v2472, 0.0
          %v2537 = vsel %vm2505, %v2473, 0.0
          %v2538 = vsel %vm2506, %v2474, 0.0
          %v2539 = vsel %vm2507, %v2475, 0.0
          %v2540 = vsel %vm2508, %v2476, 0.0
          %v2541 = vsel %vm2509, %v2477, 0.0
          %v2542 = vsel %vm2510, %v2478, 0.0
          %v2543 = vsel %vm2511, %v2479, 0.0
          %v2544 = vsel %vm2512, %v2480, 0.0
          %v2545 = vsel %vm2513, %v2481, 0.0
          %2546 = vst.msk [vmem:[%s365] sm:$0xff] %vm1773, %v2514
          %2547 = vst.msk [vmem:[%s365 + $0x8] sm:$0xff] %vm1773, %v2515
          %2548 = vst.msk [vmem:[%s365 + $0x10] sm:$0xff] %vm1773, %v2516
          %2549 = vst.msk [vmem:[%s365 + $0x18] sm:$0xff] %vm1773, %v2517
          %2550 = vst.msk [vmem:[%s365 + $0x20] sm:$0xff] %vm1773, %v2518
          %2551 = vst.msk [vmem:[%s365 + $0x28] sm:$0xff] %vm1773, %v2519
          %2552 = vst.msk [vmem:[%s365 + $0x30] sm:$0xff] %vm1773, %v2520
          %2553 = vst.msk [vmem:[%s365 + $0x38] sm:$0xff] %vm1773, %v2521
          %2554 = vst.msk [vmem:[%s365 + $0x40] sm:$0xff] %vm1773, %v2522
          %2555 = vst.msk [vmem:[%s365 + $0x48] sm:$0xff] %vm1773, %v2523
          %2556 = vst.msk [vmem:[%s365 + $0x50] sm:$0xff] %vm1773, %v2524
          %2557 = vst.msk [vmem:[%s365 + $0x58] sm:$0xff] %vm1773, %v2525
          %2558 = vst.msk [vmem:[%s365 + $0x60] sm:$0xff] %vm1773, %v2526
          %2559 = vst.msk [vmem:[%s365 + $0x68] sm:$0xff] %vm1773, %v2527
          %2560 = vst.msk [vmem:[%s365 + $0x70] sm:$0xff] %vm1773, %v2528
          %2561 = vst.msk [vmem:[%s365 + $0x78] sm:$0xff] %vm1773, %v2529
          %2562 = vst.msk [vmem:[%s365 + $0x80] sm:$0xff] %vm1773, %v2530
          %2563 = vst.msk [vmem:[%s365 + $0x88] sm:$0xff] %vm1773, %v2531
          %2564 = vst.msk [vmem:[%s365 + $0x90] sm:$0xff] %vm1773, %v2532
          %2565 = vst.msk [vmem:[%s365 + $0x98] sm:$0xff] %vm1773, %v2533
          %2566 = vst.msk [vmem:[%s365 + $0xa0] sm:$0xff] %vm1773, %v2534
          %2567 = vst.msk [vmem:[%s365 + $0xa8] sm:$0xff] %vm1773, %v2535
          %2568 = vst.msk [vmem:[%s365 + $0xb0] sm:$0xff] %vm1773, %v2536
          %2569 = vst.msk [vmem:[%s365 + $0xb8] sm:$0xff] %vm1773, %v2537
          %2570 = vst.msk [vmem:[%s365 + $0xc0] sm:$0xff] %vm1773, %v2538
          %2571 = vst.msk [vmem:[%s365 + $0xc8] sm:$0xff] %vm1773, %v2539
          %2572 = vst.msk [vmem:[%s365 + $0xd0] sm:$0xff] %vm1773, %v2540
          %2573 = vst.msk [vmem:[%s365 + $0xd8] sm:$0xff] %vm1773, %v2541
          %2574 = vst.msk [vmem:[%s365 + $0xe0] sm:$0xff] %vm1773, %v2542
          %2575 = vst.msk [vmem:[%s365 + $0xe8] sm:$0xff] %vm1773, %v2543
          %2576 = vst.msk [vmem:[%s365 + $0xf0] sm:$0xff] %vm1773, %v2544
          %2577 = vst.msk [vmem:[%s365 + $0xf8] sm:$0xff] %vm1773, %v2545
        $region78: #{_dtt_forward_jit.13} parent=65 // pred_fallthru
          _
        %s2578 = sand.u32 %s119, 1
        %s2579 = scalar_lea.sflag [#allocation7], %s2578
        %s2580 = sand.u32 %s119, 1
        %s2581 = smul.addr %s2580, 512
        %s2582 = scalar_lea.vmem [#allocation6], %s2581
        %s2583 = smul.u32 32, %s23
        %p2584 = scmp.lt.s32.totalorder %s2583, 63
        %s2585 = scalar_select %p2584, %s2583, 63
        %s2586 = smul.addr %s2585, 8
        %s2587 = scalar_lea.vmem %s4, %s2586
        // Predicated region
        $region79: #{_dtt_forward_jit.13} parent=65 // pred_check
          %p2588 = pneg %p129
        $region80: #{_dtt_forward_jit.13} parent=65 // pred_check_branch
          %2590 = sbr.rel (%p2588) target = $region82
        $region81: #{_dtt_forward_jit.13} parent=65 // pred_region
          %s2591 = smul.u32 32, %s23
          %s2592 = smul.u32 2, %s24
          %2594 = vsyncadd %s2579, 0
          %s2595 = smul.addr %s2591, 4
          %s2596 = sadd.s32 %s2592, %s2595
          %s2597 = smul.addr %s2596, 8
          %s2598 = scalar_lea.hbm %s3, %s2597
          %s2599 = sshll.u32 %s2582, 4
          %s2600 = int_to_ptr.vmem [resolvable:$true] %s2599
          %s2601 = sshll.u32 %s2598, 4
          %s2602 = int_to_ptr.hbm [resolvable:$true] %s2601
          %2607 = dma.vmem_to_hbm [thread:$0]  %s2600, 8192, %s2602, %s2579, 256, 512, 16
        $region82: #{_dtt_forward_jit.13} parent=65 // pred_fallthru
          _
        // Predicated region
        $region83: #{_dtt_forward_jit.13} parent=65 // pred_check
          %p2608 = pneg %p155
        $region84: #{_dtt_forward_jit.13} parent=65 // pred_check_branch
          %2610 = sbr.rel (%p2608) target = $region86
        $region85: #{_dtt_forward_jit.13} parent=65 // pred_region
          %s2611 = smul.u32 32, %s23
        $region86: #{_dtt_forward_jit.13} parent=65 // pred_fallthru
          _
      $region66: #{_dtt_forward_jit.13} parent=5 // pred_fallthru
        _
      %p2612 = scmp.le.s32.totalorder 2, %s14
      // Predicated region
      $region87: #{_dtt_forward_jit.13} parent=5 // pred_check
        %p2613 = pneg %p2612
      $region88: #{_dtt_forward_jit.13} parent=5 // pred_check_branch
        %2615 = sbr.rel (%p2613) target = $region90
      $region89: #{_dtt_forward_jit.13} parent=5 // pred_region
        %s2616 = ssub.s32 %s14, 2
        // Predicated region
        $region91: #{_dtt_forward_jit.13} parent=89 // pred_check
          %p2617 = pneg %p135
        $region92: #{_dtt_forward_jit.13} parent=89 // pred_check_branch
          %2619 = sbr.rel (%p2617) target = $region94
        $region93: #{_dtt_forward_jit.13} parent=89 // pred_region
          %s2620 = sand.u32 %s120, 1
          %s2621 = scalar_lea.sflag [#allocation7], %s2620
          %s2622 = sand.u32 %s120, 1
          %s2623 = smul.addr %s2622, 512
          %s2624 = scalar_lea.vmem [#allocation6], %s2623
          %2626 = dma.done %s2621, 8192
        $region94: #{_dtt_forward_jit.13} parent=89 // pred_fallthru
          _
        // Predicated region
        $region95: #{_dtt_forward_jit.13} parent=89 // pred_check
          %p2627 = pneg %p161
        $region96: #{_dtt_forward_jit.13} parent=89 // pred_check_branch
          %2629 = sbr.rel (%p2627) target = $region98
        $region97: #{_dtt_forward_jit.13} parent=89 // pred_region
          %s2630 = smul.u32 32, %s25
          %p2631 = scmp.lt.s32.totalorder %s2630, 63
          %s2632 = scalar_select %p2631, %s2630, 63
          %s2633 = smul.addr %s2632, 8
          %s2634 = scalar_lea.vmem %s4, %s2633
        $region98: #{_dtt_forward_jit.13} parent=89 // pred_fallthru
          _
      $region90: #{_dtt_forward_jit.13} parent=5 // pred_fallthru
        _
    $region6: #{_dtt_forward_jit.13} parent=1 // loop_footer
      %s18 = sadd.s32 1, %s14
    $region7: #{_dtt_forward_jit.13} parent=1 // loop_footer_branch
      %13 = sbr.rel target = $region3
    $region8: #{_dtt_forward_jit.13} parent=1 // loop_exit
      _
    %2635 = vsyncpa [#allocation7], 1
    %s2636 = scalar_lea.sflag [#allocation7], 1
    %2637 = vsyncpa %s2636, 1

// kernel: _dtt_forward_jit.8
$region0: #{_dtt_forward_jit.8}
  #allocation0 [shape = 'u32[]', space=smem, size = 0x4, offset = 0x4, fixed_abs, tag = 'smem constant byte address 0x4 - core index']
  #allocation1 [shape = 'u32[72,128]{1,0:T(1,128)}', space=vmem, size = 0x9000, scoped, tag = 'internal scratch']
  %s0 = inlined_call_operand.vmem [shape: bf16[512,128], index: 0, kind: input, shape index: {}]
  %s1 = inlined_call_operand.vmem [shape: s32[512,1], index: 1, kind: input, shape index: {}]
  %s2 = inlined_call_operand.vmem [shape: bf16[512,128], index: 2, kind: input, shape index: {}]
  %s3 = inlined_call_operand.vmem [shape: bf16[512,128], index: 3, kind: input, shape index: {}]
  %s4 = inlined_call_operand.vmem [shape: f32[1,512], index: 4, kind: input, shape index: {}]
  %s5 = inlined_call_operand.vmem [shape: bf16[128,128], index: 5, kind: input, shape index: {}]
  %s6 = inlined_call_operand.vmem [shape: bf16[128,128], index: 6, kind: input, shape index: {}]
  %s7 = inlined_call_operand.vmem [shape: bf16[128,256], index: 7, kind: input, shape index: {}]
  %s8 = inlined_call_operand.vmem [shape: bf16[256,128], index: 8, kind: input, shape index: {}]
  %s9 = inlined_call_operand.vmem [shape: bf16[512,128], index: 9, kind: output, shape index: {}]
  %s10 = sld [smem:[#allocation0]]
  $region69: #{_dtt_forward_jit.8} parent=0
    _
  %s12 = ssub.s32 1, %s10
  %s13 = scalar_select 0, %s12, %s10
  loop: start=0, step=1, limit=4
  $region2: #{_dtt_forward_jit.8} parent=0 // loop_pre_header
    _
  $region3: #{_dtt_forward_jit.8} parent=0 // loop_header
    %s15 = sphi 0, %s19
    %p16 = scmp.ge.s32.totalorder %s15, 4
    %s25 = sphi 0, %s27
    %s28 = sphi 0, %s25
    %s29 = sphi 0, %s28
    %s45 = sphi 0, %s29
    %s51 = sphi 0, %s53
    %s54 = sphi 0, %s51
    %s55 = sphi 0, %s54
    %s71 = sphi 0, %s55
    %s75 = sphi 0, %s75
    %s77 = sphi 0, %s75
    %s78 = sphi 0, %s77
    %s92 = sphi 0, %s78
    %s96 = sphi 0, %s96
    %s98 = sphi 0, %s96
    %s99 = sphi 0, %s98
    %s113 = sphi 0, %s99
    %s117 = sphi 0, %s117
    %s119 = sphi 0, %s117
    %s120 = sphi 0, %s119
    %s134 = sphi 0, %s120
    %s138 = sphi 0, %s138
    %s140 = sphi 0, %s138
    %s141 = sphi 0, %s140
    %s155 = sphi 0, %s141
    %s159 = sphi 0, %s159
    %s161 = sphi 0, %s159
    %s162 = sphi 0, %s161
    %s176 = sphi 0, %s162
    %s180 = sphi 0, %s180
    %s182 = sphi 0, %s180
    %s183 = sphi 0, %s182
    %s197 = sphi 0, %s183
    %s201 = sphi 0, %s201
    %s203 = sphi 0, %s201
    %s204 = sphi 0, %s203
    %s218 = sphi 0, %s204
    %s224 = sphi 0, %s226
    %s227 = sphi 0, %s224
    %s228 = sphi 0, %s227
    %s244 = sphi 0, %s228
  $region4: #{_dtt_forward_jit.8} parent=0 // loop_header_branch
    %18 = sbr.rel (%p16) target = $region8
  $region5: #{_dtt_forward_jit.8} parent=0 // loop_body
    %s20 = ssub.s32 %s15, 1
    %s21 = ssub.s32 %s15, 2
    %s22 = sadd.s32 %s15, 1
    %s23 = ssub.s32 %s15, %s22
    %p24 = scmp.eq.s32.totalorder %s23, 0
    %s26 = sadd.s32 %s25, 1
    %s27 = scalar_select %p24, %s25, %s26
    %p30 = pneg %p24
    %p31 = scmp.eq.s32.totalorder %s15, 1
    %p32 = por %p30, %p31
    %p33 = scmp.ne.s32.totalorder %s25, %s28
    %p34 = scmp.eq.s32.totalorder %s15, 0
    %p35 = por %p33, %p34
    %p36 = scmp.ne.s32.totalorder %s25, %s28
    %p37 = scmp.eq.s32.totalorder %s20, 1
    %p38 = por %p36, %p37
    %p39 = scmp.ne.s32.totalorder %s28, %s29
    %p40 = scmp.eq.s32.totalorder %s20, 0
    %p41 = por %p39, %p40
    %p42 = scmp.ne.s32.totalorder %s28, %s29
    %p43 = scmp.eq.s32.totalorder %s21, 1
    %p44 = por %p42, %p43
    %p46 = scmp.ne.s32.totalorder %s29, %s45
    %p47 = scmp.eq.s32.totalorder %s21, 0
    %p48 = por %p46, %p47
    %s49 = ssub.s32 %s15, %s22
    %p50 = scmp.eq.s32.totalorder %s49, 0
    %s52 = sadd.s32 %s51, 1
    %s53 = scalar_select %p50, %s51, %s52
    %p56 = pneg %p50
    %p57 = scmp.eq.s32.totalorder %s15, 1
    %p58 = por %p56, %p57
    %p59 = scmp.ne.s32.totalorder %s51, %s54
    %p60 = scmp.eq.s32.totalorder %s15, 0
    %p61 = por %p59, %p60
    %p62 = scmp.ne.s32.totalorder %s51, %s54
    %p63 = scmp.eq.s32.totalorder %s20, 1
    %p64 = por %p62, %p63
    %p65 = scmp.ne.s32.totalorder %s54, %s55
    %p66 = scmp.eq.s32.totalorder %s20, 0
    %p67 = por %p65, %p66
    %p68 = scmp.ne.s32.totalorder %s54, %s55
    %p69 = scmp.eq.s32.totalorder %s21, 1
    %p70 = por %p68, %p69
    %p72 = scmp.ne.s32.totalorder %s55, %s71
    %p73 = scmp.eq.s32.totalorder %s21, 0
    %p74 = por %p72, %p73
    %s76 = sadd.s32 %s75, 1
    %p79 = scmp.eq.s32.totalorder %s15, 1
    %p80 = scmp.ne.s32.totalorder %s75, %s77
    %p81 = scmp.eq.s32.totalorder %s15, 0
    %p82 = por %p80, %p81
    %p83 = scmp.ne.s32.totalorder %s75, %s77
    %p84 = scmp.eq.s32.totalorder %s20, 1
    %p85 = por %p83, %p84
    %p86 = scmp.ne.s32.totalorder %s77, %s78
    %p87 = scmp.eq.s32.totalorder %s20, 0
    %p88 = por %p86, %p87
    %p89 = scmp.ne.s32.totalorder %s77, %s78
    %p90 = scmp.eq.s32.totalorder %s21, 1
    %p91 = por %p89, %p90
    %p93 = scmp.ne.s32.totalorder %s78, %s92
    %p94 = scmp.eq.s32.totalorder %s21, 0
    %p95 = por %p93, %p94
    %s97 = sadd.s32 %s96, 1
    %p100 = scmp.eq.s32.totalorder %s15, 1
    %p101 = scmp.ne.s32.totalorder %s96, %s98
    %p102 = scmp.eq.s32.totalorder %s15, 0
    %p103 = por %p101, %p102
    %p104 = scmp.ne.s32.totalorder %s96, %s98
    %p105 = scmp.eq.s32.totalorder %s20, 1
    %p106 = por %p104, %p105
    %p107 = scmp.ne.s32.totalorder %s98, %s99
    %p108 = scmp.eq.s32.totalorder %s20, 0
    %p109 = por %p107, %p108
    %p110 = scmp.ne.s32.totalorder %s98, %s99
    %p111 = scmp.eq.s32.totalorder %s21, 1
    %p112 = por %p110, %p111
    %p114 = scmp.ne.s32.totalorder %s99, %s113
    %p115 = scmp.eq.s32.totalorder %s21, 0
    %p116 = por %p114, %p115
    %s118 = sadd.s32 %s117, 1
    %p121 = scmp.eq.s32.totalorder %s15, 1
    %p122 = scmp.ne.s32.totalorder %s117, %s119
    %p123 = scmp.eq.s32.totalorder %s15, 0
    %p124 = por %p122, %p123
    %p125 = scmp.ne.s32.totalorder %s117, %s119
    %p126 = scmp.eq.s32.totalorder %s20, 1
    %p127 = por %p125, %p126
    %p128 = scmp.ne.s32.totalorder %s119, %s120
    %p129 = scmp.eq.s32.totalorder %s20, 0
    %p130 = por %p128, %p129
    %p131 = scmp.ne.s32.totalorder %s119, %s120
    %p132 = scmp.eq.s32.totalorder %s21, 1
    %p133 = por %p131, %p132
    %p135 = scmp.ne.s32.totalorder %s120, %s134
    %p136 = scmp.eq.s32.totalorder %s21, 0
    %p137 = por %p135, %p136
    %s139 = sadd.s32 %s138, 1
    %p142 = scmp.eq.s32.totalorder %s15, 1
    %p143 = scmp.ne.s32.totalorder %s138, %s140
    %p144 = scmp.eq.s32.totalorder %s15, 0
    %p145 = por %p143, %p144
    %p146 = scmp.ne.s32.totalorder %s138, %s140
    %p147 = scmp.eq.s32.totalorder %s20, 1
    %p148 = por %p146, %p147
    %p149 = scmp.ne.s32.totalorder %s140, %s141
    %p150 = scmp.eq.s32.totalorder %s20, 0
    %p151 = por %p149, %p150
    %p152 = scmp.ne.s32.totalorder %s140, %s141
    %p153 = scmp.eq.s32.totalorder %s21, 1
    %p154 = por %p152, %p153
    %p156 = scmp.ne.s32.totalorder %s141, %s155
    %p157 = scmp.eq.s32.totalorder %s21, 0
    %p158 = por %p156, %p157
    %s160 = sadd.s32 %s159, 1
    %p163 = scmp.eq.s32.totalorder %s15, 1
    %p164 = scmp.ne.s32.totalorder %s159, %s161
    %p165 = scmp.eq.s32.totalorder %s15, 0
    %p166 = por %p164, %p165
    %p167 = scmp.ne.s32.totalorder %s159, %s161
    %p168 = scmp.eq.s32.totalorder %s20, 1
    %p169 = por %p167, %p168
    %p170 = scmp.ne.s32.totalorder %s161, %s162
    %p171 = scmp.eq.s32.totalorder %s20, 0
    %p172 = por %p170, %p171
    %p173 = scmp.ne.s32.totalorder %s161, %s162
    %p174 = scmp.eq.s32.totalorder %s21, 1
    %p175 = por %p173, %p174
    %p177 = scmp.ne.s32.totalorder %s162, %s176
    %p178 = scmp.eq.s32.totalorder %s21, 0
    %p179 = por %p177, %p178
    %s181 = sadd.s32 %s180, 1
    %p184 = scmp.eq.s32.totalorder %s15, 1
    %p185 = scmp.ne.s32.totalorder %s180, %s182
    %p186 = scmp.eq.s32.totalorder %s15, 0
    %p187 = por %p185, %p186
    %p188 = scmp.ne.s32.totalorder %s180, %s182
    %p189 = scmp.eq.s32.totalorder %s20, 1
    %p190 = por %p188, %p189
    %p191 = scmp.ne.s32.totalorder %s182, %s183
    %p192 = scmp.eq.s32.totalorder %s20, 0
    %p193 = por %p191, %p192
    %p194 = scmp.ne.s32.totalorder %s182, %s183
    %p195 = scmp.eq.s32.totalorder %s21, 1
    %p196 = por %p194, %p195
    %p198 = scmp.ne.s32.totalorder %s183, %s197
    %p199 = scmp.eq.s32.totalorder %s21, 0
    %p200 = por %p198, %p199
    %s202 = sadd.s32 %s201, 1
    %p205 = scmp.eq.s32.totalorder %s15, 1
    %p206 = scmp.ne.s32.totalorder %s201, %s203
    %p207 = scmp.eq.s32.totalorder %s15, 0
    %p208 = por %p206, %p207
    %p209 = scmp.ne.s32.totalorder %s201, %s203
    %p210 = scmp.eq.s32.totalorder %s20, 1
    %p211 = por %p209, %p210
    %p212 = scmp.ne.s32.totalorder %s203, %s204
    %p213 = scmp.eq.s32.totalorder %s20, 0
    %p214 = por %p212, %p213
    %p215 = scmp.ne.s32.totalorder %s203, %s204
    %p216 = scmp.eq.s32.totalorder %s21, 1
    %p217 = por %p215, %p216
    %p219 = scmp.ne.s32.totalorder %s204, %s218
    %p220 = scmp.eq.s32.totalorder %s21, 0
    %p221 = por %p219, %p220
    %s222 = ssub.s32 %s15, %s22
    %p223 = scmp.eq.s32.totalorder %s222, 0
    %s225 = sadd.s32 %s224, 1
    %s226 = scalar_select %p223, %s224, %s225
    %p229 = pneg %p223
    %p230 = scmp.eq.s32.totalorder %s15, 1
    %p231 = por %p229, %p230
    %p232 = scmp.ne.s32.totalorder %s224, %s227
    %p233 = scmp.eq.s32.totalorder %s15, 0
    %p234 = por %p232, %p233
    %p235 = scmp.ne.s32.totalorder %s224, %s227
    %p236 = scmp.eq.s32.totalorder %s20, 1
    %p237 = por %p235, %p236
    %p238 = scmp.ne.s32.totalorder %s227, %s228
    %p239 = scmp.eq.s32.totalorder %s20, 0
    %p240 = por %p238, %p239
    %p241 = scmp.ne.s32.totalorder %s227, %s228
    %p242 = scmp.eq.s32.totalorder %s21, 1
    %p243 = por %p241, %p242
    %p245 = scmp.ne.s32.totalorder %s228, %s244
    %p246 = scmp.eq.s32.totalorder %s21, 0
    %p247 = por %p245, %p246
    %p248 = scmp.le.s32.totalorder 1, %s15
    %p249 = scmp.lt.s32.totalorder %s15, 3
    %p250 = pnand %p248, %p249
    %p251 = pneg %p250
    // Predicated region
    $region9: #{_dtt_forward_jit.8} parent=5 // pred_check
      _
    $region10: #{_dtt_forward_jit.8} parent=5 // pred_check_branch
      %253 = sbr.rel (%p250) target = $region12
    $region11: #{_dtt_forward_jit.8} parent=5 // pred_region
      %s254 = ssub.s32 %s15, 1
      // Predicated region
      $region13: #{_dtt_forward_jit.8} parent=11 // pred_check
        %p255 = pneg %p88
      $region14: #{_dtt_forward_jit.8} parent=11 // pred_check_branch
        %257 = sbr.rel (%p255) target = $region16
      $region15: #{_dtt_forward_jit.8} parent=11 // pred_region
        _
      $region16: #{_dtt_forward_jit.8} parent=11 // pred_fallthru
        _
      // Predicated region
      $region17: #{_dtt_forward_jit.8} parent=11 // pred_check
        %p258 = pneg %p109
      $region18: #{_dtt_forward_jit.8} parent=11 // pred_check_branch
        %260 = sbr.rel (%p258) target = $region20
      $region19: #{_dtt_forward_jit.8} parent=11 // pred_region
        _
      $region20: #{_dtt_forward_jit.8} parent=11 // pred_fallthru
        _
      // Predicated region
      $region21: #{_dtt_forward_jit.8} parent=11 // pred_check
        %p261 = pneg %p130
      $region22: #{_dtt_forward_jit.8} parent=11 // pred_check_branch
        %263 = sbr.rel (%p261) target = $region24
      $region23: #{_dtt_forward_jit.8} parent=11 // pred_region
        _
      $region24: #{_dtt_forward_jit.8} parent=11 // pred_fallthru
        _
      // Predicated region
      $region25: #{_dtt_forward_jit.8} parent=11 // pred_check
        %p264 = pneg %p151
      $region26: #{_dtt_forward_jit.8} parent=11 // pred_check_branch
        %266 = sbr.rel (%p264) target = $region28
      $region27: #{_dtt_forward_jit.8} parent=11 // pred_region
        _
      $region28: #{_dtt_forward_jit.8} parent=11 // pred_fallthru
        _
      // Predicated region
      $region29: #{_dtt_forward_jit.8} parent=11 // pred_check
        %p267 = pneg %p172
      $region30: #{_dtt_forward_jit.8} parent=11 // pred_check_branch
        %269 = sbr.rel (%p267) target = $region32
      $region31: #{_dtt_forward_jit.8} parent=11 // pred_region
        _
      $region32: #{_dtt_forward_jit.8} parent=11 // pred_fallthru
        _
      // Predicated region
      $region33: #{_dtt_forward_jit.8} parent=11 // pred_check
        %p270 = pneg %p193
      $region34: #{_dtt_forward_jit.8} parent=11 // pred_check_branch
        %272 = sbr.rel (%p270) target = $region36
      $region35: #{_dtt_forward_jit.8} parent=11 // pred_region
        _
      $region36: #{_dtt_forward_jit.8} parent=11 // pred_fallthru
        _
      // Predicated region
      $region37: #{_dtt_forward_jit.8} parent=11 // pred_check
        %p273 = pneg %p214
      $region38: #{_dtt_forward_jit.8} parent=11 // pred_check_branch
        %275 = sbr.rel (%p273) target = $region40
      $region39: #{_dtt_forward_jit.8} parent=11 // pred_region
        _
      $region40: #{_dtt_forward_jit.8} parent=11 // pred_fallthru
        _
    $region12: #{_dtt_forward_jit.8} parent=5 // pred_fallthru
      _
    %p276 = scmp.lt.s32.totalorder %s15, 2
    // Predicated region
    $region41: #{_dtt_forward_jit.8} parent=5 // pred_check
      %p277 = pneg %p276
    $region42: #{_dtt_forward_jit.8} parent=5 // pred_check_branch
      %279 = sbr.rel (%p277) target = $region44
    $region43: #{_dtt_forward_jit.8} parent=5 // pred_region
      // Predicated region
      $region45: #{_dtt_forward_jit.8} parent=43 // pred_check
        %p280 = pneg %p35
      $region46: #{_dtt_forward_jit.8} parent=43 // pred_check_branch
        %282 = sbr.rel (%p280) target = $region48
      $region47: #{_dtt_forward_jit.8} parent=43 // pred_region
        %s283 = smul.u32 32, %s15
        %p284 = scmp.lt.s32.totalorder %s283, 63
        %s285 = scalar_select %p284, %s283, 63
        %s286 = smul.addr %s285, 4
        %s287 = scalar_lea.vmem %s0, %s286
        %s288 = smul.u32 32, %s15
      $region48: #{_dtt_forward_jit.8} parent=43 // pred_fallthru
        _
      // Predicated region
      $region49: #{_dtt_forward_jit.8} parent=43 // pred_check
        %p289 = pneg %p61
      $region50: #{_dtt_forward_jit.8} parent=43 // pred_check_branch
        %291 = sbr.rel (%p289) target = $region52
      $region51: #{_dtt_forward_jit.8} parent=43 // pred_region
        %s292 = smul.u32 32, %s15
        %p293 = scmp.lt.s32.totalorder %s292, 63
        %s294 = scalar_select %p293, %s292, 63
        %s295 = smul.addr %s294, 8
        %s296 = scalar_lea.vmem %s1, %s295
        %s297 = smul.u32 32, %s15
      $region52: #{_dtt_forward_jit.8} parent=43 // pred_fallthru
        _
    $region44: #{_dtt_forward_jit.8} parent=5 // pred_fallthru
      _
    %p298 = scmp.le.s32.totalorder 1, %s15
    %p299 = scmp.lt.s32.totalorder %s15, 3
    %p300 = pnand %p298, %p299
    %p301 = pneg %p300
    // Predicated region
    $region53: #{_dtt_forward_jit.8} parent=5 // pred_check
      _
    $region54: #{_dtt_forward_jit.8} parent=5 // pred_check_branch
      %303 = sbr.rel (%p300) target = $region56
    $region55: #{_dtt_forward_jit.8} parent=5 // pred_region
      %s304 = ssub.s32 %s15, 1
      %s305 = smul.u32 32, %s20
      %p306 = scmp.lt.s32.totalorder %s305, 63
      %s307 = scalar_select %p306, %s305, 63
      %s308 = smul.addr %s307, 4
      %s309 = scalar_lea.vmem %s0, %s308
      %p310 = pneg %p41
      %p311 = pneg %p38
      %s312 = smul.u32 32, %s20
      %p313 = scmp.lt.s32.totalorder %s312, 63
      %s314 = scalar_select %p313, %s312, 63
      %s315 = smul.addr %s314, 8
      %s316 = scalar_lea.vmem %s1, %s315
      %p317 = pneg %p67
      %p318 = pneg %p64
      %p319 = pneg %p88
      %p320 = pneg %p85
      %p321 = pneg %p109
      %p322 = pneg %p106
      %p323 = pneg %p130
      %p324 = pneg %p127
      %p325 = pneg %p151
      %p326 = pneg %p148
      %p327 = pneg %p172
      %p328 = pneg %p169
      %p329 = pneg %p193
      %p330 = pneg %p190
      %p331 = pneg %p214
      %p332 = pneg %p211
      %p333 = pneg %p240
      %p334 = pneg %p237
      %s335 = smul.u32 32, %s20
      %p336 = scmp.lt.s32.totalorder %s335, 63
      %s337 = scalar_select %p336, %s335, 63
      %s338 = smul.addr %s337, 4
      %s339 = scalar_lea.vmem %s9, %s338
      %s340 = smul.u32 32, %s20
      %p341 = scmp.lt.s32.totalorder %s340, 63
      %s342 = scalar_select %p341, %s340, 63
      %s343 = smul.addr %s342, 4
      %s344 = scalar_lea.vmem %s0, %s343
      %s345 = smul.u32 32, %s20
      %s346 = smul.u32 32, %s20
      %p347 = scmp.lt.s32.totalorder %s346, 63
      %s348 = scalar_select %p347, %s346, 63
      %s349 = smul.addr %s348, 8
      %s350 = scalar_lea.vmem %s1, %s349
      %s351 = smul.u32 32, %s20
      %s352 = smul.u32 32, %s20
      %p353 = scmp.lt.s32.totalorder %s352, 63
      %s354 = scalar_select %p353, %s352, 63
      %s355 = smul.addr %s354, 4
      %s356 = scalar_lea.vmem %s9, %s355
      %s357 = smul.u32 32, %s20
      %v358 = vld [vmem:[%s344] sm:$0xf]
      %v359 = vld [vmem:[%s344 + $0x4] sm:$0xf]
      %v360 = vld [vmem:[%s344 + $0x8] sm:$0xf]
      %v361 = vld [vmem:[%s344 + $0xc] sm:$0xf]
      %v362 = vld [vmem:[%s344 + $0x10] sm:$0xf]
      %v363 = vld [vmem:[%s344 + $0x14] sm:$0xf]
      %v364 = vld [vmem:[%s344 + $0x18] sm:$0xf]
      %v365 = vld [vmem:[%s344 + $0x1c] sm:$0xf]
      %v366 = vld [vmem:[%s344 + $0x20] sm:$0xf]
      %v367 = vld [vmem:[%s344 + $0x24] sm:$0xf]
      %v368 = vld [vmem:[%s344 + $0x28] sm:$0xf]
      %v369 = vld [vmem:[%s344 + $0x2c] sm:$0xf]
      %v370 = vld [vmem:[%s344 + $0x30] sm:$0xf]
      %v371 = vld [vmem:[%s344 + $0x34] sm:$0xf]
      %v372 = vld [vmem:[%s344 + $0x38] sm:$0xf]
      %v373 = vld [vmem:[%s344 + $0x3c] sm:$0xf]
      %v374 = vld [vmem:[%s344 + $0x40] sm:$0xf]
      %v375 = vld [vmem:[%s344 + $0x44] sm:$0xf]
      %v376 = vld [vmem:[%s344 + $0x48] sm:$0xf]
      %v377 = vld [vmem:[%s344 + $0x4c] sm:$0xf]
      %v378 = vld [vmem:[%s344 + $0x50] sm:$0xf]
      %v379 = vld [vmem:[%s344 + $0x54] sm:$0xf]
      %v380 = vld [vmem:[%s344 + $0x58] sm:$0xf]
      %v381 = vld [vmem:[%s344 + $0x5c] sm:$0xf]
      %v382 = vld [vmem:[%s344 + $0x60] sm:$0xf]
      %v383 = vld [vmem:[%s344 + $0x64] sm:$0xf]
      %v384 = vld [vmem:[%s344 + $0x68] sm:$0xf]
      %v385 = vld [vmem:[%s344 + $0x6c] sm:$0xf]
      %v386 = vld [vmem:[%s344 + $0x70] sm:$0xf]
      %v387 = vld [vmem:[%s344 + $0x74] sm:$0xf]
      %v388 = vld [vmem:[%s344 + $0x78] sm:$0xf]
      %v389 = vld [vmem:[%s344 + $0x7c] sm:$0xf]
      %v390 = vld [vmem:[%s5] sm:$0xf]
      %v391 = vld [vmem:[%s5 + $0x4] sm:$0xf]
      %v392 = vld [vmem:[%s5 + $0x8] sm:$0xf]
      %v393 = vld [vmem:[%s5 + $0xc] sm:$0xf]
      %v394 = vld [vmem:[%s5 + $0x10] sm:$0xf]
      %v395 = vld [vmem:[%s5 + $0x14] sm:$0xf]
      %v396 = vld [vmem:[%s5 + $0x18] sm:$0xf]
      %v397 = vld [vmem:[%s5 + $0x1c] sm:$0xf]
      %v398 = vld [vmem:[%s5 + $0x20] sm:$0xf]
      %v399 = vld [vmem:[%s5 + $0x24] sm:$0xf]
      %v400 = vld [vmem:[%s5 + $0x28] sm:$0xf]
      %v401 = vld [vmem:[%s5 + $0x2c] sm:$0xf]
      %v402 = vld [vmem:[%s5 + $0x30] sm:$0xf]
      %v403 = vld [vmem:[%s5 + $0x34] sm:$0xf]
      %v404 = vld [vmem:[%s5 + $0x38] sm:$0xf]
      %v405 = vld [vmem:[%s5 + $0x3c] sm:$0xf]
      %v438 = vunpack.c.l.b16 %v358
      %v439 = vunpack.c.l.b16 %v359
      %v440 = vunpack.c.l.b16 %v360
      %v441 = vunpack.c.l.b16 %v361
      %v442 = vunpack.c.l.b16 %v362
      %v443 = vunpack.c.l.b16 %v363
      %v444 = vunpack.c.l.b16 %v364
      %v445 = vunpack.c.l.b16 %v365
      %v446 = vunpack.c.l.b16 %v366
      %v447 = vunpack.c.l.b16 %v367
      %v448 = vunpack.c.l.b16 %v368
      %v449 = vunpack.c.l.b16 %v369
      %v450 = vunpack.c.l.b16 %v370
      %v451 = vunpack.c.l.b16 %v371
      %v452 = vunpack.c.l.b16 %v372
      %v453 = vunpack.c.l.b16 %v373
      %v454 = vunpack.c.l.b16 %v374
      %v455 = vunpack.c.l.b16 %v375
      %v456 = vunpack.c.l.b16 %v376
      %v457 = vunpack.c.l.b16 %v377
      %v458 = vunpack.c.l.b16 %v378
      %v459 = vunpack.c.l.b16 %v379
      %v460 = vunpack.c.l.b16 %v380
      %v461 = vunpack.c.l.b16 %v381
      %v462 = vunpack.c.l.b16 %v382
      %v463 = vunpack.c.l.b16 %v383
      %v464 = vunpack.c.l.b16 %v384
      %v465 = vunpack.c.l.b16 %v385
      %v466 = vunpack.c.l.b16 %v386
      %v467 = vunpack.c.l.b16 %v387
      %v468 = vunpack.c.l.b16 %v388
      %v469 = vunpack.c.l.b16 %v389
      %v470 = vpack.c.b16 %v439, %v438
      %v471 = vpack.c.b16 %v441, %v440
      %v472 = vpack.c.b16 %v443, %v442
      %v473 = vpack.c.b16 %v445, %v444
      %v474 = vpack.c.b16 %v447, %v446
      %v475 = vpack.c.b16 %v449, %v448
      %v476 = vpack.c.b16 %v451, %v450
      %v477 = vpack.c.b16 %v453, %v452
      %v478 = vpack.c.b16 %v455, %v454
      %v479 = vpack.c.b16 %v457, %v456
      %v480 = vpack.c.b16 %v459, %v458
      %v481 = vpack.c.b16 %v461, %v460
      %v482 = vpack.c.b16 %v463, %v462
      %v483 = vpack.c.b16 %v465, %v464
      %v484 = vpack.c.b16 %v467, %v466
      %v485 = vpack.c.b16 %v469, %v468
      %v518 = vunpack.c.l.b16 %v390
      %v519 = vunpack.c.l.b16 %v391
      %v520 = vunpack.c.l.b16 %v392
      %v521 = vunpack.c.l.b16 %v393
      %v522 = vunpack.c.l.b16 %v394
      %v523 = vunpack.c.l.b16 %v395
      %v524 = vunpack.c.l.b16 %v396
      %v525 = vunpack.c.l.b16 %v397
      %v526 = vunpack.c.l.b16 %v398
      %v527 = vunpack.c.l.b16 %v399
      %v528 = vunpack.c.l.b16 %v400
      %v529 = vunpack.c.l.b16 %v401
      %v530 = vunpack.c.l.b16 %v402
      %v531 = vunpack.c.l.b16 %v403
      %v532 = vunpack.c.l.b16 %v404
      %v533 = vunpack.c.l.b16 %v405
      %v534 = vpack.c.b16 %v519, %v518
      %v535 = vpack.c.b16 %v521, %v520
      %v536 = vpack.c.b16 %v523, %v522
      %v537 = vpack.c.b16 %v525, %v524
      %v538 = vpack.c.b16 %v527, %v526
      %v539 = vpack.c.b16 %v529, %v528
      %v540 = vpack.c.b16 %v531, %v530
      %v541 = vpack.c.b16 %v533, %v532
      %550 = vmatpush.bf16.msra.mxu0 %v541
      %551 = vmatpush.bf16.msra.mxu0 %v540
      %552 = vmatpush.bf16.msra.mxu0 %v539
      %553 = vmatpush.bf16.msra.mxu0 %v538
      %554 = vmatpush.bf16.msra.mxu0 %v537
      %555 = vmatpush.bf16.msra.mxu0 %v536
      %556 = vmatpush.bf16.msra.mxu0 %v535
      %557 = vmatpush.bf16.msra.mxu0 %v534
      %558 = vmatmul.bf16.gmra.mxu0 %v470
      %v559 = vpop.f32.mrf.mxu0
      %v560 = vadd.f32 0.0, %v559
      %v561 = vpop.f32.mrf.mxu0
      %v562 = vadd.f32 0.0, %v561
      %563 = vmatmul.bf16.gmra.mxu0 %v471
      %v564 = vpop.f32.mrf.mxu0
      %v565 = vadd.f32 0.0, %v564
      %v566 = vpop.f32.mrf.mxu0
      %v567 = vadd.f32 0.0, %v566
      %568 = vmatmul.bf16.gmra.mxu0 %v472
      %v569 = vpop.f32.mrf.mxu0
      %v570 = vadd.f32 0.0, %v569
      %v571 = vpop.f32.mrf.mxu0
      %v572 = vadd.f32 0.0, %v571
      %573 = vmatmul.bf16.gmra.mxu0 %v473
      %v574 = vpop.f32.mrf.mxu0
      %v575 = vadd.f32 0.0, %v574
      %v576 = vpop.f32.mrf.mxu0
      %v577 = vadd.f32 0.0, %v576
      %578 = vmatmul.bf16.gmra.mxu0 %v474
      %v579 = vpop.f32.mrf.mxu0
      %v580 = vadd.f32 0.0, %v579
      %v581 = vpop.f32.mrf.mxu0
      %v582 = vadd.f32 0.0, %v581
      %583 = vmatmul.bf16.gmra.mxu0 %v475
      %v584 = vpop.f32.mrf.mxu0
      %v585 = vadd.f32 0.0, %v584
      %v586 = vpop.f32.mrf.mxu0
      %v587 = vadd.f32 0.0, %v586
      %588 = vmatmul.bf16.gmra.mxu0 %v476
      %v589 = vpop.f32.mrf.mxu0
      %v590 = vadd.f32 0.0, %v589
      %v591 = vpop.f32.mrf.mxu0
      %v592 = vadd.f32 0.0, %v591
      %593 = vmatmul.bf16.gmra.mxu0 %v477
      %v594 = vpop.f32.mrf.mxu0
      %v595 = vadd.f32 0.0, %v594
      %v596 = vpop.f32.mrf.mxu0
      %v597 = vadd.f32 0.0, %v596
      %598 = vmatmul.bf16.gmra.mxu0 %v478
      %v599 = vpop.f32.mrf.mxu0
      %v600 = vadd.f32 0.0, %v599
      %v601 = vpop.f32.mrf.mxu0
      %v602 = vadd.f32 0.0, %v601
      %603 = vmatmul.bf16.gmra.mxu0 %v479
      %v604 = vpop.f32.mrf.mxu0
      %v605 = vadd.f32 0.0, %v604
      %v606 = vpop.f32.mrf.mxu0
      %v607 = vadd.f32 0.0, %v606
      %608 = vmatmul.bf16.gmra.mxu0 %v480
      %v609 = vpop.f32.mrf.mxu0
      %v610 = vadd.f32 0.0, %v609
      %v611 = vpop.f32.mrf.mxu0
      %v612 = vadd.f32 0.0, %v611
      %613 = vmatmul.bf16.gmra.mxu0 %v481
      %v614 = vpop.f32.mrf.mxu0
      %v615 = vadd.f32 0.0, %v614
      %v616 = vpop.f32.mrf.mxu0
      %v617 = vadd.f32 0.0, %v616
      %618 = vmatmul.bf16.gmra.mxu0 %v482
      %v619 = vpop.f32.mrf.mxu0
      %v620 = vadd.f32 0.0, %v619
      %v621 = vpop.f32.mrf.mxu0
      %v622 = vadd.f32 0.0, %v621
      %623 = vmatmul.bf16.gmra.mxu0 %v483
      %v624 = vpop.f32.mrf.mxu0
      %v625 = vadd.f32 0.0, %v624
      %v626 = vpop.f32.mrf.mxu0
      %v627 = vadd.f32 0.0, %v626
      %628 = vmatmul.bf16.gmra.mxu0 %v484
      %v629 = vpop.f32.mrf.mxu0
      %v630 = vadd.f32 0.0, %v629
      %v631 = vpop.f32.mrf.mxu0
      %v632 = vadd.f32 0.0, %v631
      %633 = vmatmul.bf16.gmra.mxu0 %v485
      %v634 = vpop.f32.mrf.mxu0
      %v635 = vadd.f32 0.0, %v634
      %v636 = vpop.f32.mrf.mxu0
      %v637 = vadd.f32 0.0, %v636
      %638 = vdwg.mxu0
      %v639 = vpack.c.bf16 %v562, %v560
      %v640 = vpack.c.bf16 %v567, %v565
      %v641 = vpack.c.bf16 %v572, %v570
      %v642 = vpack.c.bf16 %v577, %v575
      %v643 = vpack.c.bf16 %v582, %v580
      %v644 = vpack.c.bf16 %v587, %v585
      %v645 = vpack.c.bf16 %v592, %v590
      %v646 = vpack.c.bf16 %v597, %v595
      %v647 = vpack.c.bf16 %v602, %v600
      %v648 = vpack.c.bf16 %v607, %v605
      %v649 = vpack.c.bf16 %v612, %v610
      %v650 = vpack.c.bf16 %v617, %v615
      %v651 = vpack.c.bf16 %v622, %v620
      %v652 = vpack.c.bf16 %v627, %v625
      %v653 = vpack.c.bf16 %v632, %v630
      %v654 = vpack.c.bf16 %v637, %v635
      %v655 = vld [vmem:[%s2] sm:$0xf]
      %v656 = vld [vmem:[%s2 + $0x4] sm:$0xf]
      %v657 = vld [vmem:[%s2 + $0x8] sm:$0xf]
      %v658 = vld [vmem:[%s2 + $0xc] sm:$0xf]
      %v659 = vld [vmem:[%s2 + $0x10] sm:$0xf]
      %v660 = vld [vmem:[%s2 + $0x14] sm:$0xf]
      %v661 = vld [vmem:[%s2 + $0x18] sm:$0xf]
      %v662 = vld [vmem:[%s2 + $0x1c] sm:$0xf]
      %v663 = vld [vmem:[%s2 + $0x20] sm:$0xf]
      %v664 = vld [vmem:[%s2 + $0x24] sm:$0xf]
      %v665 = vld [vmem:[%s2 + $0x28] sm:$0xf]
      %v666 = vld [vmem:[%s2 + $0x2c] sm:$0xf]
      %v667 = vld [vmem:[%s2 + $0x30] sm:$0xf]
      %v668 = vld [vmem:[%s2 + $0x34] sm:$0xf]
      %v669 = vld [vmem:[%s2 + $0x38] sm:$0xf]
      %v670 = vld [vmem:[%s2 + $0x3c] sm:$0xf]
      %v671 = vld [vmem:[%s2 + $0x40] sm:$0xf]
      %v672 = vld [vmem:[%s2 + $0x44] sm:$0xf]
      %v673 = vld [vmem:[%s2 + $0x48] sm:$0xf]
      %v674 = vld [vmem:[%s2 + $0x4c] sm:$0xf]
      %v675 = vld [vmem:[%s2 + $0x50] sm:$0xf]
      %v676 = vld [vmem:[%s2 + $0x54] sm:$0xf]
      %v677 = vld [vmem:[%s2 + $0x58] sm:$0xf]
      %v678 = vld [vmem:[%s2 + $0x5c] sm:$0xf]
      %v679 = vld [vmem:[%s2 + $0x60] sm:$0xf]
      %v680 = vld [vmem:[%s2 + $0x64] sm:$0xf]
      %v681 = vld [vmem:[%s2 + $0x68] sm:$0xf]
      %v682 = vld [vmem:[%s2 + $0x6c] sm:$0xf]
      %v683 = vld [vmem:[%s2 + $0x70] sm:$0xf]
      %v684 = vld [vmem:[%s2 + $0x74] sm:$0xf]
      %v685 = vld [vmem:[%s2 + $0x78] sm:$0xf]
      %v686 = vld [vmem:[%s2 + $0x7c] sm:$0xf]
      %v687 = vld [vmem:[%s2 + $0x80] sm:$0xf]
      %v688 = vld [vmem:[%s2 + $0x84] sm:$0xf]
      %v689 = vld [vmem:[%s2 + $0x88] sm:$0xf]
      %v690 = vld [vmem:[%s2 + $0x8c] sm:$0xf]
      %v691 = vld [vmem:[%s2 + $0x90] sm:$0xf]
      %v692 = vld [vmem:[%s2 + $0x94] sm:$0xf]
      %v693 = vld [vmem:[%s2 + $0x98] sm:$0xf]
      %v694 = vld [vmem:[%s2 + $0x9c] sm:$0xf]
      %v695 = vld [vmem:[%s2 + $0xa0] sm:$0xf]
      %v696 = vld [vmem:[%s2 + $0xa4] sm:$0xf]
      %v697 = vld [vmem:[%s2 + $0xa8] sm:$0xf]
      %v698 = vld [vmem:[%s2 + $0xac] sm:$0xf]
      %v699 = vld [vmem:[%s2 + $0xb0] sm:$0xf]
      %v700 = vld [vmem:[%s2 + $0xb4] sm:$0xf]
      %v701 = vld [vmem:[%s2 + $0xb8] sm:$0xf]
      %v702 = vld [vmem:[%s2 + $0xbc] sm:$0xf]
      %v703 = vld [vmem:[%s2 + $0xc0] sm:$0xf]
      %v704 = vld [vmem:[%s2 + $0xc4] sm:$0xf]
      %v705 = vld [vmem:[%s2 + $0xc8] sm:$0xf]
      %v706 = vld [vmem:[%s2 + $0xcc] sm:$0xf]
      %v707 = vld [vmem:[%s2 + $0xd0] sm:$0xf]
      %v708 = vld [vmem:[%s2 + $0xd4] sm:$0xf]
      %v709 = vld [vmem:[%s2 + $0xd8] sm:$0xf]
      %v710 = vld [vmem:[%s2 + $0xdc] sm:$0xf]
      %v711 = vld [vmem:[%s2 + $0xe0] sm:$0xf]
      %v712 = vld [vmem:[%s2 + $0xe4] sm:$0xf]
      %v713 = vld [vmem:[%s2 + $0xe8] sm:$0xf]
      %v714 = vld [vmem:[%s2 + $0xec] sm:$0xf]
      %v715 = vld [vmem:[%s2 + $0xf0] sm:$0xf]
      %v716 = vld [vmem:[%s2 + $0xf4] sm:$0xf]
      %v717 = vld [vmem:[%s2 + $0xf8] sm:$0xf]
      %v718 = vld [vmem:[%s2 + $0xfc] sm:$0xf]
      %v783 = vunpack.c.l.b16 %v655
      %v784 = vunpack.c.l.b16 %v656
      %v785 = vunpack.c.l.b16 %v657
      %v786 = vunpack.c.l.b16 %v658
      %v787 = vunpack.c.l.b16 %v659
      %v788 = vunpack.c.l.b16 %v660
      %v789 = vunpack.c.l.b16 %v661
      %v790 = vunpack.c.l.b16 %v662
      %v791 = vunpack.c.l.b16 %v663
      %v792 = vunpack.c.l.b16 %v664
      %v793 = vunpack.c.l.b16 %v665
      %v794 = vunpack.c.l.b16 %v666
      %v795 = vunpack.c.l.b16 %v667
      %v796 = vunpack.c.l.b16 %v668
      %v797 = vunpack.c.l.b16 %v669
      %v798 = vunpack.c.l.b16 %v670
      %v799 = vunpack.c.l.b16 %v671
      %v800 = vunpack.c.l.b16 %v672
      %v801 = vunpack.c.l.b16 %v673
      %v802 = vunpack.c.l.b16 %v674
      %v803 = vunpack.c.l.b16 %v675
      %v804 = vunpack.c.l.b16 %v676
      %v805 = vunpack.c.l.b16 %v677
      %v806 = vunpack.c.l.b16 %v678
      %v807 = vunpack.c.l.b16 %v679
      %v808 = vunpack.c.l.b16 %v680
      %v809 = vunpack.c.l.b16 %v681
      %v810 = vunpack.c.l.b16 %v682
      %v811 = vunpack.c.l.b16 %v683
      %v812 = vunpack.c.l.b16 %v684
      %v813 = vunpack.c.l.b16 %v685
      %v814 = vunpack.c.l.b16 %v686
      %v815 = vunpack.c.l.b16 %v687
      %v816 = vunpack.c.l.b16 %v688
      %v817 = vunpack.c.l.b16 %v689
      %v818 = vunpack.c.l.b16 %v690
      %v819 = vunpack.c.l.b16 %v691
      %v820 = vunpack.c.l.b16 %v692
      %v821 = vunpack.c.l.b16 %v693
      %v822 = vunpack.c.l.b16 %v694
      %v823 = vunpack.c.l.b16 %v695
      %v824 = vunpack.c.l.b16 %v696
      %v825 = vunpack.c.l.b16 %v697
      %v826 = vunpack.c.l.b16 %v698
      %v827 = vunpack.c.l.b16 %v699
      %v828 = vunpack.c.l.b16 %v700
      %v829 = vunpack.c.l.b16 %v701
      %v830 = vunpack.c.l.b16 %v702
      %v831 = vunpack.c.l.b16 %v703
      %v832 = vunpack.c.l.b16 %v704
      %v833 = vunpack.c.l.b16 %v705
      %v834 = vunpack.c.l.b16 %v706
      %v835 = vunpack.c.l.b16 %v707
      %v836 = vunpack.c.l.b16 %v708
      %v837 = vunpack.c.l.b16 %v709
      %v838 = vunpack.c.l.b16 %v710
      %v839 = vunpack.c.l.b16 %v711
      %v840 = vunpack.c.l.b16 %v712
      %v841 = vunpack.c.l.b16 %v713
      %v842 = vunpack.c.l.b16 %v714
      %v843 = vunpack.c.l.b16 %v715
      %v844 = vunpack.c.l.b16 %v716
      %v845 = vunpack.c.l.b16 %v717
      %v846 = vunpack.c.l.b16 %v718
      %v847 = vpack.c.b16 %v784, %v783
      %v848 = vpack.c.b16 %v786, %v785
      %v849 = vpack.c.b16 %v788, %v787
      %v850 = vpack.c.b16 %v790, %v789
      %v851 = vpack.c.b16 %v792, %v791
      %v852 = vpack.c.b16 %v794, %v793
      %v853 = vpack.c.b16 %v796, %v795
      %v854 = vpack.c.b16 %v798, %v797
      %v855 = vpack.c.b16 %v800, %v799
      %v856 = vpack.c.b16 %v802, %v801
      %v857 = vpack.c.b16 %v804, %v803
      %v858 = vpack.c.b16 %v806, %v805
      %v859 = vpack.c.b16 %v808, %v807
      %v860 = vpack.c.b16 %v810, %v809
      %v861 = vpack.c.b16 %v812, %v811
      %v862 = vpack.c.b16 %v814, %v813
      %v863 = vpack.c.b16 %v816, %v815
      %v864 = vpack.c.b16 %v818, %v817
      %v865 = vpack.c.b16 %v820, %v819
      %v866 = vpack.c.b16 %v822, %v821
      %v867 = vpack.c.b16 %v824, %v823
      %v868 = vpack.c.b16 %v826, %v825
      %v869 = vpack.c.b16 %v828, %v827
      %v870 = vpack.c.b16 %v830, %v829
      %v871 = vpack.c.b16 %v832, %v831
      %v872 = vpack.c.b16 %v834, %v833
      %v873 = vpack.c.b16 %v836, %v835
      %v874 = vpack.c.b16 %v838, %v837
      %v875 = vpack.c.b16 %v840, %v839
      %v876 = vpack.c.b16 %v842, %v841
      %v877 = vpack.c.b16 %v844, %v843
      %v878 = vpack.c.b16 %v846, %v845
      %911 = vmatpush.bf16.xpose.msra.mxu0 %v854
      %912 = vmatpush.bf16.xpose.msra.mxu0 %v853
      %913 = vmatpush.bf16.xpose.msra.mxu0 %v852
      %914 = vmatpush.bf16.xpose.msra.mxu0 %v851
      %915 = vmatpush.bf16.xpose.msra.mxu0 %v850
      %916 = vmatpush.bf16.xpose.msra.mxu0 %v849
      %917 = vmatpush.bf16.xpose.msra.mxu0 %v848
      %918 = vmatpush.bf16.xpose.msra.mxu0 %v847
      %919 = vmatmul.bf16.gmra.mxu0 %v639
      %v920 = vpop.f32.mrf.mxu0
      %v921 = vadd.f32 0.0, %v920
      %v922 = vpop.f32.mrf.mxu0
      %v923 = vadd.f32 0.0, %v922
      %924 = vmatmul.bf16.gmra.mxu0 %v640
      %v925 = vpop.f32.mrf.mxu0
      %v926 = vadd.f32 0.0, %v925
      %v927 = vpop.f32.mrf.mxu0
      %v928 = vadd.f32 0.0, %v927
      %929 = vmatmul.bf16.gmra.mxu0 %v641
      %v930 = vpop.f32.mrf.mxu0
      %v931 = vadd.f32 0.0, %v930
      %v932 = vpop.f32.mrf.mxu0
      %v933 = vadd.f32 0.0, %v932
      %934 = vmatmul.bf16.gmra.mxu0 %v642
      %v935 = vpop.f32.mrf.mxu0
      %v936 = vadd.f32 0.0, %v935
      %v937 = vpop.f32.mrf.mxu0
      %v938 = vadd.f32 0.0, %v937
      %939 = vmatmul.bf16.gmra.mxu0 %v643
      %v940 = vpop.f32.mrf.mxu0
      %v941 = vadd.f32 0.0, %v940
      %v942 = vpop.f32.mrf.mxu0
      %v943 = vadd.f32 0.0, %v942
      %944 = vmatmul.bf16.gmra.mxu0 %v644
      %v945 = vpop.f32.mrf.mxu0
      %v946 = vadd.f32 0.0, %v945
      %v947 = vpop.f32.mrf.mxu0
      %v948 = vadd.f32 0.0, %v947
      %949 = vmatmul.bf16.gmra.mxu0 %v645
      %v950 = vpop.f32.mrf.mxu0
      %v951 = vadd.f32 0.0, %v950
      %v952 = vpop.f32.mrf.mxu0
      %v953 = vadd.f32 0.0, %v952
      %954 = vmatmul.bf16.gmra.mxu0 %v646
      %v955 = vpop.f32.mrf.mxu0
      %v956 = vadd.f32 0.0, %v955
      %v957 = vpop.f32.mrf.mxu0
      %v958 = vadd.f32 0.0, %v957
      %959 = vmatmul.bf16.gmra.mxu0 %v647
      %v960 = vpop.f32.mrf.mxu0
      %v961 = vadd.f32 0.0, %v960
      %v962 = vpop.f32.mrf.mxu0
      %v963 = vadd.f32 0.0, %v962
      %964 = vmatmul.bf16.gmra.mxu0 %v648
      %v965 = vpop.f32.mrf.mxu0
      %v966 = vadd.f32 0.0, %v965
      %v967 = vpop.f32.mrf.mxu0
      %v968 = vadd.f32 0.0, %v967
      %969 = vmatmul.bf16.gmra.mxu0 %v649
      %v970 = vpop.f32.mrf.mxu0
      %v971 = vadd.f32 0.0, %v970
      %v972 = vpop.f32.mrf.mxu0
      %v973 = vadd.f32 0.0, %v972
      %974 = vmatmul.bf16.gmra.mxu0 %v650
      %v975 = vpop.f32.mrf.mxu0
      %v976 = vadd.f32 0.0, %v975
      %v977 = vpop.f32.mrf.mxu0
      %v978 = vadd.f32 0.0, %v977
      %979 = vmatmul.bf16.gmra.mxu0 %v651
      %v980 = vpop.f32.mrf.mxu0
      %v981 = vadd.f32 0.0, %v980
      %v982 = vpop.f32.mrf.mxu0
      %v983 = vadd.f32 0.0, %v982
      %984 = vmatmul.bf16.gmra.mxu0 %v652
      %v985 = vpop.f32.mrf.mxu0
      %v986 = vadd.f32 0.0, %v985
      %v987 = vpop.f32.mrf.mxu0
      %v988 = vadd.f32 0.0, %v987
      %989 = vmatmul.bf16.gmra.mxu0 %v653
      %v990 = vpop.f32.mrf.mxu0
      %v991 = vadd.f32 0.0, %v990
      %v992 = vpop.f32.mrf.mxu0
      %v993 = vadd.f32 0.0, %v992
      %994 = vmatmul.bf16.gmra.mxu0 %v654
      %v995 = vpop.f32.mrf.mxu0
      %v996 = vadd.f32 0.0, %v995
      %v997 = vpop.f32.mrf.mxu0
      %v998 = vadd.f32 0.0, %v997
      %999 = vdwg.mxu0
      %1000 = vmatpush.bf16.xpose.msra.mxu0 %v862
      %1001 = vmatpush.bf16.xpose.msra.mxu0 %v861
      %1002 = vmatpush.bf16.xpose.msra.mxu0 %v860
      %1003 = vmatpush.bf16.xpose.msra.mxu0 %v859
      %1004 = vmatpush.bf16.xpose.msra.mxu0 %v858
      %1005 = vmatpush.bf16.xpose.msra.mxu0 %v857
      %1006 = vmatpush.bf16.xpose.msra.mxu0 %v856
      %1007 = vmatpush.bf16.xpose.msra.mxu0 %v855
      %1008 = vmatmul.bf16.gmra.mxu0 %v639
      %v1009 = vpop.f32.mrf.mxu0
      %v1010 = vadd.f32 0.0, %v1009
      %v1011 = vpop.f32.mrf.mxu0
      %v1012 = vadd.f32 0.0, %v1011
      %1013 = vmatmul.bf16.gmra.mxu0 %v640
      %v1014 = vpop.f32.mrf.mxu0
      %v1015 = vadd.f32 0.0, %v1014
      %v1016 = vpop.f32.mrf.mxu0
      %v1017 = vadd.f32 0.0, %v1016
      %1018 = vmatmul.bf16.gmra.mxu0 %v641
      %v1019 = vpop.f32.mrf.mxu0
      %v1020 = vadd.f32 0.0, %v1019
      %v1021 = vpop.f32.mrf.mxu0
      %v1022 = vadd.f32 0.0, %v1021
      %1023 = vmatmul.bf16.gmra.mxu0 %v642
      %v1024 = vpop.f32.mrf.mxu0
      %v1025 = vadd.f32 0.0, %v1024
      %v1026 = vpop.f32.mrf.mxu0
      %v1027 = vadd.f32 0.0, %v1026
      %1028 = vmatmul.bf16.gmra.mxu0 %v643
      %v1029 = vpop.f32.mrf.mxu0
      %v1030 = vadd.f32 0.0, %v1029
      %v1031 = vpop.f32.mrf.mxu0
      %v1032 = vadd.f32 0.0, %v1031
      %1033 = vmatmul.bf16.gmra.mxu0 %v644
      %v1034 = vpop.f32.mrf.mxu0
      %v1035 = vadd.f32 0.0, %v1034
      %v1036 = vpop.f32.mrf.mxu0
      %v1037 = vadd.f32 0.0, %v1036
      %1038 = vmatmul.bf16.gmra.mxu0 %v645
      %v1039 = vpop.f32.mrf.mxu0
      %v1040 = vadd.f32 0.0, %v1039
      %v1041 = vpop.f32.mrf.mxu0
      %v1042 = vadd.f32 0.0, %v1041
      %1043 = vmatmul.bf16.gmra.mxu0 %v646
      %v1044 = vpop.f32.mrf.mxu0
      %v1045 = vadd.f32 0.0, %v1044
      %v1046 = vpop.f32.mrf.mxu0
      %v1047 = vadd.f32 0.0, %v1046
      %1048 = vmatmul.bf16.gmra.mxu0 %v647
      %v1049 = vpop.f32.mrf.mxu0
      %v1050 = vadd.f32 0.0, %v1049
      %v1051 = vpop.f32.mrf.mxu0
      %v1052 = vadd.f32 0.0, %v1051
      %1053 = vmatmul.bf16.gmra.mxu0 %v648
      %v1054 = vpop.f32.mrf.mxu0
      %v1055 = vadd.f32 0.0, %v1054
      %v1056 = vpop.f32.mrf.mxu0
      %v1057 = vadd.f32 0.0, %v1056
      %1058 = vmatmul.bf16.gmra.mxu0 %v649
      %v1059 = vpop.f32.mrf.mxu0
      %v1060 = vadd.f32 0.0, %v1059
      %v1061 = vpop.f32.mrf.mxu0
      %v1062 = vadd.f32 0.0, %v1061
      %1063 = vmatmul.bf16.gmra.mxu0 %v650
      %v1064 = vpop.f32.mrf.mxu0
      %v1065 = vadd.f32 0.0, %v1064
      %v1066 = vpop.f32.mrf.mxu0
      %v1067 = vadd.f32 0.0, %v1066
      %1068 = vmatmul.bf16.gmra.mxu0 %v651
      %v1069 = vpop.f32.mrf.mxu0
      %v1070 = vadd.f32 0.0, %v1069
      %v1071 = vpop.f32.mrf.mxu0
      %v1072 = vadd.f32 0.0, %v1071
      %1073 = vmatmul.bf16.gmra.mxu0 %v652
      %v1074 = vpop.f32.mrf.mxu0
      %v1075 = vadd.f32 0.0, %v1074
      %v1076 = vpop.f32.mrf.mxu0
      %v1077 = vadd.f32 0.0, %v1076
      %1078 = vmatmul.bf16.gmra.mxu0 %v653
      %v1079 = vpop.f32.mrf.mxu0
      %v1080 = vadd.f32 0.0, %v1079
      %v1081 = vpop.f32.mrf.mxu0
      %v1082 = vadd.f32 0.0, %v1081
      %1083 = vmatmul.bf16.gmra.mxu0 %v654
      %v1084 = vpop.f32.mrf.mxu0
      %v1085 = vadd.f32 0.0, %v1084
      %v1086 = vpop.f32.mrf.mxu0
      %v1087 = vadd.f32 0.0, %v1086
      %1088 = vdwg.mxu0
      %1089 = vmatpush.bf16.xpose.msra.mxu0 %v870
      %1090 = vmatpush.bf16.xpose.msra.mxu0 %v869
      %1091 = vmatpush.bf16.xpose.msra.mxu0 %v868
      %1092 = vmatpush.bf16.xpose.msra.mxu0 %v867
      %1093 = vmatpush.bf16.xpose.msra.mxu0 %v866
      %1094 = vmatpush.bf16.xpose.msra.mxu0 %v865
      %1095 = vmatpush.bf16.xpose.msra.mxu0 %v864
      %1096 = vmatpush.bf16.xpose.msra.mxu0 %v863
      %1097 = vmatmul.bf16.gmra.mxu0 %v639
      %v1098 = vpop.f32.mrf.mxu0
      %v1099 = vadd.f32 0.0, %v1098
      %v1100 = vpop.f32.mrf.mxu0
      %v1101 = vadd.f32 0.0, %v1100
      %1102 = vmatmul.bf16.gmra.mxu0 %v640
      %v1103 = vpop.f32.mrf.mxu0
      %v1104 = vadd.f32 0.0, %v1103
      %v1105 = vpop.f32.mrf.mxu0
      %v1106 = vadd.f32 0.0, %v1105
      %1107 = vmatmul.bf16.gmra.mxu0 %v641
      %v1108 = vpop.f32.mrf.mxu0
      %v1109 = vadd.f32 0.0, %v1108
      %v1110 = vpop.f32.mrf.mxu0
      %v1111 = vadd.f32 0.0, %v1110
      %1112 = vmatmul.bf16.gmra.mxu0 %v642
      %v1113 = vpop.f32.mrf.mxu0
      %v1114 = vadd.f32 0.0, %v1113
      %v1115 = vpop.f32.mrf.mxu0
      %v1116 = vadd.f32 0.0, %v1115
      %1117 = vmatmul.bf16.gmra.mxu0 %v643
      %v1118 = vpop.f32.mrf.mxu0
      %v1119 = vadd.f32 0.0, %v1118
      %v1120 = vpop.f32.mrf.mxu0
      %v1121 = vadd.f32 0.0, %v1120
      %1122 = vmatmul.bf16.gmra.mxu0 %v644
      %v1123 = vpop.f32.mrf.mxu0
      %v1124 = vadd.f32 0.0, %v1123
      %v1125 = vpop.f32.mrf.mxu0
      %v1126 = vadd.f32 0.0, %v1125
      %1127 = vmatmul.bf16.gmra.mxu0 %v645
      %v1128 = vpop.f32.mrf.mxu0
      %v1129 = vadd.f32 0.0, %v1128
      %v1130 = vpop.f32.mrf.mxu0
      %v1131 = vadd.f32 0.0, %v1130
      %1132 = vmatmul.bf16.gmra.mxu0 %v646
      %v1133 = vpop.f32.mrf.mxu0
      %v1134 = vadd.f32 0.0, %v1133
      %v1135 = vpop.f32.mrf.mxu0
      %v1136 = vadd.f32 0.0, %v1135
      %1137 = vmatmul.bf16.gmra.mxu0 %v647
      %v1138 = vpop.f32.mrf.mxu0
      %v1139 = vadd.f32 0.0, %v1138
      %v1140 = vpop.f32.mrf.mxu0
      %v1141 = vadd.f32 0.0, %v1140
      %1142 = vmatmul.bf16.gmra.mxu0 %v648
      %v1143 = vpop.f32.mrf.mxu0
      %v1144 = vadd.f32 0.0, %v1143
      %v1145 = vpop.f32.mrf.mxu0
      %v1146 = vadd.f32 0.0, %v1145
      %1147 = vmatmul.bf16.gmra.mxu0 %v649
      %v1148 = vpop.f32.mrf.mxu0
      %v1149 = vadd.f32 0.0, %v1148
      %v1150 = vpop.f32.mrf.mxu0
      %v1151 = vadd.f32 0.0, %v1150
      %1152 = vmatmul.bf16.gmra.mxu0 %v650
      %v1153 = vpop.f32.mrf.mxu0
      %v1154 = vadd.f32 0.0, %v1153
      %v1155 = vpop.f32.mrf.mxu0
      %v1156 = vadd.f32 0.0, %v1155
      %1157 = vmatmul.bf16.gmra.mxu0 %v651
      %v1158 = vpop.f32.mrf.mxu0
      %v1159 = vadd.f32 0.0, %v1158
      %v1160 = vpop.f32.mrf.mxu0
      %v1161 = vadd.f32 0.0, %v1160
      %1162 = vmatmul.bf16.gmra.mxu0 %v652
      %v1163 = vpop.f32.mrf.mxu0
      %v1164 = vadd.f32 0.0, %v1163
      %v1165 = vpop.f32.mrf.mxu0
      %v1166 = vadd.f32 0.0, %v1165
      %1167 = vmatmul.bf16.gmra.mxu0 %v653
      %v1168 = vpop.f32.mrf.mxu0
      %v1169 = vadd.f32 0.0, %v1168
      %v1170 = vpop.f32.mrf.mxu0
      %v1171 = vadd.f32 0.0, %v1170
      %1172 = vmatmul.bf16.gmra.mxu0 %v654
      %v1173 = vpop.f32.mrf.mxu0
      %v1174 = vadd.f32 0.0, %v1173
      %v1175 = vpop.f32.mrf.mxu0
      %v1176 = vadd.f32 0.0, %v1175
      %1177 = vdwg.mxu0
      %1178 = vmatpush.bf16.xpose.msra.mxu0 %v878
      %1179 = vmatpush.bf16.xpose.msra.mxu0 %v877
      %1180 = vmatpush.bf16.xpose.msra.mxu0 %v876
      %1181 = vmatpush.bf16.xpose.msra.mxu0 %v875
      %1182 = vmatpush.bf16.xpose.msra.mxu0 %v874
      %1183 = vmatpush.bf16.xpose.msra.mxu0 %v873
      %1184 = vmatpush.bf16.xpose.msra.mxu0 %v872
      %1185 = vmatpush.bf16.xpose.msra.mxu0 %v871
      %1186 = vmatmul.bf16.gmra.mxu0 %v639
      %v1187 = vpop.f32.mrf.mxu0
      %v1188 = vadd.f32 0.0, %v1187
      %v1189 = vpop.f32.mrf.mxu0
      %v1190 = vadd.f32 0.0, %v1189
      %1191 = vmatmul.bf16.gmra.mxu0 %v640
      %v1192 = vpop.f32.mrf.mxu0
      %v1193 = vadd.f32 0.0, %v1192
      %v1194 = vpop.f32.mrf.mxu0
      %v1195 = vadd.f32 0.0, %v1194
      %1196 = vmatmul.bf16.gmra.mxu0 %v641
      %v1197 = vpop.f32.mrf.mxu0
      %v1198 = vadd.f32 0.0, %v1197
      %v1199 = vpop.f32.mrf.mxu0
      %v1200 = vadd.f32 0.0, %v1199
      %1201 = vmatmul.bf16.gmra.mxu0 %v642
      %v1202 = vpop.f32.mrf.mxu0
      %v1203 = vadd.f32 0.0, %v1202
      %v1204 = vpop.f32.mrf.mxu0
      %v1205 = vadd.f32 0.0, %v1204
      %1206 = vmatmul.bf16.gmra.mxu0 %v643
      %v1207 = vpop.f32.mrf.mxu0
      %v1208 = vadd.f32 0.0, %v1207
      %v1209 = vpop.f32.mrf.mxu0
      %v1210 = vadd.f32 0.0, %v1209
      %1211 = vmatmul.bf16.gmra.mxu0 %v644
      %v1212 = vpop.f32.mrf.mxu0
      %v1213 = vadd.f32 0.0, %v1212
      %v1214 = vpop.f32.mrf.mxu0
      %v1215 = vadd.f32 0.0, %v1214
      %1216 = vmatmul.bf16.gmra.mxu0 %v645
      %v1217 = vpop.f32.mrf.mxu0
      %v1218 = vadd.f32 0.0, %v1217
      %v1219 = vpop.f32.mrf.mxu0
      %v1220 = vadd.f32 0.0, %v1219
      %1221 = vmatmul.bf16.gmra.mxu0 %v646
      %v1222 = vpop.f32.mrf.mxu0
      %v1223 = vadd.f32 0.0, %v1222
      %v1224 = vpop.f32.mrf.mxu0
      %v1225 = vadd.f32 0.0, %v1224
      %1226 = vmatmul.bf16.gmra.mxu0 %v647
      %v1227 = vpop.f32.mrf.mxu0
      %v1228 = vadd.f32 0.0, %v1227
      %v1229 = vpop.f32.mrf.mxu0
      %v1230 = vadd.f32 0.0, %v1229
      %1231 = vmatmul.bf16.gmra.mxu0 %v648
      %v1232 = vpop.f32.mrf.mxu0
      %v1233 = vadd.f32 0.0, %v1232
      %v1234 = vpop.f32.mrf.mxu0
      %v1235 = vadd.f32 0.0, %v1234
      %1236 = vmatmul.bf16.gmra.mxu0 %v649
      %v1237 = vpop.f32.mrf.mxu0
      %v1238 = vadd.f32 0.0, %v1237
      %v1239 = vpop.f32.mrf.mxu0
      %v1240 = vadd.f32 0.0, %v1239
      %1241 = vmatmul.bf16.gmra.mxu0 %v650
      %v1242 = vpop.f32.mrf.mxu0
      %v1243 = vadd.f32 0.0, %v1242
      %v1244 = vpop.f32.mrf.mxu0
      %v1245 = vadd.f32 0.0, %v1244
      %1246 = vmatmul.bf16.gmra.mxu0 %v651
      %v1247 = vpop.f32.mrf.mxu0
      %v1248 = vadd.f32 0.0, %v1247
      %v1249 = vpop.f32.mrf.mxu0
      %v1250 = vadd.f32 0.0, %v1249
      %1251 = vmatmul.bf16.gmra.mxu0 %v652
      %v1252 = vpop.f32.mrf.mxu0
      %v1253 = vadd.f32 0.0, %v1252
      %v1254 = vpop.f32.mrf.mxu0
      %v1255 = vadd.f32 0.0, %v1254
      %1256 = vmatmul.bf16.gmra.mxu0 %v653
      %v1257 = vpop.f32.mrf.mxu0
      %v1258 = vadd.f32 0.0, %v1257
      %v1259 = vpop.f32.mrf.mxu0
      %v1260 = vadd.f32 0.0, %v1259
      %1261 = vmatmul.bf16.gmra.mxu0 %v654
      %v1262 = vpop.f32.mrf.mxu0
      %v1263 = vadd.f32 0.0, %v1262
      %v1264 = vpop.f32.mrf.mxu0
      %v1265 = vadd.f32 0.0, %v1264
      %1266 = vdwg.mxu0
      %v1267 = vmul.f32 %v921, 0.088388346
      %v1268 = vmul.f32 %v1010, 0.088388346
      %v1269 = vmul.f32 %v1099, 0.088388346
      %v1270 = vmul.f32 %v1188, 0.088388346
      %v1271 = vmul.f32 %v923, 0.088388346
      %v1272 = vmul.f32 %v1012, 0.088388346
      %v1273 = vmul.f32 %v1101, 0.088388346
      %v1274 = vmul.f32 %v1190, 0.088388346
      %v1275 = vmul.f32 %v926, 0.088388346
      %v1276 = vmul.f32 %v1015, 0.088388346
      %v1277 = vmul.f32 %v1104, 0.088388346
      %v1278 = vmul.f32 %v1193, 0.088388346
      %v1279 = vmul.f32 %v928, 0.088388346
      %v1280 = vmul.f32 %v1017, 0.088388346
      %v1281 = vmul.f32 %v1106, 0.088388346
      %v1282 = vmul.f32 %v1195, 0.088388346
      %v1283 = vmul.f32 %v931, 0.088388346
      %v1284 = vmul.f32 %v1020, 0.088388346
      %v1285 = vmul.f32 %v1109, 0.088388346
      %v1286 = vmul.f32 %v1198, 0.088388346
      %v1287 = vmul.f32 %v933, 0.088388346
      %v1288 = vmul.f32 %v1022, 0.088388346
      %v1289 = vmul.f32 %v1111, 0.088388346
      %v1290 = vmul.f32 %v1200, 0.088388346
      %v1291 = vmul.f32 %v936, 0.088388346
      %v1292 = vmul.f32 %v1025, 0.088388346
      %v1293 = vmul.f32 %v1114, 0.088388346
      %v1294 = vmul.f32 %v1203, 0.088388346
      %v1295 = vmul.f32 %v938, 0.088388346
      %v1296 = vmul.f32 %v1027, 0.088388346
      %v1297 = vmul.f32 %v1116, 0.088388346
      %v1298 = vmul.f32 %v1205, 0.088388346
      %v1299 = vmul.f32 %v941, 0.088388346
      %v1300 = vmul.f32 %v1030, 0.088388346
      %v1301 = vmul.f32 %v1119, 0.088388346
      %v1302 = vmul.f32 %v1208, 0.088388346
      %v1303 = vmul.f32 %v943, 0.088388346
      %v1304 = vmul.f32 %v1032, 0.088388346
      %v1305 = vmul.f32 %v1121, 0.088388346
      %v1306 = vmul.f32 %v1210, 0.088388346
      %v1307 = vmul.f32 %v946, 0.088388346
      %v1308 = vmul.f32 %v1035, 0.088388346
      %v1309 = vmul.f32 %v1124, 0.088388346
      %v1310 = vmul.f32 %v1213, 0.088388346
      %v1311 = vmul.f32 %v948, 0.088388346
      %v1312 = vmul.f32 %v1037, 0.088388346
      %v1313 = vmul.f32 %v1126, 0.088388346
      %v1314 = vmul.f32 %v1215, 0.088388346
      %v1315 = vmul.f32 %v951, 0.088388346
      %v1316 = vmul.f32 %v1040, 0.088388346
      %v1317 = vmul.f32 %v1129, 0.088388346
      %v1318 = vmul.f32 %v1218, 0.088388346
      %v1319 = vmul.f32 %v953, 0.088388346
      %v1320 = vmul.f32 %v1042, 0.088388346
      %v1321 = vmul.f32 %v1131, 0.088388346
      %v1322 = vmul.f32 %v1220, 0.088388346
      %v1323 = vmul.f32 %v956, 0.088388346
      %v1324 = vmul.f32 %v1045, 0.088388346
      %v1325 = vmul.f32 %v1134, 0.088388346
      %v1326 = vmul.f32 %v1223, 0.088388346
      %v1327 = vmul.f32 %v958, 0.088388346
      %v1328 = vmul.f32 %v1047, 0.088388346
      %v1329 = vmul.f32 %v1136, 0.088388346
      %v1330 = vmul.f32 %v1225, 0.088388346
      %v1331 = vmul.f32 %v961, 0.088388346
      %v1332 = vmul.f32 %v1050, 0.088388346
      %v1333 = vmul.f32 %v1139, 0.088388346
      %v1334 = vmul.f32 %v1228, 0.088388346
      %v1335 = vmul.f32 %v963, 0.088388346
      %v1336 = vmul.f32 %v1052, 0.088388346
      %v1337 = vmul.f32 %v1141, 0.088388346
      %v1338 = vmul.f32 %v1230, 0.088388346
      %v1339 = vmul.f32 %v966, 0.088388346
      %v1340 = vmul.f32 %v1055, 0.088388346
      %v1341 = vmul.f32 %v1144, 0.088388346
      %v1342 = vmul.f32 %v1233, 0.088388346
      %v1343 = vmul.f32 %v968, 0.088388346
      %v1344 = vmul.f32 %v1057, 0.088388346
      %v1345 = vmul.f32 %v1146, 0.088388346
      %v1346 = vmul.f32 %v1235, 0.088388346
      %v1347 = vmul.f32 %v971, 0.088388346
      %v1348 = vmul.f32 %v1060, 0.088388346
      %v1349 = vmul.f32 %v1149, 0.088388346
      %v1350 = vmul.f32 %v1238, 0.088388346
      %v1351 = vmul.f32 %v973, 0.088388346
      %v1352 = vmul.f32 %v1062, 0.088388346
      %v1353 = vmul.f32 %v1151, 0.088388346
      %v1354 = vmul.f32 %v1240, 0.088388346
      %v1355 = vmul.f32 %v976, 0.088388346
      %v1356 = vmul.f32 %v1065, 0.088388346
      %v1357 = vmul.f32 %v1154, 0.088388346
      %v1358 = vmul.f32 %v1243, 0.088388346
      %v1359 = vmul.f32 %v978, 0.088388346
      %v1360 = vmul.f32 %v1067, 0.088388346
      %v1361 = vmul.f32 %v1156, 0.088388346
      %v1362 = vmul.f32 %v1245, 0.088388346
      %v1363 = vmul.f32 %v981, 0.088388346
      %v1364 = vmul.f32 %v1070, 0.088388346
      %v1365 = vmul.f32 %v1159, 0.088388346
      %v1366 = vmul.f32 %v1248, 0.088388346
      %v1367 = vmul.f32 %v983, 0.088388346
      %v1368 = vmul.f32 %v1072, 0.088388346
      %v1369 = vmul.f32 %v1161, 0.088388346
      %v1370 = vmul.f32 %v1250, 0.088388346
      %v1371 = vmul.f32 %v986, 0.088388346
      %v1372 = vmul.f32 %v1075, 0.088388346
      %v1373 = vmul.f32 %v1164, 0.088388346
      %v1374 = vmul.f32 %v1253, 0.088388346
      %v1375 = vmul.f32 %v988, 0.088388346
      %v1376 = vmul.f32 %v1077, 0.088388346
      %v1377 = vmul.f32 %v1166, 0.088388346
      %v1378 = vmul.f32 %v1255, 0.088388346
      %v1379 = vmul.f32 %v991, 0.088388346
      %v1380 = vmul.f32 %v1080, 0.088388346
      %v1381 = vmul.f32 %v1169, 0.088388346
      %v1382 = vmul.f32 %v1258, 0.088388346
      %v1383 = vmul.f32 %v993, 0.088388346
      %v1384 = vmul.f32 %v1082, 0.088388346
      %v1385 = vmul.f32 %v1171, 0.088388346
      %v1386 = vmul.f32 %v1260, 0.088388346
      %v1387 = vmul.f32 %v996, 0.088388346
      %v1388 = vmul.f32 %v1085, 0.088388346
      %v1389 = vmul.f32 %v1174, 0.088388346
      %v1390 = vmul.f32 %v1263, 0.088388346
      %v1391 = vmul.f32 %v998, 0.088388346
      %v1392 = vmul.f32 %v1087, 0.088388346
      %v1393 = vmul.f32 %v1176, 0.088388346
      %v1394 = vmul.f32 %v1265, 0.088388346
      %s1395 = smul.u32 %s20, 256
      %v1396 = vlaneseq
      %v1397 = vshrl.u32 %v1396, 7
      %v1398 = vadd.s32 %v1397, 8
      %v1399 = vadd.s32 %v1397, 16
      %v1400 = vadd.s32 %v1397, 24
      %v1401 = vadd.s32 %v1397, 32
      %v1402 = vadd.s32 %v1397, 40
      %v1403 = vadd.s32 %v1397, 48
      %v1404 = vadd.s32 %v1397, 56
      %v1405 = vadd.s32 %v1397, 64
      %v1406 = vadd.s32 %v1397, 72
      %v1407 = vadd.s32 %v1397, 80
      %v1408 = vadd.s32 %v1397, 88
      %v1409 = vadd.s32 %v1397, 96
      %v1410 = vadd.s32 %v1397, 104
      %v1411 = vadd.s32 %v1397, 112
      %v1412 = vadd.s32 %v1397, 120
      %v1413 = vadd.s32 %v1397, 128
      %v1414 = vadd.s32 %v1397, 136
      %v1415 = vadd.s32 %v1397, 144
      %v1416 = vadd.s32 %v1397, 152
      %v1417 = vadd.s32 %v1397, 160
      %v1418 = vadd.s32 %v1397, 168
      %v1419 = vadd.s32 %v1397, 176
      %v1420 = vadd.s32 %v1397, 184
      %v1421 = vadd.s32 %v1397, 192
      %v1422 = vadd.s32 %v1397, 200
      %v1423 = vadd.s32 %v1397, 208
      %v1424 = vadd.s32 %v1397, 216
      %v1425 = vadd.s32 %v1397, 224
      %v1426 = vadd.s32 %v1397, 232
      %v1427 = vadd.s32 %v1397, 240
      %v1428 = vadd.s32 %v1397, 248
      %v1429 = vstv %s1395
      %v1430 = vadd.s32 %v1429, %v1397
      %v1431 = vadd.s32 %v1429, %v1398
      %v1432 = vadd.s32 %v1429, %v1399
      %v1433 = vadd.s32 %v1429, %v1400
      %v1434 = vadd.s32 %v1429, %v1401
      %v1435 = vadd.s32 %v1429, %v1402
      %v1436 = vadd.s32 %v1429, %v1403
      %v1437 = vadd.s32 %v1429, %v1404
      %v1438 = vadd.s32 %v1429, %v1405
      %v1439 = vadd.s32 %v1429, %v1406
      %v1440 = vadd.s32 %v1429, %v1407
      %v1441 = vadd.s32 %v1429, %v1408
      %v1442 = vadd.s32 %v1429, %v1409
      %v1443 = vadd.s32 %v1429, %v1410
      %v1444 = vadd.s32 %v1429, %v1411
      %v1445 = vadd.s32 %v1429, %v1412
      %v1446 = vadd.s32 %v1429, %v1413
      %v1447 = vadd.s32 %v1429, %v1414
      %v1448 = vadd.s32 %v1429, %v1415
      %v1449 = vadd.s32 %v1429, %v1416
      %v1450 = vadd.s32 %v1429, %v1417
      %v1451 = vadd.s32 %v1429, %v1418
      %v1452 = vadd.s32 %v1429, %v1419
      %v1453 = vadd.s32 %v1429, %v1420
      %v1454 = vadd.s32 %v1429, %v1421
      %v1455 = vadd.s32 %v1429, %v1422
      %v1456 = vadd.s32 %v1429, %v1423
      %v1457 = vadd.s32 %v1429, %v1424
      %v1458 = vadd.s32 %v1429, %v1425
      %v1459 = vadd.s32 %v1429, %v1426
      %v1460 = vadd.s32 %v1429, %v1427
      %v1461 = vadd.s32 %v1429, %v1428
      %v1462 = vlaneseq
      %v1463 = vand.u32 %v1462, 127
      %v1464 = vadd.s32 %v1463, 128
      %v1465 = vadd.s32 %v1463, 256
      %v1466 = vadd.s32 %v1463, 384
      %v1467 = vld [vmem:[%s350] sm:$0xff]
      %v1468 = vld [vmem:[%s350 + $0x8] sm:$0xff]
      %v1469 = vld [vmem:[%s350 + $0x10] sm:$0xff]
      %v1470 = vld [vmem:[%s350 + $0x18] sm:$0xff]
      %v1471 = vld [vmem:[%s350 + $0x20] sm:$0xff]
      %v1472 = vld [vmem:[%s350 + $0x28] sm:$0xff]
      %v1473 = vld [vmem:[%s350 + $0x30] sm:$0xff]
      %v1474 = vld [vmem:[%s350 + $0x38] sm:$0xff]
      %v1475 = vld [vmem:[%s350 + $0x40] sm:$0xff]
      %v1476 = vld [vmem:[%s350 + $0x48] sm:$0xff]
      %v1477 = vld [vmem:[%s350 + $0x50] sm:$0xff]
      %v1478 = vld [vmem:[%s350 + $0x58] sm:$0xff]
      %v1479 = vld [vmem:[%s350 + $0x60] sm:$0xff]
      %v1480 = vld [vmem:[%s350 + $0x68] sm:$0xff]
      %v1481 = vld [vmem:[%s350 + $0x70] sm:$0xff]
      %v1482 = vld [vmem:[%s350 + $0x78] sm:$0xff]
      %v1483 = vld [vmem:[%s350 + $0x80] sm:$0xff]
      %v1484 = vld [vmem:[%s350 + $0x88] sm:$0xff]
      %v1485 = vld [vmem:[%s350 + $0x90] sm:$0xff]
      %v1486 = vld [vmem:[%s350 + $0x98] sm:$0xff]
      %v1487 = vld [vmem:[%s350 + $0xa0] sm:$0xff]
      %v1488 = vld [vmem:[%s350 + $0xa8] sm:$0xff]
      %v1489 = vld [vmem:[%s350 + $0xb0] sm:$0xff]
      %v1490 = vld [vmem:[%s350 + $0xb8] sm:$0xff]
      %v1491 = vld [vmem:[%s350 + $0xc0] sm:$0xff]
      %v1492 = vld [vmem:[%s350 + $0xc8] sm:$0xff]
      %v1493 = vld [vmem:[%s350 + $0xd0] sm:$0xff]
      %v1494 = vld [vmem:[%s350 + $0xd8] sm:$0xff]
      %v1495 = vld [vmem:[%s350 + $0xe0] sm:$0xff]
      %v1496 = vld [vmem:[%s350 + $0xe8] sm:$0xff]
      %v1497 = vld [vmem:[%s350 + $0xf0] sm:$0xff]
      %v1498 = vld [vmem:[%s350 + $0xf8] sm:$0xff]
      %1499 = vset.pattern.permute.xlu0 0
      %1500 = vperm.xlu0 %1499, %v1467
      %v1501 = vpop.permute.xlu0 %1500
      %1502 = vset.pattern.permute.xlu0 0
      %1503 = vperm.xlu0 %1502, %v1468
      %v1504 = vpop.permute.xlu0 %1503
      %1505 = vset.pattern.permute.xlu0 0
      %1506 = vperm.xlu0 %1505, %v1469
      %v1507 = vpop.permute.xlu0 %1506
      %1508 = vset.pattern.permute.xlu0 0
      %1509 = vperm.xlu0 %1508, %v1470
      %v1510 = vpop.permute.xlu0 %1509
      %1511 = vset.pattern.permute.xlu0 0
      %1512 = vperm.xlu0 %1511, %v1471
      %v1513 = vpop.permute.xlu0 %1512
      %1514 = vset.pattern.permute.xlu0 0
      %1515 = vperm.xlu0 %1514, %v1472
      %v1516 = vpop.permute.xlu0 %1515
      %1517 = vset.pattern.permute.xlu0 0
      %1518 = vperm.xlu0 %1517, %v1473
      %v1519 = vpop.permute.xlu0 %1518
      %1520 = vset.pattern.permute.xlu0 0
      %1521 = vperm.xlu0 %1520, %v1474
      %v1522 = vpop.permute.xlu0 %1521
      %1523 = vset.pattern.permute.xlu0 0
      %1524 = vperm.xlu0 %1523, %v1475
      %v1525 = vpop.permute.xlu0 %1524
      %1526 = vset.pattern.permute.xlu0 0
      %1527 = vperm.xlu0 %1526, %v1476
      %v1528 = vpop.permute.xlu0 %1527
      %1529 = vset.pattern.permute.xlu0 0
      %1530 = vperm.xlu0 %1529, %v1477
      %v1531 = vpop.permute.xlu0 %1530
      %1532 = vset.pattern.permute.xlu0 0
      %1533 = vperm.xlu0 %1532, %v1478
      %v1534 = vpop.permute.xlu0 %1533
      %1535 = vset.pattern.permute.xlu0 0
      %1536 = vperm.xlu0 %1535, %v1479
      %v1537 = vpop.permute.xlu0 %1536
      %1538 = vset.pattern.permute.xlu0 0
      %1539 = vperm.xlu0 %1538, %v1480
      %v1540 = vpop.permute.xlu0 %1539
      %1541 = vset.pattern.permute.xlu0 0
      %1542 = vperm.xlu0 %1541, %v1481
      %v1543 = vpop.permute.xlu0 %1542
      %1544 = vset.pattern.permute.xlu0 0
      %1545 = vperm.xlu0 %1544, %v1482
      %v1546 = vpop.permute.xlu0 %1545
      %1547 = vset.pattern.permute.xlu0 0
      %1548 = vperm.xlu0 %1547, %v1483
      %v1549 = vpop.permute.xlu0 %1548
      %1550 = vset.pattern.permute.xlu0 0
      %1551 = vperm.xlu0 %1550, %v1484
      %v1552 = vpop.permute.xlu0 %1551
      %1553 = vset.pattern.permute.xlu0 0
      %1554 = vperm.xlu0 %1553, %v1485
      %v1555 = vpop.permute.xlu0 %1554
      %1556 = vset.pattern.permute.xlu0 0
      %1557 = vperm.xlu0 %1556, %v1486
      %v1558 = vpop.permute.xlu0 %1557
      %1559 = vset.pattern.permute.xlu0 0
      %1560 = vperm.xlu0 %1559, %v1487
      %v1561 = vpop.permute.xlu0 %1560
      %1562 = vset.pattern.permute.xlu0 0
      %1563 = vperm.xlu0 %1562, %v1488
      %v1564 = vpop.permute.xlu0 %1563
      %1565 = vset.pattern.permute.xlu0 0
      %1566 = vperm.xlu0 %1565, %v1489
      %v1567 = vpop.permute.xlu0 %1566
      %1568 = vset.pattern.permute.xlu0 0
      %1569 = vperm.xlu0 %1568, %v1490
      %v1570 = vpop.permute.xlu0 %1569
      %1571 = vset.pattern.permute.xlu0 0
      %1572 = vperm.xlu0 %1571, %v1491
      %v1573 = vpop.permute.xlu0 %1572
      %1574 = vset.pattern.permute.xlu0 0
      %1575 = vperm.xlu0 %1574, %v1492
      %v1576 = vpop.permute.xlu0 %1575
      %1577 = vset.pattern.permute.xlu0 0
      %1578 = vperm.xlu0 %1577, %v1493
      %v1579 = vpop.permute.xlu0 %1578
      %1580 = vset.pattern.permute.xlu0 0
      %1581 = vperm.xlu0 %1580, %v1494
      %v1582 = vpop.permute.xlu0 %1581
      %1583 = vset.pattern.permute.xlu0 0
      %1584 = vperm.xlu0 %1583, %v1495
      %v1585 = vpop.permute.xlu0 %1584
      %1586 = vset.pattern.permute.xlu0 0
      %1587 = vperm.xlu0 %1586, %v1496
      %v1588 = vpop.permute.xlu0 %1587
      %1589 = vset.pattern.permute.xlu0 0
      %1590 = vperm.xlu0 %1589, %v1497
      %v1591 = vpop.permute.xlu0 %1590
      %1592 = vset.pattern.permute.xlu0 0
      %1593 = vperm.xlu0 %1592, %v1498
      %v1594 = vpop.permute.xlu0 %1593
      %v1595 = vsub.s32 %v1430, %v1501
      %v1596 = vsub.s32 %v1431, %v1504
      %v1597 = vsub.s32 %v1432, %v1507
      %v1598 = vsub.s32 %v1433, %v1510
      %v1599 = vsub.s32 %v1434, %v1513
      %v1600 = vsub.s32 %v1435, %v1516
      %v1601 = vsub.s32 %v1436, %v1519
      %v1602 = vsub.s32 %v1437, %v1522
      %v1603 = vsub.s32 %v1438, %v1525
      %v1604 = vsub.s32 %v1439, %v1528
      %v1605 = vsub.s32 %v1440, %v1531
      %v1606 = vsub.s32 %v1441, %v1534
      %v1607 = vsub.s32 %v1442, %v1537
      %v1608 = vsub.s32 %v1443, %v1540
      %v1609 = vsub.s32 %v1444, %v1543
      %v1610 = vsub.s32 %v1445, %v1546
      %v1611 = vsub.s32 %v1446, %v1549
      %v1612 = vsub.s32 %v1447, %v1552
      %v1613 = vsub.s32 %v1448, %v1555
      %v1614 = vsub.s32 %v1449, %v1558
      %v1615 = vsub.s32 %v1450, %v1561
      %v1616 = vsub.s32 %v1451, %v1564
      %v1617 = vsub.s32 %v1452, %v1567
      %v1618 = vsub.s32 %v1453, %v1570
      %v1619 = vsub.s32 %v1454, %v1573
      %v1620 = vsub.s32 %v1455, %v1576
      %v1621 = vsub.s32 %v1456, %v1579
      %v1622 = vsub.s32 %v1457, %v1582
      %v1623 = vsub.s32 %v1458, %v1585
      %v1624 = vsub.s32 %v1459, %v1588
      %v1625 = vsub.s32 %v1460, %v1591
      %v1626 = vsub.s32 %v1461, %v1594
      %vm1627 = vcmp.ge.s32.totalorder %v1463, %v1595
      %vm1628 = vcmp.ge.s32.totalorder %v1464, %v1595
      %vm1629 = vcmp.ge.s32.totalorder %v1465, %v1595
      %vm1630 = vcmp.ge.s32.totalorder %v1466, %v1595
      %vm1631 = vcmp.ge.s32.totalorder %v1463, %v1596
      %vm1632 = vcmp.ge.s32.totalorder %v1464, %v1596
      %vm1633 = vcmp.ge.s32.totalorder %v1465, %v1596
      %vm1634 = vcmp.ge.s32.totalorder %v1466, %v1596
      %vm1635 = vcmp.ge.s32.totalorder %v1463, %v1597
      %vm1636 = vcmp.ge.s32.totalorder %v1464, %v1597
      %vm1637 = vcmp.ge.s32.totalorder %v1465, %v1597
      %vm1638 = vcmp.ge.s32.totalorder %v1466, %v1597
      %vm1639 = vcmp.ge.s32.totalorder %v1463, %v1598
      %vm1640 = vcmp.ge.s32.totalorder %v1464, %v1598
      %vm1641 = vcmp.ge.s32.totalorder %v1465, %v1598
      %vm1642 = vcmp.ge.s32.totalorder %v1466, %v1598
      %vm1643 = vcmp.ge.s32.totalorder %v1463, %v1599
      %vm1644 = vcmp.ge.s32.totalorder %v1464, %v1599
      %vm1645 = vcmp.ge.s32.totalorder %v1465, %v1599
      %vm1646 = vcmp.ge.s32.totalorder %v1466, %v1599
      %vm1647 = vcmp.ge.s32.totalorder %v1463, %v1600
      %vm1648 = vcmp.ge.s32.totalorder %v1464, %v1600
      %vm1649 = vcmp.ge.s32.totalorder %v1465, %v1600
      %vm1650 = vcmp.ge.s32.totalorder %v1466, %v1600
      %vm1651 = vcmp.ge.s32.totalorder %v1463, %v1601
      %vm1652 = vcmp.ge.s32.totalorder %v1464, %v1601
      %vm1653 = vcmp.ge.s32.totalorder %v1465, %v1601
      %vm1654 = vcmp.ge.s32.totalorder %v1466, %v1601
      %vm1655 = vcmp.ge.s32.totalorder %v1463, %v1602
      %vm1656 = vcmp.ge.s32.totalorder %v1464, %v1602
      %vm1657 = vcmp.ge.s32.totalorder %v1465, %v1602
      %vm1658 = vcmp.ge.s32.totalorder %v1466, %v1602
      %vm1659 = vcmp.ge.s32.totalorder %v1463, %v1603
      %vm1660 = vcmp.ge.s32.totalorder %v1464, %v1603
      %vm1661 = vcmp.ge.s32.totalorder %v1465, %v1603
      %vm1662 = vcmp.ge.s32.totalorder %v1466, %v1603
      %vm1663 = vcmp.ge.s32.totalorder %v1463, %v1604
      %vm1664 = vcmp.ge.s32.totalorder %v1464, %v1604
      %vm1665 = vcmp.ge.s32.totalorder %v1465, %v1604
      %vm1666 = vcmp.ge.s32.totalorder %v1466, %v1604
      %vm1667 = vcmp.ge.s32.totalorder %v1463, %v1605
      %vm1668 = vcmp.ge.s32.totalorder %v1464, %v1605
      %vm1669 = vcmp.ge.s32.totalorder %v1465, %v1605
      %vm1670 = vcmp.ge.s32.totalorder %v1466, %v1605
      %vm1671 = vcmp.ge.s32.totalorder %v1463, %v1606
      %vm1672 = vcmp.ge.s32.totalorder %v1464, %v1606
      %vm1673 = vcmp.ge.s32.totalorder %v1465, %v1606
      %vm1674 = vcmp.ge.s32.totalorder %v1466, %v1606
      %vm1675 = vcmp.ge.s32.totalorder %v1463, %v1607
      %vm1676 = vcmp.ge.s32.totalorder %v1464, %v1607
      %vm1677 = vcmp.ge.s32.totalorder %v1465, %v1607
      %vm1678 = vcmp.ge.s32.totalorder %v1466, %v1607
      %vm1679 = vcmp.ge.s32.totalorder %v1463, %v1608
      %vm1680 = vcmp.ge.s32.totalorder %v1464, %v1608
      %vm1681 = vcmp.ge.s32.totalorder %v1465, %v1608
      %vm1682 = vcmp.ge.s32.totalorder %v1466, %v1608
      %vm1683 = vcmp.ge.s32.totalorder %v1463, %v1609
      %vm1684 = vcmp.ge.s32.totalorder %v1464, %v1609
      %vm1685 = vcmp.ge.s32.totalorder %v1465, %v1609
      %vm1686 = vcmp.ge.s32.totalorder %v1466, %v1609
      %vm1687 = vcmp.ge.s32.totalorder %v1463, %v1610
      %vm1688 = vcmp.ge.s32.totalorder %v1464, %v1610
      %vm1689 = vcmp.ge.s32.totalorder %v1465, %v1610
      %vm1690 = vcmp.ge.s32.totalorder %v1466, %v1610
      %vm1691 = vcmp.ge.s32.totalorder %v1463, %v1611
      %vm1692 = vcmp.ge.s32.totalorder %v1464, %v1611
      %vm1693 = vcmp.ge.s32.totalorder %v1465, %v1611
      %vm1694 = vcmp.ge.s32.totalorder %v1466, %v1611
      %vm1695 = vcmp.ge.s32.totalorder %v1463, %v1612
      %vm1696 = vcmp.ge.s32.totalorder %v1464, %v1612
      %vm1697 = vcmp.ge.s32.totalorder %v1465, %v1612
      %vm1698 = vcmp.ge.s32.totalorder %v1466, %v1612
      %vm1699 = vcmp.ge.s32.totalorder %v1463, %v1613
      %vm1700 = vcmp.ge.s32.totalorder %v1464, %v1613
      %vm1701 = vcmp.ge.s32.totalorder %v1465, %v1613
      %vm1702 = vcmp.ge.s32.totalorder %v1466, %v1613
      %vm1703 = vcmp.ge.s32.totalorder %v1463, %v1614
      %vm1704 = vcmp.ge.s32.totalorder %v1464, %v1614
      %vm1705 = vcmp.ge.s32.totalorder %v1465, %v1614
      %vm1706 = vcmp.ge.s32.totalorder %v1466, %v1614
      %vm1707 = vcmp.ge.s32.totalorder %v1463, %v1615
      %vm1708 = vcmp.ge.s32.totalorder %v1464, %v1615
      %vm1709 = vcmp.ge.s32.totalorder %v1465, %v1615
      %vm1710 = vcmp.ge.s32.totalorder %v1466, %v1615
      %vm1711 = vcmp.ge.s32.totalorder %v1463, %v1616
      %vm1712 = vcmp.ge.s32.totalorder %v1464, %v1616
      %vm1713 = vcmp.ge.s32.totalorder %v1465, %v1616
      %vm1714 = vcmp.ge.s32.totalorder %v1466, %v1616
      %vm1715 = vcmp.ge.s32.totalorder %v1463, %v1617
      %vm1716 = vcmp.ge.s32.totalorder %v1464, %v1617
      %vm1717 = vcmp.ge.s32.totalorder %v1465, %v1617
      %vm1718 = vcmp.ge.s32.totalorder %v1466, %v1617
      %vm1719 = vcmp.ge.s32.totalorder %v1463, %v1618
      %vm1720 = vcmp.ge.s32.totalorder %v1464, %v1618
      %vm1721 = vcmp.ge.s32.totalorder %v1465, %v1618
      %vm1722 = vcmp.ge.s32.totalorder %v1466, %v1618
      %vm1723 = vcmp.ge.s32.totalorder %v1463, %v1619
      %vm1724 = vcmp.ge.s32.totalorder %v1464, %v1619
      %vm1725 = vcmp.ge.s32.totalorder %v1465, %v1619
      %vm1726 = vcmp.ge.s32.totalorder %v1466, %v1619
      %vm1727 = vcmp.ge.s32.totalorder %v1463, %v1620
      %vm1728 = vcmp.ge.s32.totalorder %v1464, %v1620
      %vm1729 = vcmp.ge.s32.totalorder %v1465, %v1620
      %vm1730 = vcmp.ge.s32.totalorder %v1466, %v1620
      %vm1731 = vcmp.ge.s32.totalorder %v1463, %v1621
      %vm1732 = vcmp.ge.s32.totalorder %v1464, %v1621
      %vm1733 = vcmp.ge.s32.totalorder %v1465, %v1621
      %vm1734 = vcmp.ge.s32.totalorder %v1466, %v1621
      %vm1735 = vcmp.ge.s32.totalorder %v1463, %v1622
      %vm1736 = vcmp.ge.s32.totalorder %v1464, %v1622
      %vm1737 = vcmp.ge.s32.totalorder %v1465, %v1622
      %vm1738 = vcmp.ge.s32.totalorder %v1466, %v1622
      %vm1739 = vcmp.ge.s32.totalorder %v1463, %v1623
      %vm1740 = vcmp.ge.s32.totalorder %v1464, %v1623
      %vm1741 = vcmp.ge.s32.totalorder %v1465, %v1623
      %vm1742 = vcmp.ge.s32.totalorder %v1466, %v1623
      %vm1743 = vcmp.ge.s32.totalorder %v1463, %v1624
      %vm1744 = vcmp.ge.s32.totalorder %v1464, %v1624
      %vm1745 = vcmp.ge.s32.totalorder %v1465, %v1624
      %vm1746 = vcmp.ge.s32.totalorder %v1466, %v1624
      %vm1747 = vcmp.ge.s32.totalorder %v1463, %v1625
      %vm1748 = vcmp.ge.s32.totalorder %v1464, %v1625
      %vm1749 = vcmp.ge.s32.totalorder %v1465, %v1625
      %vm1750 = vcmp.ge.s32.totalorder %v1466, %v1625
      %vm1751 = vcmp.ge.s32.totalorder %v1463, %v1626
      %vm1752 = vcmp.ge.s32.totalorder %v1464, %v1626
      %vm1753 = vcmp.ge.s32.totalorder %v1465, %v1626
      %vm1754 = vcmp.ge.s32.totalorder %v1466, %v1626
      %vm1755 = vcmp.le.s32.totalorder %v1463, %v1430
      %vm1756 = vcmp.le.s32.totalorder %v1464, %v1430
      %vm1757 = vcmp.le.s32.totalorder %v1465, %v1430
      %vm1758 = vcmp.le.s32.totalorder %v1466, %v1430
      %vm1759 = vcmp.le.s32.totalorder %v1463, %v1431
      %vm1760 = vcmp.le.s32.totalorder %v1464, %v1431
      %vm1761 = vcmp.le.s32.totalorder %v1465, %v1431
      %vm1762 = vcmp.le.s32.totalorder %v1466, %v1431
      %vm1763 = vcmp.le.s32.totalorder %v1463, %v1432
      %vm1764 = vcmp.le.s32.totalorder %v1464, %v1432
      %vm1765 = vcmp.le.s32.totalorder %v1465, %v1432
      %vm1766 = vcmp.le.s32.totalorder %v1466, %v1432
      %vm1767 = vcmp.le.s32.totalorder %v1463, %v1433
      %vm1768 = vcmp.le.s32.totalorder %v1464, %v1433
      %vm1769 = vcmp.le.s32.totalorder %v1465, %v1433
      %vm1770 = vcmp.le.s32.totalorder %v1466, %v1433
      %vm1771 = vcmp.le.s32.totalorder %v1463, %v1434
      %vm1772 = vcmp.le.s32.totalorder %v1464, %v1434
      %vm1773 = vcmp.le.s32.totalorder %v1465, %v1434
      %vm1774 = vcmp.le.s32.totalorder %v1466, %v1434
      %vm1775 = vcmp.le.s32.totalorder %v1463, %v1435
      %vm1776 = vcmp.le.s32.totalorder %v1464, %v1435
      %vm1777 = vcmp.le.s32.totalorder %v1465, %v1435
      %vm1778 = vcmp.le.s32.totalorder %v1466, %v1435
      %vm1779 = vcmp.le.s32.totalorder %v1463, %v1436
      %vm1780 = vcmp.le.s32.totalorder %v1464, %v1436
      %vm1781 = vcmp.le.s32.totalorder %v1465, %v1436
      %vm1782 = vcmp.le.s32.totalorder %v1466, %v1436
      %vm1783 = vcmp.le.s32.totalorder %v1463, %v1437
      %vm1784 = vcmp.le.s32.totalorder %v1464, %v1437
      %vm1785 = vcmp.le.s32.totalorder %v1465, %v1437
      %vm1786 = vcmp.le.s32.totalorder %v1466, %v1437
      %vm1787 = vcmp.le.s32.totalorder %v1463, %v1438
      %vm1788 = vcmp.le.s32.totalorder %v1464, %v1438
      %vm1789 = vcmp.le.s32.totalorder %v1465, %v1438
      %vm1790 = vcmp.le.s32.totalorder %v1466, %v1438
      %vm1791 = vcmp.le.s32.totalorder %v1463, %v1439
      %vm1792 = vcmp.le.s32.totalorder %v1464, %v1439
      %vm1793 = vcmp.le.s32.totalorder %v1465, %v1439
      %vm1794 = vcmp.le.s32.totalorder %v1466, %v1439
      %vm1795 = vcmp.le.s32.totalorder %v1463, %v1440
      %vm1796 = vcmp.le.s32.totalorder %v1464, %v1440
      %vm1797 = vcmp.le.s32.totalorder %v1465, %v1440
      %vm1798 = vcmp.le.s32.totalorder %v1466, %v1440
      %vm1799 = vcmp.le.s32.totalorder %v1463, %v1441
      %vm1800 = vcmp.le.s32.totalorder %v1464, %v1441
      %vm1801 = vcmp.le.s32.totalorder %v1465, %v1441
      %vm1802 = vcmp.le.s32.totalorder %v1466, %v1441
      %vm1803 = vcmp.le.s32.totalorder %v1463, %v1442
      %vm1804 = vcmp.le.s32.totalorder %v1464, %v1442
      %vm1805 = vcmp.le.s32.totalorder %v1465, %v1442
      %vm1806 = vcmp.le.s32.totalorder %v1466, %v1442
      %vm1807 = vcmp.le.s32.totalorder %v1463, %v1443
      %vm1808 = vcmp.le.s32.totalorder %v1464, %v1443
      %vm1809 = vcmp.le.s32.totalorder %v1465, %v1443
      %vm1810 = vcmp.le.s32.totalorder %v1466, %v1443
      %vm1811 = vcmp.le.s32.totalorder %v1463, %v1444
      %vm1812 = vcmp.le.s32.totalorder %v1464, %v1444
      %vm1813 = vcmp.le.s32.totalorder %v1465, %v1444
      %vm1814 = vcmp.le.s32.totalorder %v1466, %v1444
      %vm1815 = vcmp.le.s32.totalorder %v1463, %v1445
      %vm1816 = vcmp.le.s32.totalorder %v1464, %v1445
      %vm1817 = vcmp.le.s32.totalorder %v1465, %v1445
      %vm1818 = vcmp.le.s32.totalorder %v1466, %v1445
      %vm1819 = vcmp.le.s32.totalorder %v1463, %v1446
      %vm1820 = vcmp.le.s32.totalorder %v1464, %v1446
      %vm1821 = vcmp.le.s32.totalorder %v1465, %v1446
      %vm1822 = vcmp.le.s32.totalorder %v1466, %v1446
      %vm1823 = vcmp.le.s32.totalorder %v1463, %v1447
      %vm1824 = vcmp.le.s32.totalorder %v1464, %v1447
      %vm1825 = vcmp.le.s32.totalorder %v1465, %v1447
      %vm1826 = vcmp.le.s32.totalorder %v1466, %v1447
      %vm1827 = vcmp.le.s32.totalorder %v1463, %v1448
      %vm1828 = vcmp.le.s32.totalorder %v1464, %v1448
      %vm1829 = vcmp.le.s32.totalorder %v1465, %v1448
      %vm1830 = vcmp.le.s32.totalorder %v1466, %v1448
      %vm1831 = vcmp.le.s32.totalorder %v1463, %v1449
      %vm1832 = vcmp.le.s32.totalorder %v1464, %v1449
      %vm1833 = vcmp.le.s32.totalorder %v1465, %v1449
      %vm1834 = vcmp.le.s32.totalorder %v1466, %v1449
      %vm1835 = vcmp.le.s32.totalorder %v1463, %v1450
      %vm1836 = vcmp.le.s32.totalorder %v1464, %v1450
      %vm1837 = vcmp.le.s32.totalorder %v1465, %v1450
      %vm1838 = vcmp.le.s32.totalorder %v1466, %v1450
      %vm1839 = vcmp.le.s32.totalorder %v1463, %v1451
      %vm1840 = vcmp.le.s32.totalorder %v1464, %v1451
      %vm1841 = vcmp.le.s32.totalorder %v1465, %v1451
      %vm1842 = vcmp.le.s32.totalorder %v1466, %v1451
      %vm1843 = vcmp.le.s32.totalorder %v1463, %v1452
      %vm1844 = vcmp.le.s32.totalorder %v1464, %v1452
      %vm1845 = vcmp.le.s32.totalorder %v1465, %v1452
      %vm1846 = vcmp.le.s32.totalorder %v1466, %v1452
      %vm1847 = vcmp.le.s32.totalorder %v1463, %v1453
      %vm1848 = vcmp.le.s32.totalorder %v1464, %v1453
      %vm1849 = vcmp.le.s32.totalorder %v1465, %v1453
      %vm1850 = vcmp.le.s32.totalorder %v1466, %v1453
      %vm1851 = vcmp.le.s32.totalorder %v1463, %v1454
      %vm1852 = vcmp.le.s32.totalorder %v1464, %v1454
      %vm1853 = vcmp.le.s32.totalorder %v1465, %v1454
      %vm1854 = vcmp.le.s32.totalorder %v1466, %v1454
      %vm1855 = vcmp.le.s32.totalorder %v1463, %v1455
      %vm1856 = vcmp.le.s32.totalorder %v1464, %v1455
      %vm1857 = vcmp.le.s32.totalorder %v1465, %v1455
      %vm1858 = vcmp.le.s32.totalorder %v1466, %v1455
      %vm1859 = vcmp.le.s32.totalorder %v1463, %v1456
      %vm1860 = vcmp.le.s32.totalorder %v1464, %v1456
      %vm1861 = vcmp.le.s32.totalorder %v1465, %v1456
      %vm1862 = vcmp.le.s32.totalorder %v1466, %v1456
      %vm1863 = vcmp.le.s32.totalorder %v1463, %v1457
      %vm1864 = vcmp.le.s32.totalorder %v1464, %v1457
      %vm1865 = vcmp.le.s32.totalorder %v1465, %v1457
      %vm1866 = vcmp.le.s32.totalorder %v1466, %v1457
      %vm1867 = vcmp.le.s32.totalorder %v1463, %v1458
      %vm1868 = vcmp.le.s32.totalorder %v1464, %v1458
      %vm1869 = vcmp.le.s32.totalorder %v1465, %v1458
      %vm1870 = vcmp.le.s32.totalorder %v1466, %v1458
      %vm1871 = vcmp.le.s32.totalorder %v1463, %v1459
      %vm1872 = vcmp.le.s32.totalorder %v1464, %v1459
      %vm1873 = vcmp.le.s32.totalorder %v1465, %v1459
      %vm1874 = vcmp.le.s32.totalorder %v1466, %v1459
      %vm1875 = vcmp.le.s32.totalorder %v1463, %v1460
      %vm1876 = vcmp.le.s32.totalorder %v1464, %v1460
      %vm1877 = vcmp.le.s32.totalorder %v1465, %v1460
      %vm1878 = vcmp.le.s32.totalorder %v1466, %v1460
      %vm1879 = vcmp.le.s32.totalorder %v1463, %v1461
      %vm1880 = vcmp.le.s32.totalorder %v1464, %v1461
      %vm1881 = vcmp.le.s32.totalorder %v1465, %v1461
      %vm1882 = vcmp.le.s32.totalorder %v1466, %v1461
      %vm1883 = vmand %vm1627, %vm1755
      %vm1884 = vmand %vm1628, %vm1756
      %vm1885 = vmand %vm1629, %vm1757
      %vm1886 = vmand %vm1630, %vm1758
      %vm1887 = vmand %vm1631, %vm1759
      %vm1888 = vmand %vm1632, %vm1760
      %vm1889 = vmand %vm1633, %vm1761
      %vm1890 = vmand %vm1634, %vm1762
      %vm1891 = vmand %vm1635, %vm1763
      %vm1892 = vmand %vm1636, %vm1764
      %vm1893 = vmand %vm1637, %vm1765
      %vm1894 = vmand %vm1638, %vm1766
      %vm1895 = vmand %vm1639, %vm1767
      %vm1896 = vmand %vm1640, %vm1768
      %vm1897 = vmand %vm1641, %vm1769
      %vm1898 = vmand %vm1642, %vm1770
      %vm1899 = vmand %vm1643, %vm1771
      %vm1900 = vmand %vm1644, %vm1772
      %vm1901 = vmand %vm1645, %vm1773
      %vm1902 = vmand %vm1646, %vm1774
      %vm1903 = vmand %vm1647, %vm1775
      %vm1904 = vmand %vm1648, %vm1776
      %vm1905 = vmand %vm1649, %vm1777
      %vm1906 = vmand %vm1650, %vm1778
      %vm1907 = vmand %vm1651, %vm1779
      %vm1908 = vmand %vm1652, %vm1780
      %vm1909 = vmand %vm1653, %vm1781
      %vm1910 = vmand %vm1654, %vm1782
      %vm1911 = vmand %vm1655, %vm1783
      %vm1912 = vmand %vm1656, %vm1784
      %vm1913 = vmand %vm1657, %vm1785
      %vm1914 = vmand %vm1658, %vm1786
      %vm1915 = vmand %vm1659, %vm1787
      %vm1916 = vmand %vm1660, %vm1788
      %vm1917 = vmand %vm1661, %vm1789
      %vm1918 = vmand %vm1662, %vm1790
      %vm1919 = vmand %vm1663, %vm1791
      %vm1920 = vmand %vm1664, %vm1792
      %vm1921 = vmand %vm1665, %vm1793
      %vm1922 = vmand %vm1666, %vm1794
      %vm1923 = vmand %vm1667, %vm1795
      %vm1924 = vmand %vm1668, %vm1796
      %vm1925 = vmand %vm1669, %vm1797
      %vm1926 = vmand %vm1670, %vm1798
      %vm1927 = vmand %vm1671, %vm1799
      %vm1928 = vmand %vm1672, %vm1800
      %vm1929 = vmand %vm1673, %vm1801
      %vm1930 = vmand %vm1674, %vm1802
      %vm1931 = vmand %vm1675, %vm1803
      %vm1932 = vmand %vm1676, %vm1804
      %vm1933 = vmand %vm1677, %vm1805
      %vm1934 = vmand %vm1678, %vm1806
      %vm1935 = vmand %vm1679, %vm1807
      %vm1936 = vmand %vm1680, %vm1808
      %vm1937 = vmand %vm1681, %vm1809
      %vm1938 = vmand %vm1682, %vm1810
      %vm1939 = vmand %vm1683, %vm1811
      %vm1940 = vmand %vm1684, %vm1812
      %vm1941 = vmand %vm1685, %vm1813
      %vm1942 = vmand %vm1686, %vm1814
      %vm1943 = vmand %vm1687, %vm1815
      %vm1944 = vmand %vm1688, %vm1816
      %vm1945 = vmand %vm1689, %vm1817
      %vm1946 = vmand %vm1690, %vm1818
      %vm1947 = vmand %vm1691, %vm1819
      %vm1948 = vmand %vm1692, %vm1820
      %vm1949 = vmand %vm1693, %vm1821
      %vm1950 = vmand %vm1694, %vm1822
      %vm1951 = vmand %vm1695, %vm1823
      %vm1952 = vmand %vm1696, %vm1824
      %vm1953 = vmand %vm1697, %vm1825
      %vm1954 = vmand %vm1698, %vm1826
      %vm1955 = vmand %vm1699, %vm1827
      %vm1956 = vmand %vm1700, %vm1828
      %vm1957 = vmand %vm1701, %vm1829
      %vm1958 = vmand %vm1702, %vm1830
      %vm1959 = vmand %vm1703, %vm1831
      %vm1960 = vmand %vm1704, %vm1832
      %vm1961 = vmand %vm1705, %vm1833
      %vm1962 = vmand %vm1706, %vm1834
      %vm1963 = vmand %vm1707, %vm1835
      %vm1964 = vmand %vm1708, %vm1836
      %vm1965 = vmand %vm1709, %vm1837
      %vm1966 = vmand %vm1710, %vm1838
      %vm1967 = vmand %vm1711, %vm1839
      %vm1968 = vmand %vm1712, %vm1840
      %vm1969 = vmand %vm1713, %vm1841
      %vm1970 = vmand %vm1714, %vm1842
      %vm1971 = vmand %vm1715, %vm1843
      %vm1972 = vmand %vm1716, %vm1844
      %vm1973 = vmand %vm1717, %vm1845
      %vm1974 = vmand %vm1718, %vm1846
      %vm1975 = vmand %vm1719, %vm1847
      %vm1976 = vmand %vm1720, %vm1848
      %vm1977 = vmand %vm1721, %vm1849
      %vm1978 = vmand %vm1722, %vm1850
      %vm1979 = vmand %vm1723, %vm1851
      %vm1980 = vmand %vm1724, %vm1852
      %vm1981 = vmand %vm1725, %vm1853
      %vm1982 = vmand %vm1726, %vm1854
      %vm1983 = vmand %vm1727, %vm1855
      %vm1984 = vmand %vm1728, %vm1856
      %vm1985 = vmand %vm1729, %vm1857
      %vm1986 = vmand %vm1730, %vm1858
      %vm1987 = vmand %vm1731, %vm1859
      %vm1988 = vmand %vm1732, %vm1860
      %vm1989 = vmand %vm1733, %vm1861
      %vm1990 = vmand %vm1734, %vm1862
      %vm1991 = vmand %vm1735, %vm1863
      %vm1992 = vmand %vm1736, %vm1864
      %vm1993 = vmand %vm1737, %vm1865
      %vm1994 = vmand %vm1738, %vm1866
      %vm1995 = vmand %vm1739, %vm1867
      %vm1996 = vmand %vm1740, %vm1868
      %vm1997 = vmand %vm1741, %vm1869
      %vm1998 = vmand %vm1742, %vm1870
      %vm1999 = vmand %vm1743, %vm1871
      %vm2000 = vmand %vm1744, %vm1872
      %vm2001 = vmand %vm1745, %vm1873
      %vm2002 = vmand %vm1746, %vm1874
      %vm2003 = vmand %vm1747, %vm1875
      %vm2004 = vmand %vm1748, %vm1876
      %vm2005 = vmand %vm1749, %vm1877
      %vm2006 = vmand %vm1750, %vm1878
      %vm2007 = vmand %vm1751, %vm1879
      %vm2008 = vmand %vm1752, %vm1880
      %vm2009 = vmand %vm1753, %vm1881
      %vm2010 = vmand %vm1754, %vm1882
      %v2011 = vld [vmem:[%s4] sm:$0xf]
      %vm2012 = vcmp.gt.f32.partialorder %v2011, 0.5
      %v2013 = vsel %vm2012, 1, 0
      %v2014 = vperm.slane %v2013, 0
      %v2015 = vperm.slane %v2013, 1
      %v2016 = vperm.slane %v2013, 2
      %v2017 = vperm.slane %v2013, 3
      %vm2018 = vcmp.eq.s32.totalorder %v2014, 1
      %vm2019 = vcmp.eq.s32.totalorder %v2015, 1
      %vm2020 = vcmp.eq.s32.totalorder %v2016, 1
      %vm2021 = vcmp.eq.s32.totalorder %v2017, 1
      %vm2022 = vmand %vm1883, %vm2018
      %vm2023 = vmand %vm1884, %vm2019
      %vm2024 = vmand %vm1885, %vm2020
      %vm2025 = vmand %vm1886, %vm2021
      %vm2026 = vmand %vm1887, %vm2018
      %vm2027 = vmand %vm1888, %vm2019
      %vm2028 = vmand %vm1889, %vm2020
      %vm2029 = vmand %vm1890, %vm2021
      %vm2030 = vmand %vm1891, %vm2018
      %vm2031 = vmand %vm1892, %vm2019
      %vm2032 = vmand %vm1893, %vm2020
      %vm2033 = vmand %vm1894, %vm2021
      %vm2034 = vmand %vm1895, %vm2018
      %vm2035 = vmand %vm1896, %vm2019
      %vm2036 = vmand %vm1897, %vm2020
      %vm2037 = vmand %vm1898, %vm2021
      %vm2038 = vmand %vm1899, %vm2018
      %vm2039 = vmand %vm1900, %vm2019
      %vm2040 = vmand %vm1901, %vm2020
      %vm2041 = vmand %vm1902, %vm2021
      %vm2042 = vmand %vm1903, %vm2018
      %vm2043 = vmand %vm1904, %vm2019
      %vm2044 = vmand %vm1905, %vm2020
      %vm2045 = vmand %vm1906, %vm2021
      %vm2046 = vmand %vm1907, %vm2018
      %vm2047 = vmand %vm1908, %vm2019
      %vm2048 = vmand %vm1909, %vm2020
      %vm2049 = vmand %vm1910, %vm2021
      %vm2050 = vmand %vm1911, %vm2018
      %vm2051 = vmand %vm1912, %vm2019
      %vm2052 = vmand %vm1913, %vm2020
      %vm2053 = vmand %vm1914, %vm2021
      %vm2054 = vmand %vm1915, %vm2018
      %vm2055 = vmand %vm1916, %vm2019
      %vm2056 = vmand %vm1917, %vm2020
      %vm2057 = vmand %vm1918, %vm2021
      %vm2058 = vmand %vm1919, %vm2018
      %vm2059 = vmand %vm1920, %vm2019
      %vm2060 = vmand %vm1921, %vm2020
      %vm2061 = vmand %vm1922, %vm2021
      %vm2062 = vmand %vm1923, %vm2018
      %vm2063 = vmand %vm1924, %vm2019
      %vm2064 = vmand %vm1925, %vm2020
      %vm2065 = vmand %vm1926, %vm2021
      %vm2066 = vmand %vm1927, %vm2018
      %vm2067 = vmand %vm1928, %vm2019
      %vm2068 = vmand %vm1929, %vm2020
      %vm2069 = vmand %vm1930, %vm2021
      %vm2070 = vmand %vm1931, %vm2018
      %vm2071 = vmand %vm1932, %vm2019
      %vm2072 = vmand %vm1933, %vm2020
      %vm2073 = vmand %vm1934, %vm2021
      %vm2074 = vmand %vm1935, %vm2018
      %vm2075 = vmand %vm1936, %vm2019
      %vm2076 = vmand %vm1937, %vm2020
      %vm2077 = vmand %vm1938, %vm2021
      %vm2078 = vmand %vm1939, %vm2018
      %vm2079 = vmand %vm1940, %vm2019
      %vm2080 = vmand %vm1941, %vm2020
      %vm2081 = vmand %vm1942, %vm2021
      %vm2082 = vmand %vm1943, %vm2018
      %vm2083 = vmand %vm1944, %vm2019
      %vm2084 = vmand %vm1945, %vm2020
      %vm2085 = vmand %vm1946, %vm2021
      %vm2086 = vmand %vm1947, %vm2018
      %vm2087 = vmand %vm1948, %vm2019
      %vm2088 = vmand %vm1949, %vm2020
      %vm2089 = vmand %vm1950, %vm2021
      %vm2090 = vmand %vm1951, %vm2018
      %vm2091 = vmand %vm1952, %vm2019
      %vm2092 = vmand %vm1953, %vm2020
      %vm2093 = vmand %vm1954, %vm2021
      %vm2094 = vmand %vm1955, %vm2018
      %vm2095 = vmand %vm1956, %vm2019
      %vm2096 = vmand %vm1957, %vm2020
      %vm2097 = vmand %vm1958, %vm2021
      %vm2098 = vmand %vm1959, %vm2018
      %vm2099 = vmand %vm1960, %vm2019
      %vm2100 = vmand %vm1961, %vm2020
      %vm2101 = vmand %vm1962, %vm2021
      %vm2102 = vmand %vm1963, %vm2018
      %vm2103 = vmand %vm1964, %vm2019
      %vm2104 = vmand %vm1965, %vm2020
      %vm2105 = vmand %vm1966, %vm2021
      %vm2106 = vmand %vm1967, %vm2018
      %vm2107 = vmand %vm1968, %vm2019
      %vm2108 = vmand %vm1969, %vm2020
      %vm2109 = vmand %vm1970, %vm2021
      %vm2110 = vmand %vm1971, %vm2018
      %vm2111 = vmand %vm1972, %vm2019
      %vm2112 = vmand %vm1973, %vm2020
      %vm2113 = vmand %vm1974, %vm2021
      %vm2114 = vmand %vm1975, %vm2018
      %vm2115 = vmand %vm1976, %vm2019
      %vm2116 = vmand %vm1977, %vm2020
      %vm2117 = vmand %vm1978, %vm2021
      %vm2118 = vmand %vm1979, %vm2018
      %vm2119 = vmand %vm1980, %vm2019
      %vm2120 = vmand %vm1981, %vm2020
      %vm2121 = vmand %vm1982, %vm2021
      %vm2122 = vmand %vm1983, %vm2018
      %vm2123 = vmand %vm1984, %vm2019
      %vm2124 = vmand %vm1985, %vm2020
      %vm2125 = vmand %vm1986, %vm2021
      %vm2126 = vmand %vm1987, %vm2018
      %vm2127 = vmand %vm1988, %vm2019
      %vm2128 = vmand %vm1989, %vm2020
      %vm2129 = vmand %vm1990, %vm2021
      %vm2130 = vmand %vm1991, %vm2018
      %vm2131 = vmand %vm1992, %vm2019
      %vm2132 = vmand %vm1993, %vm2020
      %vm2133 = vmand %vm1994, %vm2021
      %vm2134 = vmand %vm1995, %vm2018
      %vm2135 = vmand %vm1996, %vm2019
      %vm2136 = vmand %vm1997, %vm2020
      %vm2137 = vmand %vm1998, %vm2021
      %vm2138 = vmand %vm1999, %vm2018
      %vm2139 = vmand %vm2000, %vm2019
      %vm2140 = vmand %vm2001, %vm2020
      %vm2141 = vmand %vm2002, %vm2021
      %vm2142 = vmand %vm2003, %vm2018
      %vm2143 = vmand %vm2004, %vm2019
      %vm2144 = vmand %vm2005, %vm2020
      %vm2145 = vmand %vm2006, %vm2021
      %vm2146 = vmand %vm2007, %vm2018
      %vm2147 = vmand %vm2008, %vm2019
      %vm2148 = vmand %vm2009, %vm2020
      %vm2149 = vmand %vm2010, %vm2021
      %v2150 = vsel %vm2022, %v1267, -1e+30
      %v2151 = vsel %vm2023, %v1268, -1e+30
      %v2152 = vsel %vm2024, %v1269, -1e+30
      %v2153 = vsel %vm2025, %v1270, -1e+30
      %v2154 = vsel %vm2026, %v1271, -1e+30
      %v2155 = vsel %vm2027, %v1272, -1e+30
      %v2156 = vsel %vm2028, %v1273, -1e+30
      %v2157 = vsel %vm2029, %v1274, -1e+30
      %v2158 = vsel %vm2030, %v1275, -1e+30
      %v2159 = vsel %vm2031, %v1276, -1e+30
      %v2160 = vsel %vm2032, %v1277, -1e+30
      %v2161 = vsel %vm2033, %v1278, -1e+30
      %v2162 = vsel %vm2034, %v1279, -1e+30
      %v2163 = vsel %vm2035, %v1280, -1e+30
      %v2164 = vsel %vm2036, %v1281, -1e+30
      %v2165 = vsel %vm2037, %v1282, -1e+30
      %v2166 = vsel %vm2038, %v1283, -1e+30
      %v2167 = vsel %vm2039, %v1284, -1e+30
      %v2168 = vsel %vm2040, %v1285, -1e+30
      %v2169 = vsel %vm2041, %v1286, -1e+30
      %v2170 = vsel %vm2042, %v1287, -1e+30
      %v2171 = vsel %vm2043, %v1288, -1e+30
      %v2172 = vsel %vm2044, %v1289, -1e+30
      %v2173 = vsel %vm2045, %v1290, -1e+30
      %v2174 = vsel %vm2046, %v1291, -1e+30
      %v2175 = vsel %vm2047, %v1292, -1e+30
      %v2176 = vsel %vm2048, %v1293, -1e+30
      %v2177 = vsel %vm2049, %v1294, -1e+30
      %v2178 = vsel %vm2050, %v1295, -1e+30
      %v2179 = vsel %vm2051, %v1296, -1e+30
      %v2180 = vsel %vm2052, %v1297, -1e+30
      %v2181 = vsel %vm2053, %v1298, -1e+30
      %v2182 = vsel %vm2054, %v1299, -1e+30
      %v2183 = vsel %vm2055, %v1300, -1e+30
      %v2184 = vsel %vm2056, %v1301, -1e+30
      %v2185 = vsel %vm2057, %v1302, -1e+30
      %v2186 = vsel %vm2058, %v1303, -1e+30
      %v2187 = vsel %vm2059, %v1304, -1e+30
      %v2188 = vsel %vm2060, %v1305, -1e+30
      %v2189 = vsel %vm2061, %v1306, -1e+30
      %v2190 = vsel %vm2062, %v1307, -1e+30
      %v2191 = vsel %vm2063, %v1308, -1e+30
      %v2192 = vsel %vm2064, %v1309, -1e+30
      %v2193 = vsel %vm2065, %v1310, -1e+30
      %v2194 = vsel %vm2066, %v1311, -1e+30
      %v2195 = vsel %vm2067, %v1312, -1e+30
      %v2196 = vsel %vm2068, %v1313, -1e+30
      %v2197 = vsel %vm2069, %v1314, -1e+30
      %v2198 = vsel %vm2070, %v1315, -1e+30
      %v2199 = vsel %vm2071, %v1316, -1e+30
      %v2200 = vsel %vm2072, %v1317, -1e+30
      %v2201 = vsel %vm2073, %v1318, -1e+30
      %v2202 = vsel %vm2074, %v1319, -1e+30
      %v2203 = vsel %vm2075, %v1320, -1e+30
      %v2204 = vsel %vm2076, %v1321, -1e+30
      %v2205 = vsel %vm2077, %v1322, -1e+30
      %v2206 = vsel %vm2078, %v1323, -1e+30
      %v2207 = vsel %vm2079, %v1324, -1e+30
      %v2208 = vsel %vm2080, %v1325, -1e+30
      %v2209 = vsel %vm2081, %v1326, -1e+30
      %v2210 = vsel %vm2082, %v1327, -1e+30
      %v2211 = vsel %vm2083, %v1328, -1e+30
      %v2212 = vsel %vm2084, %v1329, -1e+30
      %v2213 = vsel %vm2085, %v1330, -1e+30
      %v2214 = vsel %vm2086, %v1331, -1e+30
      %v2215 = vsel %vm2087, %v1332, -1e+30
      %v2216 = vsel %vm2088, %v1333, -1e+30
      %v2217 = vsel %vm2089, %v1334, -1e+30
      %v2218 = vsel %vm2090, %v1335, -1e+30
      %v2219 = vsel %vm2091, %v1336, -1e+30
      %v2220 = vsel %vm2092, %v1337, -1e+30
      %v2221 = vsel %vm2093, %v1338, -1e+30
      %v2222 = vsel %vm2094, %v1339, -1e+30
      %v2223 = vsel %vm2095, %v1340, -1e+30
      %v2224 = vsel %vm2096, %v1341, -1e+30
      %v2225 = vsel %vm2097, %v1342, -1e+30
      %v2226 = vsel %vm2098, %v1343, -1e+30
      %v2227 = vsel %vm2099, %v1344, -1e+30
      %v2228 = vsel %vm2100, %v1345, -1e+30
      %v2229 = vsel %vm2101, %v1346, -1e+30
      %v2230 = vsel %vm2102, %v1347, -1e+30
      %v2231 = vsel %vm2103, %v1348, -1e+30
      %v2232 = vsel %vm2104, %v1349, -1e+30
      %v2233 = vsel %vm2105, %v1350, -1e+30
      %v2234 = vsel %vm2106, %v1351, -1e+30
      %v2235 = vsel %vm2107, %v1352, -1e+30
      %v2236 = vsel %vm2108, %v1353, -1e+30
      %v2237 = vsel %vm2109, %v1354, -1e+30
      %v2238 = vsel %vm2110, %v1355, -1e+30
      %v2239 = vsel %vm2111, %v1356, -1e+30
      %v2240 = vsel %vm2112, %v1357, -1e+30
      %v2241 = vsel %vm2113, %v1358, -1e+30
      %v2242 = vsel %vm2114, %v1359, -1e+30
      %v2243 = vsel %vm2115, %v1360, -1e+30
      %v2244 = vsel %vm2116, %v1361, -1e+30
      %v2245 = vsel %vm2117, %v1362, -1e+30
      %v2246 = vsel %vm2118, %v1363, -1e+30
      %v2247 = vsel %vm2119, %v1364, -1e+30
      %v2248 = vsel %vm2120, %v1365, -1e+30
      %v2249 = vsel %vm2121, %v1366, -1e+30
      %v2250 = vsel %vm2122, %v1367, -1e+30
      %v2251 = vsel %vm2123, %v1368, -1e+30
      %v2252 = vsel %vm2124, %v1369, -1e+30
      %v2253 = vsel %vm2125, %v1370, -1e+30
      %v2254 = vsel %vm2126, %v1371, -1e+30
      %v2255 = vsel %vm2127, %v1372, -1e+30
      %v2256 = vsel %vm2128, %v1373, -1e+30
      %v2257 = vsel %vm2129, %v1374, -1e+30
      %v2258 = vsel %vm2130, %v1375, -1e+30
      %v2259 = vsel %vm2131, %v1376, -1e+30
      %v2260 = vsel %vm2132, %v1377, -1e+30
      %v2261 = vsel %vm2133, %v1378, -1e+30
      %v2262 = vsel %vm2134, %v1379, -1e+30
      %v2263 = vsel %vm2135, %v1380, -1e+30
      %v2264 = vsel %vm2136, %v1381, -1e+30
      %v2265 = vsel %vm2137, %v1382, -1e+30
      %v2266 = vsel %vm2138, %v1383, -1e+30
      %v2267 = vsel %vm2139, %v1384, -1e+30
      %v2268 = vsel %vm2140, %v1385, -1e+30
      %v2269 = vsel %vm2141, %v1386, -1e+30
      %v2270 = vsel %vm2142, %v1387, -1e+30
      %v2271 = vsel %vm2143, %v1388, -1e+30
      %v2272 = vsel %vm2144, %v1389, -1e+30
      %v2273 = vsel %vm2145, %v1390, -1e+30
      %v2274 = vsel %vm2146, %v1391, -1e+30
      %v2275 = vsel %vm2147, %v1392, -1e+30
      %v2276 = vsel %vm2148, %v1393, -1e+30
      %v2277 = vsel %vm2149, %v1394, -1e+30
      %v2278 = vmax.f32 %v2150, %v2151
      %v2279 = vmax.f32 %v2278, %v2152
      %v2280 = vmax.f32 %v2279, %v2153
      %2281 = vmax.xlane.f32.xlu0 %v2280
      %v2282 = vpop.xlane.xlu0 %2281
      %v2283 = vmax.f32 %v2154, %v2155
      %v2284 = vmax.f32 %v2283, %v2156
      %v2285 = vmax.f32 %v2284, %v2157
      %2286 = vmax.xlane.f32.xlu0 %v2285
      %v2287 = vpop.xlane.xlu0 %2286
      %v2288 = vmax.f32 %v2158, %v2159
      %v2289 = vmax.f32 %v2288, %v2160
      %v2290 = vmax.f32 %v2289, %v2161
      %2291 = vmax.xlane.f32.xlu0 %v2290
      %v2292 = vpop.xlane.xlu0 %2291
      %v2293 = vmax.f32 %v2162, %v2163
      %v2294 = vmax.f32 %v2293, %v2164
      %v2295 = vmax.f32 %v2294, %v2165
      %2296 = vmax.xlane.f32.xlu0 %v2295
      %v2297 = vpop.xlane.xlu0 %2296
      %v2298 = vmax.f32 %v2166, %v2167
      %v2299 = vmax.f32 %v2298, %v2168
      %v2300 = vmax.f32 %v2299, %v2169
      %2301 = vmax.xlane.f32.xlu0 %v2300
      %v2302 = vpop.xlane.xlu0 %2301
      %v2303 = vmax.f32 %v2170, %v2171
      %v2304 = vmax.f32 %v2303, %v2172
      %v2305 = vmax.f32 %v2304, %v2173
      %2306 = vmax.xlane.f32.xlu0 %v2305
      %v2307 = vpop.xlane.xlu0 %2306
      %v2308 = vmax.f32 %v2174, %v2175
      %v2309 = vmax.f32 %v2308, %v2176
      %v2310 = vmax.f32 %v2309, %v2177
      %2311 = vmax.xlane.f32.xlu0 %v2310
      %v2312 = vpop.xlane.xlu0 %2311
      %v2313 = vmax.f32 %v2178, %v2179
      %v2314 = vmax.f32 %v2313, %v2180
      %v2315 = vmax.f32 %v2314, %v2181
      %2316 = vmax.xlane.f32.xlu0 %v2315
      %v2317 = vpop.xlane.xlu0 %2316
      %v2318 = vmax.f32 %v2182, %v2183
      %v2319 = vmax.f32 %v2318, %v2184
      %v2320 = vmax.f32 %v2319, %v2185
      %2321 = vmax.xlane.f32.xlu0 %v2320
      %v2322 = vpop.xlane.xlu0 %2321
      %v2323 = vmax.f32 %v2186, %v2187
      %v2324 = vmax.f32 %v2323, %v2188
      %v2325 = vmax.f32 %v2324, %v2189
      %2326 = vmax.xlane.f32.xlu0 %v2325
      %v2327 = vpop.xlane.xlu0 %2326
      %v2328 = vmax.f32 %v2190, %v2191
      %v2329 = vmax.f32 %v2328, %v2192
      %v2330 = vmax.f32 %v2329, %v2193
      %2331 = vmax.xlane.f32.xlu0 %v2330
      %v2332 = vpop.xlane.xlu0 %2331
      %v2333 = vmax.f32 %v2194, %v2195
      %v2334 = vmax.f32 %v2333, %v2196
      %v2335 = vmax.f32 %v2334, %v2197
      %2336 = vmax.xlane.f32.xlu0 %v2335
      %v2337 = vpop.xlane.xlu0 %2336
      %v2338 = vmax.f32 %v2198, %v2199
      %v2339 = vmax.f32 %v2338, %v2200
      %v2340 = vmax.f32 %v2339, %v2201
      %2341 = vmax.xlane.f32.xlu0 %v2340
      %v2342 = vpop.xlane.xlu0 %2341
      %v2343 = vmax.f32 %v2202, %v2203
      %v2344 = vmax.f32 %v2343, %v2204
      %v2345 = vmax.f32 %v2344, %v2205
      %2346 = vmax.xlane.f32.xlu0 %v2345
      %v2347 = vpop.xlane.xlu0 %2346
      %v2348 = vmax.f32 %v2206, %v2207
      %v2349 = vmax.f32 %v2348, %v2208
      %v2350 = vmax.f32 %v2349, %v2209
      %2351 = vmax.xlane.f32.xlu0 %v2350
      %v2352 = vpop.xlane.xlu0 %2351
      %v2353 = vmax.f32 %v2210, %v2211
      %v2354 = vmax.f32 %v2353, %v2212
      %v2355 = vmax.f32 %v2354, %v2213
      %2356 = vmax.xlane.f32.xlu0 %v2355
      %v2357 = vpop.xlane.xlu0 %2356
      %v2358 = vmax.f32 %v2214, %v2215
      %v2359 = vmax.f32 %v2358, %v2216
      %v2360 = vmax.f32 %v2359, %v2217
      %2361 = vmax.xlane.f32.xlu0 %v2360
      %v2362 = vpop.xlane.xlu0 %2361
      %v2363 = vmax.f32 %v2218, %v2219
      %v2364 = vmax.f32 %v2363, %v2220
      %v2365 = vmax.f32 %v2364, %v2221
      %2366 = vmax.xlane.f32.xlu0 %v2365
      %v2367 = vpop.xlane.xlu0 %2366
      %v2368 = vmax.f32 %v2222, %v2223
      %v2369 = vmax.f32 %v2368, %v2224
      %v2370 = vmax.f32 %v2369, %v2225
      %2371 = vmax.xlane.f32.xlu0 %v2370
      %v2372 = vpop.xlane.xlu0 %2371
      %v2373 = vmax.f32 %v2226, %v2227
      %v2374 = vmax.f32 %v2373, %v2228
      %v2375 = vmax.f32 %v2374, %v2229
      %2376 = vmax.xlane.f32.xlu0 %v2375
      %v2377 = vpop.xlane.xlu0 %2376
      %v2378 = vmax.f32 %v2230, %v2231
      %v2379 = vmax.f32 %v2378, %v2232
      %v2380 = vmax.f32 %v2379, %v2233
      %2381 = vmax.xlane.f32.xlu0 %v2380
      %v2382 = vpop.xlane.xlu0 %2381
      %v2383 = vmax.f32 %v2234, %v2235
      %v2384 = vmax.f32 %v2383, %v2236
      %v2385 = vmax.f32 %v2384, %v2237
      %2386 = vmax.xlane.f32.xlu0 %v2385
      %v2387 = vpop.xlane.xlu0 %2386
      %v2388 = vmax.f32 %v2238, %v2239
      %v2389 = vmax.f32 %v2388, %v2240
      %v2390 = vmax.f32 %v2389, %v2241
      %2391 = vmax.xlane.f32.xlu0 %v2390
      %v2392 = vpop.xlane.xlu0 %2391
      %v2393 = vmax.f32 %v2242, %v2243
      %v2394 = vmax.f32 %v2393, %v2244
      %v2395 = vmax.f32 %v2394, %v2245
      %2396 = vmax.xlane.f32.xlu0 %v2395
      %v2397 = vpop.xlane.xlu0 %2396
      %v2398 = vmax.f32 %v2246, %v2247
      %v2399 = vmax.f32 %v2398, %v2248
      %v2400 = vmax.f32 %v2399, %v2249
      %2401 = vmax.xlane.f32.xlu0 %v2400
      %v2402 = vpop.xlane.xlu0 %2401
      %v2403 = vmax.f32 %v2250, %v2251
      %v2404 = vmax.f32 %v2403, %v2252
      %v2405 = vmax.f32 %v2404, %v2253
      %2406 = vmax.xlane.f32.xlu0 %v2405
      %v2407 = vpop.xlane.xlu0 %2406
      %v2408 = vmax.f32 %v2254, %v2255
      %v2409 = vmax.f32 %v2408, %v2256
      %v2410 = vmax.f32 %v2409, %v2257
      %2411 = vmax.xlane.f32.xlu0 %v2410
      %v2412 = vpop.xlane.xlu0 %2411
      %v2413 = vmax.f32 %v2258, %v2259
      %v2414 = vmax.f32 %v2413, %v2260
      %v2415 = vmax.f32 %v2414, %v2261
      %2416 = vmax.xlane.f32.xlu0 %v2415
      %v2417 = vpop.xlane.xlu0 %2416
      %v2418 = vmax.f32 %v2262, %v2263
      %v2419 = vmax.f32 %v2418, %v2264
      %v2420 = vmax.f32 %v2419, %v2265
      %2421 = vmax.xlane.f32.xlu0 %v2420
      %v2422 = vpop.xlane.xlu0 %2421
      %v2423 = vmax.f32 %v2266, %v2267
      %v2424 = vmax.f32 %v2423, %v2268
      %v2425 = vmax.f32 %v2424, %v2269
      %2426 = vmax.xlane.f32.xlu0 %v2425
      %v2427 = vpop.xlane.xlu0 %2426
      %v2428 = vmax.f32 %v2270, %v2271
      %v2429 = vmax.f32 %v2428, %v2272
      %v2430 = vmax.f32 %v2429, %v2273
      %2431 = vmax.xlane.f32.xlu0 %v2430
      %v2432 = vpop.xlane.xlu0 %2431
      %v2433 = vmax.f32 %v2274, %v2275
      %v2434 = vmax.f32 %v2433, %v2276
      %v2435 = vmax.f32 %v2434, %v2277
      %2436 = vmax.xlane.f32.xlu0 %v2435
      %v2437 = vpop.xlane.xlu0 %2436
      %v2438 = vsub.f32 %v2150, %v2282
      %v2439 = vsub.f32 %v2151, %v2282
      %v2440 = vsub.f32 %v2152, %v2282
      %v2441 = vsub.f32 %v2153, %v2282
      %v2442 = vsub.f32 %v2154, %v2287
      %v2443 = vsub.f32 %v2155, %v2287
      %v2444 = vsub.f32 %v2156, %v2287
      %v2445 = vsub.f32 %v2157, %v2287
      %v2446 = vsub.f32 %v2158, %v2292
      %v2447 = vsub.f32 %v2159, %v2292
      %v2448 = vsub.f32 %v2160, %v2292
      %v2449 = vsub.f32 %v2161, %v2292
      %v2450 = vsub.f32 %v2162, %v2297
      %v2451 = vsub.f32 %v2163, %v2297
      %v2452 = vsub.f32 %v2164, %v2297
      %v2453 = vsub.f32 %v2165, %v2297
      %v2454 = vsub.f32 %v2166, %v2302
      %v2455 = vsub.f32 %v2167, %v2302
      %v2456 = vsub.f32 %v2168, %v2302
      %v2457 = vsub.f32 %v2169, %v2302
      %v2458 = vsub.f32 %v2170, %v2307
      %v2459 = vsub.f32 %v2171, %v2307
      %v2460 = vsub.f32 %v2172, %v2307
      %v2461 = vsub.f32 %v2173, %v2307
      %v2462 = vsub.f32 %v2174, %v2312
      %v2463 = vsub.f32 %v2175, %v2312
      %v2464 = vsub.f32 %v2176, %v2312
      %v2465 = vsub.f32 %v2177, %v2312
      %v2466 = vsub.f32 %v2178, %v2317
      %v2467 = vsub.f32 %v2179, %v2317
      %v2468 = vsub.f32 %v2180, %v2317
      %v2469 = vsub.f32 %v2181, %v2317
      %v2470 = vsub.f32 %v2182, %v2322
      %v2471 = vsub.f32 %v2183, %v2322
      %v2472 = vsub.f32 %v2184, %v2322
      %v2473 = vsub.f32 %v2185, %v2322
      %v2474 = vsub.f32 %v2186, %v2327
      %v2475 = vsub.f32 %v2187, %v2327
      %v2476 = vsub.f32 %v2188, %v2327
      %v2477 = vsub.f32 %v2189, %v2327
      %v2478 = vsub.f32 %v2190, %v2332
      %v2479 = vsub.f32 %v2191, %v2332
      %v2480 = vsub.f32 %v2192, %v2332
      %v2481 = vsub.f32 %v2193, %v2332
      %v2482 = vsub.f32 %v2194, %v2337
      %v2483 = vsub.f32 %v2195, %v2337
      %v2484 = vsub.f32 %v2196, %v2337
      %v2485 = vsub.f32 %v2197, %v2337
      %v2486 = vsub.f32 %v2198, %v2342
      %v2487 = vsub.f32 %v2199, %v2342
      %v2488 = vsub.f32 %v2200, %v2342
      %v2489 = vsub.f32 %v2201, %v2342
      %v2490 = vsub.f32 %v2202, %v2347
      %v2491 = vsub.f32 %v2203, %v2347
      %v2492 = vsub.f32 %v2204, %v2347
      %v2493 = vsub.f32 %v2205, %v2347
      %v2494 = vsub.f32 %v2206, %v2352
      %v2495 = vsub.f32 %v2207, %v2352
      %v2496 = vsub.f32 %v2208, %v2352
      %v2497 = vsub.f32 %v2209, %v2352
      %v2498 = vsub.f32 %v2210, %v2357
      %v2499 = vsub.f32 %v2211, %v2357
      %v2500 = vsub.f32 %v2212, %v2357
      %v2501 = vsub.f32 %v2213, %v2357
      %v2502 = vsub.f32 %v2214, %v2362
      %v2503 = vsub.f32 %v2215, %v2362
      %v2504 = vsub.f32 %v2216, %v2362
      %v2505 = vsub.f32 %v2217, %v2362
      %v2506 = vsub.f32 %v2218, %v2367
      %v2507 = vsub.f32 %v2219, %v2367
      %v2508 = vsub.f32 %v2220, %v2367
      %v2509 = vsub.f32 %v2221, %v2367
      %v2510 = vsub.f32 %v2222, %v2372
      %v2511 = vsub.f32 %v2223, %v2372
      %v2512 = vsub.f32 %v2224, %v2372
      %v2513 = vsub.f32 %v2225, %v2372
      %v2514 = vsub.f32 %v2226, %v2377
      %v2515 = vsub.f32 %v2227, %v2377
      %v2516 = vsub.f32 %v2228, %v2377
      %v2517 = vsub.f32 %v2229, %v2377
      %v2518 = vsub.f32 %v2230, %v2382
      %v2519 = vsub.f32 %v2231, %v2382
      %v2520 = vsub.f32 %v2232, %v2382
      %v2521 = vsub.f32 %v2233, %v2382
      %v2522 = vsub.f32 %v2234, %v2387
      %v2523 = vsub.f32 %v2235, %v2387
      %v2524 = vsub.f32 %v2236, %v2387
      %v2525 = vsub.f32 %v2237, %v2387
      %v2526 = vsub.f32 %v2238, %v2392
      %v2527 = vsub.f32 %v2239, %v2392
      %v2528 = vsub.f32 %v2240, %v2392
      %v2529 = vsub.f32 %v2241, %v2392
      %v2530 = vsub.f32 %v2242, %v2397
      %v2531 = vsub.f32 %v2243, %v2397
      %v2532 = vsub.f32 %v2244, %v2397
      %v2533 = vsub.f32 %v2245, %v2397
      %v2534 = vsub.f32 %v2246, %v2402
      %v2535 = vsub.f32 %v2247, %v2402
      %v2536 = vsub.f32 %v2248, %v2402
      %v2537 = vsub.f32 %v2249, %v2402
      %v2538 = vsub.f32 %v2250, %v2407
      %v2539 = vsub.f32 %v2251, %v2407
      %v2540 = vsub.f32 %v2252, %v2407
      %v2541 = vsub.f32 %v2253, %v2407
      %v2542 = vsub.f32 %v2254, %v2412
      %v2543 = vsub.f32 %v2255, %v2412
      %v2544 = vsub.f32 %v2256, %v2412
      %v2545 = vsub.f32 %v2257, %v2412
      %v2546 = vsub.f32 %v2258, %v2417
      %v2547 = vsub.f32 %v2259, %v2417
      %v2548 = vsub.f32 %v2260, %v2417
      %v2549 = vsub.f32 %v2261, %v2417
      %v2550 = vsub.f32 %v2262, %v2422
      %v2551 = vsub.f32 %v2263, %v2422
      %v2552 = vsub.f32 %v2264, %v2422
      %v2553 = vsub.f32 %v2265, %v2422
      %v2554 = vsub.f32 %v2266, %v2427
      %v2555 = vsub.f32 %v2267, %v2427
      %v2556 = vsub.f32 %v2268, %v2427
      %v2557 = vsub.f32 %v2269, %v2427
      %v2558 = vsub.f32 %v2270, %v2432
      %v2559 = vsub.f32 %v2271, %v2432
      %v2560 = vsub.f32 %v2272, %v2432
      %v2561 = vsub.f32 %v2273, %v2432
      %v2562 = vsub.f32 %v2274, %v2437
      %v2563 = vsub.f32 %v2275, %v2437
      %v2564 = vsub.f32 %v2276, %v2437
      %v2565 = vsub.f32 %v2277, %v2437
      %v2566 = vmul.f32 %v2438, 1.442695
      %v2567 = vpow.pop %v2566
      %v2568 = vmul.f32 %v2439, 1.442695
      %v2569 = vpow.pop %v2568
      %v2570 = vmul.f32 %v2440, 1.442695
      %v2571 = vpow.pop %v2570
      %v2572 = vmul.f32 %v2441, 1.442695
      %v2573 = vpow.pop %v2572
      %v2574 = vmul.f32 %v2442, 1.442695
      %v2575 = vpow.pop %v2574
      %v2576 = vmul.f32 %v2443, 1.442695
      %v2577 = vpow.pop %v2576
      %v2578 = vmul.f32 %v2444, 1.442695
      %v2579 = vpow.pop %v2578
      %v2580 = vmul.f32 %v2445, 1.442695
      %v2581 = vpow.pop %v2580
      %v2582 = vmul.f32 %v2446, 1.442695
      %v2583 = vpow.pop %v2582
      %v2584 = vmul.f32 %v2447, 1.442695
      %v2585 = vpow.pop %v2584
      %v2586 = vmul.f32 %v2448, 1.442695
      %v2587 = vpow.pop %v2586
      %v2588 = vmul.f32 %v2449, 1.442695
      %v2589 = vpow.pop %v2588
      %v2590 = vmul.f32 %v2450, 1.442695
      %v2591 = vpow.pop %v2590
      %v2592 = vmul.f32 %v2451, 1.442695
      %v2593 = vpow.pop %v2592
      %v2594 = vmul.f32 %v2452, 1.442695
      %v2595 = vpow.pop %v2594
      %v2596 = vmul.f32 %v2453, 1.442695
      %v2597 = vpow.pop %v2596
      %v2598 = vmul.f32 %v2454, 1.442695
      %v2599 = vpow.pop %v2598
      %v2600 = vmul.f32 %v2455, 1.442695
      %v2601 = vpow.pop %v2600
      %v2602 = vmul.f32 %v2456, 1.442695
      %v2603 = vpow.pop %v2602
      %v2604 = vmul.f32 %v2457, 1.442695
      %v2605 = vpow.pop %v2604
      %v2606 = vmul.f32 %v2458, 1.442695
      %v2607 = vpow.pop %v2606
      %v2608 = vmul.f32 %v2459, 1.442695
      %v2609 = vpow.pop %v2608
      %v2610 = vmul.f32 %v2460, 1.442695
      %v2611 = vpow.pop %v2610
      %v2612 = vmul.f32 %v2461, 1.442695
      %v2613 = vpow.pop %v2612
      %v2614 = vmul.f32 %v2462, 1.442695
      %v2615 = vpow.pop %v2614
      %v2616 = vmul.f32 %v2463, 1.442695
      %v2617 = vpow.pop %v2616
      %v2618 = vmul.f32 %v2464, 1.442695
      %v2619 = vpow.pop %v2618
      %v2620 = vmul.f32 %v2465, 1.442695
      %v2621 = vpow.pop %v2620
      %v2622 = vmul.f32 %v2466, 1.442695
      %v2623 = vpow.pop %v2622
      %v2624 = vmul.f32 %v2467, 1.442695
      %v2625 = vpow.pop %v2624
      %v2626 = vmul.f32 %v2468, 1.442695
      %v2627 = vpow.pop %v2626
      %v2628 = vmul.f32 %v2469, 1.442695
      %v2629 = vpow.pop %v2628
      %v2630 = vmul.f32 %v2470, 1.442695
      %v2631 = vpow.pop %v2630
      %v2632 = vmul.f32 %v2471, 1.442695
      %v2633 = vpow.pop %v2632
      %v2634 = vmul.f32 %v2472, 1.442695
      %v2635 = vpow.pop %v2634
      %v2636 = vmul.f32 %v2473, 1.442695
      %v2637 = vpow.pop %v2636
      %v2638 = vmul.f32 %v2474, 1.442695
      %v2639 = vpow.pop %v2638
      %v2640 = vmul.f32 %v2475, 1.442695
      %v2641 = vpow.pop %v2640
      %v2642 = vmul.f32 %v2476, 1.442695
      %v2643 = vpow.pop %v2642
      %v2644 = vmul.f32 %v2477, 1.442695
      %v2645 = vpow.pop %v2644
      %v2646 = vmul.f32 %v2478, 1.442695
      %v2647 = vpow.pop %v2646
      %v2648 = vmul.f32 %v2479, 1.442695
      %v2649 = vpow.pop %v2648
      %v2650 = vmul.f32 %v2480, 1.442695
      %v2651 = vpow.pop %v2650
      %v2652 = vmul.f32 %v2481, 1.442695
      %v2653 = vpow.pop %v2652
      %v2654 = vmul.f32 %v2482, 1.442695
      %v2655 = vpow.pop %v2654
      %v2656 = vmul.f32 %v2483, 1.442695
      %v2657 = vpow.pop %v2656
      %v2658 = vmul.f32 %v2484, 1.442695
      %v2659 = vpow.pop %v2658
      %v2660 = vmul.f32 %v2485, 1.442695
      %v2661 = vpow.pop %v2660
      %v2662 = vmul.f32 %v2486, 1.442695
      %v2663 = vpow.pop %v2662
      %v2664 = vmul.f32 %v2487, 1.442695
      %v2665 = vpow.pop %v2664
      %v2666 = vmul.f32 %v2488, 1.442695
      %v2667 = vpow.pop %v2666
      %v2668 = vmul.f32 %v2489, 1.442695
      %v2669 = vpow.pop %v2668
      %v2670 = vmul.f32 %v2490, 1.442695
      %v2671 = vpow.pop %v2670
      %v2672 = vmul.f32 %v2491, 1.442695
      %v2673 = vpow.pop %v2672
      %v2674 = vmul.f32 %v2492, 1.442695
      %v2675 = vpow.pop %v2674
      %v2676 = vmul.f32 %v2493, 1.442695
      %v2677 = vpow.pop %v2676
      %v2678 = vmul.f32 %v2494, 1.442695
      %v2679 = vpow.pop %v2678
      %v2680 = vmul.f32 %v2495, 1.442695
      %v2681 = vpow.pop %v2680
      %v2682 = vmul.f32 %v2496, 1.442695
      %v2683 = vpow.pop %v2682
      %v2684 = vmul.f32 %v2497, 1.442695
      %v2685 = vpow.pop %v2684
      %v2686 = vmul.f32 %v2498, 1.442695
      %v2687 = vpow.pop %v2686
      %v2688 = vmul.f32 %v2499, 1.442695
      %v2689 = vpow.pop %v2688
      %v2690 = vmul.f32 %v2500, 1.442695
      %v2691 = vpow.pop %v2690
      %v2692 = vmul.f32 %v2501, 1.442695
      %v2693 = vpow.pop %v2692
      %v2694 = vmul.f32 %v2502, 1.442695
      %v2695 = vpow.pop %v2694
      %v2696 = vmul.f32 %v2503, 1.442695
      %v2697 = vpow.pop %v2696
      %v2698 = vmul.f32 %v2504, 1.442695
      %v2699 = vpow.pop %v2698
      %v2700 = vmul.f32 %v2505, 1.442695
      %v2701 = vpow.pop %v2700
      %v2702 = vmul.f32 %v2506, 1.442695
      %v2703 = vpow.pop %v2702
      %v2704 = vmul.f32 %v2507, 1.442695
      %v2705 = vpow.pop %v2704
      %v2706 = vmul.f32 %v2508, 1.442695
      %v2707 = vpow.pop %v2706
      %v2708 = vmul.f32 %v2509, 1.442695
      %v2709 = vpow.pop %v2708
      %v2710 = vmul.f32 %v2510, 1.442695
      %v2711 = vpow.pop %v2710
      %v2712 = vmul.f32 %v2511, 1.442695
      %v2713 = vpow.pop %v2712
      %v2714 = vmul.f32 %v2512, 1.442695
      %v2715 = vpow.pop %v2714
      %v2716 = vmul.f32 %v2513, 1.442695
      %v2717 = vpow.pop %v2716
      %v2718 = vmul.f32 %v2514, 1.442695
      %v2719 = vpow.pop %v2718
      %v2720 = vmul.f32 %v2515, 1.442695
      %v2721 = vpow.pop %v2720
      %v2722 = vmul.f32 %v2516, 1.442695
      %v2723 = vpow.pop %v2722
      %v2724 = vmul.f32 %v2517, 1.442695
      %v2725 = vpow.pop %v2724
      %v2726 = vmul.f32 %v2518, 1.442695
      %v2727 = vpow.pop %v2726
      %v2728 = vmul.f32 %v2519, 1.442695
      %v2729 = vpow.pop %v2728
      %v2730 = vmul.f32 %v2520, 1.442695
      %v2731 = vpow.pop %v2730
      %v2732 = vmul.f32 %v2521, 1.442695
      %v2733 = vpow.pop %v2732
      %v2734 = vmul.f32 %v2522, 1.442695
      %v2735 = vpow.pop %v2734
      %v2736 = vmul.f32 %v2523, 1.442695
      %v2737 = vpow.pop %v2736
      %v2738 = vmul.f32 %v2524, 1.442695
      %v2739 = vpow.pop %v2738
      %v2740 = vmul.f32 %v2525, 1.442695
      %v2741 = vpow.pop %v2740
      %v2742 = vmul.f32 %v2526, 1.442695
      %v2743 = vpow.pop %v2742
      %v2744 = vmul.f32 %v2527, 1.442695
      %v2745 = vpow.pop %v2744
      %v2746 = vmul.f32 %v2528, 1.442695
      %v2747 = vpow.pop %v2746
      %v2748 = vmul.f32 %v2529, 1.442695
      %v2749 = vpow.pop %v2748
      %v2750 = vmul.f32 %v2530, 1.442695
      %v2751 = vpow.pop %v2750
      %v2752 = vmul.f32 %v2531, 1.442695
      %v2753 = vpow.pop %v2752
      %v2754 = vmul.f32 %v2532, 1.442695
      %v2755 = vpow.pop %v2754
      %v2756 = vmul.f32 %v2533, 1.442695
      %v2757 = vpow.pop %v2756
      %v2758 = vmul.f32 %v2534, 1.442695
      %v2759 = vpow.pop %v2758
      %v2760 = vmul.f32 %v2535, 1.442695
      %v2761 = vpow.pop %v2760
      %v2762 = vmul.f32 %v2536, 1.442695
      %v2763 = vpow.pop %v2762
      %v2764 = vmul.f32 %v2537, 1.442695
      %v2765 = vpow.pop %v2764
      %v2766 = vmul.f32 %v2538, 1.442695
      %v2767 = vpow.pop %v2766
      %v2768 = vmul.f32 %v2539, 1.442695
      %v2769 = vpow.pop %v2768
      %v2770 = vmul.f32 %v2540, 1.442695
      %v2771 = vpow.pop %v2770
      %v2772 = vmul.f32 %v2541, 1.442695
      %v2773 = vpow.pop %v2772
      %v2774 = vmul.f32 %v2542, 1.442695
      %v2775 = vpow.pop %v2774
      %v2776 = vmul.f32 %v2543, 1.442695
      %v2777 = vpow.pop %v2776
      %v2778 = vmul.f32 %v2544, 1.442695
      %v2779 = vpow.pop %v2778
      %v2780 = vmul.f32 %v2545, 1.442695
      %v2781 = vpow.pop %v2780
      %v2782 = vmul.f32 %v2546, 1.442695
      %v2783 = vpow.pop %v2782
      %v2784 = vmul.f32 %v2547, 1.442695
      %v2785 = vpow.pop %v2784
      %v2786 = vmul.f32 %v2548, 1.442695
      %v2787 = vpow.pop %v2786
      %v2788 = vmul.f32 %v2549, 1.442695
      %v2789 = vpow.pop %v2788
      %v2790 = vmul.f32 %v2550, 1.442695
      %v2791 = vpow.pop %v2790
      %v2792 = vmul.f32 %v2551, 1.442695
      %v2793 = vpow.pop %v2792
      %v2794 = vmul.f32 %v2552, 1.442695
      %v2795 = vpow.pop %v2794
      %v2796 = vmul.f32 %v2553, 1.442695
      %v2797 = vpow.pop %v2796
      %v2798 = vmul.f32 %v2554, 1.442695
      %v2799 = vpow.pop %v2798
      %v2800 = vmul.f32 %v2555, 1.442695
      %v2801 = vpow.pop %v2800
      %v2802 = vmul.f32 %v2556, 1.442695
      %v2803 = vpow.pop %v2802
      %v2804 = vmul.f32 %v2557, 1.442695
      %v2805 = vpow.pop %v2804
      %v2806 = vmul.f32 %v2558, 1.442695
      %v2807 = vpow.pop %v2806
      %v2808 = vmul.f32 %v2559, 1.442695
      %v2809 = vpow.pop %v2808
      %v2810 = vmul.f32 %v2560, 1.442695
      %v2811 = vpow.pop %v2810
      %v2812 = vmul.f32 %v2561, 1.442695
      %v2813 = vpow.pop %v2812
      %v2814 = vmul.f32 %v2562, 1.442695
      %v2815 = vpow.pop %v2814
      %v2816 = vmul.f32 %v2563, 1.442695
      %v2817 = vpow.pop %v2816
      %v2818 = vmul.f32 %v2564, 1.442695
      %v2819 = vpow.pop %v2818
      %v2820 = vmul.f32 %v2565, 1.442695
      %v2821 = vpow.pop %v2820
      %v2822 = vadd.f32 %v2567, %v2569
      %v2823 = vadd.f32 %v2822, %v2571
      %v2824 = vadd.f32 %v2823, %v2573
      %2825 = vadd.xlane.f32.xlu0 %v2824
      %v2826 = vpop.xlane.xlu0 %2825
      %v2827 = vadd.f32 %v2575, %v2577
      %v2828 = vadd.f32 %v2827, %v2579
      %v2829 = vadd.f32 %v2828, %v2581
      %2830 = vadd.xlane.f32.xlu0 %v2829
      %v2831 = vpop.xlane.xlu0 %2830
      %v2832 = vadd.f32 %v2583, %v2585
      %v2833 = vadd.f32 %v2832, %v2587
      %v2834 = vadd.f32 %v2833, %v2589
      %2835 = vadd.xlane.f32.xlu0 %v2834
      %v2836 = vpop.xlane.xlu0 %2835
      %v2837 = vadd.f32 %v2591, %v2593
      %v2838 = vadd.f32 %v2837, %v2595
      %v2839 = vadd.f32 %v2838, %v2597
      %2840 = vadd.xlane.f32.xlu0 %v2839
      %v2841 = vpop.xlane.xlu0 %2840
      %v2842 = vadd.f32 %v2599, %v2601
      %v2843 = vadd.f32 %v2842, %v2603
      %v2844 = vadd.f32 %v2843, %v2605
      %2845 = vadd.xlane.f32.xlu0 %v2844
      %v2846 = vpop.xlane.xlu0 %2845
      %v2847 = vadd.f32 %v2607, %v2609
      %v2848 = vadd.f32 %v2847, %v2611
      %v2849 = vadd.f32 %v2848, %v2613
      %2850 = vadd.xlane.f32.xlu0 %v2849
      %v2851 = vpop.xlane.xlu0 %2850
      %v2852 = vadd.f32 %v2615, %v2617
      %v2853 = vadd.f32 %v2852, %v2619
      %v2854 = vadd.f32 %v2853, %v2621
      %2855 = vadd.xlane.f32.xlu0 %v2854
      %v2856 = vpop.xlane.xlu0 %2855
      %v2857 = vadd.f32 %v2623, %v2625
      %v2858 = vadd.f32 %v2857, %v2627
      %v2859 = vadd.f32 %v2858, %v2629
      %2860 = vadd.xlane.f32.xlu0 %v2859
      %v2861 = vpop.xlane.xlu0 %2860
      %v2862 = vadd.f32 %v2631, %v2633
      %v2863 = vadd.f32 %v2862, %v2635
      %v2864 = vadd.f32 %v2863, %v2637
      %2865 = vadd.xlane.f32.xlu0 %v2864
      %v2866 = vpop.xlane.xlu0 %2865
      %v2867 = vadd.f32 %v2639, %v2641
      %v2868 = vadd.f32 %v2867, %v2643
      %v2869 = vadd.f32 %v2868, %v2645
      %2870 = vadd.xlane.f32.xlu0 %v2869
      %v2871 = vpop.xlane.xlu0 %2870
      %v2872 = vadd.f32 %v2647, %v2649
      %v2873 = vadd.f32 %v2872, %v2651
      %v2874 = vadd.f32 %v2873, %v2653
      %2875 = vadd.xlane.f32.xlu0 %v2874
      %v2876 = vpop.xlane.xlu0 %2875
      %v2877 = vadd.f32 %v2655, %v2657
      %v2878 = vadd.f32 %v2877, %v2659
      %v2879 = vadd.f32 %v2878, %v2661
      %2880 = vadd.xlane.f32.xlu0 %v2879
      %v2881 = vpop.xlane.xlu0 %2880
      %v2882 = vadd.f32 %v2663, %v2665
      %v2883 = vadd.f32 %v2882, %v2667
      %v2884 = vadd.f32 %v2883, %v2669
      %2885 = vadd.xlane.f32.xlu0 %v2884
      %v2886 = vpop.xlane.xlu0 %2885
      %v2887 = vadd.f32 %v2671, %v2673
      %v2888 = vadd.f32 %v2887, %v2675
      %v2889 = vadd.f32 %v2888, %v2677
      %2890 = vadd.xlane.f32.xlu0 %v2889
      %v2891 = vpop.xlane.xlu0 %2890
      %v2892 = vadd.f32 %v2679, %v2681
      %v2893 = vadd.f32 %v2892, %v2683
      %v2894 = vadd.f32 %v2893, %v2685
      %2895 = vadd.xlane.f32.xlu0 %v2894
      %v2896 = vpop.xlane.xlu0 %2895
      %v2897 = vadd.f32 %v2687, %v2689
      %v2898 = vadd.f32 %v2897, %v2691
      %v2899 = vadd.f32 %v2898, %v2693
      %2900 = vadd.xlane.f32.xlu0 %v2899
      %v2901 = vpop.xlane.xlu0 %2900
      %v2902 = vadd.f32 %v2695, %v2697
      %v2903 = vadd.f32 %v2902, %v2699
      %v2904 = vadd.f32 %v2903, %v2701
      %2905 = vadd.xlane.f32.xlu0 %v2904
      %v2906 = vpop.xlane.xlu0 %2905
      %v2907 = vadd.f32 %v2703, %v2705
      %v2908 = vadd.f32 %v2907, %v2707
      %v2909 = vadd.f32 %v2908, %v2709
      %2910 = vadd.xlane.f32.xlu0 %v2909
      %v2911 = vpop.xlane.xlu0 %2910
      %v2912 = vadd.f32 %v2711, %v2713
      %v2913 = vadd.f32 %v2912, %v2715
      %v2914 = vadd.f32 %v2913, %v2717
      %2915 = vadd.xlane.f32.xlu0 %v2914
      %v2916 = vpop.xlane.xlu0 %2915
      %v2917 = vadd.f32 %v2719, %v2721
      %v2918 = vadd.f32 %v2917, %v2723
      %v2919 = vadd.f32 %v2918, %v2725
      %2920 = vadd.xlane.f32.xlu0 %v2919
      %v2921 = vpop.xlane.xlu0 %2920
      %v2922 = vadd.f32 %v2727, %v2729
      %v2923 = vadd.f32 %v2922, %v2731
      %v2924 = vadd.f32 %v2923, %v2733
      %2925 = vadd.xlane.f32.xlu0 %v2924
      %v2926 = vpop.xlane.xlu0 %2925
      %v2927 = vadd.f32 %v2735, %v2737
      %v2928 = vadd.f32 %v2927, %v2739
      %v2929 = vadd.f32 %v2928, %v2741
      %2930 = vadd.xlane.f32.xlu0 %v2929
      %v2931 = vpop.xlane.xlu0 %2930
      %v2932 = vadd.f32 %v2743, %v2745
      %v2933 = vadd.f32 %v2932, %v2747
      %v2934 = vadd.f32 %v2933, %v2749
      %2935 = vadd.xlane.f32.xlu0 %v2934
      %v2936 = vpop.xlane.xlu0 %2935
      %v2937 = vadd.f32 %v2751, %v2753
      %v2938 = vadd.f32 %v2937, %v2755
      %v2939 = vadd.f32 %v2938, %v2757
      %2940 = vadd.xlane.f32.xlu0 %v2939
      %v2941 = vpop.xlane.xlu0 %2940
      %v2942 = vadd.f32 %v2759, %v2761
      %v2943 = vadd.f32 %v2942, %v2763
      %v2944 = vadd.f32 %v2943, %v2765
      %2945 = vadd.xlane.f32.xlu0 %v2944
      %v2946 = vpop.xlane.xlu0 %2945
      %v2947 = vadd.f32 %v2767, %v2769
      %v2948 = vadd.f32 %v2947, %v2771
      %v2949 = vadd.f32 %v2948, %v2773
      %2950 = vadd.xlane.f32.xlu0 %v2949
      %v2951 = vpop.xlane.xlu0 %2950
      %v2952 = vadd.f32 %v2775, %v2777
      %v2953 = vadd.f32 %v2952, %v2779
      %v2954 = vadd.f32 %v2953, %v2781
      %2955 = vadd.xlane.f32.xlu0 %v2954
      %v2956 = vpop.xlane.xlu0 %2955
      %v2957 = vadd.f32 %v2783, %v2785
      %v2958 = vadd.f32 %v2957, %v2787
      %v2959 = vadd.f32 %v2958, %v2789
      %2960 = vadd.xlane.f32.xlu0 %v2959
      %v2961 = vpop.xlane.xlu0 %2960
      %v2962 = vadd.f32 %v2791, %v2793
      %v2963 = vadd.f32 %v2962, %v2795
      %v2964 = vadd.f32 %v2963, %v2797
      %2965 = vadd.xlane.f32.xlu0 %v2964
      %v2966 = vpop.xlane.xlu0 %2965
      %v2967 = vadd.f32 %v2799, %v2801
      %v2968 = vadd.f32 %v2967, %v2803
      %v2969 = vadd.f32 %v2968, %v2805
      %2970 = vadd.xlane.f32.xlu0 %v2969
      %v2971 = vpop.xlane.xlu0 %2970
      %v2972 = vadd.f32 %v2807, %v2809
      %v2973 = vadd.f32 %v2972, %v2811
      %v2974 = vadd.f32 %v2973, %v2813
      %2975 = vadd.xlane.f32.xlu0 %v2974
      %v2976 = vpop.xlane.xlu0 %2975
      %v2977 = vadd.f32 %v2815, %v2817
      %v2978 = vadd.f32 %v2977, %v2819
      %v2979 = vadd.f32 %v2978, %v2821
      %2980 = vadd.xlane.f32.xlu0 %v2979
      %v2981 = vpop.xlane.xlu0 %2980
      %v2982 = vrcp.pop %v2826
      %v2983 = vrcp.pop %v2831
      %v2984 = vrcp.pop %v2836
      %v2985 = vrcp.pop %v2841
      %v2986 = vrcp.pop %v2846
      %v2987 = vrcp.pop %v2851
      %v2988 = vrcp.pop %v2856
      %v2989 = vrcp.pop %v2861
      %v2990 = vrcp.pop %v2866
      %v2991 = vrcp.pop %v2871
      %v2992 = vrcp.pop %v2876
      %v2993 = vrcp.pop %v2881
      %v2994 = vrcp.pop %v2886
      %v2995 = vrcp.pop %v2891
      %v2996 = vrcp.pop %v2896
      %v2997 = vrcp.pop %v2901
      %v2998 = vrcp.pop %v2906
      %v2999 = vrcp.pop %v2911
      %v3000 = vrcp.pop %v2916
      %v3001 = vrcp.pop %v2921
      %v3002 = vrcp.pop %v2926
      %v3003 = vrcp.pop %v2931
      %v3004 = vrcp.pop %v2936
      %v3005 = vrcp.pop %v2941
      %v3006 = vrcp.pop %v2946
      %v3007 = vrcp.pop %v2951
      %v3008 = vrcp.pop %v2956
      %v3009 = vrcp.pop %v2961
      %v3010 = vrcp.pop %v2966
      %v3011 = vrcp.pop %v2971
      %v3012 = vrcp.pop %v2976
      %v3013 = vrcp.pop %v2981
      %v3014 = vmul.f32 %v2567, %v2982
      %v3015 = vmul.f32 %v2569, %v2982
      %v3016 = vmul.f32 %v2571, %v2982
      %v3017 = vmul.f32 %v2573, %v2982
      %v3018 = vmul.f32 %v2575, %v2983
      %v3019 = vmul.f32 %v2577, %v2983
      %v3020 = vmul.f32 %v2579, %v2983
      %v3021 = vmul.f32 %v2581, %v2983
      %v3022 = vmul.f32 %v2583, %v2984
      %v3023 = vmul.f32 %v2585, %v2984
      %v3024 = vmul.f32 %v2587, %v2984
      %v3025 = vmul.f32 %v2589, %v2984
      %v3026 = vmul.f32 %v2591, %v2985
      %v3027 = vmul.f32 %v2593, %v2985
      %v3028 = vmul.f32 %v2595, %v2985
      %v3029 = vmul.f32 %v2597, %v2985
      %v3030 = vmul.f32 %v2599, %v2986
      %v3031 = vmul.f32 %v2601, %v2986
      %v3032 = vmul.f32 %v2603, %v2986
      %v3033 = vmul.f32 %v2605, %v2986
      %v3034 = vmul.f32 %v2607, %v2987
      %v3035 = vmul.f32 %v2609, %v2987
      %v3036 = vmul.f32 %v2611, %v2987
      %v3037 = vmul.f32 %v2613, %v2987
      %v3038 = vmul.f32 %v2615, %v2988
      %v3039 = vmul.f32 %v2617, %v2988
      %v3040 = vmul.f32 %v2619, %v2988
      %v3041 = vmul.f32 %v2621, %v2988
      %v3042 = vmul.f32 %v2623, %v2989
      %v3043 = vmul.f32 %v2625, %v2989
      %v3044 = vmul.f32 %v2627, %v2989
      %v3045 = vmul.f32 %v2629, %v2989
      %v3046 = vmul.f32 %v2631, %v2990
      %v3047 = vmul.f32 %v2633, %v2990
      %v3048 = vmul.f32 %v2635, %v2990
      %v3049 = vmul.f32 %v2637, %v2990
      %v3050 = vmul.f32 %v2639, %v2991
      %v3051 = vmul.f32 %v2641, %v2991
      %v3052 = vmul.f32 %v2643, %v2991
      %v3053 = vmul.f32 %v2645, %v2991
      %v3054 = vmul.f32 %v2647, %v2992
      %v3055 = vmul.f32 %v2649, %v2992
      %v3056 = vmul.f32 %v2651, %v2992
      %v3057 = vmul.f32 %v2653, %v2992
      %v3058 = vmul.f32 %v2655, %v2993
      %v3059 = vmul.f32 %v2657, %v2993
      %v3060 = vmul.f32 %v2659, %v2993
      %v3061 = vmul.f32 %v2661, %v2993
      %v3062 = vmul.f32 %v2663, %v2994
      %v3063 = vmul.f32 %v2665, %v2994
      %v3064 = vmul.f32 %v2667, %v2994
      %v3065 = vmul.f32 %v2669, %v2994
      %v3066 = vmul.f32 %v2671, %v2995
      %v3067 = vmul.f32 %v2673, %v2995
      %v3068 = vmul.f32 %v2675, %v2995
      %v3069 = vmul.f32 %v2677, %v2995
      %v3070 = vmul.f32 %v2679, %v2996
      %v3071 = vmul.f32 %v2681, %v2996
      %v3072 = vmul.f32 %v2683, %v2996
      %v3073 = vmul.f32 %v2685, %v2996
      %v3074 = vmul.f32 %v2687, %v2997
      %v3075 = vmul.f32 %v2689, %v2997
      %v3076 = vmul.f32 %v2691, %v2997
      %v3077 = vmul.f32 %v2693, %v2997
      %v3078 = vmul.f32 %v2695, %v2998
      %v3079 = vmul.f32 %v2697, %v2998
      %v3080 = vmul.f32 %v2699, %v2998
      %v3081 = vmul.f32 %v2701, %v2998
      %v3082 = vmul.f32 %v2703, %v2999
      %v3083 = vmul.f32 %v2705, %v2999
      %v3084 = vmul.f32 %v2707, %v2999
      %v3085 = vmul.f32 %v2709, %v2999
      %v3086 = vmul.f32 %v2711, %v3000
      %v3087 = vmul.f32 %v2713, %v3000
      %v3088 = vmul.f32 %v2715, %v3000
      %v3089 = vmul.f32 %v2717, %v3000
      %v3090 = vmul.f32 %v2719, %v3001
      %v3091 = vmul.f32 %v2721, %v3001
      %v3092 = vmul.f32 %v2723, %v3001
      %v3093 = vmul.f32 %v2725, %v3001
      %v3094 = vmul.f32 %v2727, %v3002
      %v3095 = vmul.f32 %v2729, %v3002
      %v3096 = vmul.f32 %v2731, %v3002
      %v3097 = vmul.f32 %v2733, %v3002
      %v3098 = vmul.f32 %v2735, %v3003
      %v3099 = vmul.f32 %v2737, %v3003
      %v3100 = vmul.f32 %v2739, %v3003
      %v3101 = vmul.f32 %v2741, %v3003
      %v3102 = vmul.f32 %v2743, %v3004
      %v3103 = vmul.f32 %v2745, %v3004
      %v3104 = vmul.f32 %v2747, %v3004
      %v3105 = vmul.f32 %v2749, %v3004
      %v3106 = vmul.f32 %v2751, %v3005
      %v3107 = vmul.f32 %v2753, %v3005
      %v3108 = vmul.f32 %v2755, %v3005
      %v3109 = vmul.f32 %v2757, %v3005
      %v3110 = vmul.f32 %v2759, %v3006
      %v3111 = vmul.f32 %v2761, %v3006
      %v3112 = vmul.f32 %v2763, %v3006
      %v3113 = vmul.f32 %v2765, %v3006
      %v3114 = vmul.f32 %v2767, %v3007
      %v3115 = vmul.f32 %v2769, %v3007
      %v3116 = vmul.f32 %v2771, %v3007
      %v3117 = vmul.f32 %v2773, %v3007
      %v3118 = vmul.f32 %v2775, %v3008
      %v3119 = vmul.f32 %v2777, %v3008
      %v3120 = vmul.f32 %v2779, %v3008
      %v3121 = vmul.f32 %v2781, %v3008
      %v3122 = vmul.f32 %v2783, %v3009
      %v3123 = vmul.f32 %v2785, %v3009
      %v3124 = vmul.f32 %v2787, %v3009
      %v3125 = vmul.f32 %v2789, %v3009
      %v3126 = vmul.f32 %v2791, %v3010
      %v3127 = vmul.f32 %v2793, %v3010
      %v3128 = vmul.f32 %v2795, %v3010
      %v3129 = vmul.f32 %v2797, %v3010
      %v3130 = vmul.f32 %v2799, %v3011
      %v3131 = vmul.f32 %v2801, %v3011
      %v3132 = vmul.f32 %v2803, %v3011
      %v3133 = vmul.f32 %v2805, %v3011
      %v3134 = vmul.f32 %v2807, %v3012
      %v3135 = vmul.f32 %v2809, %v3012
      %v3136 = vmul.f32 %v2811, %v3012
      %v3137 = vmul.f32 %v2813, %v3012
      %v3138 = vmul.f32 %v2815, %v3013
      %v3139 = vmul.f32 %v2817, %v3013
      %v3140 = vmul.f32 %v2819, %v3013
      %v3141 = vmul.f32 %v2821, %v3013
      %v3142 = vpack.c.bf16 %v3018, %v3014
      %v3143 = vpack.c.bf16 %v3019, %v3015
      %v3144 = vpack.c.bf16 %v3020, %v3016
      %v3145 = vpack.c.bf16 %v3021, %v3017
      %v3146 = vpack.c.bf16 %v3026, %v3022
      %v3147 = vpack.c.bf16 %v3027, %v3023
      %v3148 = vpack.c.bf16 %v3028, %v3024
      %v3149 = vpack.c.bf16 %v3029, %v3025
      %v3150 = vpack.c.bf16 %v3034, %v3030
      %v3151 = vpack.c.bf16 %v3035, %v3031
      %v3152 = vpack.c.bf16 %v3036, %v3032
      %v3153 = vpack.c.bf16 %v3037, %v3033
      %v3154 = vpack.c.bf16 %v3042, %v3038
      %v3155 = vpack.c.bf16 %v3043, %v3039
      %v3156 = vpack.c.bf16 %v3044, %v3040
      %v3157 = vpack.c.bf16 %v3045, %v3041
      %v3158 = vpack.c.bf16 %v3050, %v3046
      %v3159 = vpack.c.bf16 %v3051, %v3047
      %v3160 = vpack.c.bf16 %v3052, %v3048
      %v3161 = vpack.c.bf16 %v3053, %v3049
      %v3162 = vpack.c.bf16 %v3058, %v3054
      %v3163 = vpack.c.bf16 %v3059, %v3055
      %v3164 = vpack.c.bf16 %v3060, %v3056
      %v3165 = vpack.c.bf16 %v3061, %v3057
      %v3166 = vpack.c.bf16 %v3066, %v3062
      %v3167 = vpack.c.bf16 %v3067, %v3063
      %v3168 = vpack.c.bf16 %v3068, %v3064
      %v3169 = vpack.c.bf16 %v3069, %v3065
      %v3170 = vpack.c.bf16 %v3074, %v3070
      %v3171 = vpack.c.bf16 %v3075, %v3071
      %v3172 = vpack.c.bf16 %v3076, %v3072
      %v3173 = vpack.c.bf16 %v3077, %v3073
      %v3174 = vpack.c.bf16 %v3082, %v3078
      %v3175 = vpack.c.bf16 %v3083, %v3079
      %v3176 = vpack.c.bf16 %v3084, %v3080
      %v3177 = vpack.c.bf16 %v3085, %v3081
      %v3178 = vpack.c.bf16 %v3090, %v3086
      %v3179 = vpack.c.bf16 %v3091, %v3087
      %v3180 = vpack.c.bf16 %v3092, %v3088
      %v3181 = vpack.c.bf16 %v3093, %v3089
      %v3182 = vpack.c.bf16 %v3098, %v3094
      %v3183 = vpack.c.bf16 %v3099, %v3095
      %v3184 = vpack.c.bf16 %v3100, %v3096
      %v3185 = vpack.c.bf16 %v3101, %v3097
      %v3186 = vpack.c.bf16 %v3106, %v3102
      %v3187 = vpack.c.bf16 %v3107, %v3103
      %v3188 = vpack.c.bf16 %v3108, %v3104
      %v3189 = vpack.c.bf16 %v3109, %v3105
      %v3190 = vpack.c.bf16 %v3114, %v3110
      %v3191 = vpack.c.bf16 %v3115, %v3111
      %v3192 = vpack.c.bf16 %v3116, %v3112
      %v3193 = vpack.c.bf16 %v3117, %v3113
      %v3194 = vpack.c.bf16 %v3122, %v3118
      %v3195 = vpack.c.bf16 %v3123, %v3119
      %v3196 = vpack.c.bf16 %v3124, %v3120
      %v3197 = vpack.c.bf16 %v3125, %v3121
      %v3198 = vpack.c.bf16 %v3130, %v3126
      %v3199 = vpack.c.bf16 %v3131, %v3127
      %v3200 = vpack.c.bf16 %v3132, %v3128
      %v3201 = vpack.c.bf16 %v3133, %v3129
      %v3202 = vpack.c.bf16 %v3138, %v3134
      %v3203 = vpack.c.bf16 %v3139, %v3135
      %v3204 = vpack.c.bf16 %v3140, %v3136
      %v3205 = vpack.c.bf16 %v3141, %v3137
      %v3206 = vld [vmem:[%s3] sm:$0xf]
      %v3207 = vld [vmem:[%s3 + $0x4] sm:$0xf]
      %v3208 = vld [vmem:[%s3 + $0x8] sm:$0xf]
      %v3209 = vld [vmem:[%s3 + $0xc] sm:$0xf]
      %v3210 = vld [vmem:[%s3 + $0x10] sm:$0xf]
      %v3211 = vld [vmem:[%s3 + $0x14] sm:$0xf]
      %v3212 = vld [vmem:[%s3 + $0x18] sm:$0xf]
      %v3213 = vld [vmem:[%s3 + $0x1c] sm:$0xf]
      %v3214 = vld [vmem:[%s3 + $0x20] sm:$0xf]
      %v3215 = vld [vmem:[%s3 + $0x24] sm:$0xf]
      %v3216 = vld [vmem:[%s3 + $0x28] sm:$0xf]
      %v3217 = vld [vmem:[%s3 + $0x2c] sm:$0xf]
      %v3218 = vld [vmem:[%s3 + $0x30] sm:$0xf]
      %v3219 = vld [vmem:[%s3 + $0x34] sm:$0xf]
      %v3220 = vld [vmem:[%s3 + $0x38] sm:$0xf]
      %v3221 = vld [vmem:[%s3 + $0x3c] sm:$0xf]
      %v3222 = vld [vmem:[%s3 + $0x40] sm:$0xf]
      %v3223 = vld [vmem:[%s3 + $0x44] sm:$0xf]
      %v3224 = vld [vmem:[%s3 + $0x48] sm:$0xf]
      %v3225 = vld [vmem:[%s3 + $0x4c] sm:$0xf]
      %v3226 = vld [vmem:[%s3 + $0x50] sm:$0xf]
      %v3227 = vld [vmem:[%s3 + $0x54] sm:$0xf]
      %v3228 = vld [vmem:[%s3 + $0x58] sm:$0xf]
      %v3229 = vld [vmem:[%s3 + $0x5c] sm:$0xf]
      %v3230 = vld [vmem:[%s3 + $0x60] sm:$0xf]
      %v3231 = vld [vmem:[%s3 + $0x64] sm:$0xf]
      %v3232 = vld [vmem:[%s3 + $0x68] sm:$0xf]
      %v3233 = vld [vmem:[%s3 + $0x6c] sm:$0xf]
      %v3234 = vld [vmem:[%s3 + $0x70] sm:$0xf]
      %v3235 = vld [vmem:[%s3 + $0x74] sm:$0xf]
      %v3236 = vld [vmem:[%s3 + $0x78] sm:$0xf]
      %v3237 = vld [vmem:[%s3 + $0x7c] sm:$0xf]
      %v3238 = vld [vmem:[%s3 + $0x80] sm:$0xf]
      %v3239 = vld [vmem:[%s3 + $0x84] sm:$0xf]
      %v3240 = vld [vmem:[%s3 + $0x88] sm:$0xf]
      %v3241 = vld [vmem:[%s3 + $0x8c] sm:$0xf]
      %v3242 = vld [vmem:[%s3 + $0x90] sm:$0xf]
      %v3243 = vld [vmem:[%s3 + $0x94] sm:$0xf]
      %v3244 = vld [vmem:[%s3 + $0x98] sm:$0xf]
      %v3245 = vld [vmem:[%s3 + $0x9c] sm:$0xf]
      %v3246 = vld [vmem:[%s3 + $0xa0] sm:$0xf]
      %v3247 = vld [vmem:[%s3 + $0xa4] sm:$0xf]
      %v3248 = vld [vmem:[%s3 + $0xa8] sm:$0xf]
      %v3249 = vld [vmem:[%s3 + $0xac] sm:$0xf]
      %v3250 = vld [vmem:[%s3 + $0xb0] sm:$0xf]
      %v3251 = vld [vmem:[%s3 + $0xb4] sm:$0xf]
      %v3252 = vld [vmem:[%s3 + $0xb8] sm:$0xf]
      %v3253 = vld [vmem:[%s3 + $0xbc] sm:$0xf]
      %v3254 = vld [vmem:[%s3 + $0xc0] sm:$0xf]
      %v3255 = vld [vmem:[%s3 + $0xc4] sm:$0xf]
      %v3256 = vld [vmem:[%s3 + $0xc8] sm:$0xf]
      %v3257 = vld [vmem:[%s3 + $0xcc] sm:$0xf]
      %v3258 = vld [vmem:[%s3 + $0xd0] sm:$0xf]
      %v3259 = vld [vmem:[%s3 + $0xd4] sm:$0xf]
      %v3260 = vld [vmem:[%s3 + $0xd8] sm:$0xf]
      %v3261 = vld [vmem:[%s3 + $0xdc] sm:$0xf]
      %v3262 = vld [vmem:[%s3 + $0xe0] sm:$0xf]
      %v3263 = vld [vmem:[%s3 + $0xe4] sm:$0xf]
      %v3264 = vld [vmem:[%s3 + $0xe8] sm:$0xf]
      %v3265 = vld [vmem:[%s3 + $0xec] sm:$0xf]
      %v3266 = vld [vmem:[%s3 + $0xf0] sm:$0xf]
      %v3267 = vld [vmem:[%s3 + $0xf4] sm:$0xf]
      %v3268 = vld [vmem:[%s3 + $0xf8] sm:$0xf]
      %v3269 = vld [vmem:[%s3 + $0xfc] sm:$0xf]
      %v3334 = vunpack.c.l.b16 %v3206
      %v3335 = vunpack.c.l.b16 %v3207
      %v3336 = vunpack.c.l.b16 %v3208
      %v3337 = vunpack.c.l.b16 %v3209
      %v3338 = vunpack.c.l.b16 %v3210
      %v3339 = vunpack.c.l.b16 %v3211
      %v3340 = vunpack.c.l.b16 %v3212
      %v3341 = vunpack.c.l.b16 %v3213
      %v3342 = vunpack.c.l.b16 %v3214
      %v3343 = vunpack.c.l.b16 %v3215
      %v3344 = vunpack.c.l.b16 %v3216
      %v3345 = vunpack.c.l.b16 %v3217
      %v3346 = vunpack.c.l.b16 %v3218
      %v3347 = vunpack.c.l.b16 %v3219
      %v3348 = vunpack.c.l.b16 %v3220
      %v3349 = vunpack.c.l.b16 %v3221
      %v3350 = vunpack.c.l.b16 %v3222
      %v3351 = vunpack.c.l.b16 %v3223
      %v3352 = vunpack.c.l.b16 %v3224
      %v3353 = vunpack.c.l.b16 %v3225
      %v3354 = vunpack.c.l.b16 %v3226
      %v3355 = vunpack.c.l.b16 %v3227
      %v3356 = vunpack.c.l.b16 %v3228
      %v3357 = vunpack.c.l.b16 %v3229
      %v3358 = vunpack.c.l.b16 %v3230
      %v3359 = vunpack.c.l.b16 %v3231
      %v3360 = vunpack.c.l.b16 %v3232
      %v3361 = vunpack.c.l.b16 %v3233
      %v3362 = vunpack.c.l.b16 %v3234
      %v3363 = vunpack.c.l.b16 %v3235
      %v3364 = vunpack.c.l.b16 %v3236
      %v3365 = vunpack.c.l.b16 %v3237
      %v3366 = vunpack.c.l.b16 %v3238
      %v3367 = vunpack.c.l.b16 %v3239
      %v3368 = vunpack.c.l.b16 %v3240
      %v3369 = vunpack.c.l.b16 %v3241
      %v3370 = vunpack.c.l.b16 %v3242
      %v3371 = vunpack.c.l.b16 %v3243
      %v3372 = vunpack.c.l.b16 %v3244
      %v3373 = vunpack.c.l.b16 %v3245
      %v3374 = vunpack.c.l.b16 %v3246
      %v3375 = vunpack.c.l.b16 %v3247
      %v3376 = vunpack.c.l.b16 %v3248
      %v3377 = vunpack.c.l.b16 %v3249
      %v3378 = vunpack.c.l.b16 %v3250
      %v3379 = vunpack.c.l.b16 %v3251
      %v3380 = vunpack.c.l.b16 %v3252
      %v3381 = vunpack.c.l.b16 %v3253
      %v3382 = vunpack.c.l.b16 %v3254
      %v3383 = vunpack.c.l.b16 %v3255
      %v3384 = vunpack.c.l.b16 %v3256
      %v3385 = vunpack.c.l.b16 %v3257
      %v3386 = vunpack.c.l.b16 %v3258
      %v3387 = vunpack.c.l.b16 %v3259
      %v3388 = vunpack.c.l.b16 %v3260
      %v3389 = vunpack.c.l.b16 %v3261
      %v3390 = vunpack.c.l.b16 %v3262
      %v3391 = vunpack.c.l.b16 %v3263
      %v3392 = vunpack.c.l.b16 %v3264
      %v3393 = vunpack.c.l.b16 %v3265
      %v3394 = vunpack.c.l.b16 %v3266
      %v3395 = vunpack.c.l.b16 %v3267
      %v3396 = vunpack.c.l.b16 %v3268
      %v3397 = vunpack.c.l.b16 %v3269
      %v3398 = vpack.c.b16 %v3335, %v3334
      %v3399 = vpack.c.b16 %v3337, %v3336
      %v3400 = vpack.c.b16 %v3339, %v3338
      %v3401 = vpack.c.b16 %v3341, %v3340
      %v3402 = vpack.c.b16 %v3343, %v3342
      %v3403 = vpack.c.b16 %v3345, %v3344
      %v3404 = vpack.c.b16 %v3347, %v3346
      %v3405 = vpack.c.b16 %v3349, %v3348
      %v3406 = vpack.c.b16 %v3351, %v3350
      %v3407 = vpack.c.b16 %v3353, %v3352
      %v3408 = vpack.c.b16 %v3355, %v3354
      %v3409 = vpack.c.b16 %v3357, %v3356
      %v3410 = vpack.c.b16 %v3359, %v3358
      %v3411 = vpack.c.b16 %v3361, %v3360
      %v3412 = vpack.c.b16 %v3363, %v3362
      %v3413 = vpack.c.b16 %v3365, %v3364
      %v3414 = vpack.c.b16 %v3367, %v3366
      %v3415 = vpack.c.b16 %v3369, %v3368
      %v3416 = vpack.c.b16 %v3371, %v3370
      %v3417 = vpack.c.b16 %v3373, %v3372
      %v3418 = vpack.c.b16 %v3375, %v3374
      %v3419 = vpack.c.b16 %v3377, %v3376
      %v3420 = vpack.c.b16 %v3379, %v3378
      %v3421 = vpack.c.b16 %v3381, %v3380
      %v3422 = vpack.c.b16 %v3383, %v3382
      %v3423 = vpack.c.b16 %v3385, %v3384
      %v3424 = vpack.c.b16 %v3387, %v3386
      %v3425 = vpack.c.b16 %v3389, %v3388
      %v3426 = vpack.c.b16 %v3391, %v3390
      %v3427 = vpack.c.b16 %v3393, %v3392
      %v3428 = vpack.c.b16 %v3395, %v3394
      %v3429 = vpack.c.b16 %v3397, %v3396
      %3462 = vmatpush.bf16.msra.mxu0 %v3405
      %3463 = vmatpush.bf16.msra.mxu0 %v3404
      %3464 = vmatpush.bf16.msra.mxu0 %v3403
      %3465 = vmatpush.bf16.msra.mxu0 %v3402
      %3466 = vmatpush.bf16.msra.mxu0 %v3401
      %3467 = vmatpush.bf16.msra.mxu0 %v3400
      %3468 = vmatpush.bf16.msra.mxu0 %v3399
      %3469 = vmatpush.bf16.msra.mxu0 %v3398
      %3470 = vmatmul.bf16.gmra.mxu0 %v3142
      %v3471 = vpop.f32.mrf.mxu0
      %v3472 = vadd.f32 0.0, %v3471
      %v3473 = vpop.f32.mrf.mxu0
      %v3474 = vadd.f32 0.0, %v3473
      %3475 = vmatmul.bf16.gmra.mxu0 %v3146
      %v3476 = vpop.f32.mrf.mxu0
      %v3477 = vadd.f32 0.0, %v3476
      %v3478 = vpop.f32.mrf.mxu0
      %v3479 = vadd.f32 0.0, %v3478
      %3480 = vmatmul.bf16.gmra.mxu0 %v3150
      %v3481 = vpop.f32.mrf.mxu0
      %v3482 = vadd.f32 0.0, %v3481
      %v3483 = vpop.f32.mrf.mxu0
      %v3484 = vadd.f32 0.0, %v3483
      %3485 = vmatmul.bf16.gmra.mxu0 %v3154
      %v3486 = vpop.f32.mrf.mxu0
      %v3487 = vadd.f32 0.0, %v3486
      %v3488 = vpop.f32.mrf.mxu0
      %v3489 = vadd.f32 0.0, %v3488
      %3490 = vmatmul.bf16.gmra.mxu0 %v3158
      %v3491 = vpop.f32.mrf.mxu0
      %v3492 = vadd.f32 0.0, %v3491
      %v3493 = vpop.f32.mrf.mxu0
      %v3494 = vadd.f32 0.0, %v3493
      %3495 = vmatmul.bf16.gmra.mxu0 %v3162
      %v3496 = vpop.f32.mrf.mxu0
      %v3497 = vadd.f32 0.0, %v3496
      %v3498 = vpop.f32.mrf.mxu0
      %v3499 = vadd.f32 0.0, %v3498
      %3500 = vmatmul.bf16.gmra.mxu0 %v3166
      %v3501 = vpop.f32.mrf.mxu0
      %v3502 = vadd.f32 0.0, %v3501
      %v3503 = vpop.f32.mrf.mxu0
      %v3504 = vadd.f32 0.0, %v3503
      %3505 = vmatmul.bf16.gmra.mxu0 %v3170
      %v3506 = vpop.f32.mrf.mxu0
      %v3507 = vadd.f32 0.0, %v3506
      %v3508 = vpop.f32.mrf.mxu0
      %v3509 = vadd.f32 0.0, %v3508
      %3510 = vmatmul.bf16.gmra.mxu0 %v3174
      %v3511 = vpop.f32.mrf.mxu0
      %v3512 = vadd.f32 0.0, %v3511
      %v3513 = vpop.f32.mrf.mxu0
      %v3514 = vadd.f32 0.0, %v3513
      %3515 = vmatmul.bf16.gmra.mxu0 %v3178
      %v3516 = vpop.f32.mrf.mxu0
      %v3517 = vadd.f32 0.0, %v3516
      %v3518 = vpop.f32.mrf.mxu0
      %v3519 = vadd.f32 0.0, %v3518
      %3520 = vmatmul.bf16.gmra.mxu0 %v3182
      %v3521 = vpop.f32.mrf.mxu0
      %v3522 = vadd.f32 0.0, %v3521
      %v3523 = vpop.f32.mrf.mxu0
      %v3524 = vadd.f32 0.0, %v3523
      %3525 = vmatmul.bf16.gmra.mxu0 %v3186
      %v3526 = vpop.f32.mrf.mxu0
      %v3527 = vadd.f32 0.0, %v3526
      %v3528 = vpop.f32.mrf.mxu0
      %v3529 = vadd.f32 0.0, %v3528
      %3530 = vmatmul.bf16.gmra.mxu0 %v3190
      %v3531 = vpop.f32.mrf.mxu0
      %v3532 = vadd.f32 0.0, %v3531
      %v3533 = vpop.f32.mrf.mxu0
      %v3534 = vadd.f32 0.0, %v3533
      %3535 = vmatmul.bf16.gmra.mxu0 %v3194
      %v3536 = vpop.f32.mrf.mxu0
      %v3537 = vadd.f32 0.0, %v3536
      %v3538 = vpop.f32.mrf.mxu0
      %v3539 = vadd.f32 0.0, %v3538
      %3540 = vmatmul.bf16.gmra.mxu0 %v3198
      %v3541 = vpop.f32.mrf.mxu0
      %v3542 = vadd.f32 0.0, %v3541
      %v3543 = vpop.f32.mrf.mxu0
      %v3544 = vadd.f32 0.0, %v3543
      %3545 = vmatmul.bf16.gmra.mxu0 %v3202
      %v3546 = vpop.f32.mrf.mxu0
      %v3547 = vadd.f32 0.0, %v3546
      %v3548 = vpop.f32.mrf.mxu0
      %v3549 = vadd.f32 0.0, %v3548
      %3550 = vdwg.mxu0
      %3551 = vmatpush.bf16.msra.mxu0 %v3413
      %3552 = vmatpush.bf16.msra.mxu0 %v3412
      %3553 = vmatpush.bf16.msra.mxu0 %v3411
      %3554 = vmatpush.bf16.msra.mxu0 %v3410
      %3555 = vmatpush.bf16.msra.mxu0 %v3409
      %3556 = vmatpush.bf16.msra.mxu0 %v3408
      %3557 = vmatpush.bf16.msra.mxu0 %v3407
      %3558 = vmatpush.bf16.msra.mxu0 %v3406
      %3559 = vmatmul.bf16.gmra.mxu0 %v3143
      %v3560 = vpop.f32.mrf.mxu0
      %v3561 = vadd.f32 %v3472, %v3560
      %v3562 = vpop.f32.mrf.mxu0
      %v3563 = vadd.f32 %v3474, %v3562
      %3564 = vmatmul.bf16.gmra.mxu0 %v3147
      %v3565 = vpop.f32.mrf.mxu0
      %v3566 = vadd.f32 %v3477, %v3565
      %v3567 = vpop.f32.mrf.mxu0
      %v3568 = vadd.f32 %v3479, %v3567
      %3569 = vmatmul.bf16.gmra.mxu0 %v3151
      %v3570 = vpop.f32.mrf.mxu0
      %v3571 = vadd.f32 %v3482, %v3570
      %v3572 = vpop.f32.mrf.mxu0
      %v3573 = vadd.f32 %v3484, %v3572
      %3574 = vmatmul.bf16.gmra.mxu0 %v3155
      %v3575 = vpop.f32.mrf.mxu0
      %v3576 = vadd.f32 %v3487, %v3575
      %v3577 = vpop.f32.mrf.mxu0
      %v3578 = vadd.f32 %v3489, %v3577
      %3579 = vmatmul.bf16.gmra.mxu0 %v3159
      %v3580 = vpop.f32.mrf.mxu0
      %v3581 = vadd.f32 %v3492, %v3580
      %v3582 = vpop.f32.mrf.mxu0
      %v3583 = vadd.f32 %v3494, %v3582
      %3584 = vmatmul.bf16.gmra.mxu0 %v3163
      %v3585 = vpop.f32.mrf.mxu0
      %v3586 = vadd.f32 %v3497, %v3585
      %v3587 = vpop.f32.mrf.mxu0
      %v3588 = vadd.f32 %v3499, %v3587
      %3589 = vmatmul.bf16.gmra.mxu0 %v3167
      %v3590 = vpop.f32.mrf.mxu0
      %v3591 = vadd.f32 %v3502, %v3590
      %v3592 = vpop.f32.mrf.mxu0
      %v3593 = vadd.f32 %v3504, %v3592
      %3594 = vmatmul.bf16.gmra.mxu0 %v3171
      %v3595 = vpop.f32.mrf.mxu0
      %v3596 = vadd.f32 %v3507, %v3595
      %v3597 = vpop.f32.mrf.mxu0
      %v3598 = vadd.f32 %v3509, %v3597
      %3599 = vmatmul.bf16.gmra.mxu0 %v3175
      %v3600 = vpop.f32.mrf.mxu0
      %v3601 = vadd.f32 %v3512, %v3600
      %v3602 = vpop.f32.mrf.mxu0
      %v3603 = vadd.f32 %v3514, %v3602
      %3604 = vmatmul.bf16.gmra.mxu0 %v3179
      %v3605 = vpop.f32.mrf.mxu0
      %v3606 = vadd.f32 %v3517, %v3605
      %v3607 = vpop.f32.mrf.mxu0
      %v3608 = vadd.f32 %v3519, %v3607
      %3609 = vmatmul.bf16.gmra.mxu0 %v3183
      %v3610 = vpop.f32.mrf.mxu0
      %v3611 = vadd.f32 %v3522, %v3610
      %v3612 = vpop.f32.mrf.mxu0
      %v3613 = vadd.f32 %v3524, %v3612
      %3614 = vmatmul.bf16.gmra.mxu0 %v3187
      %v3615 = vpop.f32.mrf.mxu0
      %v3616 = vadd.f32 %v3527, %v3615
      %v3617 = vpop.f32.mrf.mxu0
      %v3618 = vadd.f32 %v3529, %v3617
      %3619 = vmatmul.bf16.gmra.mxu0 %v3191
      %v3620 = vpop.f32.mrf.mxu0
      %v3621 = vadd.f32 %v3532, %v3620
      %v3622 = vpop.f32.mrf.mxu0
      %v3623 = vadd.f32 %v3534, %v3622
      %3624 = vmatmul.bf16.gmra.mxu0 %v3195
      %v3625 = vpop.f32.mrf.mxu0
      %v3626 = vadd.f32 %v3537, %v3625
      %v3627 = vpop.f32.mrf.mxu0
      %v3628 = vadd.f32 %v3539, %v3627
      %3629 = vmatmul.bf16.gmra.mxu0 %v3199
      %v3630 = vpop.f32.mrf.mxu0
      %v3631 = vadd.f32 %v3542, %v3630
      %v3632 = vpop.f32.mrf.mxu0
      %v3633 = vadd.f32 %v3544, %v3632
      %3634 = vmatmul.bf16.gmra.mxu0 %v3203
      %v3635 = vpop.f32.mrf.mxu0
      %v3636 = vadd.f32 %v3547, %v3635
      %v3637 = vpop.f32.mrf.mxu0
      %v3638 = vadd.f32 %v3549, %v3637
      %3639 = vdwg.mxu0
      %3640 = vmatpush.bf16.msra.mxu0 %v3421
      %3641 = vmatpush.bf16.msra.mxu0 %v3420
      %3642 = vmatpush.bf16.msra.mxu0 %v3419
      %3643 = vmatpush.bf16.msra.mxu0 %v3418
      %3644 = vmatpush.bf16.msra.mxu0 %v3417
      %3645 = vmatpush.bf16.msra.mxu0 %v3416
      %3646 = vmatpush.bf16.msra.mxu0 %v3415
      %3647 = vmatpush.bf16.msra.mxu0 %v3414
      %3648 = vmatmul.bf16.gmra.mxu0 %v3144
      %v3649 = vpop.f32.mrf.mxu0
      %v3650 = vadd.f32 %v3561, %v3649
      %v3651 = vpop.f32.mrf.mxu0
      %v3652 = vadd.f32 %v3563, %v3651
      %3653 = vmatmul.bf16.gmra.mxu0 %v3148
      %v3654 = vpop.f32.mrf.mxu0
      %v3655 = vadd.f32 %v3566, %v3654
      %v3656 = vpop.f32.mrf.mxu0
      %v3657 = vadd.f32 %v3568, %v3656
      %3658 = vmatmul.bf16.gmra.mxu0 %v3152
      %v3659 = vpop.f32.mrf.mxu0
      %v3660 = vadd.f32 %v3571, %v3659
      %v3661 = vpop.f32.mrf.mxu0
      %v3662 = vadd.f32 %v3573, %v3661
      %3663 = vmatmul.bf16.gmra.mxu0 %v3156
      %v3664 = vpop.f32.mrf.mxu0
      %v3665 = vadd.f32 %v3576, %v3664
      %v3666 = vpop.f32.mrf.mxu0
      %v3667 = vadd.f32 %v3578, %v3666
      %3668 = vmatmul.bf16.gmra.mxu0 %v3160
      %v3669 = vpop.f32.mrf.mxu0
      %v3670 = vadd.f32 %v3581, %v3669
      %v3671 = vpop.f32.mrf.mxu0
      %v3672 = vadd.f32 %v3583, %v3671
      %3673 = vmatmul.bf16.gmra.mxu0 %v3164
      %v3674 = vpop.f32.mrf.mxu0
      %v3675 = vadd.f32 %v3586, %v3674
      %v3676 = vpop.f32.mrf.mxu0
      %v3677 = vadd.f32 %v3588, %v3676
      %3678 = vmatmul.bf16.gmra.mxu0 %v3168
      %v3679 = vpop.f32.mrf.mxu0
      %v3680 = vadd.f32 %v3591, %v3679
      %v3681 = vpop.f32.mrf.mxu0
      %v3682 = vadd.f32 %v3593, %v3681
      %3683 = vmatmul.bf16.gmra.mxu0 %v3172
      %v3684 = vpop.f32.mrf.mxu0
      %v3685 = vadd.f32 %v3596, %v3684
      %v3686 = vpop.f32.mrf.mxu0
      %v3687 = vadd.f32 %v3598, %v3686
      %3688 = vmatmul.bf16.gmra.mxu0 %v3176
      %v3689 = vpop.f32.mrf.mxu0
      %v3690 = vadd.f32 %v3601, %v3689
      %v3691 = vpop.f32.mrf.mxu0
      %v3692 = vadd.f32 %v3603, %v3691
      %3693 = vmatmul.bf16.gmra.mxu0 %v3180
      %v3694 = vpop.f32.mrf.mxu0
      %v3695 = vadd.f32 %v3606, %v3694
      %v3696 = vpop.f32.mrf.mxu0
      %v3697 = vadd.f32 %v3608, %v3696
      %3698 = vmatmul.bf16.gmra.mxu0 %v3184
      %v3699 = vpop.f32.mrf.mxu0
      %v3700 = vadd.f32 %v3611, %v3699
      %v3701 = vpop.f32.mrf.mxu0
      %v3702 = vadd.f32 %v3613, %v3701
      %3703 = vmatmul.bf16.gmra.mxu0 %v3188
      %v3704 = vpop.f32.mrf.mxu0
      %v3705 = vadd.f32 %v3616, %v3704
      %v3706 = vpop.f32.mrf.mxu0
      %v3707 = vadd.f32 %v3618, %v3706
      %3708 = vmatmul.bf16.gmra.mxu0 %v3192
      %v3709 = vpop.f32.mrf.mxu0
      %v3710 = vadd.f32 %v3621, %v3709
      %v3711 = vpop.f32.mrf.mxu0
      %v3712 = vadd.f32 %v3623, %v3711
      %3713 = vmatmul.bf16.gmra.mxu0 %v3196
      %v3714 = vpop.f32.mrf.mxu0
      %v3715 = vadd.f32 %v3626, %v3714
      %v3716 = vpop.f32.mrf.mxu0
      %v3717 = vadd.f32 %v3628, %v3716
      %3718 = vmatmul.bf16.gmra.mxu0 %v3200
      %v3719 = vpop.f32.mrf.mxu0
      %v3720 = vadd.f32 %v3631, %v3719
      %v3721 = vpop.f32.mrf.mxu0
      %v3722 = vadd.f32 %v3633, %v3721
      %3723 = vmatmul.bf16.gmra.mxu0 %v3204
      %v3724 = vpop.f32.mrf.mxu0
      %v3725 = vadd.f32 %v3636, %v3724
      %v3726 = vpop.f32.mrf.mxu0
      %v3727 = vadd.f32 %v3638, %v3726
      %3728 = vdwg.mxu0
      %3729 = vmatpush.bf16.msra.mxu0 %v3429
      %3730 = vmatpush.bf16.msra.mxu0 %v3428
      %3731 = vmatpush.bf16.msra.mxu0 %v3427
      %3732 = vmatpush.bf16.msra.mxu0 %v3426
      %3733 = vmatpush.bf16.msra.mxu0 %v3425
      %3734 = vmatpush.bf16.msra.mxu0 %v3424
      %3735 = vmatpush.bf16.msra.mxu0 %v3423
      %3736 = vmatpush.bf16.msra.mxu0 %v3422
      %3737 = vmatmul.bf16.gmra.mxu0 %v3145
      %v3738 = vpop.f32.mrf.mxu0
      %v3739 = vadd.f32 %v3650, %v3738
      %v3740 = vpop.f32.mrf.mxu0
      %v3741 = vadd.f32 %v3652, %v3740
      %3742 = vmatmul.bf16.gmra.mxu0 %v3149
      %v3743 = vpop.f32.mrf.mxu0
      %v3744 = vadd.f32 %v3655, %v3743
      %v3745 = vpop.f32.mrf.mxu0
      %v3746 = vadd.f32 %v3657, %v3745
      %3747 = vmatmul.bf16.gmra.mxu0 %v3153
      %v3748 = vpop.f32.mrf.mxu0
      %v3749 = vadd.f32 %v3660, %v3748
      %v3750 = vpop.f32.mrf.mxu0
      %v3751 = vadd.f32 %v3662, %v3750
      %3752 = vmatmul.bf16.gmra.mxu0 %v3157
      %v3753 = vpop.f32.mrf.mxu0
      %v3754 = vadd.f32 %v3665, %v3753
      %v3755 = vpop.f32.mrf.mxu0
      %v3756 = vadd.f32 %v3667, %v3755
      %3757 = vmatmul.bf16.gmra.mxu0 %v3161
      %v3758 = vpop.f32.mrf.mxu0
      %v3759 = vadd.f32 %v3670, %v3758
      %v3760 = vpop.f32.mrf.mxu0
      %v3761 = vadd.f32 %v3672, %v3760
      %3762 = vmatmul.bf16.gmra.mxu0 %v3165
      %v3763 = vpop.f32.mrf.mxu0
      %v3764 = vadd.f32 %v3675, %v3763
      %v3765 = vpop.f32.mrf.mxu0
      %v3766 = vadd.f32 %v3677, %v3765
      %3767 = vmatmul.bf16.gmra.mxu0 %v3169
      %v3768 = vpop.f32.mrf.mxu0
      %v3769 = vadd.f32 %v3680, %v3768
      %v3770 = vpop.f32.mrf.mxu0
      %v3771 = vadd.f32 %v3682, %v3770
      %3772 = vmatmul.bf16.gmra.mxu0 %v3173
      %v3773 = vpop.f32.mrf.mxu0
      %v3774 = vadd.f32 %v3685, %v3773
      %v3775 = vpop.f32.mrf.mxu0
      %v3776 = vadd.f32 %v3687, %v3775
      %3777 = vmatmul.bf16.gmra.mxu0 %v3177
      %v3778 = vpop.f32.mrf.mxu0
      %v3779 = vadd.f32 %v3690, %v3778
      %v3780 = vpop.f32.mrf.mxu0
      %v3781 = vadd.f32 %v3692, %v3780
      %3782 = vmatmul.bf16.gmra.mxu0 %v3181
      %v3783 = vpop.f32.mrf.mxu0
      %v3784 = vadd.f32 %v3695, %v3783
      %v3785 = vpop.f32.mrf.mxu0
      %v3786 = vadd.f32 %v3697, %v3785
      %3787 = vmatmul.bf16.gmra.mxu0 %v3185
      %v3788 = vpop.f32.mrf.mxu0
      %v3789 = vadd.f32 %v3700, %v3788
      %v3790 = vpop.f32.mrf.mxu0
      %v3791 = vadd.f32 %v3702, %v3790
      %3792 = vmatmul.bf16.gmra.mxu0 %v3189
      %v3793 = vpop.f32.mrf.mxu0
      %v3794 = vadd.f32 %v3705, %v3793
      %v3795 = vpop.f32.mrf.mxu0
      %v3796 = vadd.f32 %v3707, %v3795
      %3797 = vmatmul.bf16.gmra.mxu0 %v3193
      %v3798 = vpop.f32.mrf.mxu0
      %v3799 = vadd.f32 %v3710, %v3798
      %v3800 = vpop.f32.mrf.mxu0
      %v3801 = vadd.f32 %v3712, %v3800
      %3802 = vmatmul.bf16.gmra.mxu0 %v3197
      %v3803 = vpop.f32.mrf.mxu0
      %v3804 = vadd.f32 %v3715, %v3803
      %v3805 = vpop.f32.mrf.mxu0
      %v3806 = vadd.f32 %v3717, %v3805
      %3807 = vmatmul.bf16.gmra.mxu0 %v3201
      %v3808 = vpop.f32.mrf.mxu0
      %v3809 = vadd.f32 %v3720, %v3808
      %v3810 = vpop.f32.mrf.mxu0
      %v3811 = vadd.f32 %v3722, %v3810
      %3812 = vmatmul.bf16.gmra.mxu0 %v3205
      %v3813 = vpop.f32.mrf.mxu0
      %v3814 = vadd.f32 %v3725, %v3813
      %v3815 = vpop.f32.mrf.mxu0
      %v3816 = vadd.f32 %v3727, %v3815
      %3817 = vdwg.mxu0
      %v3818 = vunpack.c.l.bf16 %v358
      %v3819 = vunpack.c.l.bf16 %v359
      %v3820 = vunpack.c.l.bf16 %v360
      %v3821 = vunpack.c.l.bf16 %v361
      %v3822 = vunpack.c.l.bf16 %v362
      %v3823 = vunpack.c.l.bf16 %v363
      %v3824 = vunpack.c.l.bf16 %v364
      %v3825 = vunpack.c.l.bf16 %v365
      %v3826 = vunpack.c.l.bf16 %v366
      %v3827 = vunpack.c.l.bf16 %v367
      %v3828 = vunpack.c.l.bf16 %v368
      %v3829 = vunpack.c.l.bf16 %v369
      %v3830 = vunpack.c.l.bf16 %v370
      %v3831 = vunpack.c.l.bf16 %v371
      %v3832 = vunpack.c.l.bf16 %v372
      %v3833 = vunpack.c.l.bf16 %v373
      %v3834 = vunpack.c.l.bf16 %v374
      %v3835 = vunpack.c.l.bf16 %v375
      %v3836 = vunpack.c.l.bf16 %v376
      %v3837 = vunpack.c.l.bf16 %v377
      %v3838 = vunpack.c.l.bf16 %v378
      %v3839 = vunpack.c.l.bf16 %v379
      %v3840 = vunpack.c.l.bf16 %v380
      %v3841 = vunpack.c.l.bf16 %v381
      %v3842 = vunpack.c.l.bf16 %v382
      %v3843 = vunpack.c.l.bf16 %v383
      %v3844 = vunpack.c.l.bf16 %v384
      %v3845 = vunpack.c.l.bf16 %v385
      %v3846 = vunpack.c.l.bf16 %v386
      %v3847 = vunpack.c.l.bf16 %v387
      %v3848 = vunpack.c.l.bf16 %v388
      %v3849 = vunpack.c.l.bf16 %v389
      %v3850 = vpack.c.bf16 %v3741, %v3739
      %v3851 = vpack.c.bf16 %v3746, %v3744
      %v3852 = vpack.c.bf16 %v3751, %v3749
      %v3853 = vpack.c.bf16 %v3756, %v3754
      %v3854 = vpack.c.bf16 %v3761, %v3759
      %v3855 = vpack.c.bf16 %v3766, %v3764
      %v3856 = vpack.c.bf16 %v3771, %v3769
      %v3857 = vpack.c.bf16 %v3776, %v3774
      %v3858 = vpack.c.bf16 %v3781, %v3779
      %v3859 = vpack.c.bf16 %v3786, %v3784
      %v3860 = vpack.c.bf16 %v3791, %v3789
      %v3861 = vpack.c.bf16 %v3796, %v3794
      %v3862 = vpack.c.bf16 %v3801, %v3799
      %v3863 = vpack.c.bf16 %v3806, %v3804
      %v3864 = vpack.c.bf16 %v3811, %v3809
      %v3865 = vpack.c.bf16 %v3816, %v3814
      %v3866 = vld [vmem:[%s6] sm:$0xf]
      %v3867 = vld [vmem:[%s6 + $0x4] sm:$0xf]
      %v3868 = vld [vmem:[%s6 + $0x8] sm:$0xf]
      %v3869 = vld [vmem:[%s6 + $0xc] sm:$0xf]
      %v3870 = vld [vmem:[%s6 + $0x10] sm:$0xf]
      %v3871 = vld [vmem:[%s6 + $0x14] sm:$0xf]
      %v3872 = vld [vmem:[%s6 + $0x18] sm:$0xf]
      %v3873 = vld [vmem:[%s6 + $0x1c] sm:$0xf]
      %v3874 = vld [vmem:[%s6 + $0x20] sm:$0xf]
      %v3875 = vld [vmem:[%s6 + $0x24] sm:$0xf]
      %v3876 = vld [vmem:[%s6 + $0x28] sm:$0xf]
      %v3877 = vld [vmem:[%s6 + $0x2c] sm:$0xf]
      %v3878 = vld [vmem:[%s6 + $0x30] sm:$0xf]
      %v3879 = vld [vmem:[%s6 + $0x34] sm:$0xf]
      %v3880 = vld [vmem:[%s6 + $0x38] sm:$0xf]
      %v3881 = vld [vmem:[%s6 + $0x3c] sm:$0xf]
      %v3898 = vunpack.c.l.b16 %v3866
      %v3899 = vunpack.c.l.b16 %v3867
      %v3900 = vunpack.c.l.b16 %v3868
      %v3901 = vunpack.c.l.b16 %v3869
      %v3902 = vunpack.c.l.b16 %v3870
      %v3903 = vunpack.c.l.b16 %v3871
      %v3904 = vunpack.c.l.b16 %v3872
      %v3905 = vunpack.c.l.b16 %v3873
      %v3906 = vunpack.c.l.b16 %v3874
      %v3907 = vunpack.c.l.b16 %v3875
      %v3908 = vunpack.c.l.b16 %v3876
      %v3909 = vunpack.c.l.b16 %v3877
      %v3910 = vunpack.c.l.b16 %v3878
      %v3911 = vunpack.c.l.b16 %v3879
      %v3912 = vunpack.c.l.b16 %v3880
      %v3913 = vunpack.c.l.b16 %v3881
      %v3914 = vpack.c.b16 %v3899, %v3898
      %v3915 = vpack.c.b16 %v3901, %v3900
      %v3916 = vpack.c.b16 %v3903, %v3902
      %v3917 = vpack.c.b16 %v3905, %v3904
      %v3918 = vpack.c.b16 %v3907, %v3906
      %v3919 = vpack.c.b16 %v3909, %v3908
      %v3920 = vpack.c.b16 %v3911, %v3910
      %v3921 = vpack.c.b16 %v3913, %v3912
      %3930 = vmatpush.bf16.msra.mxu0 %v3921
      %3931 = vmatpush.bf16.msra.mxu0 %v3920
      %3932 = vmatpush.bf16.msra.mxu0 %v3919
      %3933 = vmatpush.bf16.msra.mxu0 %v3918
      %3934 = vmatpush.bf16.msra.mxu0 %v3917
      %3935 = vmatpush.bf16.msra.mxu0 %v3916
      %3936 = vmatpush.bf16.msra.mxu0 %v3915
      %3937 = vmatpush.bf16.msra.mxu0 %v3914
      %3938 = vmatmul.bf16.gmra.mxu0 %v3850
      %v3939 = vpop.f32.mrf.mxu0
      %v3940 = vadd.f32 0.0, %v3939
      %v3941 = vpop.f32.mrf.mxu0
      %v3942 = vadd.f32 0.0, %v3941
      %3943 = vmatmul.bf16.gmra.mxu0 %v3851
      %v3944 = vpop.f32.mrf.mxu0
      %v3945 = vadd.f32 0.0, %v3944
      %v3946 = vpop.f32.mrf.mxu0
      %v3947 = vadd.f32 0.0, %v3946
      %3948 = vmatmul.bf16.gmra.mxu0 %v3852
      %v3949 = vpop.f32.mrf.mxu0
      %v3950 = vadd.f32 0.0, %v3949
      %v3951 = vpop.f32.mrf.mxu0
      %v3952 = vadd.f32 0.0, %v3951
      %3953 = vmatmul.bf16.gmra.mxu0 %v3853
      %v3954 = vpop.f32.mrf.mxu0
      %v3955 = vadd.f32 0.0, %v3954
      %v3956 = vpop.f32.mrf.mxu0
      %v3957 = vadd.f32 0.0, %v3956
      %3958 = vmatmul.bf16.gmra.mxu0 %v3854
      %v3959 = vpop.f32.mrf.mxu0
      %v3960 = vadd.f32 0.0, %v3959
      %v3961 = vpop.f32.mrf.mxu0
      %v3962 = vadd.f32 0.0, %v3961
      %3963 = vmatmul.bf16.gmra.mxu0 %v3855
      %v3964 = vpop.f32.mrf.mxu0
      %v3965 = vadd.f32 0.0, %v3964
      %v3966 = vpop.f32.mrf.mxu0
      %v3967 = vadd.f32 0.0, %v3966
      %3968 = vmatmul.bf16.gmra.mxu0 %v3856
      %v3969 = vpop.f32.mrf.mxu0
      %v3970 = vadd.f32 0.0, %v3969
      %v3971 = vpop.f32.mrf.mxu0
      %v3972 = vadd.f32 0.0, %v3971
      %3973 = vmatmul.bf16.gmra.mxu0 %v3857
      %v3974 = vpop.f32.mrf.mxu0
      %v3975 = vadd.f32 0.0, %v3974
      %v3976 = vpop.f32.mrf.mxu0
      %v3977 = vadd.f32 0.0, %v3976
      %3978 = vmatmul.bf16.gmra.mxu0 %v3858
      %v3979 = vpop.f32.mrf.mxu0
      %v3980 = vadd.f32 0.0, %v3979
      %v3981 = vpop.f32.mrf.mxu0
      %v3982 = vadd.f32 0.0, %v3981
      %3983 = vmatmul.bf16.gmra.mxu0 %v3859
      %v3984 = vpop.f32.mrf.mxu0
      %v3985 = vadd.f32 0.0, %v3984
      %v3986 = vpop.f32.mrf.mxu0
      %v3987 = vadd.f32 0.0, %v3986
      %3988 = vmatmul.bf16.gmra.mxu0 %v3860
      %v3989 = vpop.f32.mrf.mxu0
      %v3990 = vadd.f32 0.0, %v3989
      %v3991 = vpop.f32.mrf.mxu0
      %v3992 = vadd.f32 0.0, %v3991
      %3993 = vmatmul.bf16.gmra.mxu0 %v3861
      %v3994 = vpop.f32.mrf.mxu0
      %v3995 = vadd.f32 0.0, %v3994
      %v3996 = vpop.f32.mrf.mxu0
      %v3997 = vadd.f32 0.0, %v3996
      %3998 = vmatmul.bf16.gmra.mxu0 %v3862
      %v3999 = vpop.f32.mrf.mxu0
      %v4000 = vadd.f32 0.0, %v3999
      %v4001 = vpop.f32.mrf.mxu0
      %v4002 = vadd.f32 0.0, %v4001
      %4003 = vmatmul.bf16.gmra.mxu0 %v3863
      %v4004 = vpop.f32.mrf.mxu0
      %v4005 = vadd.f32 0.0, %v4004
      %v4006 = vpop.f32.mrf.mxu0
      %v4007 = vadd.f32 0.0, %v4006
      %4008 = vmatmul.bf16.gmra.mxu0 %v3864
      %v4009 = vpop.f32.mrf.mxu0
      %v4010 = vadd.f32 0.0, %v4009
      %v4011 = vpop.f32.mrf.mxu0
      %v4012 = vadd.f32 0.0, %v4011
      %4013 = vmatmul.bf16.gmra.mxu0 %v3865
      %v4014 = vpop.f32.mrf.mxu0
      %v4015 = vadd.f32 0.0, %v4014
      %v4016 = vpop.f32.mrf.mxu0
      %v4017 = vadd.f32 0.0, %v4016
      %4018 = vdwg.mxu0
      %v4019 = vadd.f32 %v3818, %v3940
      %v4020 = vadd.f32 %v3819, %v3942
      %v4021 = vadd.f32 %v3820, %v3945
      %v4022 = vadd.f32 %v3821, %v3947
      %v4023 = vadd.f32 %v3822, %v3950
      %v4024 = vadd.f32 %v3823, %v3952
      %v4025 = vadd.f32 %v3824, %v3955
      %v4026 = vadd.f32 %v3825, %v3957
      %v4027 = vadd.f32 %v3826, %v3960
      %v4028 = vadd.f32 %v3827, %v3962
      %v4029 = vadd.f32 %v3828, %v3965
      %v4030 = vadd.f32 %v3829, %v3967
      %v4031 = vadd.f32 %v3830, %v3970
      %v4032 = vadd.f32 %v3831, %v3972
      %v4033 = vadd.f32 %v3832, %v3975
      %v4034 = vadd.f32 %v3833, %v3977
      %v4035 = vadd.f32 %v3834, %v3980
      %v4036 = vadd.f32 %v3835, %v3982
      %v4037 = vadd.f32 %v3836, %v3985
      %v4038 = vadd.f32 %v3837, %v3987
      %v4039 = vadd.f32 %v3838, %v3990
      %v4040 = vadd.f32 %v3839, %v3992
      %v4041 = vadd.f32 %v3840, %v3995
      %v4042 = vadd.f32 %v3841, %v3997
      %v4043 = vadd.f32 %v3842, %v4000
      %v4044 = vadd.f32 %v3843, %v4002
      %v4045 = vadd.f32 %v3844, %v4005
      %v4046 = vadd.f32 %v3845, %v4007
      %v4047 = vadd.f32 %v3846, %v4010
      %v4048 = vadd.f32 %v3847, %v4012
      %v4049 = vadd.f32 %v3848, %v4015
      %v4050 = vadd.f32 %v3849, %v4017
      %v4051 = vpack.c.bf16 %v4020, %v4019
      %v4052 = vpack.c.bf16 %v4022, %v4021
      %v4053 = vpack.c.bf16 %v4024, %v4023
      %v4054 = vpack.c.bf16 %v4026, %v4025
      %v4055 = vpack.c.bf16 %v4028, %v4027
      %v4056 = vpack.c.bf16 %v4030, %v4029
      %v4057 = vpack.c.bf16 %v4032, %v4031
      %v4058 = vpack.c.bf16 %v4034, %v4033
      %v4059 = vpack.c.bf16 %v4036, %v4035
      %v4060 = vpack.c.bf16 %v4038, %v4037
      %v4061 = vpack.c.bf16 %v4040, %v4039
      %v4062 = vpack.c.bf16 %v4042, %v4041
      %v4063 = vpack.c.bf16 %v4044, %v4043
      %v4064 = vpack.c.bf16 %v4046, %v4045
      %v4065 = vpack.c.bf16 %v4048, %v4047
      %v4066 = vpack.c.bf16 %v4050, %v4049
      %v4067 = vld [vmem:[%s7] sm:$0xff]
      %v4068 = vld [vmem:[%s7 + $0x8] sm:$0xff]
      %v4069 = vld [vmem:[%s7 + $0x10] sm:$0xff]
      %v4070 = vld [vmem:[%s7 + $0x18] sm:$0xff]
      %v4071 = vld [vmem:[%s7 + $0x20] sm:$0xff]
      %v4072 = vld [vmem:[%s7 + $0x28] sm:$0xff]
      %v4073 = vld [vmem:[%s7 + $0x30] sm:$0xff]
      %v4074 = vld [vmem:[%s7 + $0x38] sm:$0xff]
      %v4075 = vld [vmem:[%s7 + $0x40] sm:$0xff]
      %v4076 = vld [vmem:[%s7 + $0x48] sm:$0xff]
      %v4077 = vld [vmem:[%s7 + $0x50] sm:$0xff]
      %v4078 = vld [vmem:[%s7 + $0x58] sm:$0xff]
      %v4079 = vld [vmem:[%s7 + $0x60] sm:$0xff]
      %v4080 = vld [vmem:[%s7 + $0x68] sm:$0xff]
      %v4081 = vld [vmem:[%s7 + $0x70] sm:$0xff]
      %v4082 = vld [vmem:[%s7 + $0x78] sm:$0xff]
      %v4099 = vunpack.c.l.b16 %v4067
      %v4100 = vunpack.c.h.b16 %v4067
      %v4101 = vunpack.c.l.b16 %v4068
      %v4102 = vunpack.c.h.b16 %v4068
      %v4103 = vunpack.c.l.b16 %v4069
      %v4104 = vunpack.c.h.b16 %v4069
      %v4105 = vunpack.c.l.b16 %v4070
      %v4106 = vunpack.c.h.b16 %v4070
      %v4107 = vunpack.c.l.b16 %v4071
      %v4108 = vunpack.c.h.b16 %v4071
      %v4109 = vunpack.c.l.b16 %v4072
      %v4110 = vunpack.c.h.b16 %v4072
      %v4111 = vunpack.c.l.b16 %v4073
      %v4112 = vunpack.c.h.b16 %v4073
      %v4113 = vunpack.c.l.b16 %v4074
      %v4114 = vunpack.c.h.b16 %v4074
      %v4115 = vunpack.c.l.b16 %v4075
      %v4116 = vunpack.c.h.b16 %v4075
      %v4117 = vunpack.c.l.b16 %v4076
      %v4118 = vunpack.c.h.b16 %v4076
      %v4119 = vunpack.c.l.b16 %v4077
      %v4120 = vunpack.c.h.b16 %v4077
      %v4121 = vunpack.c.l.b16 %v4078
      %v4122 = vunpack.c.h.b16 %v4078
      %v4123 = vunpack.c.l.b16 %v4079
      %v4124 = vunpack.c.h.b16 %v4079
      %v4125 = vunpack.c.l.b16 %v4080
      %v4126 = vunpack.c.h.b16 %v4080
      %v4127 = vunpack.c.l.b16 %v4081
      %v4128 = vunpack.c.h.b16 %v4081
      %v4129 = vunpack.c.l.b16 %v4082
      %v4130 = vunpack.c.h.b16 %v4082
      %v4131 = vpack.c.b16 %v4101, %v4099
      %v4132 = vpack.c.b16 %v4102, %v4100
      %v4133 = vpack.c.b16 %v4105, %v4103
      %v4134 = vpack.c.b16 %v4106, %v4104
      %v4135 = vpack.c.b16 %v4109, %v4107
      %v4136 = vpack.c.b16 %v4110, %v4108
      %v4137 = vpack.c.b16 %v4113, %v4111
      %v4138 = vpack.c.b16 %v4114, %v4112
      %v4139 = vpack.c.b16 %v4117, %v4115
      %v4140 = vpack.c.b16 %v4118, %v4116
      %v4141 = vpack.c.b16 %v4121, %v4119
      %v4142 = vpack.c.b16 %v4122, %v4120
      %v4143 = vpack.c.b16 %v4125, %v4123
      %v4144 = vpack.c.b16 %v4126, %v4124
      %v4145 = vpack.c.b16 %v4129, %v4127
      %v4146 = vpack.c.b16 %v4130, %v4128
      %4163 = vmatpush.bf16.msra.mxu0 %v4145
      %4164 = vmatpush.bf16.msra.mxu0 %v4143
      %4165 = vmatpush.bf16.msra.mxu0 %v4141
      %4166 = vmatpush.bf16.msra.mxu0 %v4139
      %4167 = vmatpush.bf16.msra.mxu0 %v4137
      %4168 = vmatpush.bf16.msra.mxu0 %v4135
      %4169 = vmatpush.bf16.msra.mxu0 %v4133
      %4170 = vmatpush.bf16.msra.mxu0 %v4131
      %4171 = vmatmul.bf16.gmra.mxu0 %v4051
      %v4172 = vpop.f32.mrf.mxu0
      %v4173 = vadd.f32 0.0, %v4172
      %v4174 = vpop.f32.mrf.mxu0
      %v4175 = vadd.f32 0.0, %v4174
      %4176 = vmatmul.bf16.gmra.mxu0 %v4052
      %v4177 = vpop.f32.mrf.mxu0
      %v4178 = vadd.f32 0.0, %v4177
      %v4179 = vpop.f32.mrf.mxu0
      %v4180 = vadd.f32 0.0, %v4179
      %4181 = vmatmul.bf16.gmra.mxu0 %v4053
      %v4182 = vpop.f32.mrf.mxu0
      %v4183 = vadd.f32 0.0, %v4182
      %v4184 = vpop.f32.mrf.mxu0
      %v4185 = vadd.f32 0.0, %v4184
      %4186 = vmatmul.bf16.gmra.mxu0 %v4054
      %v4187 = vpop.f32.mrf.mxu0
      %v4188 = vadd.f32 0.0, %v4187
      %v4189 = vpop.f32.mrf.mxu0
      %v4190 = vadd.f32 0.0, %v4189
      %4191 = vmatmul.bf16.gmra.mxu0 %v4055
      %v4192 = vpop.f32.mrf.mxu0
      %v4193 = vadd.f32 0.0, %v4192
      %v4194 = vpop.f32.mrf.mxu0
      %v4195 = vadd.f32 0.0, %v4194
      %4196 = vmatmul.bf16.gmra.mxu0 %v4056
      %v4197 = vpop.f32.mrf.mxu0
      %v4198 = vadd.f32 0.0, %v4197
      %v4199 = vpop.f32.mrf.mxu0
      %v4200 = vadd.f32 0.0, %v4199
      %4201 = vmatmul.bf16.gmra.mxu0 %v4057
      %v4202 = vpop.f32.mrf.mxu0
      %v4203 = vadd.f32 0.0, %v4202
      %v4204 = vpop.f32.mrf.mxu0
      %v4205 = vadd.f32 0.0, %v4204
      %4206 = vmatmul.bf16.gmra.mxu0 %v4058
      %v4207 = vpop.f32.mrf.mxu0
      %v4208 = vadd.f32 0.0, %v4207
      %v4209 = vpop.f32.mrf.mxu0
      %v4210 = vadd.f32 0.0, %v4209
      %4211 = vmatmul.bf16.gmra.mxu0 %v4059
      %v4212 = vpop.f32.mrf.mxu0
      %v4213 = vadd.f32 0.0, %v4212
      %v4214 = vpop.f32.mrf.mxu0
      %v4215 = vadd.f32 0.0, %v4214
      %4216 = vmatmul.bf16.gmra.mxu0 %v4060
      %v4217 = vpop.f32.mrf.mxu0
      %v4218 = vadd.f32 0.0, %v4217
      %v4219 = vpop.f32.mrf.mxu0
      %v4220 = vadd.f32 0.0, %v4219
      %4221 = vmatmul.bf16.gmra.mxu0 %v4061
      %v4222 = vpop.f32.mrf.mxu0
      %v4223 = vadd.f32 0.0, %v4222
      %v4224 = vpop.f32.mrf.mxu0
      %v4225 = vadd.f32 0.0, %v4224
      %4226 = vmatmul.bf16.gmra.mxu0 %v4062
      %v4227 = vpop.f32.mrf.mxu0
      %v4228 = vadd.f32 0.0, %v4227
      %v4229 = vpop.f32.mrf.mxu0
      %v4230 = vadd.f32 0.0, %v4229
      %4231 = vmatmul.bf16.gmra.mxu0 %v4063
      %v4232 = vpop.f32.mrf.mxu0
      %v4233 = vadd.f32 0.0, %v4232
      %v4234 = vpop.f32.mrf.mxu0
      %v4235 = vadd.f32 0.0, %v4234
      %4236 = vmatmul.bf16.gmra.mxu0 %v4064
      %v4237 = vpop.f32.mrf.mxu0
      %v4238 = vadd.f32 0.0, %v4237
      %v4239 = vpop.f32.mrf.mxu0
      %v4240 = vadd.f32 0.0, %v4239
      %4241 = vmatmul.bf16.gmra.mxu0 %v4065
      %v4242 = vpop.f32.mrf.mxu0
      %v4243 = vadd.f32 0.0, %v4242
      %v4244 = vpop.f32.mrf.mxu0
      %v4245 = vadd.f32 0.0, %v4244
      %4246 = vmatmul.bf16.gmra.mxu0 %v4066
      %v4247 = vpop.f32.mrf.mxu0
      %v4248 = vadd.f32 0.0, %v4247
      %v4249 = vpop.f32.mrf.mxu0
      %v4250 = vadd.f32 0.0, %v4249
      %4251 = vdwg.mxu0
      %4252 = vmatpush.bf16.msra.mxu0 %v4146
      %4253 = vmatpush.bf16.msra.mxu0 %v4144
      %4254 = vmatpush.bf16.msra.mxu0 %v4142
      %4255 = vmatpush.bf16.msra.mxu0 %v4140
      %4256 = vmatpush.bf16.msra.mxu0 %v4138
      %4257 = vmatpush.bf16.msra.mxu0 %v4136
      %4258 = vmatpush.bf16.msra.mxu0 %v4134
      %4259 = vmatpush.bf16.msra.mxu0 %v4132
      %4260 = vmatmul.bf16.gmra.mxu0 %v4051
      %v4261 = vpop.f32.mrf.mxu0
      %v4262 = vadd.f32 0.0, %v4261
      %v4263 = vpop.f32.mrf.mxu0
      %v4264 = vadd.f32 0.0, %v4263
      %4265 = vmatmul.bf16.gmra.mxu0 %v4052
      %v4266 = vpop.f32.mrf.mxu0
      %v4267 = vadd.f32 0.0, %v4266
      %v4268 = vpop.f32.mrf.mxu0
      %v4269 = vadd.f32 0.0, %v4268
      %4270 = vmatmul.bf16.gmra.mxu0 %v4053
      %v4271 = vpop.f32.mrf.mxu0
      %v4272 = vadd.f32 0.0, %v4271
      %v4273 = vpop.f32.mrf.mxu0
      %v4274 = vadd.f32 0.0, %v4273
      %4275 = vmatmul.bf16.gmra.mxu0 %v4054
      %v4276 = vpop.f32.mrf.mxu0
      %v4277 = vadd.f32 0.0, %v4276
      %v4278 = vpop.f32.mrf.mxu0
      %v4279 = vadd.f32 0.0, %v4278
      %4280 = vmatmul.bf16.gmra.mxu0 %v4055
      %v4281 = vpop.f32.mrf.mxu0
      %v4282 = vadd.f32 0.0, %v4281
      %v4283 = vpop.f32.mrf.mxu0
      %v4284 = vadd.f32 0.0, %v4283
      %4285 = vmatmul.bf16.gmra.mxu0 %v4056
      %v4286 = vpop.f32.mrf.mxu0
      %v4287 = vadd.f32 0.0, %v4286
      %v4288 = vpop.f32.mrf.mxu0
      %v4289 = vadd.f32 0.0, %v4288
      %4290 = vmatmul.bf16.gmra.mxu0 %v4057
      %v4291 = vpop.f32.mrf.mxu0
      %v4292 = vadd.f32 0.0, %v4291
      %v4293 = vpop.f32.mrf.mxu0
      %v4294 = vadd.f32 0.0, %v4293
      %4295 = vmatmul.bf16.gmra.mxu0 %v4058
      %v4296 = vpop.f32.mrf.mxu0
      %v4297 = vadd.f32 0.0, %v4296
      %v4298 = vpop.f32.mrf.mxu0
      %v4299 = vadd.f32 0.0, %v4298
      %4300 = vmatmul.bf16.gmra.mxu0 %v4059
      %v4301 = vpop.f32.mrf.mxu0
      %v4302 = vadd.f32 0.0, %v4301
      %v4303 = vpop.f32.mrf.mxu0
      %v4304 = vadd.f32 0.0, %v4303
      %4305 = vmatmul.bf16.gmra.mxu0 %v4060
      %v4306 = vpop.f32.mrf.mxu0
      %v4307 = vadd.f32 0.0, %v4306
      %v4308 = vpop.f32.mrf.mxu0
      %v4309 = vadd.f32 0.0, %v4308
      %4310 = vmatmul.bf16.gmra.mxu0 %v4061
      %v4311 = vpop.f32.mrf.mxu0
      %v4312 = vadd.f32 0.0, %v4311
      %v4313 = vpop.f32.mrf.mxu0
      %v4314 = vadd.f32 0.0, %v4313
      %4315 = vmatmul.bf16.gmra.mxu0 %v4062
      %v4316 = vpop.f32.mrf.mxu0
      %v4317 = vadd.f32 0.0, %v4316
      %v4318 = vpop.f32.mrf.mxu0
      %v4319 = vadd.f32 0.0, %v4318
      %4320 = vmatmul.bf16.gmra.mxu0 %v4063
      %v4321 = vpop.f32.mrf.mxu0
      %v4322 = vadd.f32 0.0, %v4321
      %v4323 = vpop.f32.mrf.mxu0
      %v4324 = vadd.f32 0.0, %v4323
      %4325 = vmatmul.bf16.gmra.mxu0 %v4064
      %v4326 = vpop.f32.mrf.mxu0
      %v4327 = vadd.f32 0.0, %v4326
      %v4328 = vpop.f32.mrf.mxu0
      %v4329 = vadd.f32 0.0, %v4328
      %4330 = vmatmul.bf16.gmra.mxu0 %v4065
      %v4331 = vpop.f32.mrf.mxu0
      %v4332 = vadd.f32 0.0, %v4331
      %v4333 = vpop.f32.mrf.mxu0
      %v4334 = vadd.f32 0.0, %v4333
      %4335 = vmatmul.bf16.gmra.mxu0 %v4066
      %v4336 = vpop.f32.mrf.mxu0
      %v4337 = vadd.f32 0.0, %v4336
      %v4338 = vpop.f32.mrf.mxu0
      %v4339 = vadd.f32 0.0, %v4338
      %4340 = vdwg.mxu0
      %v4341 = vmax.f32 %v4173, 0.0
      %v4342 = vmax.f32 %v4262, 0.0
      %v4343 = vmax.f32 %v4175, 0.0
      %v4344 = vmax.f32 %v4264, 0.0
      %v4345 = vmax.f32 %v4178, 0.0
      %v4346 = vmax.f32 %v4267, 0.0
      %v4347 = vmax.f32 %v4180, 0.0
      %v4348 = vmax.f32 %v4269, 0.0
      %v4349 = vmax.f32 %v4183, 0.0
      %v4350 = vmax.f32 %v4272, 0.0
      %v4351 = vmax.f32 %v4185, 0.0
      %v4352 = vmax.f32 %v4274, 0.0
      %v4353 = vmax.f32 %v4188, 0.0
      %v4354 = vmax.f32 %v4277, 0.0
      %v4355 = vmax.f32 %v4190, 0.0
      %v4356 = vmax.f32 %v4279, 0.0
      %v4357 = vmax.f32 %v4193, 0.0
      %v4358 = vmax.f32 %v4282, 0.0
      %v4359 = vmax.f32 %v4195, 0.0
      %v4360 = vmax.f32 %v4284, 0.0
      %v4361 = vmax.f32 %v4198, 0.0
      %v4362 = vmax.f32 %v4287, 0.0
      %v4363 = vmax.f32 %v4200, 0.0
      %v4364 = vmax.f32 %v4289, 0.0
      %v4365 = vmax.f32 %v4203, 0.0
      %v4366 = vmax.f32 %v4292, 0.0
      %v4367 = vmax.f32 %v4205, 0.0
      %v4368 = vmax.f32 %v4294, 0.0
      %v4369 = vmax.f32 %v4208, 0.0
      %v4370 = vmax.f32 %v4297, 0.0
      %v4371 = vmax.f32 %v4210, 0.0
      %v4372 = vmax.f32 %v4299, 0.0
      %v4373 = vmax.f32 %v4213, 0.0
      %v4374 = vmax.f32 %v4302, 0.0
      %v4375 = vmax.f32 %v4215, 0.0
      %v4376 = vmax.f32 %v4304, 0.0
      %v4377 = vmax.f32 %v4218, 0.0
      %v4378 = vmax.f32 %v4307, 0.0
      %v4379 = vmax.f32 %v4220, 0.0
      %v4380 = vmax.f32 %v4309, 0.0
      %v4381 = vmax.f32 %v4223, 0.0
      %v4382 = vmax.f32 %v4312, 0.0
      %v4383 = vmax.f32 %v4225, 0.0
      %v4384 = vmax.f32 %v4314, 0.0
      %v4385 = vmax.f32 %v4228, 0.0
      %v4386 = vmax.f32 %v4317, 0.0
      %v4387 = vmax.f32 %v4230, 0.0
      %v4388 = vmax.f32 %v4319, 0.0
      %v4389 = vmax.f32 %v4233, 0.0
      %v4390 = vmax.f32 %v4322, 0.0
      %v4391 = vmax.f32 %v4235, 0.0
      %v4392 = vmax.f32 %v4324, 0.0
      %v4393 = vmax.f32 %v4238, 0.0
      %v4394 = vmax.f32 %v4327, 0.0
      %v4395 = vmax.f32 %v4240, 0.0
      %v4396 = vmax.f32 %v4329, 0.0
      %v4397 = vmax.f32 %v4243, 0.0
      %v4398 = vmax.f32 %v4332, 0.0
      %v4399 = vmax.f32 %v4245, 0.0
      %v4400 = vmax.f32 %v4334, 0.0
      %v4401 = vmax.f32 %v4248, 0.0
      %v4402 = vmax.f32 %v4337, 0.0
      %v4403 = vmax.f32 %v4250, 0.0
      %v4404 = vmax.f32 %v4339, 0.0
      %v4405 = vpack.c.bf16 %v4343, %v4341
      %v4406 = vpack.c.bf16 %v4344, %v4342
      %v4407 = vpack.c.bf16 %v4347, %v4345
      %v4408 = vpack.c.bf16 %v4348, %v4346
      %v4409 = vpack.c.bf16 %v4351, %v4349
      %v4410 = vpack.c.bf16 %v4352, %v4350
      %v4411 = vpack.c.bf16 %v4355, %v4353
      %v4412 = vpack.c.bf16 %v4356, %v4354
      %v4413 = vpack.c.bf16 %v4359, %v4357
      %v4414 = vpack.c.bf16 %v4360, %v4358
      %v4415 = vpack.c.bf16 %v4363, %v4361
      %v4416 = vpack.c.bf16 %v4364, %v4362
      %v4417 = vpack.c.bf16 %v4367, %v4365
      %v4418 = vpack.c.bf16 %v4368, %v4366
      %v4419 = vpack.c.bf16 %v4371, %v4369
      %v4420 = vpack.c.bf16 %v4372, %v4370
      %v4421 = vpack.c.bf16 %v4375, %v4373
      %v4422 = vpack.c.bf16 %v4376, %v4374
      %v4423 = vpack.c.bf16 %v4379, %v4377
      %v4424 = vpack.c.bf16 %v4380, %v4378
      %v4425 = vpack.c.bf16 %v4383, %v4381
      %v4426 = vpack.c.bf16 %v4384, %v4382
      %v4427 = vpack.c.bf16 %v4387, %v4385
      %v4428 = vpack.c.bf16 %v4388, %v4386
      %v4429 = vpack.c.bf16 %v4391, %v4389
      %v4430 = vpack.c.bf16 %v4392, %v4390
      %v4431 = vpack.c.bf16 %v4395, %v4393
      %v4432 = vpack.c.bf16 %v4396, %v4394
      %v4433 = vpack.c.bf16 %v4399, %v4397
      %v4434 = vpack.c.bf16 %v4400, %v4398
      %v4435 = vpack.c.bf16 %v4403, %v4401
      %v4436 = vpack.c.bf16 %v4404, %v4402
      %v4437 = vld [vmem:[%s8] sm:$0xf]
      %v4438 = vld [vmem:[%s8 + $0x4] sm:$0xf]
      %v4439 = vld [vmem:[%s8 + $0x8] sm:$0xf]
      %v4440 = vld [vmem:[%s8 + $0xc] sm:$0xf]
      %v4441 = vld [vmem:[%s8 + $0x10] sm:$0xf]
      %v4442 = vld [vmem:[%s8 + $0x14] sm:$0xf]
      %v4443 = vld [vmem:[%s8 + $0x18] sm:$0xf]
      %v4444 = vld [vmem:[%s8 + $0x1c] sm:$0xf]
      %v4445 = vld [vmem:[%s8 + $0x20] sm:$0xf]
      %v4446 = vld [vmem:[%s8 + $0x24] sm:$0xf]
      %v4447 = vld [vmem:[%s8 + $0x28] sm:$0xf]
      %v4448 = vld [vmem:[%s8 + $0x2c] sm:$0xf]
      %v4449 = vld [vmem:[%s8 + $0x30] sm:$0xf]
      %v4450 = vld [vmem:[%s8 + $0x34] sm:$0xf]
      %v4451 = vld [vmem:[%s8 + $0x38] sm:$0xf]
      %v4452 = vld [vmem:[%s8 + $0x3c] sm:$0xf]
      %v4453 = vld [vmem:[%s8 + $0x40] sm:$0xf]
      %v4454 = vld [vmem:[%s8 + $0x44] sm:$0xf]
      %v4455 = vld [vmem:[%s8 + $0x48] sm:$0xf]
      %v4456 = vld [vmem:[%s8 + $0x4c] sm:$0xf]
      %v4457 = vld [vmem:[%s8 + $0x50] sm:$0xf]
      %v4458 = vld [vmem:[%s8 + $0x54] sm:$0xf]
      %v4459 = vld [vmem:[%s8 + $0x58] sm:$0xf]
      %v4460 = vld [vmem:[%s8 + $0x5c] sm:$0xf]
      %v4461 = vld [vmem:[%s8 + $0x60] sm:$0xf]
      %v4462 = vld [vmem:[%s8 + $0x64] sm:$0xf]
      %v4463 = vld [vmem:[%s8 + $0x68] sm:$0xf]
      %v4464 = vld [vmem:[%s8 + $0x6c] sm:$0xf]
      %v4465 = vld [vmem:[%s8 + $0x70] sm:$0xf]
      %v4466 = vld [vmem:[%s8 + $0x74] sm:$0xf]
      %v4467 = vld [vmem:[%s8 + $0x78] sm:$0xf]
      %v4468 = vld [vmem:[%s8 + $0x7c] sm:$0xf]
      %v4501 = vunpack.c.l.b16 %v4437
      %v4502 = vunpack.c.l.b16 %v4438
      %v4503 = vunpack.c.l.b16 %v4439
      %v4504 = vunpack.c.l.b16 %v4440
      %v4505 = vunpack.c.l.b16 %v4441
      %v4506 = vunpack.c.l.b16 %v4442
      %v4507 = vunpack.c.l.b16 %v4443
      %v4508 = vunpack.c.l.b16 %v4444
      %v4509 = vunpack.c.l.b16 %v4445
      %v4510 = vunpack.c.l.b16 %v4446
      %v4511 = vunpack.c.l.b16 %v4447
      %v4512 = vunpack.c.l.b16 %v4448
      %v4513 = vunpack.c.l.b16 %v4449
      %v4514 = vunpack.c.l.b16 %v4450
      %v4515 = vunpack.c.l.b16 %v4451
      %v4516 = vunpack.c.l.b16 %v4452
      %v4517 = vunpack.c.l.b16 %v4453
      %v4518 = vunpack.c.l.b16 %v4454
      %v4519 = vunpack.c.l.b16 %v4455
      %v4520 = vunpack.c.l.b16 %v4456
      %v4521 = vunpack.c.l.b16 %v4457
      %v4522 = vunpack.c.l.b16 %v4458
      %v4523 = vunpack.c.l.b16 %v4459
      %v4524 = vunpack.c.l.b16 %v4460
      %v4525 = vunpack.c.l.b16 %v4461
      %v4526 = vunpack.c.l.b16 %v4462
      %v4527 = vunpack.c.l.b16 %v4463
      %v4528 = vunpack.c.l.b16 %v4464
      %v4529 = vunpack.c.l.b16 %v4465
      %v4530 = vunpack.c.l.b16 %v4466
      %v4531 = vunpack.c.l.b16 %v4467
      %v4532 = vunpack.c.l.b16 %v4468
      %v4533 = vpack.c.b16 %v4502, %v4501
      %v4534 = vpack.c.b16 %v4504, %v4503
      %v4535 = vpack.c.b16 %v4506, %v4505
      %v4536 = vpack.c.b16 %v4508, %v4507
      %v4537 = vpack.c.b16 %v4510, %v4509
      %v4538 = vpack.c.b16 %v4512, %v4511
      %v4539 = vpack.c.b16 %v4514, %v4513
      %v4540 = vpack.c.b16 %v4516, %v4515
      %v4541 = vpack.c.b16 %v4518, %v4517
      %v4542 = vpack.c.b16 %v4520, %v4519
      %v4543 = vpack.c.b16 %v4522, %v4521
      %v4544 = vpack.c.b16 %v4524, %v4523
      %v4545 = vpack.c.b16 %v4526, %v4525
      %v4546 = vpack.c.b16 %v4528, %v4527
      %v4547 = vpack.c.b16 %v4530, %v4529
      %v4548 = vpack.c.b16 %v4532, %v4531
      %4565 = vmatpush.bf16.msra.mxu0 %v4540
      %4566 = vmatpush.bf16.msra.mxu0 %v4539
      %4567 = vmatpush.bf16.msra.mxu0 %v4538
      %4568 = vmatpush.bf16.msra.mxu0 %v4537
      %4569 = vmatpush.bf16.msra.mxu0 %v4536
      %4570 = vmatpush.bf16.msra.mxu0 %v4535
      %4571 = vmatpush.bf16.msra.mxu0 %v4534
      %4572 = vmatpush.bf16.msra.mxu0 %v4533
      %4573 = vmatmul.bf16.gmra.mxu0 %v4405
      %v4574 = vpop.f32.mrf.mxu0
      %v4575 = vadd.f32 0.0, %v4574
      %v4576 = vpop.f32.mrf.mxu0
      %v4577 = vadd.f32 0.0, %v4576
      %4578 = vmatmul.bf16.gmra.mxu0 %v4407
      %v4579 = vpop.f32.mrf.mxu0
      %v4580 = vadd.f32 0.0, %v4579
      %v4581 = vpop.f32.mrf.mxu0
      %v4582 = vadd.f32 0.0, %v4581
      %4583 = vmatmul.bf16.gmra.mxu0 %v4409
      %v4584 = vpop.f32.mrf.mxu0
      %v4585 = vadd.f32 0.0, %v4584
      %v4586 = vpop.f32.mrf.mxu0
      %v4587 = vadd.f32 0.0, %v4586
      %4588 = vmatmul.bf16.gmra.mxu0 %v4411
      %v4589 = vpop.f32.mrf.mxu0
      %v4590 = vadd.f32 0.0, %v4589
      %v4591 = vpop.f32.mrf.mxu0
      %v4592 = vadd.f32 0.0, %v4591
      %4593 = vmatmul.bf16.gmra.mxu0 %v4413
      %v4594 = vpop.f32.mrf.mxu0
      %v4595 = vadd.f32 0.0, %v4594
      %v4596 = vpop.f32.mrf.mxu0
      %v4597 = vadd.f32 0.0, %v4596
      %4598 = vmatmul.bf16.gmra.mxu0 %v4415
      %v4599 = vpop.f32.mrf.mxu0
      %v4600 = vadd.f32 0.0, %v4599
      %v4601 = vpop.f32.mrf.mxu0
      %v4602 = vadd.f32 0.0, %v4601
      %4603 = vmatmul.bf16.gmra.mxu0 %v4417
      %v4604 = vpop.f32.mrf.mxu0
      %v4605 = vadd.f32 0.0, %v4604
      %v4606 = vpop.f32.mrf.mxu0
      %v4607 = vadd.f32 0.0, %v4606
      %4608 = vmatmul.bf16.gmra.mxu0 %v4419
      %v4609 = vpop.f32.mrf.mxu0
      %v4610 = vadd.f32 0.0, %v4609
      %v4611 = vpop.f32.mrf.mxu0
      %v4612 = vadd.f32 0.0, %v4611
      %4613 = vmatmul.bf16.gmra.mxu0 %v4421
      %v4614 = vpop.f32.mrf.mxu0
      %v4615 = vadd.f32 0.0, %v4614
      %v4616 = vpop.f32.mrf.mxu0
      %v4617 = vadd.f32 0.0, %v4616
      %4618 = vmatmul.bf16.gmra.mxu0 %v4423
      %v4619 = vpop.f32.mrf.mxu0
      %v4620 = vadd.f32 0.0, %v4619
      %v4621 = vpop.f32.mrf.mxu0
      %v4622 = vadd.f32 0.0, %v4621
      %4623 = vmatmul.bf16.gmra.mxu0 %v4425
      %v4624 = vpop.f32.mrf.mxu0
      %v4625 = vadd.f32 0.0, %v4624
      %v4626 = vpop.f32.mrf.mxu0
      %v4627 = vadd.f32 0.0, %v4626
      %4628 = vmatmul.bf16.gmra.mxu0 %v4427
      %v4629 = vpop.f32.mrf.mxu0
      %v4630 = vadd.f32 0.0, %v4629
      %v4631 = vpop.f32.mrf.mxu0
      %v4632 = vadd.f32 0.0, %v4631
      %4633 = vmatmul.bf16.gmra.mxu0 %v4429
      %v4634 = vpop.f32.mrf.mxu0
      %v4635 = vadd.f32 0.0, %v4634
      %v4636 = vpop.f32.mrf.mxu0
      %v4637 = vadd.f32 0.0, %v4636
      %4638 = vmatmul.bf16.gmra.mxu0 %v4431
      %v4639 = vpop.f32.mrf.mxu0
      %v4640 = vadd.f32 0.0, %v4639
      %v4641 = vpop.f32.mrf.mxu0
      %v4642 = vadd.f32 0.0, %v4641
      %4643 = vmatmul.bf16.gmra.mxu0 %v4433
      %v4644 = vpop.f32.mrf.mxu0
      %v4645 = vadd.f32 0.0, %v4644
      %v4646 = vpop.f32.mrf.mxu0
      %v4647 = vadd.f32 0.0, %v4646
      %4648 = vmatmul.bf16.gmra.mxu0 %v4435
      %v4649 = vpop.f32.mrf.mxu0
      %v4650 = vadd.f32 0.0, %v4649
      %v4651 = vpop.f32.mrf.mxu0
      %v4652 = vadd.f32 0.0, %v4651
      %4653 = vdwg.mxu0
      %4654 = vmatpush.bf16.msra.mxu0 %v4548
      %4655 = vmatpush.bf16.msra.mxu0 %v4547
      %4656 = vmatpush.bf16.msra.mxu0 %v4546
      %4657 = vmatpush.bf16.msra.mxu0 %v4545
      %4658 = vmatpush.bf16.msra.mxu0 %v4544
      %4659 = vmatpush.bf16.msra.mxu0 %v4543
      %4660 = vmatpush.bf16.msra.mxu0 %v4542
      %4661 = vmatpush.bf16.msra.mxu0 %v4541
      %4662 = vmatmul.bf16.gmra.mxu0 %v4406
      %v4663 = vpop.f32.mrf.mxu0
      %v4664 = vadd.f32 %v4575, %v4663
      %v4665 = vpop.f32.mrf.mxu0
      %v4666 = vadd.f32 %v4577, %v4665
      %4667 = vmatmul.bf16.gmra.mxu0 %v4408
      %v4668 = vpop.f32.mrf.mxu0
      %v4669 = vadd.f32 %v4580, %v4668
      %v4670 = vpop.f32.mrf.mxu0
      %v4671 = vadd.f32 %v4582, %v4670
      %4672 = vmatmul.bf16.gmra.mxu0 %v4410
      %v4673 = vpop.f32.mrf.mxu0
      %v4674 = vadd.f32 %v4585, %v4673
      %v4675 = vpop.f32.mrf.mxu0
      %v4676 = vadd.f32 %v4587, %v4675
      %4677 = vmatmul.bf16.gmra.mxu0 %v4412
      %v4678 = vpop.f32.mrf.mxu0
      %v4679 = vadd.f32 %v4590, %v4678
      %v4680 = vpop.f32.mrf.mxu0
      %v4681 = vadd.f32 %v4592, %v4680
      %4682 = vmatmul.bf16.gmra.mxu0 %v4414
      %v4683 = vpop.f32.mrf.mxu0
      %v4684 = vadd.f32 %v4595, %v4683
      %v4685 = vpop.f32.mrf.mxu0
      %v4686 = vadd.f32 %v4597, %v4685
      %4687 = vmatmul.bf16.gmra.mxu0 %v4416
      %v4688 = vpop.f32.mrf.mxu0
      %v4689 = vadd.f32 %v4600, %v4688
      %v4690 = vpop.f32.mrf.mxu0
      %v4691 = vadd.f32 %v4602, %v4690
      %4692 = vmatmul.bf16.gmra.mxu0 %v4418
      %v4693 = vpop.f32.mrf.mxu0
      %v4694 = vadd.f32 %v4605, %v4693
      %v4695 = vpop.f32.mrf.mxu0
      %v4696 = vadd.f32 %v4607, %v4695
      %4697 = vmatmul.bf16.gmra.mxu0 %v4420
      %v4698 = vpop.f32.mrf.mxu0
      %v4699 = vadd.f32 %v4610, %v4698
      %v4700 = vpop.f32.mrf.mxu0
      %v4701 = vadd.f32 %v4612, %v4700
      %4702 = vmatmul.bf16.gmra.mxu0 %v4422
      %v4703 = vpop.f32.mrf.mxu0
      %v4704 = vadd.f32 %v4615, %v4703
      %v4705 = vpop.f32.mrf.mxu0
      %v4706 = vadd.f32 %v4617, %v4705
      %4707 = vmatmul.bf16.gmra.mxu0 %v4424
      %v4708 = vpop.f32.mrf.mxu0
      %v4709 = vadd.f32 %v4620, %v4708
      %v4710 = vpop.f32.mrf.mxu0
      %v4711 = vadd.f32 %v4622, %v4710
      %4712 = vmatmul.bf16.gmra.mxu0 %v4426
      %v4713 = vpop.f32.mrf.mxu0
      %v4714 = vadd.f32 %v4625, %v4713
      %v4715 = vpop.f32.mrf.mxu0
      %v4716 = vadd.f32 %v4627, %v4715
      %4717 = vmatmul.bf16.gmra.mxu0 %v4428
      %v4718 = vpop.f32.mrf.mxu0
      %v4719 = vadd.f32 %v4630, %v4718
      %v4720 = vpop.f32.mrf.mxu0
      %v4721 = vadd.f32 %v4632, %v4720
      %4722 = vmatmul.bf16.gmra.mxu0 %v4430
      %v4723 = vpop.f32.mrf.mxu0
      %v4724 = vadd.f32 %v4635, %v4723
      %v4725 = vpop.f32.mrf.mxu0
      %v4726 = vadd.f32 %v4637, %v4725
      %4727 = vmatmul.bf16.gmra.mxu0 %v4432
      %v4728 = vpop.f32.mrf.mxu0
      %v4729 = vadd.f32 %v4640, %v4728
      %v4730 = vpop.f32.mrf.mxu0
      %v4731 = vadd.f32 %v4642, %v4730
      %4732 = vmatmul.bf16.gmra.mxu0 %v4434
      %v4733 = vpop.f32.mrf.mxu0
      %v4734 = vadd.f32 %v4645, %v4733
      %v4735 = vpop.f32.mrf.mxu0
      %v4736 = vadd.f32 %v4647, %v4735
      %4737 = vmatmul.bf16.gmra.mxu0 %v4436
      %v4738 = vpop.f32.mrf.mxu0
      %v4739 = vadd.f32 %v4650, %v4738
      %v4740 = vpop.f32.mrf.mxu0
      %v4741 = vadd.f32 %v4652, %v4740
      %4742 = vdwg.mxu0
      %v4743 = vadd.f32 %v4019, %v4664
      %v4744 = vadd.f32 %v4020, %v4666
      %v4745 = vadd.f32 %v4021, %v4669
      %v4746 = vadd.f32 %v4022, %v4671
      %v4747 = vadd.f32 %v4023, %v4674
      %v4748 = vadd.f32 %v4024, %v4676
      %v4749 = vadd.f32 %v4025, %v4679
      %v4750 = vadd.f32 %v4026, %v4681
      %v4751 = vadd.f32 %v4027, %v4684
      %v4752 = vadd.f32 %v4028, %v4686
      %v4753 = vadd.f32 %v4029, %v4689
      %v4754 = vadd.f32 %v4030, %v4691
      %v4755 = vadd.f32 %v4031, %v4694
      %v4756 = vadd.f32 %v4032, %v4696
      %v4757 = vadd.f32 %v4033, %v4699
      %v4758 = vadd.f32 %v4034, %v4701
      %v4759 = vadd.f32 %v4035, %v4704
      %v4760 = vadd.f32 %v4036, %v4706
      %v4761 = vadd.f32 %v4037, %v4709
      %v4762 = vadd.f32 %v4038, %v4711
      %v4763 = vadd.f32 %v4039, %v4714
      %v4764 = vadd.f32 %v4040, %v4716
      %v4765 = vadd.f32 %v4041, %v4719
      %v4766 = vadd.f32 %v4042, %v4721
      %v4767 = vadd.f32 %v4043, %v4724
      %v4768 = vadd.f32 %v4044, %v4726
      %v4769 = vadd.f32 %v4045, %v4729
      %v4770 = vadd.f32 %v4046, %v4731
      %v4771 = vadd.f32 %v4047, %v4734
      %v4772 = vadd.f32 %v4048, %v4736
      %v4773 = vadd.f32 %v4049, %v4739
      %v4774 = vadd.f32 %v4050, %v4741
      %v4775 = vpack.c.bf16 %v4743, %v4743
      %v4776 = vpack.c.bf16 %v4744, %v4744
      %v4777 = vpack.c.bf16 %v4745, %v4745
      %v4778 = vpack.c.bf16 %v4746, %v4746
      %v4779 = vpack.c.bf16 %v4747, %v4747
      %v4780 = vpack.c.bf16 %v4748, %v4748
      %v4781 = vpack.c.bf16 %v4749, %v4749
      %v4782 = vpack.c.bf16 %v4750, %v4750
      %v4783 = vpack.c.bf16 %v4751, %v4751
      %v4784 = vpack.c.bf16 %v4752, %v4752
      %v4785 = vpack.c.bf16 %v4753, %v4753
      %v4786 = vpack.c.bf16 %v4754, %v4754
      %v4787 = vpack.c.bf16 %v4755, %v4755
      %v4788 = vpack.c.bf16 %v4756, %v4756
      %v4789 = vpack.c.bf16 %v4757, %v4757
      %v4790 = vpack.c.bf16 %v4758, %v4758
      %v4791 = vpack.c.bf16 %v4759, %v4759
      %v4792 = vpack.c.bf16 %v4760, %v4760
      %v4793 = vpack.c.bf16 %v4761, %v4761
      %v4794 = vpack.c.bf16 %v4762, %v4762
      %v4795 = vpack.c.bf16 %v4763, %v4763
      %v4796 = vpack.c.bf16 %v4764, %v4764
      %v4797 = vpack.c.bf16 %v4765, %v4765
      %v4798 = vpack.c.bf16 %v4766, %v4766
      %v4799 = vpack.c.bf16 %v4767, %v4767
      %v4800 = vpack.c.bf16 %v4768, %v4768
      %v4801 = vpack.c.bf16 %v4769, %v4769
      %v4802 = vpack.c.bf16 %v4770, %v4770
      %v4803 = vpack.c.bf16 %v4771, %v4771
      %v4804 = vpack.c.bf16 %v4772, %v4772
      %v4805 = vpack.c.bf16 %v4773, %v4773
      %v4806 = vpack.c.bf16 %v4774, %v4774
      %4807 = vst [vmem:[%s356] sm:$0xf] %v4775
      %4808 = vst [vmem:[%s356 + $0x4] sm:$0xf] %v4776
      %4809 = vst [vmem:[%s356 + $0x8] sm:$0xf] %v4777
      %4810 = vst [vmem:[%s356 + $0xc] sm:$0xf] %v4778
      %4811 = vst [vmem:[%s356 + $0x10] sm:$0xf] %v4779
      %4812 = vst [vmem:[%s356 + $0x14] sm:$0xf] %v4780
      %4813 = vst [vmem:[%s356 + $0x18] sm:$0xf] %v4781
      %4814 = vst [vmem:[%s356 + $0x1c] sm:$0xf] %v4782
      %4815 = vst [vmem:[%s356 + $0x20] sm:$0xf] %v4783
      %4816 = vst [vmem:[%s356 + $0x24] sm:$0xf] %v4784
      %4817 = vst [vmem:[%s356 + $0x28] sm:$0xf] %v4785
      %4818 = vst [vmem:[%s356 + $0x2c] sm:$0xf] %v4786
      %4819 = vst [vmem:[%s356 + $0x30] sm:$0xf] %v4787
      %4820 = vst [vmem:[%s356 + $0x34] sm:$0xf] %v4788
      %4821 = vst [vmem:[%s356 + $0x38] sm:$0xf] %v4789
      %4822 = vst [vmem:[%s356 + $0x3c] sm:$0xf] %v4790
      %4823 = vst [vmem:[%s356 + $0x40] sm:$0xf] %v4791
      %4824 = vst [vmem:[%s356 + $0x44] sm:$0xf] %v4792
      %4825 = vst [vmem:[%s356 + $0x48] sm:$0xf] %v4793
      %4826 = vst [vmem:[%s356 + $0x4c] sm:$0xf] %v4794
      %4827 = vst [vmem:[%s356 + $0x50] sm:$0xf] %v4795
      %4828 = vst [vmem:[%s356 + $0x54] sm:$0xf] %v4796
      %4829 = vst [vmem:[%s356 + $0x58] sm:$0xf] %v4797
      %4830 = vst [vmem:[%s356 + $0x5c] sm:$0xf] %v4798
      %4831 = vst [vmem:[%s356 + $0x60] sm:$0xf] %v4799
      %4832 = vst [vmem:[%s356 + $0x64] sm:$0xf] %v4800
      %4833 = vst [vmem:[%s356 + $0x68] sm:$0xf] %v4801
      %4834 = vst [vmem:[%s356 + $0x6c] sm:$0xf] %v4802
      %4835 = vst [vmem:[%s356 + $0x70] sm:$0xf] %v4803
      %4836 = vst [vmem:[%s356 + $0x74] sm:$0xf] %v4804
      %4837 = vst [vmem:[%s356 + $0x78] sm:$0xf] %v4805
      %4838 = vst [vmem:[%s356 + $0x7c] sm:$0xf] %v4806
      %s4839 = smul.u32 32, %s20
      %p4840 = scmp.lt.s32.totalorder %s4839, 63
      %s4841 = scalar_select %p4840, %s4839, 63
      %s4842 = smul.addr %s4841, 4
      %s4843 = scalar_lea.vmem %s9, %s4842
      // Predicated region
      $region57: #{_dtt_forward_jit.8} parent=55 // pred_check
        %p4844 = pneg %p237
      $region58: #{_dtt_forward_jit.8} parent=55 // pred_check_branch
        %4846 = sbr.rel (%p4844) target = $region60
      $region59: #{_dtt_forward_jit.8} parent=55 // pred_region
        %s4847 = smul.u32 32, %s20
      $region60: #{_dtt_forward_jit.8} parent=55 // pred_fallthru
        _
    $region56: #{_dtt_forward_jit.8} parent=5 // pred_fallthru
      _
    %p4848 = scmp.le.s32.totalorder 2, %s15
    // Predicated region
    $region61: #{_dtt_forward_jit.8} parent=5 // pred_check
      %p4849 = pneg %p4848
    $region62: #{_dtt_forward_jit.8} parent=5 // pred_check_branch
      %4851 = sbr.rel (%p4849) target = $region64
    $region63: #{_dtt_forward_jit.8} parent=5 // pred_region
      %s4852 = ssub.s32 %s15, 2
      // Predicated region
      $region65: #{_dtt_forward_jit.8} parent=63 // pred_check
        %p4853 = pneg %p243
      $region66: #{_dtt_forward_jit.8} parent=63 // pred_check_branch
        %4855 = sbr.rel (%p4853) target = $region68
      $region67: #{_dtt_forward_jit.8} parent=63 // pred_region
        %s4856 = smul.u32 32, %s21
        %p4857 = scmp.lt.s32.totalorder %s4856, 63
        %s4858 = scalar_select %p4857, %s4856, 63
        %s4859 = smul.addr %s4858, 4
        %s4860 = scalar_lea.vmem %s9, %s4859
      $region68: #{_dtt_forward_jit.8} parent=63 // pred_fallthru
        _
    $region64: #{_dtt_forward_jit.8} parent=5 // pred_fallthru
      _
  $region6: #{_dtt_forward_jit.8} parent=0 // loop_footer
    %s19 = sadd.s32 1, %s15
  $region7: #{_dtt_forward_jit.8} parent=0 // loop_footer_branch
    %14 = sbr.rel target = $region3
  $region8: #{_dtt_forward_jit.8} parent=0 // loop_exit
    _

</llo_original>
